<compile_context>
chip_gen: v6e
topology: v6e:2x2x1
jax: 0.10.0
libtpu: 0.0.40
codegen_flags: <defaults>
</compile_context>

<pallas_src>
import functools

import jax
import jax.numpy as jnp
from jax import lax
from jax.experimental import pallas as pl
from jax.experimental.pallas import tpu as pltpu

BLOCK_SIZE = 32          # block_size in the PyTorch module (max sequence len)
M_EMBED = 512            # m_embed in the PyTorch module
NUM_HEADS = 4
HEAD_SIZE = 128          # head_size * num_heads == m_embed

_MASK_NEG = -1e30        # large finite negative (safer than -inf)


def _mha_kernel(x_ref, wqkv_ref, wproj_ref, bproj_ref, o_ref,
                *, num_heads, head_size, block_b):
    """Fused MHA + output projection for a block of BB batch rows.

    x_ref     : (BB, T, C)        bf16 activations
    wqkv_ref  : (C, 3*H*hs)       bf16 fused Q/K/V weights (Wq pre-scaled)
    wproj_ref : (H*hs, C)         bf16 output projection (heads concatenated)
    bproj_ref : (1, C)            f32 output projection bias
    o_ref     : (BB, T, C)        bf16 output
    """
    BB = block_b
    H = num_heads
    hs = head_size
    T = x_ref.shape[1]
    C = x_ref.shape[2]

    # Single wide QKV projection on the flattened (BB*T, C) activations.
    # f32 accumulation, then ONE full-width bf16 cast of the result.
    x = x_ref[...].reshape(BB * T, C)                                # bf16
    qkv = jnp.dot(x, wqkv_ref[...],
                  preferred_element_type=jnp.float32)                # (BB*T, 3*H*hs) f32
    qkv = qkv.astype(jnp.bfloat16).reshape(BB, T, 3 * H * hs)        # bf16

    # Loop-invariant mask tensors, built once (JAX does not CSE broadcasts).
    row = lax.broadcasted_iota(jnp.int32, (BB, T, T), 1)
    col = lax.broadcasted_iota(jnp.int32, (BB, T, T), 2)
    causal = row >= col                                              # (BB, T, T) bool
    neg = jnp.full((BB, T, T), _MASK_NEG, dtype=jnp.float32)

    # Output accumulator initialized with the (broadcast) projection bias.
    out = jnp.broadcast_to(bproj_ref[...], (BB * T, C))              # f32

    for h in range(H):                                               # static, H small
        q = qkv[:, :, h * hs:(h + 1) * hs]                           # (BB, T, hs) bf16
        k = qkv[:, :, (H + h) * hs:(H + h + 1) * hs]                 # (BB, T, hs) bf16
        v = qkv[:, :, (2 * H + h) * hs:(2 * H + h + 1) * hs]         # (BB, T, hs) bf16

        # Batched q @ k^T over all BB rows at once (scale folded into Wq).
        s = jnp.einsum('bqd,bkd->bqk', q, k,
                       preferred_element_type=jnp.float32)           # (BB, T, T) f32
        s = jnp.where(causal, s, neg)

        # Softmax with deferred normalization (reciprocal on the EUP).
        m = jnp.max(s, axis=-1, keepdims=True)                       # (BB, T, 1)
        e = jnp.exp(s - m)                                           # f32
        inv = pl.reciprocal(jnp.sum(e, axis=-1, keepdims=True),
                            approx=True)                             # (BB, T, 1)
        pv = jnp.einsum('bqk,bkd->bqd', e.astype(jnp.bfloat16), v,
                        preferred_element_type=jnp.float32)          # (BB, T, hs) f32
        head = (pv * inv).astype(jnp.bfloat16).reshape(BB * T, hs)

        # Accumulate the output projection per head (no concatenates).
        out = out + jnp.dot(head, wproj_ref[h * hs:(h + 1) * hs, :],
                            preferred_element_type=jnp.float32)      # (BB*T, C) f32

    o_ref[...] = out.reshape(BB, T, C).astype(jnp.bfloat16)


def _pick_block_b(B, T, target_rows):
    """Largest divisor of B with block_b * T <= target_rows (MXU row fill)."""
    bb = 1
    for cand in range(1, B + 1):
        if B % cand == 0 and cand * T <= target_rows:
            bb = cand
    return bb


def _default_target_rows():
    """Per-generation M (rows) for the big projections.

    v6e: 256 rows -> grid=1, fills the 2x256^2 MXU and removes a grid step.
    v5e: 128 rows matches the 4x128^2 MXU.
    v7x: keep 128 rows -> grid=2 so dimension_semantics=("parallel",) engages
         both TensorCores (kernel is weight-DMA bound, not MXU bound).
    """
    try:
        kind = jax.devices()[0].device_kind.lower()
    except Exception:
        return 128
    if "v6" in kind:
        return 256
    return 128


def multi_head_attention(x, wq, wk, wv, wproj, bproj, *, block_b=None):
    """x: (B, T, C); wq/wk/wv: (H, C, hs); wproj: (H, hs, C); bproj: (C,)."""
    B, T, C = x.shape
    H, _, hs = wq.shape
    # NOTE: PyTorch module scales by C ** -0.5 with C = m_embed (not head_size).
    scale = float(C) ** -0.5

    if block_b is None:
        block_b = _pick_block_b(B, T, _default_target_rows())
    assert B % block_b == 0, "batch must be divisible by block_b"
    BB = block_b

    # Host-side weight prep (once): fuse QKV, fold scale into Wq, cast to bf16.
    def per_head_cols(w):            # (H, C, hs) -> (C, H*hs); head h -> cols [h*hs,(h+1)*hs)
        return jnp.transpose(w, (1, 0, 2)).reshape(C, H * hs)

    wqkv = jnp.concatenate([per_head_cols(wq) * scale,
                            per_head_cols(wk),
                            per_head_cols(wv)], axis=1).astype(jnp.bfloat16)   # (C, 3*H*hs)
    wproj_flat = wproj.reshape(H * hs, C).astype(jnp.bfloat16)                 # (H*hs, C)
    bproj2 = bproj.reshape(1, C).astype(jnp.float32)
    x_bf16 = x.astype(jnp.bfloat16)

    kernel = functools.partial(_mha_kernel, num_heads=H, head_size=hs,
                               block_b=BB)

    return pl.pallas_call(
        kernel,
        out_shape=jax.ShapeDtypeStruct((B, T, C), jnp.bfloat16),
        grid_spec=pltpu.PrefetchScalarGridSpec(
            num_scalar_prefetch=0,
            grid=(B // BB,),
            in_specs=[
                pl.BlockSpec((BB, T, C), lambda i: (i, 0, 0)),        # x block
                pl.BlockSpec((C, 3 * H * hs), lambda i: (0, 0)),      # fused Wqkv (resident)
                pl.BlockSpec((H * hs, C), lambda i: (0, 0)),          # Wproj (resident)
                pl.BlockSpec((1, C), lambda i: (0, 0)),               # bias
            ],
            out_specs=pl.BlockSpec((BB, T, C), lambda i: (i, 0, 0)),
        ),
        compiler_params=pltpu.CompilerParams(
            dimension_semantics=("parallel",),
        ),
    )(x_bf16, wqkv, wproj_flat, bproj2)


def reference_mha(x, wq, wk, wv, wproj, bproj):
    """Pure-JAX f32 reference mirroring the PyTorch forward (dropout = identity)."""
    B, T, C = x.shape
    H, _, hs = wq.shape
    scale = float(C) ** -0.5
    tril = jnp.tril(jnp.ones((T, T), dtype=bool))
    heads = []
    for h in range(H):
        q = x @ wq[h]
        k = x @ wk[h]
        v = x @ wv[h]
        wei = (q @ jnp.swapaxes(k, -2, -1)) * scale
        wei = jnp.where(tril, wei, -jnp.inf)
        wei = jax.nn.softmax(wei, axis=-1)
        heads.append(wei @ v)
    out = jnp.concatenate(heads, axis=-1)               # (B, T, H*hs)
    wp_full = wproj.reshape(H * hs, C)                  # concat order matches
    return out @ wp_full + bproj


if __name__ == "__main__":
    key = jax.random.PRNGKey(0)
    B, T = 8, BLOCK_SIZE
    H, hs, C = NUM_HEADS, HEAD_SIZE, M_EMBED

    k_x, k_q, k_k, k_v, k_p, k_b = jax.random.split(key, 6)
    x = jax.random.normal(k_x, (B, T, C), dtype=jnp.float32)

    # Deterministic "Linear" weights. PyTorch Linear(in, out) stores W as
    # (out, in) and computes x @ W.T; we build the transposed (in, out) form
    # directly, per head.
    std = 1.0 / jnp.sqrt(C)
    wq = jax.random.normal(k_q, (H, C, hs), dtype=jnp.float32) * std
    wk = jax.random.normal(k_k, (H, C, hs), dtype=jnp.float32) * std
    wv = jax.random.normal(k_v, (H, C, hs), dtype=jnp.float32) * std
    # proj: Linear(H*hs, C); transposed form (H*hs, C), reshaped to (H, hs, C).
    wproj = (jax.random.normal(k_p, (H * hs, C), dtype=jnp.float32)
             / jnp.sqrt(H * hs)).reshape(H, hs, C)
    bproj = jax.random.normal(k_b, (C,), dtype=jnp.float32) * 0.01

    out = multi_head_attention(x, wq, wk, wv, wproj, bproj)
    out = jax.block_until_ready(out)

    ref = reference_mha(x, wq, wk, wv, wproj, bproj)
    assert out.shape == (B, T, C)
    out_f32 = out.astype(jnp.float32)
    # bf16 matmul inputs + bf16 output writeback vs f32 reference -> loosened tol.
    max_err = float(jnp.max(jnp.abs(out_f32 - ref)))
    assert jnp.allclose(out_f32, ref, atol=5e-2, rtol=5e-2), (
        f"mismatch vs reference (max abs err {max_err})")

    print("KERNEL_OK")
</pallas_src>

<mosaic_0001>
module attributes {stable_mosaic.version = 11 : i64} {
  func.func @_mha_kernel(%arg0: i32, %arg1: memref<4x32x512xbf16, #tpu.memory_space<vmem>>, %arg2: memref<512x1536xbf16, #tpu.memory_space<vmem>>, %arg3: memref<512x512xbf16, #tpu.memory_space<vmem>>, %arg4: memref<1x512xf32, #tpu.memory_space<vmem>>, %arg5: memref<4x32x512xbf16, #tpu.memory_space<vmem>>) attributes {dimension_semantics = [#tpu.dimension_semantics<parallel>], iteration_bounds = array<i64: 2>, scalar_prefetch = 0 : i64, scratch_operands = 0 : i64, tpu.core_type = #tpu.core_type<tc>, window_params = [{transform_indices = @transform_0, window_bounds = array<i64: 4, 32, 512>}, {pipeline_mode = #tpu.pipeline_mode<synchronous>, transform_indices = @transform_1, window_bounds = array<i64: 512, 1536>}, {pipeline_mode = #tpu.pipeline_mode<synchronous>, transform_indices = @transform_2, window_bounds = array<i64: 512, 512>}, {pipeline_mode = #tpu.pipeline_mode<synchronous>, transform_indices = @transform_3, window_bounds = array<i64: 1, 512>}, {transform_indices = @transform_4, window_bounds = array<i64: 4, 32, 512>}]} {
    %c0 = arith.constant 0 : index
    %c0_0 = arith.constant 0 : index
    %c0_1 = arith.constant 0 : index
    %0 = vector.load %arg1[%c0, %c0_0, %c0_1] : memref<4x32x512xbf16, #tpu.memory_space<vmem>>, vector<4x32x512xbf16>
    %1 = vector.shape_cast %0 : vector<4x32x512xbf16> to vector<128x512xbf16>
    %c0_2 = arith.constant 0 : index
    %c0_3 = arith.constant 0 : index
    %2 = vector.load %arg2[%c0_2, %c0_3] : memref<512x1536xbf16, #tpu.memory_space<vmem>>, vector<512x1536xbf16>
    %cst = arith.constant dense<0.000000e+00> : vector<128x1536xf32>
    %3 = tpu.matmul %1, %2, %cst {dimension_numbers = #tpu.dot_dimension_numbers<[1], [0], [0], [1], [0, 0, 1, 1], [], []>} : vector<128x512xbf16>, vector<512x1536xbf16>, vector<128x1536xf32> -> vector<128x1536xf32>
    %4 = arith.truncf %3 : vector<128x1536xf32> to vector<128x1536xbf16>
    %5 = vector.shape_cast %4 : vector<128x1536xbf16> to vector<4x32x1536xbf16>
    %6 = tpu.iota {dimensions = array<i32: 1>} : vector<4x32x32xi32>
    %7 = tpu.iota {dimensions = array<i32: 2>} : vector<4x32x32xi32>
    %8 = arith.cmpi sge, %6, %7 : vector<4x32x32xi32>
    %cst_4 = arith.constant -1.000000e+30 : f32
    %9 = vector.broadcast %cst_4 : f32 to vector<4x32x32xf32>
    %c0_5 = arith.constant 0 : index
    %c0_6 = arith.constant 0 : index
    %10 = vector.load %arg4[%c0_5, %c0_6] : memref<1x512xf32, #tpu.memory_space<vmem>>, vector<1x512xf32>
    %11 = vector.shape_cast %10 : vector<1x512xf32> to vector<1x512xf32>
    %12 = vector.broadcast %11 : vector<1x512xf32> to vector<128x512xf32>
    %13 = vector.extract_strided_slice %5 {offsets = [0, 0, 0], sizes = [4, 32, 128], strides = [1, 1, 1]} : vector<4x32x1536xbf16> to vector<4x32x128xbf16>
    %14 = vector.extract_strided_slice %5 {offsets = [0, 0, 512], sizes = [4, 32, 128], strides = [1, 1, 1]} : vector<4x32x1536xbf16> to vector<4x32x128xbf16>
    %15 = vector.extract_strided_slice %5 {offsets = [0, 0, 1024], sizes = [4, 32, 128], strides = [1, 1, 1]} : vector<4x32x1536xbf16> to vector<4x32x128xbf16>
    "tpu.trace_start"() <{level = 10 : i32, message = "bqd,bkd->bqk"}> : () -> ()
    %cst_7 = arith.constant dense<0.000000e+00> : vector<4x32x32xf32>
    %16 = tpu.matmul %13, %14, %cst_7 {dimension_numbers = #tpu.dot_dimension_numbers<[2], [2], [1], [1], [0, 0, 0, 1, 1, 1], [0], [0]>} : vector<4x32x128xbf16>, vector<4x32x128xbf16>, vector<4x32x32xf32> -> vector<4x32x32xf32>
    "tpu.trace_stop"() : () -> ()
    %17 = arith.select %8, %16, %9 : vector<4x32x32xi1>, vector<4x32x32xf32>
    %cst_8 = arith.constant dense<0xFF800000> : vector<4x32xf32>
    %18 = vector.multi_reduction <maximumf>, %17, %cst_8 [2] : vector<4x32x32xf32> to vector<4x32xf32>
    %19 = vector.shape_cast %18 : vector<4x32xf32> to vector<4x32x1xf32>
    %20 = vector.broadcast %19 : vector<4x32x1xf32> to vector<4x32x32xf32>
    %21 = arith.subf %17, %20 : vector<4x32x32xf32>
    %22 = math.exp %21 : vector<4x32x32xf32>
    %cst_9 = arith.constant dense<0.000000e+00> : vector<4x32xf32>
    %23 = vector.multi_reduction <add>, %22, %cst_9 [2] : vector<4x32x32xf32> to vector<4x32xf32>
    %24 = vector.shape_cast %23 : vector<4x32xf32> to vector<4x32x1xf32>
    %25 = tpu.reciprocal %24 {approx = true} : vector<4x32x1xf32> -> vector<4x32x1xf32>
    %26 = arith.truncf %22 : vector<4x32x32xf32> to vector<4x32x32xbf16>
    "tpu.trace_start"() <{level = 10 : i32, message = "bqk,bkd->bqd"}> : () -> ()
    %cst_10 = arith.constant dense<0.000000e+00> : vector<4x32x128xf32>
    %27 = tpu.matmul %26, %15, %cst_10 {dimension_numbers = #tpu.dot_dimension_numbers<[2], [1], [1], [2], [0, 0, 0, 1, 1, 2], [0], [0]>} : vector<4x32x32xbf16>, vector<4x32x128xbf16>, vector<4x32x128xf32> -> vector<4x32x128xf32>
    "tpu.trace_stop"() : () -> ()
    %28 = vector.broadcast %25 : vector<4x32x1xf32> to vector<4x32x128xf32>
    %29 = arith.mulf %27, %28 : vector<4x32x128xf32>
    %30 = arith.truncf %29 : vector<4x32x128xf32> to vector<4x32x128xbf16>
    %31 = vector.shape_cast %30 : vector<4x32x128xbf16> to vector<128x128xbf16>
    %c0_11 = arith.constant 0 : index
    %c0_12 = arith.constant 0 : index
    %32 = vector.load %arg3[%c0_11, %c0_12] : memref<512x512xbf16, #tpu.memory_space<vmem>>, vector<128x512xbf16>
    %cst_13 = arith.constant dense<0.000000e+00> : vector<128x512xf32>
    %33 = tpu.matmul %31, %32, %cst_13 {dimension_numbers = #tpu.dot_dimension_numbers<[1], [0], [0], [1], [0, 0, 1, 1], [], []>} : vector<128x128xbf16>, vector<128x512xbf16>, vector<128x512xf32> -> vector<128x512xf32>
    %34 = arith.addf %12, %33 : vector<128x512xf32>
    %35 = vector.extract_strided_slice %5 {offsets = [0, 0, 128], sizes = [4, 32, 128], strides = [1, 1, 1]} : vector<4x32x1536xbf16> to vector<4x32x128xbf16>
    %36 = vector.extract_strided_slice %5 {offsets = [0, 0, 640], sizes = [4, 32, 128], strides = [1, 1, 1]} : vector<4x32x1536xbf16> to vector<4x32x128xbf16>
    %37 = vector.extract_strided_slice %5 {offsets = [0, 0, 1152], sizes = [4, 32, 128], strides = [1, 1, 1]} : vector<4x32x1536xbf16> to vector<4x32x128xbf16>
    "tpu.trace_start"() <{level = 10 : i32, message = "bqd,bkd->bqk"}> : () -> ()
    %cst_14 = arith.constant dense<0.000000e+00> : vector<4x32x32xf32>
    %38 = tpu.matmul %35, %36, %cst_14 {dimension_numbers = #tpu.dot_dimension_numbers<[2], [2], [1], [1], [0, 0, 0, 1, 1, 1], [0], [0]>} : vector<4x32x128xbf16>, vector<4x32x128xbf16>, vector<4x32x32xf32> -> vector<4x32x32xf32>
    "tpu.trace_stop"() : () -> ()
    %39 = arith.select %8, %38, %9 : vector<4x32x32xi1>, vector<4x32x32xf32>
    %cst_15 = arith.constant dense<0xFF800000> : vector<4x32xf32>
    %40 = vector.multi_reduction <maximumf>, %39, %cst_15 [2] : vector<4x32x32xf32> to vector<4x32xf32>
    %41 = vector.shape_cast %40 : vector<4x32xf32> to vector<4x32x1xf32>
    %42 = vector.broadcast %41 : vector<4x32x1xf32> to vector<4x32x32xf32>
    %43 = arith.subf %39, %42 : vector<4x32x32xf32>
    %44 = math.exp %43 : vector<4x32x32xf32>
    %cst_16 = arith.constant dense<0.000000e+00> : vector<4x32xf32>
    %45 = vector.multi_reduction <add>, %44, %cst_16 [2] : vector<4x32x32xf32> to vector<4x32xf32>
    %46 = vector.shape_cast %45 : vector<4x32xf32> to vector<4x32x1xf32>
    %47 = tpu.reciprocal %46 {approx = true} : vector<4x32x1xf32> -> vector<4x32x1xf32>
    %48 = arith.truncf %44 : vector<4x32x32xf32> to vector<4x32x32xbf16>
    "tpu.trace_start"() <{level = 10 : i32, message = "bqk,bkd->bqd"}> : () -> ()
    %cst_17 = arith.constant dense<0.000000e+00> : vector<4x32x128xf32>
    %49 = tpu.matmul %48, %37, %cst_17 {dimension_numbers = #tpu.dot_dimension_numbers<[2], [1], [1], [2], [0, 0, 0, 1, 1, 2], [0], [0]>} : vector<4x32x32xbf16>, vector<4x32x128xbf16>, vector<4x32x128xf32> -> vector<4x32x128xf32>
    "tpu.trace_stop"() : () -> ()
    %50 = vector.broadcast %47 : vector<4x32x1xf32> to vector<4x32x128xf32>
    %51 = arith.mulf %49, %50 : vector<4x32x128xf32>
    %52 = arith.truncf %51 : vector<4x32x128xf32> to vector<4x32x128xbf16>
    %53 = vector.shape_cast %52 : vector<4x32x128xbf16> to vector<128x128xbf16>
    %c128 = arith.constant 128 : index
    %c0_18 = arith.constant 0 : index
    %54 = vector.load %arg3[%c128, %c0_18] : memref<512x512xbf16, #tpu.memory_space<vmem>>, vector<128x512xbf16>
    %cst_19 = arith.constant dense<0.000000e+00> : vector<128x512xf32>
    %55 = tpu.matmul %53, %54, %cst_19 {dimension_numbers = #tpu.dot_dimension_numbers<[1], [0], [0], [1], [0, 0, 1, 1], [], []>} : vector<128x128xbf16>, vector<128x512xbf16>, vector<128x512xf32> -> vector<128x512xf32>
    %56 = arith.addf %34, %55 : vector<128x512xf32>
    %57 = vector.extract_strided_slice %5 {offsets = [0, 0, 256], sizes = [4, 32, 128], strides = [1, 1, 1]} : vector<4x32x1536xbf16> to vector<4x32x128xbf16>
    %58 = vector.extract_strided_slice %5 {offsets = [0, 0, 768], sizes = [4, 32, 128], strides = [1, 1, 1]} : vector<4x32x1536xbf16> to vector<4x32x128xbf16>
    %59 = vector.extract_strided_slice %5 {offsets = [0, 0, 1280], sizes = [4, 32, 128], strides = [1, 1, 1]} : vector<4x32x1536xbf16> to vector<4x32x128xbf16>
    "tpu.trace_start"() <{level = 10 : i32, message = "bqd,bkd->bqk"}> : () -> ()
    %cst_20 = arith.constant dense<0.000000e+00> : vector<4x32x32xf32>
    %60 = tpu.matmul %57, %58, %cst_20 {dimension_numbers = #tpu.dot_dimension_numbers<[2], [2], [1], [1], [0, 0, 0, 1, 1, 1], [0], [0]>} : vector<4x32x128xbf16>, vector<4x32x128xbf16>, vector<4x32x32xf32> -> vector<4x32x32xf32>
    "tpu.trace_stop"() : () -> ()
    %61 = arith.select %8, %60, %9 : vector<4x32x32xi1>, vector<4x32x32xf32>
    %cst_21 = arith.constant dense<0xFF800000> : vector<4x32xf32>
    %62 = vector.multi_reduction <maximumf>, %61, %cst_21 [2] : vector<4x32x32xf32> to vector<4x32xf32>
    %63 = vector.shape_cast %62 : vector<4x32xf32> to vector<4x32x1xf32>
    %64 = vector.broadcast %63 : vector<4x32x1xf32> to vector<4x32x32xf32>
    %65 = arith.subf %61, %64 : vector<4x32x32xf32>
    %66 = math.exp %65 : vector<4x32x32xf32>
    %cst_22 = arith.constant dense<0.000000e+00> : vector<4x32xf32>
    %67 = vector.multi_reduction <add>, %66, %cst_22 [2] : vector<4x32x32xf32> to vector<4x32xf32>
    %68 = vector.shape_cast %67 : vector<4x32xf32> to vector<4x32x1xf32>
    %69 = tpu.reciprocal %68 {approx = true} : vector<4x32x1xf32> -> vector<4x32x1xf32>
    %70 = arith.truncf %66 : vector<4x32x32xf32> to vector<4x32x32xbf16>
    "tpu.trace_start"() <{level = 10 : i32, message = "bqk,bkd->bqd"}> : () -> ()
    %cst_23 = arith.constant dense<0.000000e+00> : vector<4x32x128xf32>
    %71 = tpu.matmul %70, %59, %cst_23 {dimension_numbers = #tpu.dot_dimension_numbers<[2], [1], [1], [2], [0, 0, 0, 1, 1, 2], [0], [0]>} : vector<4x32x32xbf16>, vector<4x32x128xbf16>, vector<4x32x128xf32> -> vector<4x32x128xf32>
    "tpu.trace_stop"() : () -> ()
    %72 = vector.broadcast %69 : vector<4x32x1xf32> to vector<4x32x128xf32>
    %73 = arith.mulf %71, %72 : vector<4x32x128xf32>
    %74 = arith.truncf %73 : vector<4x32x128xf32> to vector<4x32x128xbf16>
    %75 = vector.shape_cast %74 : vector<4x32x128xbf16> to vector<128x128xbf16>
    %c256 = arith.constant 256 : index
    %c0_24 = arith.constant 0 : index
    %76 = vector.load %arg3[%c256, %c0_24] : memref<512x512xbf16, #tpu.memory_space<vmem>>, vector<128x512xbf16>
    %cst_25 = arith.constant dense<0.000000e+00> : vector<128x512xf32>
    %77 = tpu.matmul %75, %76, %cst_25 {dimension_numbers = #tpu.dot_dimension_numbers<[1], [0], [0], [1], [0, 0, 1, 1], [], []>} : vector<128x128xbf16>, vector<128x512xbf16>, vector<128x512xf32> -> vector<128x512xf32>
    %78 = arith.addf %56, %77 : vector<128x512xf32>
    %79 = vector.extract_strided_slice %5 {offsets = [0, 0, 384], sizes = [4, 32, 128], strides = [1, 1, 1]} : vector<4x32x1536xbf16> to vector<4x32x128xbf16>
    %80 = vector.extract_strided_slice %5 {offsets = [0, 0, 896], sizes = [4, 32, 128], strides = [1, 1, 1]} : vector<4x32x1536xbf16> to vector<4x32x128xbf16>
    %81 = vector.extract_strided_slice %5 {offsets = [0, 0, 1408], sizes = [4, 32, 128], strides = [1, 1, 1]} : vector<4x32x1536xbf16> to vector<4x32x128xbf16>
    "tpu.trace_start"() <{level = 10 : i32, message = "bqd,bkd->bqk"}> : () -> ()
    %cst_26 = arith.constant dense<0.000000e+00> : vector<4x32x32xf32>
    %82 = tpu.matmul %79, %80, %cst_26 {dimension_numbers = #tpu.dot_dimension_numbers<[2], [2], [1], [1], [0, 0, 0, 1, 1, 1], [0], [0]>} : vector<4x32x128xbf16>, vector<4x32x128xbf16>, vector<4x32x32xf32> -> vector<4x32x32xf32>
    "tpu.trace_stop"() : () -> ()
    %83 = arith.select %8, %82, %9 : vector<4x32x32xi1>, vector<4x32x32xf32>
    %cst_27 = arith.constant dense<0xFF800000> : vector<4x32xf32>
    %84 = vector.multi_reduction <maximumf>, %83, %cst_27 [2] : vector<4x32x32xf32> to vector<4x32xf32>
    %85 = vector.shape_cast %84 : vector<4x32xf32> to vector<4x32x1xf32>
    %86 = vector.broadcast %85 : vector<4x32x1xf32> to vector<4x32x32xf32>
    %87 = arith.subf %83, %86 : vector<4x32x32xf32>
    %88 = math.exp %87 : vector<4x32x32xf32>
    %cst_28 = arith.constant dense<0.000000e+00> : vector<4x32xf32>
    %89 = vector.multi_reduction <add>, %88, %cst_28 [2] : vector<4x32x32xf32> to vector<4x32xf32>
    %90 = vector.shape_cast %89 : vector<4x32xf32> to vector<4x32x1xf32>
    %91 = tpu.reciprocal %90 {approx = true} : vector<4x32x1xf32> -> vector<4x32x1xf32>
    %92 = arith.truncf %88 : vector<4x32x32xf32> to vector<4x32x32xbf16>
    "tpu.trace_start"() <{level = 10 : i32, message = "bqk,bkd->bqd"}> : () -> ()
    %cst_29 = arith.constant dense<0.000000e+00> : vector<4x32x128xf32>
    %93 = tpu.matmul %92, %81, %cst_29 {dimension_numbers = #tpu.dot_dimension_numbers<[2], [1], [1], [2], [0, 0, 0, 1, 1, 2], [0], [0]>} : vector<4x32x32xbf16>, vector<4x32x128xbf16>, vector<4x32x128xf32> -> vector<4x32x128xf32>
    "tpu.trace_stop"() : () -> ()
    %94 = vector.broadcast %91 : vector<4x32x1xf32> to vector<4x32x128xf32>
    %95 = arith.mulf %93, %94 : vector<4x32x128xf32>
    %96 = arith.truncf %95 : vector<4x32x128xf32> to vector<4x32x128xbf16>
    %97 = vector.shape_cast %96 : vector<4x32x128xbf16> to vector<128x128xbf16>
    %c384 = arith.constant 384 : index
    %c0_30 = arith.constant 0 : index
    %98 = vector.load %arg3[%c384, %c0_30] : memref<512x512xbf16, #tpu.memory_space<vmem>>, vector<128x512xbf16>
    %cst_31 = arith.constant dense<0.000000e+00> : vector<128x512xf32>
    %99 = tpu.matmul %97, %98, %cst_31 {dimension_numbers = #tpu.dot_dimension_numbers<[1], [0], [0], [1], [0, 0, 1, 1], [], []>} : vector<128x128xbf16>, vector<128x512xbf16>, vector<128x512xf32> -> vector<128x512xf32>
    %100 = arith.addf %78, %99 : vector<128x512xf32>
    %101 = vector.shape_cast %100 : vector<128x512xf32> to vector<4x32x512xf32>
    %102 = arith.truncf %101 : vector<4x32x512xf32> to vector<4x32x512xbf16>
    %c0_32 = arith.constant 0 : index
    %c0_33 = arith.constant 0 : index
    %c0_34 = arith.constant 0 : index
    %103 = vector.load %arg5[%c0_32, %c0_33, %c0_34] : memref<4x32x512xbf16, #tpu.memory_space<vmem>>, vector<4x32x512xbf16>
    tpu.vector_store %arg5[%c0_32, %c0_33, %c0_34], %102 {strides = array<i32>} : memref<4x32x512xbf16, #tpu.memory_space<vmem>>, vector<4x32x512xbf16>,
    return
  }
  func.func @transform_0(%arg0: i32) -> (i32, i32, i32) {
    %c0_i32 = arith.constant 0 : i32
    %c0_i32_0 = arith.constant 0 : i32
    %c0_i32_1 = arith.constant 0 : i32
    return %arg0, %c0_i32, %c0_i32_0 : i32, i32, i32
  }
  func.func @transform_1(%arg0: i32) -> (i32, i32) {
    %c0_i32 = arith.constant 0 : i32
    %c0_i32_0 = arith.constant 0 : i32
    %c0_i32_1 = arith.constant 0 : i32
    return %c0_i32, %c0_i32_0 : i32, i32
  }
  func.func @transform_2(%arg0: i32) -> (i32, i32) {
    %c0_i32 = arith.constant 0 : i32
    %c0_i32_0 = arith.constant 0 : i32
    %c0_i32_1 = arith.constant 0 : i32
    return %c0_i32, %c0_i32_0 : i32, i32
  }
  func.func @transform_3(%arg0: i32) -> (i32, i32) {
    %c0_i32 = arith.constant 0 : i32
    %c0_i32_0 = arith.constant 0 : i32
    %c0_i32_1 = arith.constant 0 : i32
    return %c0_i32, %c0_i32_0 : i32, i32
  }
  func.func @transform_4(%arg0: i32) -> (i32, i32, i32) {
    %c0_i32 = arith.constant 0 : i32
    %c0_i32_0 = arith.constant 0 : i32
    %c0_i32_1 = arith.constant 0 : i32
    return %arg0, %c0_i32, %c0_i32_0 : i32, i32, i32
  }
}

</mosaic_0001>

<llo_original>
// kernel: tpu_custom_call.1
$region0: #{tpu_custom_call.1}
  #allocation0 [shape = 'u32[]', space=smem, size = 0x4, offset = 0x4, fixed_abs, tag = 'smem constant byte address 0x4 - core index']
  #allocation1 [shape = 'u32[144,128]{1,0:T(1,128)}', space=vmem, size = 0x12000, scoped, tag = 'internal scratch']
  %s0 = inlined_call_operand.hbm [shape: bf16[8,32,512], index: 0, kind: input, shape index: {}]
  %s1 = inlined_call_operand.hbm [shape: bf16[512,1536], index: 1, kind: input, shape index: {}]
  %s2 = inlined_call_operand.hbm [shape: bf16[512,512], index: 2, kind: input, shape index: {}]
  %s3 = inlined_call_operand.hbm [shape: f32[1,512], index: 3, kind: input, shape index: {}]
  %s4 = inlined_call_operand.hbm [shape: bf16[8,32,512], index: 4, kind: output, shape index: {}]
  %s5 = sld [smem:[#allocation0]]
  $region65: #{tpu_custom_call.1} parent=0
    _
  %s7 = ssub.s32 1, %s5
  %s8 = scalar_select 0, %s7, %s5
  $region1: #{tpu_custom_call.1} parent=0
    #allocation2 [shape = 'u8[262144]{0}', space=vmem, size = 0x40000, scoped, tag = 'input window, operand 0']
    #allocation3 [shape = 's32[2]{0}', space=sflag, size = 0x8, scoped, tag = 'scoped memory for tpu_custom_call.1']
    #allocation4 [shape = 's32[2]{0}', space=sflag, size = 0x8, scoped, tag = 'scoped memory for tpu_custom_call.1']
    #allocation5 [shape = 'u8[1572864]{0}', space=vmem, size = 0x180000, scoped, tag = 'input window, operand 1, single buffered']
    #allocation6 [shape = 's32[1]{0}', space=sflag, size = 0x4, scoped, tag = 'scoped memory for tpu_custom_call.1']
    #allocation7 [shape = 'u8[524288]{0}', space=vmem, size = 0x80000, scoped, tag = 'input window, operand 2, single buffered']
    #allocation8 [shape = 'u8[2048]{0}', space=vmem, size = 0x800, scoped, tag = 'input window, operand 3, single buffered']
    #allocation9 [shape = 's32[1]{0}', space=sflag, size = 0x4, scoped, tag = 'scoped memory for tpu_custom_call.1']
    #allocation10 [shape = 'u8[262144]{0}', space=vmem, size = 0x40000, scoped, tag = 'output window, operand 0']
    %9 = vsyncpa [#allocation3], 0
    %s10 = scalar_lea.sflag [#allocation3], 1
    %11 = vsyncpa %s10, 0
    %12 = vsyncpa [#allocation6], 0
    %13 = vsyncpa [#allocation9], 0
    %14 = vsyncpa [#allocation4], 0
    %s15 = scalar_lea.sflag [#allocation4], 1
    %16 = vsyncpa %s15, 0
    loop: start=0, step=1, limit=4
    $region2: #{tpu_custom_call.1} parent=1 // loop_pre_header
      _
    $region3: #{tpu_custom_call.1} parent=1 // loop_header
      %s18 = sphi 0, %s22
      %p19 = scmp.ge.s32.totalorder %s18, 4
      %s28 = sphi 0, %s30
      %s31 = sphi 0, %s28
      %s32 = sphi 0, %s31
      %s48 = sphi 0, %s32
      %s52 = sphi 0, %s52
      %s54 = sphi 0, %s52
      %s55 = sphi 0, %s54
      %s69 = sphi 0, %s55
      %s73 = sphi 0, %s73
      %s75 = sphi 0, %s73
      %s76 = sphi 0, %s75
      %s90 = sphi 0, %s76
      %s94 = sphi 0, %s94
      %s96 = sphi 0, %s94
      %s97 = sphi 0, %s96
      %s111 = sphi 0, %s97
      %s117 = sphi 0, %s119
      %s120 = sphi 0, %s117
      %s121 = sphi 0, %s120
      %s137 = sphi 0, %s121
    $region4: #{tpu_custom_call.1} parent=1 // loop_header_branch
      %21 = sbr.rel (%p19) target = $region8
    $region5: #{tpu_custom_call.1} parent=1 // loop_body
      %s23 = ssub.s32 %s18, 1
      %s24 = ssub.s32 %s18, 2
      %s25 = sadd.s32 %s18, 1
      %s26 = ssub.s32 %s18, %s25
      %p27 = scmp.eq.s32.totalorder %s26, 0
      %s29 = sadd.s32 %s28, 1
      %s30 = scalar_select %p27, %s28, %s29
      %p33 = pneg %p27
      %p34 = scmp.eq.s32.totalorder %s18, 1
      %p35 = por %p33, %p34
      %p36 = scmp.ne.s32.totalorder %s28, %s31
      %p37 = scmp.eq.s32.totalorder %s18, 0
      %p38 = por %p36, %p37
      %p39 = scmp.ne.s32.totalorder %s28, %s31
      %p40 = scmp.eq.s32.totalorder %s23, 1
      %p41 = por %p39, %p40
      %p42 = scmp.ne.s32.totalorder %s31, %s32
      %p43 = scmp.eq.s32.totalorder %s23, 0
      %p44 = por %p42, %p43
      %p45 = scmp.ne.s32.totalorder %s31, %s32
      %p46 = scmp.eq.s32.totalorder %s24, 1
      %p47 = por %p45, %p46
      %p49 = scmp.ne.s32.totalorder %s32, %s48
      %p50 = scmp.eq.s32.totalorder %s24, 0
      %p51 = por %p49, %p50
      %s53 = sadd.s32 %s52, 1
      %p56 = scmp.eq.s32.totalorder %s18, 1
      %p57 = scmp.ne.s32.totalorder %s52, %s54
      %p58 = scmp.eq.s32.totalorder %s18, 0
      %p59 = por %p57, %p58
      %p60 = scmp.ne.s32.totalorder %s52, %s54
      %p61 = scmp.eq.s32.totalorder %s23, 1
      %p62 = por %p60, %p61
      %p63 = scmp.ne.s32.totalorder %s54, %s55
      %p64 = scmp.eq.s32.totalorder %s23, 0
      %p65 = por %p63, %p64
      %p66 = scmp.ne.s32.totalorder %s54, %s55
      %p67 = scmp.eq.s32.totalorder %s24, 1
      %p68 = por %p66, %p67
      %p70 = scmp.ne.s32.totalorder %s55, %s69
      %p71 = scmp.eq.s32.totalorder %s24, 0
      %p72 = por %p70, %p71
      %s74 = sadd.s32 %s73, 1
      %p77 = scmp.eq.s32.totalorder %s18, 1
      %p78 = scmp.ne.s32.totalorder %s73, %s75
      %p79 = scmp.eq.s32.totalorder %s18, 0
      %p80 = por %p78, %p79
      %p81 = scmp.ne.s32.totalorder %s73, %s75
      %p82 = scmp.eq.s32.totalorder %s23, 1
      %p83 = por %p81, %p82
      %p84 = scmp.ne.s32.totalorder %s75, %s76
      %p85 = scmp.eq.s32.totalorder %s23, 0
      %p86 = por %p84, %p85
      %p87 = scmp.ne.s32.totalorder %s75, %s76
      %p88 = scmp.eq.s32.totalorder %s24, 1
      %p89 = por %p87, %p88
      %p91 = scmp.ne.s32.totalorder %s76, %s90
      %p92 = scmp.eq.s32.totalorder %s24, 0
      %p93 = por %p91, %p92
      %s95 = sadd.s32 %s94, 1
      %p98 = scmp.eq.s32.totalorder %s18, 1
      %p99 = scmp.ne.s32.totalorder %s94, %s96
      %p100 = scmp.eq.s32.totalorder %s18, 0
      %p101 = por %p99, %p100
      %p102 = scmp.ne.s32.totalorder %s94, %s96
      %p103 = scmp.eq.s32.totalorder %s23, 1
      %p104 = por %p102, %p103
      %p105 = scmp.ne.s32.totalorder %s96, %s97
      %p106 = scmp.eq.s32.totalorder %s23, 0
      %p107 = por %p105, %p106
      %p108 = scmp.ne.s32.totalorder %s96, %s97
      %p109 = scmp.eq.s32.totalorder %s24, 1
      %p110 = por %p108, %p109
      %p112 = scmp.ne.s32.totalorder %s97, %s111
      %p113 = scmp.eq.s32.totalorder %s24, 0
      %p114 = por %p112, %p113
      %s115 = ssub.s32 %s18, %s25
      %p116 = scmp.eq.s32.totalorder %s115, 0
      %s118 = sadd.s32 %s117, 1
      %s119 = scalar_select %p116, %s117, %s118
      %p122 = pneg %p116
      %p123 = scmp.eq.s32.totalorder %s18, 1
      %p124 = por %p122, %p123
      %p125 = scmp.ne.s32.totalorder %s117, %s120
      %p126 = scmp.eq.s32.totalorder %s18, 0
      %p127 = por %p125, %p126
      %p128 = scmp.ne.s32.totalorder %s117, %s120
      %p129 = scmp.eq.s32.totalorder %s23, 1
      %p130 = por %p128, %p129
      %p131 = scmp.ne.s32.totalorder %s120, %s121
      %p132 = scmp.eq.s32.totalorder %s23, 0
      %p133 = por %p131, %p132
      %p134 = scmp.ne.s32.totalorder %s120, %s121
      %p135 = scmp.eq.s32.totalorder %s24, 1
      %p136 = por %p134, %p135
      %p138 = scmp.ne.s32.totalorder %s121, %s137
      %p139 = scmp.eq.s32.totalorder %s24, 0
      %p140 = por %p138, %p139
      %p141 = scmp.le.s32.totalorder 1, %s18
      %p142 = scmp.lt.s32.totalorder %s18, 3
      %p143 = pnand %p141, %p142
      %p144 = pneg %p143
      // Predicated region
      $region9: #{tpu_custom_call.1} parent=5 // pred_check
        _
      $region10: #{tpu_custom_call.1} parent=5 // pred_check_branch
        %146 = sbr.rel (%p143) target = $region12
      $region11: #{tpu_custom_call.1} parent=5 // pred_region
        %s147 = ssub.s32 %s18, 1
        // Predicated region
        $region13: #{tpu_custom_call.1} parent=11 // pred_check
          %p148 = pneg %p65
        $region14: #{tpu_custom_call.1} parent=11 // pred_check_branch
          %150 = sbr.rel (%p148) target = $region16
        $region15: #{tpu_custom_call.1} parent=11 // pred_region
          %s152 = ssub.s32 49152, 49152
          %153 = vsyncadd [#allocation6], %s152
          %s154 = sshll.u32 [#allocation5], 4
          %s155 = int_to_ptr.vmem [resolvable:$true] %s154
          %160 = dma.hbm_to_vmem [thread:$0]  %s1, 49152, %s155, [#allocation6], 768, 768, 48
        $region16: #{tpu_custom_call.1} parent=11 // pred_fallthru
          _
        // Predicated region
        $region17: #{tpu_custom_call.1} parent=11 // pred_check
          %p161 = pneg %p86
        $region18: #{tpu_custom_call.1} parent=11 // pred_check_branch
          %163 = sbr.rel (%p161) target = $region20
        $region19: #{tpu_custom_call.1} parent=11 // pred_region
          %s165 = ssub.s32 16384, 16384
          %166 = vsyncadd [#allocation6], %s165
          %s167 = sshll.u32 [#allocation7], 4
          %s168 = int_to_ptr.vmem [resolvable:$true] %s167
          %173 = dma.hbm_to_vmem [thread:$0]  %s2, 16384, %s168, [#allocation6], 256, 256, 16
        $region20: #{tpu_custom_call.1} parent=11 // pred_fallthru
          _
        // Predicated region
        $region21: #{tpu_custom_call.1} parent=11 // pred_check
          %p174 = pneg %p107
        $region22: #{tpu_custom_call.1} parent=11 // pred_check_branch
          %176 = sbr.rel (%p174) target = $region24
        $region23: #{tpu_custom_call.1} parent=11 // pred_region
          %s178 = ssub.s32 64, 64
          %179 = vsyncadd [#allocation9], %s178
          %s181 = sshll.u32 [#allocation8], 4
          %s182 = int_to_ptr.vmem [resolvable:$true] %s181
          %184 = dma.hbm_to_vmem [thread:$0]  %s3, 64, %s182, [#allocation9]
        $region24: #{tpu_custom_call.1} parent=11 // pred_fallthru
          _
      $region12: #{tpu_custom_call.1} parent=5 // pred_fallthru
        _
      %p185 = scmp.lt.s32.totalorder %s18, 2
      // Predicated region
      $region25: #{tpu_custom_call.1} parent=5 // pred_check
        %p186 = pneg %p185
      $region26: #{tpu_custom_call.1} parent=5 // pred_check_branch
        %188 = sbr.rel (%p186) target = $region28
      $region27: #{tpu_custom_call.1} parent=5 // pred_region
        // Predicated region
        $region29: #{tpu_custom_call.1} parent=27 // pred_check
          %p189 = pneg %p38
        $region30: #{tpu_custom_call.1} parent=27 // pred_check_branch
          %191 = sbr.rel (%p189) target = $region32
        $region31: #{tpu_custom_call.1} parent=27 // pred_region
          %s192 = sand.u32 %s28, 1
          %s193 = scalar_lea.sflag [#allocation3], %s192
          %s194 = sand.u32 %s28, 1
          %s195 = smul.addr %s194, 256
          %s196 = scalar_lea.vmem [#allocation2], %s195
          %s197 = smul.u32 4, %s18
          %s199 = ssub.s32 4096, 4096
          %200 = vsyncadd %s193, %s199
          %s201 = smul.addr %s197, 16
          %s202 = smul.addr %s201, 64
          %s203 = scalar_lea.hbm %s0, %s202
          %s204 = sshll.u32 %s196, 4
          %s205 = int_to_ptr.vmem [resolvable:$true] %s204
          %210 = dma.hbm_to_vmem [thread:$0]  %s203, 4096, %s205, %s193, 256, 256, 16
        $region32: #{tpu_custom_call.1} parent=27 // pred_fallthru
          _
      $region28: #{tpu_custom_call.1} parent=5 // pred_fallthru
        _
      %p211 = scmp.le.s32.totalorder 1, %s18
      %p212 = scmp.lt.s32.totalorder %s18, 3
      %p213 = pnand %p211, %p212
      %p214 = pneg %p213
      // Predicated region
      $region33: #{tpu_custom_call.1} parent=5 // pred_check
        _
      $region34: #{tpu_custom_call.1} parent=5 // pred_check_branch
        %216 = sbr.rel (%p213) target = $region36
      $region35: #{tpu_custom_call.1} parent=5 // pred_region
        %s217 = ssub.s32 %s18, 1
        %s218 = sand.u32 %s31, 1
        %s219 = scalar_lea.sflag [#allocation3], %s218
        %s220 = sand.u32 %s31, 1
        %s221 = smul.addr %s220, 256
        %s222 = scalar_lea.vmem [#allocation2], %s221
        // Predicated region
        $region37: #{tpu_custom_call.1} parent=35 // pred_check
          %p223 = pneg %p44
        $region38: #{tpu_custom_call.1} parent=35 // pred_check_branch
          %225 = sbr.rel (%p223) target = $region40
        $region39: #{tpu_custom_call.1} parent=35 // pred_region
          %226 = dma.done %s219, 4096
        $region40: #{tpu_custom_call.1} parent=35 // pred_fallthru
          _
        // Predicated region
        $region41: #{tpu_custom_call.1} parent=35 // pred_check
          %p227 = pneg %p65
        $region42: #{tpu_custom_call.1} parent=35 // pred_check_branch
          %229 = sbr.rel (%p227) target = $region44
        $region43: #{tpu_custom_call.1} parent=35 // pred_region
          %230 = dma.done [#allocation6], 49152
        $region44: #{tpu_custom_call.1} parent=35 // pred_fallthru
          _
        // Predicated region
        $region45: #{tpu_custom_call.1} parent=35 // pred_check
          %p231 = pneg %p86
        $region46: #{tpu_custom_call.1} parent=35 // pred_check_branch
          %233 = sbr.rel (%p231) target = $region48
        $region47: #{tpu_custom_call.1} parent=35 // pred_region
          %234 = dma.done [#allocation6], 16384
        $region48: #{tpu_custom_call.1} parent=35 // pred_fallthru
          _
        // Predicated region
        $region49: #{tpu_custom_call.1} parent=35 // pred_check
          %p235 = pneg %p107
        $region50: #{tpu_custom_call.1} parent=35 // pred_check_branch
          %237 = sbr.rel (%p235) target = $region52
        $region51: #{tpu_custom_call.1} parent=35 // pred_region
          %238 = dma.done [#allocation9], 64
        $region52: #{tpu_custom_call.1} parent=35 // pred_fallthru
          _
        %s239 = sand.u32 %s31, 1
        %s240 = scalar_lea.sflag [#allocation3], %s239
        %s241 = sand.u32 %s31, 1
        %s242 = smul.addr %s241, 256
        %s243 = scalar_lea.vmem [#allocation2], %s242
        %p244 = pneg %p44
        %p245 = pneg %p41
        %p246 = pneg %p65
        %p247 = pneg %p62
        %p248 = pneg %p86
        %p249 = pneg %p83
        %p250 = pneg %p107
        %p251 = pneg %p104
        %p252 = pneg %p133
        %p253 = pneg %p130
        %s254 = sand.u32 %s120, 1
        %s255 = scalar_lea.sflag [#allocation4], %s254
        %s256 = sand.u32 %s120, 1
        %s257 = smul.addr %s256, 256
        %s258 = scalar_lea.vmem [#allocation10], %s257
        %s259 = smul.u32 4, %s23
        %s260 = smul.u32 4, %s23
        %v262 = vld [vmem:[%s222] sm:$0xff]
        %v263 = vld [vmem:[%s222 + $0x8] sm:$0xff]
        %v264 = vld [vmem:[%s222 + $0x10] sm:$0xff]
        %v265 = vld [vmem:[%s222 + $0x18] sm:$0xff]
        %v266 = vld [vmem:[%s222 + $0x20] sm:$0xff]
        %v267 = vld [vmem:[%s222 + $0x28] sm:$0xff]
        %v268 = vld [vmem:[%s222 + $0x30] sm:$0xff]
        %v269 = vld [vmem:[%s222 + $0x38] sm:$0xff]
        %v270 = vld [vmem:[%s222 + $0x40] sm:$0xff]
        %v271 = vld [vmem:[%s222 + $0x48] sm:$0xff]
        %v272 = vld [vmem:[%s222 + $0x50] sm:$0xff]
        %v273 = vld [vmem:[%s222 + $0x58] sm:$0xff]
        %v274 = vld [vmem:[%s222 + $0x60] sm:$0xff]
        %v275 = vld [vmem:[%s222 + $0x68] sm:$0xff]
        %v276 = vld [vmem:[%s222 + $0x70] sm:$0xff]
        %v277 = vld [vmem:[%s222 + $0x78] sm:$0xff]
        %v278 = vld [vmem:[%s222 + $0x80] sm:$0xff]
        %v279 = vld [vmem:[%s222 + $0x88] sm:$0xff]
        %v280 = vld [vmem:[%s222 + $0x90] sm:$0xff]
        %v281 = vld [vmem:[%s222 + $0x98] sm:$0xff]
        %v282 = vld [vmem:[%s222 + $0xa0] sm:$0xff]
        %v283 = vld [vmem:[%s222 + $0xa8] sm:$0xff]
        %v284 = vld [vmem:[%s222 + $0xb0] sm:$0xff]
        %v285 = vld [vmem:[%s222 + $0xb8] sm:$0xff]
        %v286 = vld [vmem:[%s222 + $0xc0] sm:$0xff]
        %v287 = vld [vmem:[%s222 + $0xc8] sm:$0xff]
        %v288 = vld [vmem:[%s222 + $0xd0] sm:$0xff]
        %v289 = vld [vmem:[%s222 + $0xd8] sm:$0xff]
        %v290 = vld [vmem:[%s222 + $0xe0] sm:$0xff]
        %v291 = vld [vmem:[%s222 + $0xe8] sm:$0xff]
        %v292 = vld [vmem:[%s222 + $0xf0] sm:$0xff]
        %v293 = vld [vmem:[%s222 + $0xf8] sm:$0xff]
        %v294 = vld [vmem:[#allocation5] sm:$0xff]
        %v295 = vld [vmem:[#allocation5 + $0x8] sm:$0xff]
        %v296 = vld [vmem:[#allocation5 + $0x10] sm:$0xff]
        %v297 = vld [vmem:[#allocation5 + $0x18] sm:$0xff]
        %v298 = vld [vmem:[#allocation5 + $0x20] sm:$0xff]
        %v299 = vld [vmem:[#allocation5 + $0x28] sm:$0xff]
        %v300 = vld [vmem:[#allocation5 + $0x30] sm:$0xff]
        %v301 = vld [vmem:[#allocation5 + $0x38] sm:$0xff]
        %v302 = vld [vmem:[#allocation5 + $0x40] sm:$0xff]
        %v303 = vld [vmem:[#allocation5 + $0x48] sm:$0xff]
        %v304 = vld [vmem:[#allocation5 + $0x50] sm:$0xff]
        %v305 = vld [vmem:[#allocation5 + $0x58] sm:$0xff]
        %v306 = vld [vmem:[#allocation5 + $0x60] sm:$0xff]
        %v307 = vld [vmem:[#allocation5 + $0x68] sm:$0xff]
        %v308 = vld [vmem:[#allocation5 + $0x70] sm:$0xff]
        %v309 = vld [vmem:[#allocation5 + $0x78] sm:$0xff]
        %v310 = vld [vmem:[#allocation5 + $0x80] sm:$0xff]
        %v311 = vld [vmem:[#allocation5 + $0x88] sm:$0xff]
        %v312 = vld [vmem:[#allocation5 + $0x90] sm:$0xff]
        %v313 = vld [vmem:[#allocation5 + $0x98] sm:$0xff]
        %v314 = vld [vmem:[#allocation5 + $0xa0] sm:$0xff]
        %v315 = vld [vmem:[#allocation5 + $0xa8] sm:$0xff]
        %v316 = vld [vmem:[#allocation5 + $0xb0] sm:$0xff]
        %v317 = vld [vmem:[#allocation5 + $0xb8] sm:$0xff]
        %v318 = vld [vmem:[#allocation5 + $0xc0] sm:$0xff]
        %v319 = vld [vmem:[#allocation5 + $0xc8] sm:$0xff]
        %v320 = vld [vmem:[#allocation5 + $0xd0] sm:$0xff]
        %v321 = vld [vmem:[#allocation5 + $0xd8] sm:$0xff]
        %v322 = vld [vmem:[#allocation5 + $0xe0] sm:$0xff]
        %v323 = vld [vmem:[#allocation5 + $0xe8] sm:$0xff]
        %v324 = vld [vmem:[#allocation5 + $0xf0] sm:$0xff]
        %v325 = vld [vmem:[#allocation5 + $0xf8] sm:$0xff]
        %v326 = vld [vmem:[#allocation5 + $0x100] sm:$0xff]
        %v327 = vld [vmem:[#allocation5 + $0x108] sm:$0xff]
        %v328 = vld [vmem:[#allocation5 + $0x110] sm:$0xff]
        %v329 = vld [vmem:[#allocation5 + $0x118] sm:$0xff]
        %v330 = vld [vmem:[#allocation5 + $0x120] sm:$0xff]
        %v331 = vld [vmem:[#allocation5 + $0x128] sm:$0xff]
        %v332 = vld [vmem:[#allocation5 + $0x130] sm:$0xff]
        %v333 = vld [vmem:[#allocation5 + $0x138] sm:$0xff]
        %v334 = vld [vmem:[#allocation5 + $0x140] sm:$0xff]
        %v335 = vld [vmem:[#allocation5 + $0x148] sm:$0xff]
        %v336 = vld [vmem:[#allocation5 + $0x150] sm:$0xff]
        %v337 = vld [vmem:[#allocation5 + $0x158] sm:$0xff]
        %v338 = vld [vmem:[#allocation5 + $0x160] sm:$0xff]
        %v339 = vld [vmem:[#allocation5 + $0x168] sm:$0xff]
        %v340 = vld [vmem:[#allocation5 + $0x170] sm:$0xff]
        %v341 = vld [vmem:[#allocation5 + $0x178] sm:$0xff]
        %v342 = vld [vmem:[#allocation5 + $0x180] sm:$0xff]
        %v343 = vld [vmem:[#allocation5 + $0x188] sm:$0xff]
        %v344 = vld [vmem:[#allocation5 + $0x190] sm:$0xff]
        %v345 = vld [vmem:[#allocation5 + $0x198] sm:$0xff]
        %v346 = vld [vmem:[#allocation5 + $0x1a0] sm:$0xff]
        %v347 = vld [vmem:[#allocation5 + $0x1a8] sm:$0xff]
        %v348 = vld [vmem:[#allocation5 + $0x1b0] sm:$0xff]
        %v349 = vld [vmem:[#allocation5 + $0x1b8] sm:$0xff]
        %v350 = vld [vmem:[#allocation5 + $0x1c0] sm:$0xff]
        %v351 = vld [vmem:[#allocation5 + $0x1c8] sm:$0xff]
        %v352 = vld [vmem:[#allocation5 + $0x1d0] sm:$0xff]
        %v353 = vld [vmem:[#allocation5 + $0x1d8] sm:$0xff]
        %v354 = vld [vmem:[#allocation5 + $0x1e0] sm:$0xff]
        %v355 = vld [vmem:[#allocation5 + $0x1e8] sm:$0xff]
        %v356 = vld [vmem:[#allocation5 + $0x1f0] sm:$0xff]
        %v357 = vld [vmem:[#allocation5 + $0x1f8] sm:$0xff]
        %v358 = vld [vmem:[#allocation5 + $0x200] sm:$0xff]
        %v359 = vld [vmem:[#allocation5 + $0x208] sm:$0xff]
        %v360 = vld [vmem:[#allocation5 + $0x210] sm:$0xff]
        %v361 = vld [vmem:[#allocation5 + $0x218] sm:$0xff]
        %v362 = vld [vmem:[#allocation5 + $0x220] sm:$0xff]
        %v363 = vld [vmem:[#allocation5 + $0x228] sm:$0xff]
        %v364 = vld [vmem:[#allocation5 + $0x230] sm:$0xff]
        %v365 = vld [vmem:[#allocation5 + $0x238] sm:$0xff]
        %v366 = vld [vmem:[#allocation5 + $0x240] sm:$0xff]
        %v367 = vld [vmem:[#allocation5 + $0x248] sm:$0xff]
        %v368 = vld [vmem:[#allocation5 + $0x250] sm:$0xff]
        %v369 = vld [vmem:[#allocation5 + $0x258] sm:$0xff]
        %v370 = vld [vmem:[#allocation5 + $0x260] sm:$0xff]
        %v371 = vld [vmem:[#allocation5 + $0x268] sm:$0xff]
        %v372 = vld [vmem:[#allocation5 + $0x270] sm:$0xff]
        %v373 = vld [vmem:[#allocation5 + $0x278] sm:$0xff]
        %v374 = vld [vmem:[#allocation5 + $0x280] sm:$0xff]
        %v375 = vld [vmem:[#allocation5 + $0x288] sm:$0xff]
        %v376 = vld [vmem:[#allocation5 + $0x290] sm:$0xff]
        %v377 = vld [vmem:[#allocation5 + $0x298] sm:$0xff]
        %v378 = vld [vmem:[#allocation5 + $0x2a0] sm:$0xff]
        %v379 = vld [vmem:[#allocation5 + $0x2a8] sm:$0xff]
        %v380 = vld [vmem:[#allocation5 + $0x2b0] sm:$0xff]
        %v381 = vld [vmem:[#allocation5 + $0x2b8] sm:$0xff]
        %v382 = vld [vmem:[#allocation5 + $0x2c0] sm:$0xff]
        %v383 = vld [vmem:[#allocation5 + $0x2c8] sm:$0xff]
        %v384 = vld [vmem:[#allocation5 + $0x2d0] sm:$0xff]
        %v385 = vld [vmem:[#allocation5 + $0x2d8] sm:$0xff]
        %v386 = vld [vmem:[#allocation5 + $0x2e0] sm:$0xff]
        %v387 = vld [vmem:[#allocation5 + $0x2e8] sm:$0xff]
        %v388 = vld [vmem:[#allocation5 + $0x2f0] sm:$0xff]
        %v389 = vld [vmem:[#allocation5 + $0x2f8] sm:$0xff]
        %v390 = vld [vmem:[#allocation5 + $0x300] sm:$0xff]
        %v391 = vld [vmem:[#allocation5 + $0x308] sm:$0xff]
        %v392 = vld [vmem:[#allocation5 + $0x310] sm:$0xff]
        %v393 = vld [vmem:[#allocation5 + $0x318] sm:$0xff]
        %v394 = vld [vmem:[#allocation5 + $0x320] sm:$0xff]
        %v395 = vld [vmem:[#allocation5 + $0x328] sm:$0xff]
        %v396 = vld [vmem:[#allocation5 + $0x330] sm:$0xff]
        %v397 = vld [vmem:[#allocation5 + $0x338] sm:$0xff]
        %v398 = vld [vmem:[#allocation5 + $0x340] sm:$0xff]
        %v399 = vld [vmem:[#allocation5 + $0x348] sm:$0xff]
        %v400 = vld [vmem:[#allocation5 + $0x350] sm:$0xff]
        %v401 = vld [vmem:[#allocation5 + $0x358] sm:$0xff]
        %v402 = vld [vmem:[#allocation5 + $0x360] sm:$0xff]
        %v403 = vld [vmem:[#allocation5 + $0x368] sm:$0xff]
        %v404 = vld [vmem:[#allocation5 + $0x370] sm:$0xff]
        %v405 = vld [vmem:[#allocation5 + $0x378] sm:$0xff]
        %v406 = vld [vmem:[#allocation5 + $0x380] sm:$0xff]
        %v407 = vld [vmem:[#allocation5 + $0x388] sm:$0xff]
        %v408 = vld [vmem:[#allocation5 + $0x390] sm:$0xff]
        %v409 = vld [vmem:[#allocation5 + $0x398] sm:$0xff]
        %v410 = vld [vmem:[#allocation5 + $0x3a0] sm:$0xff]
        %v411 = vld [vmem:[#allocation5 + $0x3a8] sm:$0xff]
        %v412 = vld [vmem:[#allocation5 + $0x3b0] sm:$0xff]
        %v413 = vld [vmem:[#allocation5 + $0x3b8] sm:$0xff]
        %v414 = vld [vmem:[#allocation5 + $0x3c0] sm:$0xff]
        %v415 = vld [vmem:[#allocation5 + $0x3c8] sm:$0xff]
        %v416 = vld [vmem:[#allocation5 + $0x3d0] sm:$0xff]
        %v417 = vld [vmem:[#allocation5 + $0x3d8] sm:$0xff]
        %v418 = vld [vmem:[#allocation5 + $0x3e0] sm:$0xff]
        %v419 = vld [vmem:[#allocation5 + $0x3e8] sm:$0xff]
        %v420 = vld [vmem:[#allocation5 + $0x3f0] sm:$0xff]
        %v421 = vld [vmem:[#allocation5 + $0x3f8] sm:$0xff]
        %v422 = vld [vmem:[#allocation5 + $0x400] sm:$0xff]
        %v423 = vld [vmem:[#allocation5 + $0x408] sm:$0xff]
        %v424 = vld [vmem:[#allocation5 + $0x410] sm:$0xff]
        %v425 = vld [vmem:[#allocation5 + $0x418] sm:$0xff]
        %v426 = vld [vmem:[#allocation5 + $0x420] sm:$0xff]
        %v427 = vld [vmem:[#allocation5 + $0x428] sm:$0xff]
        %v428 = vld [vmem:[#allocation5 + $0x430] sm:$0xff]
        %v429 = vld [vmem:[#allocation5 + $0x438] sm:$0xff]
        %v430 = vld [vmem:[#allocation5 + $0x440] sm:$0xff]
        %v431 = vld [vmem:[#allocation5 + $0x448] sm:$0xff]
        %v432 = vld [vmem:[#allocation5 + $0x450] sm:$0xff]
        %v433 = vld [vmem:[#allocation5 + $0x458] sm:$0xff]
        %v434 = vld [vmem:[#allocation5 + $0x460] sm:$0xff]
        %v435 = vld [vmem:[#allocation5 + $0x468] sm:$0xff]
        %v436 = vld [vmem:[#allocation5 + $0x470] sm:$0xff]
        %v437 = vld [vmem:[#allocation5 + $0x478] sm:$0xff]
        %v438 = vld [vmem:[#allocation5 + $0x480] sm:$0xff]
        %v439 = vld [vmem:[#allocation5 + $0x488] sm:$0xff]
        %v440 = vld [vmem:[#allocation5 + $0x490] sm:$0xff]
        %v441 = vld [vmem:[#allocation5 + $0x498] sm:$0xff]
        %v442 = vld [vmem:[#allocation5 + $0x4a0] sm:$0xff]
        %v443 = vld [vmem:[#allocation5 + $0x4a8] sm:$0xff]
        %v444 = vld [vmem:[#allocation5 + $0x4b0] sm:$0xff]
        %v445 = vld [vmem:[#allocation5 + $0x4b8] sm:$0xff]
        %v446 = vld [vmem:[#allocation5 + $0x4c0] sm:$0xff]
        %v447 = vld [vmem:[#allocation5 + $0x4c8] sm:$0xff]
        %v448 = vld [vmem:[#allocation5 + $0x4d0] sm:$0xff]
        %v449 = vld [vmem:[#allocation5 + $0x4d8] sm:$0xff]
        %v450 = vld [vmem:[#allocation5 + $0x4e0] sm:$0xff]
        %v451 = vld [vmem:[#allocation5 + $0x4e8] sm:$0xff]
        %v452 = vld [vmem:[#allocation5 + $0x4f0] sm:$0xff]
        %v453 = vld [vmem:[#allocation5 + $0x4f8] sm:$0xff]
        %v454 = vld [vmem:[#allocation5 + $0x500] sm:$0xff]
        %v455 = vld [vmem:[#allocation5 + $0x508] sm:$0xff]
        %v456 = vld [vmem:[#allocation5 + $0x510] sm:$0xff]
        %v457 = vld [vmem:[#allocation5 + $0x518] sm:$0xff]
        %v458 = vld [vmem:[#allocation5 + $0x520] sm:$0xff]
        %v459 = vld [vmem:[#allocation5 + $0x528] sm:$0xff]
        %v460 = vld [vmem:[#allocation5 + $0x530] sm:$0xff]
        %v461 = vld [vmem:[#allocation5 + $0x538] sm:$0xff]
        %v462 = vld [vmem:[#allocation5 + $0x540] sm:$0xff]
        %v463 = vld [vmem:[#allocation5 + $0x548] sm:$0xff]
        %v464 = vld [vmem:[#allocation5 + $0x550] sm:$0xff]
        %v465 = vld [vmem:[#allocation5 + $0x558] sm:$0xff]
        %v466 = vld [vmem:[#allocation5 + $0x560] sm:$0xff]
        %v467 = vld [vmem:[#allocation5 + $0x568] sm:$0xff]
        %v468 = vld [vmem:[#allocation5 + $0x570] sm:$0xff]
        %v469 = vld [vmem:[#allocation5 + $0x578] sm:$0xff]
        %v470 = vld [vmem:[#allocation5 + $0x580] sm:$0xff]
        %v471 = vld [vmem:[#allocation5 + $0x588] sm:$0xff]
        %v472 = vld [vmem:[#allocation5 + $0x590] sm:$0xff]
        %v473 = vld [vmem:[#allocation5 + $0x598] sm:$0xff]
        %v474 = vld [vmem:[#allocation5 + $0x5a0] sm:$0xff]
        %v475 = vld [vmem:[#allocation5 + $0x5a8] sm:$0xff]
        %v476 = vld [vmem:[#allocation5 + $0x5b0] sm:$0xff]
        %v477 = vld [vmem:[#allocation5 + $0x5b8] sm:$0xff]
        %v478 = vld [vmem:[#allocation5 + $0x5c0] sm:$0xff]
        %v479 = vld [vmem:[#allocation5 + $0x5c8] sm:$0xff]
        %v480 = vld [vmem:[#allocation5 + $0x5d0] sm:$0xff]
        %v481 = vld [vmem:[#allocation5 + $0x5d8] sm:$0xff]
        %v482 = vld [vmem:[#allocation5 + $0x5e0] sm:$0xff]
        %v483 = vld [vmem:[#allocation5 + $0x5e8] sm:$0xff]
        %v484 = vld [vmem:[#allocation5 + $0x5f0] sm:$0xff]
        %v485 = vld [vmem:[#allocation5 + $0x5f8] sm:$0xff]
        %v486 = vld [vmem:[#allocation5 + $0x600] sm:$0xff]
        %v487 = vld [vmem:[#allocation5 + $0x608] sm:$0xff]
        %v488 = vld [vmem:[#allocation5 + $0x610] sm:$0xff]
        %v489 = vld [vmem:[#allocation5 + $0x618] sm:$0xff]
        %v490 = vld [vmem:[#allocation5 + $0x620] sm:$0xff]
        %v491 = vld [vmem:[#allocation5 + $0x628] sm:$0xff]
        %v492 = vld [vmem:[#allocation5 + $0x630] sm:$0xff]
        %v493 = vld [vmem:[#allocation5 + $0x638] sm:$0xff]
        %v494 = vld [vmem:[#allocation5 + $0x640] sm:$0xff]
        %v495 = vld [vmem:[#allocation5 + $0x648] sm:$0xff]
        %v496 = vld [vmem:[#allocation5 + $0x650] sm:$0xff]
        %v497 = vld [vmem:[#allocation5 + $0x658] sm:$0xff]
        %v498 = vld [vmem:[#allocation5 + $0x660] sm:$0xff]
        %v499 = vld [vmem:[#allocation5 + $0x668] sm:$0xff]
        %v500 = vld [vmem:[#allocation5 + $0x670] sm:$0xff]
        %v501 = vld [vmem:[#allocation5 + $0x678] sm:$0xff]
        %v502 = vld [vmem:[#allocation5 + $0x680] sm:$0xff]
        %v503 = vld [vmem:[#allocation5 + $0x688] sm:$0xff]
        %v504 = vld [vmem:[#allocation5 + $0x690] sm:$0xff]
        %v505 = vld [vmem:[#allocation5 + $0x698] sm:$0xff]
        %v506 = vld [vmem:[#allocation5 + $0x6a0] sm:$0xff]
        %v507 = vld [vmem:[#allocation5 + $0x6a8] sm:$0xff]
        %v508 = vld [vmem:[#allocation5 + $0x6b0] sm:$0xff]
        %v509 = vld [vmem:[#allocation5 + $0x6b8] sm:$0xff]
        %v510 = vld [vmem:[#allocation5 + $0x6c0] sm:$0xff]
        %v511 = vld [vmem:[#allocation5 + $0x6c8] sm:$0xff]
        %v512 = vld [vmem:[#allocation5 + $0x6d0] sm:$0xff]
        %v513 = vld [vmem:[#allocation5 + $0x6d8] sm:$0xff]
        %v514 = vld [vmem:[#allocation5 + $0x6e0] sm:$0xff]
        %v515 = vld [vmem:[#allocation5 + $0x6e8] sm:$0xff]
        %v516 = vld [vmem:[#allocation5 + $0x6f0] sm:$0xff]
        %v517 = vld [vmem:[#allocation5 + $0x6f8] sm:$0xff]
        %v518 = vld [vmem:[#allocation5 + $0x700] sm:$0xff]
        %v519 = vld [vmem:[#allocation5 + $0x708] sm:$0xff]
        %v520 = vld [vmem:[#allocation5 + $0x710] sm:$0xff]
        %v521 = vld [vmem:[#allocation5 + $0x718] sm:$0xff]
        %v522 = vld [vmem:[#allocation5 + $0x720] sm:$0xff]
        %v523 = vld [vmem:[#allocation5 + $0x728] sm:$0xff]
        %v524 = vld [vmem:[#allocation5 + $0x730] sm:$0xff]
        %v525 = vld [vmem:[#allocation5 + $0x738] sm:$0xff]
        %v526 = vld [vmem:[#allocation5 + $0x740] sm:$0xff]
        %v527 = vld [vmem:[#allocation5 + $0x748] sm:$0xff]
        %v528 = vld [vmem:[#allocation5 + $0x750] sm:$0xff]
        %v529 = vld [vmem:[#allocation5 + $0x758] sm:$0xff]
        %v530 = vld [vmem:[#allocation5 + $0x760] sm:$0xff]
        %v531 = vld [vmem:[#allocation5 + $0x768] sm:$0xff]
        %v532 = vld [vmem:[#allocation5 + $0x770] sm:$0xff]
        %v533 = vld [vmem:[#allocation5 + $0x778] sm:$0xff]
        %v534 = vld [vmem:[#allocation5 + $0x780] sm:$0xff]
        %v535 = vld [vmem:[#allocation5 + $0x788] sm:$0xff]
        %v536 = vld [vmem:[#allocation5 + $0x790] sm:$0xff]
        %v537 = vld [vmem:[#allocation5 + $0x798] sm:$0xff]
        %v538 = vld [vmem:[#allocation5 + $0x7a0] sm:$0xff]
        %v539 = vld [vmem:[#allocation5 + $0x7a8] sm:$0xff]
        %v540 = vld [vmem:[#allocation5 + $0x7b0] sm:$0xff]
        %v541 = vld [vmem:[#allocation5 + $0x7b8] sm:$0xff]
        %v542 = vld [vmem:[#allocation5 + $0x7c0] sm:$0xff]
        %v543 = vld [vmem:[#allocation5 + $0x7c8] sm:$0xff]
        %v544 = vld [vmem:[#allocation5 + $0x7d0] sm:$0xff]
        %v545 = vld [vmem:[#allocation5 + $0x7d8] sm:$0xff]
        %v546 = vld [vmem:[#allocation5 + $0x7e0] sm:$0xff]
        %v547 = vld [vmem:[#allocation5 + $0x7e8] sm:$0xff]
        %v548 = vld [vmem:[#allocation5 + $0x7f0] sm:$0xff]
        %v549 = vld [vmem:[#allocation5 + $0x7f8] sm:$0xff]
        %v550 = vld [vmem:[#allocation5 + $0x800] sm:$0xff]
        %v551 = vld [vmem:[#allocation5 + $0x808] sm:$0xff]
        %v552 = vld [vmem:[#allocation5 + $0x810] sm:$0xff]
        %v553 = vld [vmem:[#allocation5 + $0x818] sm:$0xff]
        %v554 = vld [vmem:[#allocation5 + $0x820] sm:$0xff]
        %v555 = vld [vmem:[#allocation5 + $0x828] sm:$0xff]
        %v556 = vld [vmem:[#allocation5 + $0x830] sm:$0xff]
        %v557 = vld [vmem:[#allocation5 + $0x838] sm:$0xff]
        %v558 = vld [vmem:[#allocation5 + $0x840] sm:$0xff]
        %v559 = vld [vmem:[#allocation5 + $0x848] sm:$0xff]
        %v560 = vld [vmem:[#allocation5 + $0x850] sm:$0xff]
        %v561 = vld [vmem:[#allocation5 + $0x858] sm:$0xff]
        %v562 = vld [vmem:[#allocation5 + $0x860] sm:$0xff]
        %v563 = vld [vmem:[#allocation5 + $0x868] sm:$0xff]
        %v564 = vld [vmem:[#allocation5 + $0x870] sm:$0xff]
        %v565 = vld [vmem:[#allocation5 + $0x878] sm:$0xff]
        %v566 = vld [vmem:[#allocation5 + $0x880] sm:$0xff]
        %v567 = vld [vmem:[#allocation5 + $0x888] sm:$0xff]
        %v568 = vld [vmem:[#allocation5 + $0x890] sm:$0xff]
        %v569 = vld [vmem:[#allocation5 + $0x898] sm:$0xff]
        %v570 = vld [vmem:[#allocation5 + $0x8a0] sm:$0xff]
        %v571 = vld [vmem:[#allocation5 + $0x8a8] sm:$0xff]
        %v572 = vld [vmem:[#allocation5 + $0x8b0] sm:$0xff]
        %v573 = vld [vmem:[#allocation5 + $0x8b8] sm:$0xff]
        %v574 = vld [vmem:[#allocation5 + $0x8c0] sm:$0xff]
        %v575 = vld [vmem:[#allocation5 + $0x8c8] sm:$0xff]
        %v576 = vld [vmem:[#allocation5 + $0x8d0] sm:$0xff]
        %v577 = vld [vmem:[#allocation5 + $0x8d8] sm:$0xff]
        %v578 = vld [vmem:[#allocation5 + $0x8e0] sm:$0xff]
        %v579 = vld [vmem:[#allocation5 + $0x8e8] sm:$0xff]
        %v580 = vld [vmem:[#allocation5 + $0x8f0] sm:$0xff]
        %v581 = vld [vmem:[#allocation5 + $0x8f8] sm:$0xff]
        %v582 = vld [vmem:[#allocation5 + $0x900] sm:$0xff]
        %v583 = vld [vmem:[#allocation5 + $0x908] sm:$0xff]
        %v584 = vld [vmem:[#allocation5 + $0x910] sm:$0xff]
        %v585 = vld [vmem:[#allocation5 + $0x918] sm:$0xff]
        %v586 = vld [vmem:[#allocation5 + $0x920] sm:$0xff]
        %v587 = vld [vmem:[#allocation5 + $0x928] sm:$0xff]
        %v588 = vld [vmem:[#allocation5 + $0x930] sm:$0xff]
        %v589 = vld [vmem:[#allocation5 + $0x938] sm:$0xff]
        %v590 = vld [vmem:[#allocation5 + $0x940] sm:$0xff]
        %v591 = vld [vmem:[#allocation5 + $0x948] sm:$0xff]
        %v592 = vld [vmem:[#allocation5 + $0x950] sm:$0xff]
        %v593 = vld [vmem:[#allocation5 + $0x958] sm:$0xff]
        %v594 = vld [vmem:[#allocation5 + $0x960] sm:$0xff]
        %v595 = vld [vmem:[#allocation5 + $0x968] sm:$0xff]
        %v596 = vld [vmem:[#allocation5 + $0x970] sm:$0xff]
        %v597 = vld [vmem:[#allocation5 + $0x978] sm:$0xff]
        %v598 = vld [vmem:[#allocation5 + $0x980] sm:$0xff]
        %v599 = vld [vmem:[#allocation5 + $0x988] sm:$0xff]
        %v600 = vld [vmem:[#allocation5 + $0x990] sm:$0xff]
        %v601 = vld [vmem:[#allocation5 + $0x998] sm:$0xff]
        %v602 = vld [vmem:[#allocation5 + $0x9a0] sm:$0xff]
        %v603 = vld [vmem:[#allocation5 + $0x9a8] sm:$0xff]
        %v604 = vld [vmem:[#allocation5 + $0x9b0] sm:$0xff]
        %v605 = vld [vmem:[#allocation5 + $0x9b8] sm:$0xff]
        %v606 = vld [vmem:[#allocation5 + $0x9c0] sm:$0xff]
        %v607 = vld [vmem:[#allocation5 + $0x9c8] sm:$0xff]
        %v608 = vld [vmem:[#allocation5 + $0x9d0] sm:$0xff]
        %v609 = vld [vmem:[#allocation5 + $0x9d8] sm:$0xff]
        %v610 = vld [vmem:[#allocation5 + $0x9e0] sm:$0xff]
        %v611 = vld [vmem:[#allocation5 + $0x9e8] sm:$0xff]
        %v612 = vld [vmem:[#allocation5 + $0x9f0] sm:$0xff]
        %v613 = vld [vmem:[#allocation5 + $0x9f8] sm:$0xff]
        %v614 = vld [vmem:[#allocation5 + $0xa00] sm:$0xff]
        %v615 = vld [vmem:[#allocation5 + $0xa08] sm:$0xff]
        %v616 = vld [vmem:[#allocation5 + $0xa10] sm:$0xff]
        %v617 = vld [vmem:[#allocation5 + $0xa18] sm:$0xff]
        %v618 = vld [vmem:[#allocation5 + $0xa20] sm:$0xff]
        %v619 = vld [vmem:[#allocation5 + $0xa28] sm:$0xff]
        %v620 = vld [vmem:[#allocation5 + $0xa30] sm:$0xff]
        %v621 = vld [vmem:[#allocation5 + $0xa38] sm:$0xff]
        %v622 = vld [vmem:[#allocation5 + $0xa40] sm:$0xff]
        %v623 = vld [vmem:[#allocation5 + $0xa48] sm:$0xff]
        %v624 = vld [vmem:[#allocation5 + $0xa50] sm:$0xff]
        %v625 = vld [vmem:[#allocation5 + $0xa58] sm:$0xff]
        %v626 = vld [vmem:[#allocation5 + $0xa60] sm:$0xff]
        %v627 = vld [vmem:[#allocation5 + $0xa68] sm:$0xff]
        %v628 = vld [vmem:[#allocation5 + $0xa70] sm:$0xff]
        %v629 = vld [vmem:[#allocation5 + $0xa78] sm:$0xff]
        %v630 = vld [vmem:[#allocation5 + $0xa80] sm:$0xff]
        %v631 = vld [vmem:[#allocation5 + $0xa88] sm:$0xff]
        %v632 = vld [vmem:[#allocation5 + $0xa90] sm:$0xff]
        %v633 = vld [vmem:[#allocation5 + $0xa98] sm:$0xff]
        %v634 = vld [vmem:[#allocation5 + $0xaa0] sm:$0xff]
        %v635 = vld [vmem:[#allocation5 + $0xaa8] sm:$0xff]
        %v636 = vld [vmem:[#allocation5 + $0xab0] sm:$0xff]
        %v637 = vld [vmem:[#allocation5 + $0xab8] sm:$0xff]
        %v638 = vld [vmem:[#allocation5 + $0xac0] sm:$0xff]
        %v639 = vld [vmem:[#allocation5 + $0xac8] sm:$0xff]
        %v640 = vld [vmem:[#allocation5 + $0xad0] sm:$0xff]
        %v641 = vld [vmem:[#allocation5 + $0xad8] sm:$0xff]
        %v642 = vld [vmem:[#allocation5 + $0xae0] sm:$0xff]
        %v643 = vld [vmem:[#allocation5 + $0xae8] sm:$0xff]
        %v644 = vld [vmem:[#allocation5 + $0xaf0] sm:$0xff]
        %v645 = vld [vmem:[#allocation5 + $0xaf8] sm:$0xff]
        %v646 = vld [vmem:[#allocation5 + $0xb00] sm:$0xff]
        %v647 = vld [vmem:[#allocation5 + $0xb08] sm:$0xff]
        %v648 = vld [vmem:[#allocation5 + $0xb10] sm:$0xff]
        %v649 = vld [vmem:[#allocation5 + $0xb18] sm:$0xff]
        %v650 = vld [vmem:[#allocation5 + $0xb20] sm:$0xff]
        %v651 = vld [vmem:[#allocation5 + $0xb28] sm:$0xff]
        %v652 = vld [vmem:[#allocation5 + $0xb30] sm:$0xff]
        %v653 = vld [vmem:[#allocation5 + $0xb38] sm:$0xff]
        %v654 = vld [vmem:[#allocation5 + $0xb40] sm:$0xff]
        %v655 = vld [vmem:[#allocation5 + $0xb48] sm:$0xff]
        %v656 = vld [vmem:[#allocation5 + $0xb50] sm:$0xff]
        %v657 = vld [vmem:[#allocation5 + $0xb58] sm:$0xff]
        %v658 = vld [vmem:[#allocation5 + $0xb60] sm:$0xff]
        %v659 = vld [vmem:[#allocation5 + $0xb68] sm:$0xff]
        %v660 = vld [vmem:[#allocation5 + $0xb70] sm:$0xff]
        %v661 = vld [vmem:[#allocation5 + $0xb78] sm:$0xff]
        %v662 = vld [vmem:[#allocation5 + $0xb80] sm:$0xff]
        %v663 = vld [vmem:[#allocation5 + $0xb88] sm:$0xff]
        %v664 = vld [vmem:[#allocation5 + $0xb90] sm:$0xff]
        %v665 = vld [vmem:[#allocation5 + $0xb98] sm:$0xff]
        %v666 = vld [vmem:[#allocation5 + $0xba0] sm:$0xff]
        %v667 = vld [vmem:[#allocation5 + $0xba8] sm:$0xff]
        %v668 = vld [vmem:[#allocation5 + $0xbb0] sm:$0xff]
        %v669 = vld [vmem:[#allocation5 + $0xbb8] sm:$0xff]
        %v670 = vld [vmem:[#allocation5 + $0xbc0] sm:$0xff]
        %v671 = vld [vmem:[#allocation5 + $0xbc8] sm:$0xff]
        %v672 = vld [vmem:[#allocation5 + $0xbd0] sm:$0xff]
        %v673 = vld [vmem:[#allocation5 + $0xbd8] sm:$0xff]
        %v674 = vld [vmem:[#allocation5 + $0xbe0] sm:$0xff]
        %v675 = vld [vmem:[#allocation5 + $0xbe8] sm:$0xff]
        %v676 = vld [vmem:[#allocation5 + $0xbf0] sm:$0xff]
        %v677 = vld [vmem:[#allocation5 + $0xbf8] sm:$0xff]
        %v710 = vunpack.c.l.b16 %v262
        %v711 = vunpack.c.h.b16 %v262
        %v712 = vunpack.c.l.b16 %v263
        %v713 = vunpack.c.h.b16 %v263
        %v714 = vunpack.c.l.b16 %v264
        %v715 = vunpack.c.h.b16 %v264
        %v716 = vunpack.c.l.b16 %v265
        %v717 = vunpack.c.h.b16 %v265
        %v718 = vunpack.c.l.b16 %v266
        %v719 = vunpack.c.h.b16 %v266
        %v720 = vunpack.c.l.b16 %v267
        %v721 = vunpack.c.h.b16 %v267
        %v722 = vunpack.c.l.b16 %v268
        %v723 = vunpack.c.h.b16 %v268
        %v724 = vunpack.c.l.b16 %v269
        %v725 = vunpack.c.h.b16 %v269
        %v726 = vunpack.c.l.b16 %v270
        %v727 = vunpack.c.h.b16 %v270
        %v728 = vunpack.c.l.b16 %v271
        %v729 = vunpack.c.h.b16 %v271
        %v730 = vunpack.c.l.b16 %v272
        %v731 = vunpack.c.h.b16 %v272
        %v732 = vunpack.c.l.b16 %v273
        %v733 = vunpack.c.h.b16 %v273
        %v734 = vunpack.c.l.b16 %v274
        %v735 = vunpack.c.h.b16 %v274
        %v736 = vunpack.c.l.b16 %v275
        %v737 = vunpack.c.h.b16 %v275
        %v738 = vunpack.c.l.b16 %v276
        %v739 = vunpack.c.h.b16 %v276
        %v740 = vunpack.c.l.b16 %v277
        %v741 = vunpack.c.h.b16 %v277
        %v742 = vunpack.c.l.b16 %v278
        %v743 = vunpack.c.h.b16 %v278
        %v744 = vunpack.c.l.b16 %v279
        %v745 = vunpack.c.h.b16 %v279
        %v746 = vunpack.c.l.b16 %v280
        %v747 = vunpack.c.h.b16 %v280
        %v748 = vunpack.c.l.b16 %v281
        %v749 = vunpack.c.h.b16 %v281
        %v750 = vunpack.c.l.b16 %v282
        %v751 = vunpack.c.h.b16 %v282
        %v752 = vunpack.c.l.b16 %v283
        %v753 = vunpack.c.h.b16 %v283
        %v754 = vunpack.c.l.b16 %v284
        %v755 = vunpack.c.h.b16 %v284
        %v756 = vunpack.c.l.b16 %v285
        %v757 = vunpack.c.h.b16 %v285
        %v758 = vunpack.c.l.b16 %v286
        %v759 = vunpack.c.h.b16 %v286
        %v760 = vunpack.c.l.b16 %v287
        %v761 = vunpack.c.h.b16 %v287
        %v762 = vunpack.c.l.b16 %v288
        %v763 = vunpack.c.h.b16 %v288
        %v764 = vunpack.c.l.b16 %v289
        %v765 = vunpack.c.h.b16 %v289
        %v766 = vunpack.c.l.b16 %v290
        %v767 = vunpack.c.h.b16 %v290
        %v768 = vunpack.c.l.b16 %v291
        %v769 = vunpack.c.h.b16 %v291
        %v770 = vunpack.c.l.b16 %v292
        %v771 = vunpack.c.h.b16 %v292
        %v772 = vunpack.c.l.b16 %v293
        %v773 = vunpack.c.h.b16 %v293
        %v774 = vpack.c.b16 %v714, %v710
        %v775 = vpack.c.b16 %v715, %v711
        %v776 = vpack.c.b16 %v716, %v712
        %v777 = vpack.c.b16 %v717, %v713
        %v778 = vpack.c.b16 %v722, %v718
        %v779 = vpack.c.b16 %v723, %v719
        %v780 = vpack.c.b16 %v724, %v720
        %v781 = vpack.c.b16 %v725, %v721
        %v782 = vpack.c.b16 %v730, %v726
        %v783 = vpack.c.b16 %v731, %v727
        %v784 = vpack.c.b16 %v732, %v728
        %v785 = vpack.c.b16 %v733, %v729
        %v786 = vpack.c.b16 %v738, %v734
        %v787 = vpack.c.b16 %v739, %v735
        %v788 = vpack.c.b16 %v740, %v736
        %v789 = vpack.c.b16 %v741, %v737
        %v790 = vpack.c.b16 %v746, %v742
        %v791 = vpack.c.b16 %v747, %v743
        %v792 = vpack.c.b16 %v748, %v744
        %v793 = vpack.c.b16 %v749, %v745
        %v794 = vpack.c.b16 %v754, %v750
        %v795 = vpack.c.b16 %v755, %v751
        %v796 = vpack.c.b16 %v756, %v752
        %v797 = vpack.c.b16 %v757, %v753
        %v798 = vpack.c.b16 %v762, %v758
        %v799 = vpack.c.b16 %v763, %v759
        %v800 = vpack.c.b16 %v764, %v760
        %v801 = vpack.c.b16 %v765, %v761
        %v802 = vpack.c.b16 %v770, %v766
        %v803 = vpack.c.b16 %v771, %v767
        %v804 = vpack.c.b16 %v772, %v768
        %v805 = vpack.c.b16 %v773, %v769
        %v1222 = vunpack.c.l.b16 %v294
        %v1223 = vunpack.c.h.b16 %v294
        %v1224 = vunpack.c.l.b16 %v295
        %v1225 = vunpack.c.h.b16 %v295
        %v1226 = vunpack.c.l.b16 %v296
        %v1227 = vunpack.c.h.b16 %v296
        %v1228 = vunpack.c.l.b16 %v297
        %v1229 = vunpack.c.h.b16 %v297
        %v1230 = vunpack.c.l.b16 %v298
        %v1231 = vunpack.c.h.b16 %v298
        %v1232 = vunpack.c.l.b16 %v299
        %v1233 = vunpack.c.h.b16 %v299
        %v1234 = vunpack.c.l.b16 %v300
        %v1235 = vunpack.c.h.b16 %v300
        %v1236 = vunpack.c.l.b16 %v301
        %v1237 = vunpack.c.h.b16 %v301
        %v1238 = vunpack.c.l.b16 %v302
        %v1239 = vunpack.c.h.b16 %v302
        %v1240 = vunpack.c.l.b16 %v303
        %v1241 = vunpack.c.h.b16 %v303
        %v1242 = vunpack.c.l.b16 %v304
        %v1243 = vunpack.c.h.b16 %v304
        %v1244 = vunpack.c.l.b16 %v305
        %v1245 = vunpack.c.h.b16 %v305
        %v1246 = vunpack.c.l.b16 %v306
        %v1247 = vunpack.c.h.b16 %v306
        %v1248 = vunpack.c.l.b16 %v307
        %v1249 = vunpack.c.h.b16 %v307
        %v1250 = vunpack.c.l.b16 %v308
        %v1251 = vunpack.c.h.b16 %v308
        %v1252 = vunpack.c.l.b16 %v309
        %v1253 = vunpack.c.h.b16 %v309
        %v1254 = vunpack.c.l.b16 %v310
        %v1255 = vunpack.c.h.b16 %v310
        %v1256 = vunpack.c.l.b16 %v311
        %v1257 = vunpack.c.h.b16 %v311
        %v1258 = vunpack.c.l.b16 %v312
        %v1259 = vunpack.c.h.b16 %v312
        %v1260 = vunpack.c.l.b16 %v313
        %v1261 = vunpack.c.h.b16 %v313
        %v1262 = vunpack.c.l.b16 %v314
        %v1263 = vunpack.c.h.b16 %v314
        %v1264 = vunpack.c.l.b16 %v315
        %v1265 = vunpack.c.h.b16 %v315
        %v1266 = vunpack.c.l.b16 %v316
        %v1267 = vunpack.c.h.b16 %v316
        %v1268 = vunpack.c.l.b16 %v317
        %v1269 = vunpack.c.h.b16 %v317
        %v1270 = vunpack.c.l.b16 %v318
        %v1271 = vunpack.c.h.b16 %v318
        %v1272 = vunpack.c.l.b16 %v319
        %v1273 = vunpack.c.h.b16 %v319
        %v1274 = vunpack.c.l.b16 %v320
        %v1275 = vunpack.c.h.b16 %v320
        %v1276 = vunpack.c.l.b16 %v321
        %v1277 = vunpack.c.h.b16 %v321
        %v1278 = vunpack.c.l.b16 %v322
        %v1279 = vunpack.c.h.b16 %v322
        %v1280 = vunpack.c.l.b16 %v323
        %v1281 = vunpack.c.h.b16 %v323
        %v1282 = vunpack.c.l.b16 %v324
        %v1283 = vunpack.c.h.b16 %v324
        %v1284 = vunpack.c.l.b16 %v325
        %v1285 = vunpack.c.h.b16 %v325
        %v1286 = vunpack.c.l.b16 %v326
        %v1287 = vunpack.c.h.b16 %v326
        %v1288 = vunpack.c.l.b16 %v327
        %v1289 = vunpack.c.h.b16 %v327
        %v1290 = vunpack.c.l.b16 %v328
        %v1291 = vunpack.c.h.b16 %v328
        %v1292 = vunpack.c.l.b16 %v329
        %v1293 = vunpack.c.h.b16 %v329
        %v1294 = vunpack.c.l.b16 %v330
        %v1295 = vunpack.c.h.b16 %v330
        %v1296 = vunpack.c.l.b16 %v331
        %v1297 = vunpack.c.h.b16 %v331
        %v1298 = vunpack.c.l.b16 %v332
        %v1299 = vunpack.c.h.b16 %v332
        %v1300 = vunpack.c.l.b16 %v333
        %v1301 = vunpack.c.h.b16 %v333
        %v1302 = vunpack.c.l.b16 %v334
        %v1303 = vunpack.c.h.b16 %v334
        %v1304 = vunpack.c.l.b16 %v335
        %v1305 = vunpack.c.h.b16 %v335
        %v1306 = vunpack.c.l.b16 %v336
        %v1307 = vunpack.c.h.b16 %v336
        %v1308 = vunpack.c.l.b16 %v337
        %v1309 = vunpack.c.h.b16 %v337
        %v1310 = vunpack.c.l.b16 %v338
        %v1311 = vunpack.c.h.b16 %v338
        %v1312 = vunpack.c.l.b16 %v339
        %v1313 = vunpack.c.h.b16 %v339
        %v1314 = vunpack.c.l.b16 %v340
        %v1315 = vunpack.c.h.b16 %v340
        %v1316 = vunpack.c.l.b16 %v341
        %v1317 = vunpack.c.h.b16 %v341
        %v1318 = vunpack.c.l.b16 %v342
        %v1319 = vunpack.c.h.b16 %v342
        %v1320 = vunpack.c.l.b16 %v343
        %v1321 = vunpack.c.h.b16 %v343
        %v1322 = vunpack.c.l.b16 %v344
        %v1323 = vunpack.c.h.b16 %v344
        %v1324 = vunpack.c.l.b16 %v345
        %v1325 = vunpack.c.h.b16 %v345
        %v1326 = vunpack.c.l.b16 %v346
        %v1327 = vunpack.c.h.b16 %v346
        %v1328 = vunpack.c.l.b16 %v347
        %v1329 = vunpack.c.h.b16 %v347
        %v1330 = vunpack.c.l.b16 %v348
        %v1331 = vunpack.c.h.b16 %v348
        %v1332 = vunpack.c.l.b16 %v349
        %v1333 = vunpack.c.h.b16 %v349
        %v1334 = vunpack.c.l.b16 %v350
        %v1335 = vunpack.c.h.b16 %v350
        %v1336 = vunpack.c.l.b16 %v351
        %v1337 = vunpack.c.h.b16 %v351
        %v1338 = vunpack.c.l.b16 %v352
        %v1339 = vunpack.c.h.b16 %v352
        %v1340 = vunpack.c.l.b16 %v353
        %v1341 = vunpack.c.h.b16 %v353
        %v1342 = vunpack.c.l.b16 %v354
        %v1343 = vunpack.c.h.b16 %v354
        %v1344 = vunpack.c.l.b16 %v355
        %v1345 = vunpack.c.h.b16 %v355
        %v1346 = vunpack.c.l.b16 %v356
        %v1347 = vunpack.c.h.b16 %v356
        %v1348 = vunpack.c.l.b16 %v357
        %v1349 = vunpack.c.h.b16 %v357
        %v1350 = vunpack.c.l.b16 %v358
        %v1351 = vunpack.c.h.b16 %v358
        %v1352 = vunpack.c.l.b16 %v359
        %v1353 = vunpack.c.h.b16 %v359
        %v1354 = vunpack.c.l.b16 %v360
        %v1355 = vunpack.c.h.b16 %v360
        %v1356 = vunpack.c.l.b16 %v361
        %v1357 = vunpack.c.h.b16 %v361
        %v1358 = vunpack.c.l.b16 %v362
        %v1359 = vunpack.c.h.b16 %v362
        %v1360 = vunpack.c.l.b16 %v363
        %v1361 = vunpack.c.h.b16 %v363
        %v1362 = vunpack.c.l.b16 %v364
        %v1363 = vunpack.c.h.b16 %v364
        %v1364 = vunpack.c.l.b16 %v365
        %v1365 = vunpack.c.h.b16 %v365
        %v1366 = vunpack.c.l.b16 %v366
        %v1367 = vunpack.c.h.b16 %v366
        %v1368 = vunpack.c.l.b16 %v367
        %v1369 = vunpack.c.h.b16 %v367
        %v1370 = vunpack.c.l.b16 %v368
        %v1371 = vunpack.c.h.b16 %v368
        %v1372 = vunpack.c.l.b16 %v369
        %v1373 = vunpack.c.h.b16 %v369
        %v1374 = vunpack.c.l.b16 %v370
        %v1375 = vunpack.c.h.b16 %v370
        %v1376 = vunpack.c.l.b16 %v371
        %v1377 = vunpack.c.h.b16 %v371
        %v1378 = vunpack.c.l.b16 %v372
        %v1379 = vunpack.c.h.b16 %v372
        %v1380 = vunpack.c.l.b16 %v373
        %v1381 = vunpack.c.h.b16 %v373
        %v1382 = vunpack.c.l.b16 %v374
        %v1383 = vunpack.c.h.b16 %v374
        %v1384 = vunpack.c.l.b16 %v375
        %v1385 = vunpack.c.h.b16 %v375
        %v1386 = vunpack.c.l.b16 %v376
        %v1387 = vunpack.c.h.b16 %v376
        %v1388 = vunpack.c.l.b16 %v377
        %v1389 = vunpack.c.h.b16 %v377
        %v1390 = vunpack.c.l.b16 %v378
        %v1391 = vunpack.c.h.b16 %v378
        %v1392 = vunpack.c.l.b16 %v379
        %v1393 = vunpack.c.h.b16 %v379
        %v1394 = vunpack.c.l.b16 %v380
        %v1395 = vunpack.c.h.b16 %v380
        %v1396 = vunpack.c.l.b16 %v381
        %v1397 = vunpack.c.h.b16 %v381
        %v1398 = vunpack.c.l.b16 %v382
        %v1399 = vunpack.c.h.b16 %v382
        %v1400 = vunpack.c.l.b16 %v383
        %v1401 = vunpack.c.h.b16 %v383
        %v1402 = vunpack.c.l.b16 %v384
        %v1403 = vunpack.c.h.b16 %v384
        %v1404 = vunpack.c.l.b16 %v385
        %v1405 = vunpack.c.h.b16 %v385
        %v1406 = vunpack.c.l.b16 %v386
        %v1407 = vunpack.c.h.b16 %v386
        %v1408 = vunpack.c.l.b16 %v387
        %v1409 = vunpack.c.h.b16 %v387
        %v1410 = vunpack.c.l.b16 %v388
        %v1411 = vunpack.c.h.b16 %v388
        %v1412 = vunpack.c.l.b16 %v389
        %v1413 = vunpack.c.h.b16 %v389
        %v1414 = vunpack.c.l.b16 %v390
        %v1415 = vunpack.c.h.b16 %v390
        %v1416 = vunpack.c.l.b16 %v391
        %v1417 = vunpack.c.h.b16 %v391
        %v1418 = vunpack.c.l.b16 %v392
        %v1419 = vunpack.c.h.b16 %v392
        %v1420 = vunpack.c.l.b16 %v393
        %v1421 = vunpack.c.h.b16 %v393
        %v1422 = vunpack.c.l.b16 %v394
        %v1423 = vunpack.c.h.b16 %v394
        %v1424 = vunpack.c.l.b16 %v395
        %v1425 = vunpack.c.h.b16 %v395
        %v1426 = vunpack.c.l.b16 %v396
        %v1427 = vunpack.c.h.b16 %v396
        %v1428 = vunpack.c.l.b16 %v397
        %v1429 = vunpack.c.h.b16 %v397
        %v1430 = vunpack.c.l.b16 %v398
        %v1431 = vunpack.c.h.b16 %v398
        %v1432 = vunpack.c.l.b16 %v399
        %v1433 = vunpack.c.h.b16 %v399
        %v1434 = vunpack.c.l.b16 %v400
        %v1435 = vunpack.c.h.b16 %v400
        %v1436 = vunpack.c.l.b16 %v401
        %v1437 = vunpack.c.h.b16 %v401
        %v1438 = vunpack.c.l.b16 %v402
        %v1439 = vunpack.c.h.b16 %v402
        %v1440 = vunpack.c.l.b16 %v403
        %v1441 = vunpack.c.h.b16 %v403
        %v1442 = vunpack.c.l.b16 %v404
        %v1443 = vunpack.c.h.b16 %v404
        %v1444 = vunpack.c.l.b16 %v405
        %v1445 = vunpack.c.h.b16 %v405
        %v1446 = vunpack.c.l.b16 %v406
        %v1447 = vunpack.c.h.b16 %v406
        %v1448 = vunpack.c.l.b16 %v407
        %v1449 = vunpack.c.h.b16 %v407
        %v1450 = vunpack.c.l.b16 %v408
        %v1451 = vunpack.c.h.b16 %v408
        %v1452 = vunpack.c.l.b16 %v409
        %v1453 = vunpack.c.h.b16 %v409
        %v1454 = vunpack.c.l.b16 %v410
        %v1455 = vunpack.c.h.b16 %v410
        %v1456 = vunpack.c.l.b16 %v411
        %v1457 = vunpack.c.h.b16 %v411
        %v1458 = vunpack.c.l.b16 %v412
        %v1459 = vunpack.c.h.b16 %v412
        %v1460 = vunpack.c.l.b16 %v413
        %v1461 = vunpack.c.h.b16 %v413
        %v1462 = vunpack.c.l.b16 %v414
        %v1463 = vunpack.c.h.b16 %v414
        %v1464 = vunpack.c.l.b16 %v415
        %v1465 = vunpack.c.h.b16 %v415
        %v1466 = vunpack.c.l.b16 %v416
        %v1467 = vunpack.c.h.b16 %v416
        %v1468 = vunpack.c.l.b16 %v417
        %v1469 = vunpack.c.h.b16 %v417
        %v1470 = vunpack.c.l.b16 %v418
        %v1471 = vunpack.c.h.b16 %v418
        %v1472 = vunpack.c.l.b16 %v419
        %v1473 = vunpack.c.h.b16 %v419
        %v1474 = vunpack.c.l.b16 %v420
        %v1475 = vunpack.c.h.b16 %v420
        %v1476 = vunpack.c.l.b16 %v421
        %v1477 = vunpack.c.h.b16 %v421
        %v1478 = vunpack.c.l.b16 %v422
        %v1479 = vunpack.c.h.b16 %v422
        %v1480 = vunpack.c.l.b16 %v423
        %v1481 = vunpack.c.h.b16 %v423
        %v1482 = vunpack.c.l.b16 %v424
        %v1483 = vunpack.c.h.b16 %v424
        %v1484 = vunpack.c.l.b16 %v425
        %v1485 = vunpack.c.h.b16 %v425
        %v1486 = vunpack.c.l.b16 %v426
        %v1487 = vunpack.c.h.b16 %v426
        %v1488 = vunpack.c.l.b16 %v427
        %v1489 = vunpack.c.h.b16 %v427
        %v1490 = vunpack.c.l.b16 %v428
        %v1491 = vunpack.c.h.b16 %v428
        %v1492 = vunpack.c.l.b16 %v429
        %v1493 = vunpack.c.h.b16 %v429
        %v1494 = vunpack.c.l.b16 %v430
        %v1495 = vunpack.c.h.b16 %v430
        %v1496 = vunpack.c.l.b16 %v431
        %v1497 = vunpack.c.h.b16 %v431
        %v1498 = vunpack.c.l.b16 %v432
        %v1499 = vunpack.c.h.b16 %v432
        %v1500 = vunpack.c.l.b16 %v433
        %v1501 = vunpack.c.h.b16 %v433
        %v1502 = vunpack.c.l.b16 %v434
        %v1503 = vunpack.c.h.b16 %v434
        %v1504 = vunpack.c.l.b16 %v435
        %v1505 = vunpack.c.h.b16 %v435
        %v1506 = vunpack.c.l.b16 %v436
        %v1507 = vunpack.c.h.b16 %v436
        %v1508 = vunpack.c.l.b16 %v437
        %v1509 = vunpack.c.h.b16 %v437
        %v1510 = vunpack.c.l.b16 %v438
        %v1511 = vunpack.c.h.b16 %v438
        %v1512 = vunpack.c.l.b16 %v439
        %v1513 = vunpack.c.h.b16 %v439
        %v1514 = vunpack.c.l.b16 %v440
        %v1515 = vunpack.c.h.b16 %v440
        %v1516 = vunpack.c.l.b16 %v441
        %v1517 = vunpack.c.h.b16 %v441
        %v1518 = vunpack.c.l.b16 %v442
        %v1519 = vunpack.c.h.b16 %v442
        %v1520 = vunpack.c.l.b16 %v443
        %v1521 = vunpack.c.h.b16 %v443
        %v1522 = vunpack.c.l.b16 %v444
        %v1523 = vunpack.c.h.b16 %v444
        %v1524 = vunpack.c.l.b16 %v445
        %v1525 = vunpack.c.h.b16 %v445
        %v1526 = vunpack.c.l.b16 %v446
        %v1527 = vunpack.c.h.b16 %v446
        %v1528 = vunpack.c.l.b16 %v447
        %v1529 = vunpack.c.h.b16 %v447
        %v1530 = vunpack.c.l.b16 %v448
        %v1531 = vunpack.c.h.b16 %v448
        %v1532 = vunpack.c.l.b16 %v449
        %v1533 = vunpack.c.h.b16 %v449
        %v1534 = vunpack.c.l.b16 %v450
        %v1535 = vunpack.c.h.b16 %v450
        %v1536 = vunpack.c.l.b16 %v451
        %v1537 = vunpack.c.h.b16 %v451
        %v1538 = vunpack.c.l.b16 %v452
        %v1539 = vunpack.c.h.b16 %v452
        %v1540 = vunpack.c.l.b16 %v453
        %v1541 = vunpack.c.h.b16 %v453
        %v1542 = vunpack.c.l.b16 %v454
        %v1543 = vunpack.c.h.b16 %v454
        %v1544 = vunpack.c.l.b16 %v455
        %v1545 = vunpack.c.h.b16 %v455
        %v1546 = vunpack.c.l.b16 %v456
        %v1547 = vunpack.c.h.b16 %v456
        %v1548 = vunpack.c.l.b16 %v457
        %v1549 = vunpack.c.h.b16 %v457
        %v1550 = vunpack.c.l.b16 %v458
        %v1551 = vunpack.c.h.b16 %v458
        %v1552 = vunpack.c.l.b16 %v459
        %v1553 = vunpack.c.h.b16 %v459
        %v1554 = vunpack.c.l.b16 %v460
        %v1555 = vunpack.c.h.b16 %v460
        %v1556 = vunpack.c.l.b16 %v461
        %v1557 = vunpack.c.h.b16 %v461
        %v1558 = vunpack.c.l.b16 %v462
        %v1559 = vunpack.c.h.b16 %v462
        %v1560 = vunpack.c.l.b16 %v463
        %v1561 = vunpack.c.h.b16 %v463
        %v1562 = vunpack.c.l.b16 %v464
        %v1563 = vunpack.c.h.b16 %v464
        %v1564 = vunpack.c.l.b16 %v465
        %v1565 = vunpack.c.h.b16 %v465
        %v1566 = vunpack.c.l.b16 %v466
        %v1567 = vunpack.c.h.b16 %v466
        %v1568 = vunpack.c.l.b16 %v467
        %v1569 = vunpack.c.h.b16 %v467
        %v1570 = vunpack.c.l.b16 %v468
        %v1571 = vunpack.c.h.b16 %v468
        %v1572 = vunpack.c.l.b16 %v469
        %v1573 = vunpack.c.h.b16 %v469
        %v1574 = vunpack.c.l.b16 %v470
        %v1575 = vunpack.c.h.b16 %v470
        %v1576 = vunpack.c.l.b16 %v471
        %v1577 = vunpack.c.h.b16 %v471
        %v1578 = vunpack.c.l.b16 %v472
        %v1579 = vunpack.c.h.b16 %v472
        %v1580 = vunpack.c.l.b16 %v473
        %v1581 = vunpack.c.h.b16 %v473
        %v1582 = vunpack.c.l.b16 %v474
        %v1583 = vunpack.c.h.b16 %v474
        %v1584 = vunpack.c.l.b16 %v475
        %v1585 = vunpack.c.h.b16 %v475
        %v1586 = vunpack.c.l.b16 %v476
        %v1587 = vunpack.c.h.b16 %v476
        %v1588 = vunpack.c.l.b16 %v477
        %v1589 = vunpack.c.h.b16 %v477
        %v1590 = vunpack.c.l.b16 %v478
        %v1591 = vunpack.c.h.b16 %v478
        %v1592 = vunpack.c.l.b16 %v479
        %v1593 = vunpack.c.h.b16 %v479
        %v1594 = vunpack.c.l.b16 %v480
        %v1595 = vunpack.c.h.b16 %v480
        %v1596 = vunpack.c.l.b16 %v481
        %v1597 = vunpack.c.h.b16 %v481
        %v1598 = vunpack.c.l.b16 %v482
        %v1599 = vunpack.c.h.b16 %v482
        %v1600 = vunpack.c.l.b16 %v483
        %v1601 = vunpack.c.h.b16 %v483
        %v1602 = vunpack.c.l.b16 %v484
        %v1603 = vunpack.c.h.b16 %v484
        %v1604 = vunpack.c.l.b16 %v485
        %v1605 = vunpack.c.h.b16 %v485
        %v1606 = vunpack.c.l.b16 %v486
        %v1607 = vunpack.c.h.b16 %v486
        %v1608 = vunpack.c.l.b16 %v487
        %v1609 = vunpack.c.h.b16 %v487
        %v1610 = vunpack.c.l.b16 %v488
        %v1611 = vunpack.c.h.b16 %v488
        %v1612 = vunpack.c.l.b16 %v489
        %v1613 = vunpack.c.h.b16 %v489
        %v1614 = vunpack.c.l.b16 %v490
        %v1615 = vunpack.c.h.b16 %v490
        %v1616 = vunpack.c.l.b16 %v491
        %v1617 = vunpack.c.h.b16 %v491
        %v1618 = vunpack.c.l.b16 %v492
        %v1619 = vunpack.c.h.b16 %v492
        %v1620 = vunpack.c.l.b16 %v493
        %v1621 = vunpack.c.h.b16 %v493
        %v1622 = vunpack.c.l.b16 %v494
        %v1623 = vunpack.c.h.b16 %v494
        %v1624 = vunpack.c.l.b16 %v495
        %v1625 = vunpack.c.h.b16 %v495
        %v1626 = vunpack.c.l.b16 %v496
        %v1627 = vunpack.c.h.b16 %v496
        %v1628 = vunpack.c.l.b16 %v497
        %v1629 = vunpack.c.h.b16 %v497
        %v1630 = vunpack.c.l.b16 %v498
        %v1631 = vunpack.c.h.b16 %v498
        %v1632 = vunpack.c.l.b16 %v499
        %v1633 = vunpack.c.h.b16 %v499
        %v1634 = vunpack.c.l.b16 %v500
        %v1635 = vunpack.c.h.b16 %v500
        %v1636 = vunpack.c.l.b16 %v501
        %v1637 = vunpack.c.h.b16 %v501
        %v1638 = vunpack.c.l.b16 %v502
        %v1639 = vunpack.c.h.b16 %v502
        %v1640 = vunpack.c.l.b16 %v503
        %v1641 = vunpack.c.h.b16 %v503
        %v1642 = vunpack.c.l.b16 %v504
        %v1643 = vunpack.c.h.b16 %v504
        %v1644 = vunpack.c.l.b16 %v505
        %v1645 = vunpack.c.h.b16 %v505
        %v1646 = vunpack.c.l.b16 %v506
        %v1647 = vunpack.c.h.b16 %v506
        %v1648 = vunpack.c.l.b16 %v507
        %v1649 = vunpack.c.h.b16 %v507
        %v1650 = vunpack.c.l.b16 %v508
        %v1651 = vunpack.c.h.b16 %v508
        %v1652 = vunpack.c.l.b16 %v509
        %v1653 = vunpack.c.h.b16 %v509
        %v1654 = vunpack.c.l.b16 %v510
        %v1655 = vunpack.c.h.b16 %v510
        %v1656 = vunpack.c.l.b16 %v511
        %v1657 = vunpack.c.h.b16 %v511
        %v1658 = vunpack.c.l.b16 %v512
        %v1659 = vunpack.c.h.b16 %v512
        %v1660 = vunpack.c.l.b16 %v513
        %v1661 = vunpack.c.h.b16 %v513
        %v1662 = vunpack.c.l.b16 %v514
        %v1663 = vunpack.c.h.b16 %v514
        %v1664 = vunpack.c.l.b16 %v515
        %v1665 = vunpack.c.h.b16 %v515
        %v1666 = vunpack.c.l.b16 %v516
        %v1667 = vunpack.c.h.b16 %v516
        %v1668 = vunpack.c.l.b16 %v517
        %v1669 = vunpack.c.h.b16 %v517
        %v1670 = vunpack.c.l.b16 %v518
        %v1671 = vunpack.c.h.b16 %v518
        %v1672 = vunpack.c.l.b16 %v519
        %v1673 = vunpack.c.h.b16 %v519
        %v1674 = vunpack.c.l.b16 %v520
        %v1675 = vunpack.c.h.b16 %v520
        %v1676 = vunpack.c.l.b16 %v521
        %v1677 = vunpack.c.h.b16 %v521
        %v1678 = vunpack.c.l.b16 %v522
        %v1679 = vunpack.c.h.b16 %v522
        %v1680 = vunpack.c.l.b16 %v523
        %v1681 = vunpack.c.h.b16 %v523
        %v1682 = vunpack.c.l.b16 %v524
        %v1683 = vunpack.c.h.b16 %v524
        %v1684 = vunpack.c.l.b16 %v525
        %v1685 = vunpack.c.h.b16 %v525
        %v1686 = vunpack.c.l.b16 %v526
        %v1687 = vunpack.c.h.b16 %v526
        %v1688 = vunpack.c.l.b16 %v527
        %v1689 = vunpack.c.h.b16 %v527
        %v1690 = vunpack.c.l.b16 %v528
        %v1691 = vunpack.c.h.b16 %v528
        %v1692 = vunpack.c.l.b16 %v529
        %v1693 = vunpack.c.h.b16 %v529
        %v1694 = vunpack.c.l.b16 %v530
        %v1695 = vunpack.c.h.b16 %v530
        %v1696 = vunpack.c.l.b16 %v531
        %v1697 = vunpack.c.h.b16 %v531
        %v1698 = vunpack.c.l.b16 %v532
        %v1699 = vunpack.c.h.b16 %v532
        %v1700 = vunpack.c.l.b16 %v533
        %v1701 = vunpack.c.h.b16 %v533
        %v1702 = vunpack.c.l.b16 %v534
        %v1703 = vunpack.c.h.b16 %v534
        %v1704 = vunpack.c.l.b16 %v535
        %v1705 = vunpack.c.h.b16 %v535
        %v1706 = vunpack.c.l.b16 %v536
        %v1707 = vunpack.c.h.b16 %v536
        %v1708 = vunpack.c.l.b16 %v537
        %v1709 = vunpack.c.h.b16 %v537
        %v1710 = vunpack.c.l.b16 %v538
        %v1711 = vunpack.c.h.b16 %v538
        %v1712 = vunpack.c.l.b16 %v539
        %v1713 = vunpack.c.h.b16 %v539
        %v1714 = vunpack.c.l.b16 %v540
        %v1715 = vunpack.c.h.b16 %v540
        %v1716 = vunpack.c.l.b16 %v541
        %v1717 = vunpack.c.h.b16 %v541
        %v1718 = vunpack.c.l.b16 %v542
        %v1719 = vunpack.c.h.b16 %v542
        %v1720 = vunpack.c.l.b16 %v543
        %v1721 = vunpack.c.h.b16 %v543
        %v1722 = vunpack.c.l.b16 %v544
        %v1723 = vunpack.c.h.b16 %v544
        %v1724 = vunpack.c.l.b16 %v545
        %v1725 = vunpack.c.h.b16 %v545
        %v1726 = vunpack.c.l.b16 %v546
        %v1727 = vunpack.c.h.b16 %v546
        %v1728 = vunpack.c.l.b16 %v547
        %v1729 = vunpack.c.h.b16 %v547
        %v1730 = vunpack.c.l.b16 %v548
        %v1731 = vunpack.c.h.b16 %v548
        %v1732 = vunpack.c.l.b16 %v549
        %v1733 = vunpack.c.h.b16 %v549
        %v1734 = vunpack.c.l.b16 %v550
        %v1735 = vunpack.c.h.b16 %v550
        %v1736 = vunpack.c.l.b16 %v551
        %v1737 = vunpack.c.h.b16 %v551
        %v1738 = vunpack.c.l.b16 %v552
        %v1739 = vunpack.c.h.b16 %v552
        %v1740 = vunpack.c.l.b16 %v553
        %v1741 = vunpack.c.h.b16 %v553
        %v1742 = vunpack.c.l.b16 %v554
        %v1743 = vunpack.c.h.b16 %v554
        %v1744 = vunpack.c.l.b16 %v555
        %v1745 = vunpack.c.h.b16 %v555
        %v1746 = vunpack.c.l.b16 %v556
        %v1747 = vunpack.c.h.b16 %v556
        %v1748 = vunpack.c.l.b16 %v557
        %v1749 = vunpack.c.h.b16 %v557
        %v1750 = vunpack.c.l.b16 %v558
        %v1751 = vunpack.c.h.b16 %v558
        %v1752 = vunpack.c.l.b16 %v559
        %v1753 = vunpack.c.h.b16 %v559
        %v1754 = vunpack.c.l.b16 %v560
        %v1755 = vunpack.c.h.b16 %v560
        %v1756 = vunpack.c.l.b16 %v561
        %v1757 = vunpack.c.h.b16 %v561
        %v1758 = vunpack.c.l.b16 %v562
        %v1759 = vunpack.c.h.b16 %v562
        %v1760 = vunpack.c.l.b16 %v563
        %v1761 = vunpack.c.h.b16 %v563
        %v1762 = vunpack.c.l.b16 %v564
        %v1763 = vunpack.c.h.b16 %v564
        %v1764 = vunpack.c.l.b16 %v565
        %v1765 = vunpack.c.h.b16 %v565
        %v1766 = vunpack.c.l.b16 %v566
        %v1767 = vunpack.c.h.b16 %v566
        %v1768 = vunpack.c.l.b16 %v567
        %v1769 = vunpack.c.h.b16 %v567
        %v1770 = vunpack.c.l.b16 %v568
        %v1771 = vunpack.c.h.b16 %v568
        %v1772 = vunpack.c.l.b16 %v569
        %v1773 = vunpack.c.h.b16 %v569
        %v1774 = vunpack.c.l.b16 %v570
        %v1775 = vunpack.c.h.b16 %v570
        %v1776 = vunpack.c.l.b16 %v571
        %v1777 = vunpack.c.h.b16 %v571
        %v1778 = vunpack.c.l.b16 %v572
        %v1779 = vunpack.c.h.b16 %v572
        %v1780 = vunpack.c.l.b16 %v573
        %v1781 = vunpack.c.h.b16 %v573
        %v1782 = vunpack.c.l.b16 %v574
        %v1783 = vunpack.c.h.b16 %v574
        %v1784 = vunpack.c.l.b16 %v575
        %v1785 = vunpack.c.h.b16 %v575
        %v1786 = vunpack.c.l.b16 %v576
        %v1787 = vunpack.c.h.b16 %v576
        %v1788 = vunpack.c.l.b16 %v577
        %v1789 = vunpack.c.h.b16 %v577
        %v1790 = vunpack.c.l.b16 %v578
        %v1791 = vunpack.c.h.b16 %v578
        %v1792 = vunpack.c.l.b16 %v579
        %v1793 = vunpack.c.h.b16 %v579
        %v1794 = vunpack.c.l.b16 %v580
        %v1795 = vunpack.c.h.b16 %v580
        %v1796 = vunpack.c.l.b16 %v581
        %v1797 = vunpack.c.h.b16 %v581
        %v1798 = vunpack.c.l.b16 %v582
        %v1799 = vunpack.c.h.b16 %v582
        %v1800 = vunpack.c.l.b16 %v583
        %v1801 = vunpack.c.h.b16 %v583
        %v1802 = vunpack.c.l.b16 %v584
        %v1803 = vunpack.c.h.b16 %v584
        %v1804 = vunpack.c.l.b16 %v585
        %v1805 = vunpack.c.h.b16 %v585
        %v1806 = vunpack.c.l.b16 %v586
        %v1807 = vunpack.c.h.b16 %v586
        %v1808 = vunpack.c.l.b16 %v587
        %v1809 = vunpack.c.h.b16 %v587
        %v1810 = vunpack.c.l.b16 %v588
        %v1811 = vunpack.c.h.b16 %v588
        %v1812 = vunpack.c.l.b16 %v589
        %v1813 = vunpack.c.h.b16 %v589
        %v1814 = vunpack.c.l.b16 %v590
        %v1815 = vunpack.c.h.b16 %v590
        %v1816 = vunpack.c.l.b16 %v591
        %v1817 = vunpack.c.h.b16 %v591
        %v1818 = vunpack.c.l.b16 %v592
        %v1819 = vunpack.c.h.b16 %v592
        %v1820 = vunpack.c.l.b16 %v593
        %v1821 = vunpack.c.h.b16 %v593
        %v1822 = vunpack.c.l.b16 %v594
        %v1823 = vunpack.c.h.b16 %v594
        %v1824 = vunpack.c.l.b16 %v595
        %v1825 = vunpack.c.h.b16 %v595
        %v1826 = vunpack.c.l.b16 %v596
        %v1827 = vunpack.c.h.b16 %v596
        %v1828 = vunpack.c.l.b16 %v597
        %v1829 = vunpack.c.h.b16 %v597
        %v1830 = vunpack.c.l.b16 %v598
        %v1831 = vunpack.c.h.b16 %v598
        %v1832 = vunpack.c.l.b16 %v599
        %v1833 = vunpack.c.h.b16 %v599
        %v1834 = vunpack.c.l.b16 %v600
        %v1835 = vunpack.c.h.b16 %v600
        %v1836 = vunpack.c.l.b16 %v601
        %v1837 = vunpack.c.h.b16 %v601
        %v1838 = vunpack.c.l.b16 %v602
        %v1839 = vunpack.c.h.b16 %v602
        %v1840 = vunpack.c.l.b16 %v603
        %v1841 = vunpack.c.h.b16 %v603
        %v1842 = vunpack.c.l.b16 %v604
        %v1843 = vunpack.c.h.b16 %v604
        %v1844 = vunpack.c.l.b16 %v605
        %v1845 = vunpack.c.h.b16 %v605
        %v1846 = vunpack.c.l.b16 %v606
        %v1847 = vunpack.c.h.b16 %v606
        %v1848 = vunpack.c.l.b16 %v607
        %v1849 = vunpack.c.h.b16 %v607
        %v1850 = vunpack.c.l.b16 %v608
        %v1851 = vunpack.c.h.b16 %v608
        %v1852 = vunpack.c.l.b16 %v609
        %v1853 = vunpack.c.h.b16 %v609
        %v1854 = vunpack.c.l.b16 %v610
        %v1855 = vunpack.c.h.b16 %v610
        %v1856 = vunpack.c.l.b16 %v611
        %v1857 = vunpack.c.h.b16 %v611
        %v1858 = vunpack.c.l.b16 %v612
        %v1859 = vunpack.c.h.b16 %v612
        %v1860 = vunpack.c.l.b16 %v613
        %v1861 = vunpack.c.h.b16 %v613
        %v1862 = vunpack.c.l.b16 %v614
        %v1863 = vunpack.c.h.b16 %v614
        %v1864 = vunpack.c.l.b16 %v615
        %v1865 = vunpack.c.h.b16 %v615
        %v1866 = vunpack.c.l.b16 %v616
        %v1867 = vunpack.c.h.b16 %v616
        %v1868 = vunpack.c.l.b16 %v617
        %v1869 = vunpack.c.h.b16 %v617
        %v1870 = vunpack.c.l.b16 %v618
        %v1871 = vunpack.c.h.b16 %v618
        %v1872 = vunpack.c.l.b16 %v619
        %v1873 = vunpack.c.h.b16 %v619
        %v1874 = vunpack.c.l.b16 %v620
        %v1875 = vunpack.c.h.b16 %v620
        %v1876 = vunpack.c.l.b16 %v621
        %v1877 = vunpack.c.h.b16 %v621
        %v1878 = vunpack.c.l.b16 %v622
        %v1879 = vunpack.c.h.b16 %v622
        %v1880 = vunpack.c.l.b16 %v623
        %v1881 = vunpack.c.h.b16 %v623
        %v1882 = vunpack.c.l.b16 %v624
        %v1883 = vunpack.c.h.b16 %v624
        %v1884 = vunpack.c.l.b16 %v625
        %v1885 = vunpack.c.h.b16 %v625
        %v1886 = vunpack.c.l.b16 %v626
        %v1887 = vunpack.c.h.b16 %v626
        %v1888 = vunpack.c.l.b16 %v627
        %v1889 = vunpack.c.h.b16 %v627
        %v1890 = vunpack.c.l.b16 %v628
        %v1891 = vunpack.c.h.b16 %v628
        %v1892 = vunpack.c.l.b16 %v629
        %v1893 = vunpack.c.h.b16 %v629
        %v1894 = vunpack.c.l.b16 %v630
        %v1895 = vunpack.c.h.b16 %v630
        %v1896 = vunpack.c.l.b16 %v631
        %v1897 = vunpack.c.h.b16 %v631
        %v1898 = vunpack.c.l.b16 %v632
        %v1899 = vunpack.c.h.b16 %v632
        %v1900 = vunpack.c.l.b16 %v633
        %v1901 = vunpack.c.h.b16 %v633
        %v1902 = vunpack.c.l.b16 %v634
        %v1903 = vunpack.c.h.b16 %v634
        %v1904 = vunpack.c.l.b16 %v635
        %v1905 = vunpack.c.h.b16 %v635
        %v1906 = vunpack.c.l.b16 %v636
        %v1907 = vunpack.c.h.b16 %v636
        %v1908 = vunpack.c.l.b16 %v637
        %v1909 = vunpack.c.h.b16 %v637
        %v1910 = vunpack.c.l.b16 %v638
        %v1911 = vunpack.c.h.b16 %v638
        %v1912 = vunpack.c.l.b16 %v639
        %v1913 = vunpack.c.h.b16 %v639
        %v1914 = vunpack.c.l.b16 %v640
        %v1915 = vunpack.c.h.b16 %v640
        %v1916 = vunpack.c.l.b16 %v641
        %v1917 = vunpack.c.h.b16 %v641
        %v1918 = vunpack.c.l.b16 %v642
        %v1919 = vunpack.c.h.b16 %v642
        %v1920 = vunpack.c.l.b16 %v643
        %v1921 = vunpack.c.h.b16 %v643
        %v1922 = vunpack.c.l.b16 %v644
        %v1923 = vunpack.c.h.b16 %v644
        %v1924 = vunpack.c.l.b16 %v645
        %v1925 = vunpack.c.h.b16 %v645
        %v1926 = vunpack.c.l.b16 %v646
        %v1927 = vunpack.c.h.b16 %v646
        %v1928 = vunpack.c.l.b16 %v647
        %v1929 = vunpack.c.h.b16 %v647
        %v1930 = vunpack.c.l.b16 %v648
        %v1931 = vunpack.c.h.b16 %v648
        %v1932 = vunpack.c.l.b16 %v649
        %v1933 = vunpack.c.h.b16 %v649
        %v1934 = vunpack.c.l.b16 %v650
        %v1935 = vunpack.c.h.b16 %v650
        %v1936 = vunpack.c.l.b16 %v651
        %v1937 = vunpack.c.h.b16 %v651
        %v1938 = vunpack.c.l.b16 %v652
        %v1939 = vunpack.c.h.b16 %v652
        %v1940 = vunpack.c.l.b16 %v653
        %v1941 = vunpack.c.h.b16 %v653
        %v1942 = vunpack.c.l.b16 %v654
        %v1943 = vunpack.c.h.b16 %v654
        %v1944 = vunpack.c.l.b16 %v655
        %v1945 = vunpack.c.h.b16 %v655
        %v1946 = vunpack.c.l.b16 %v656
        %v1947 = vunpack.c.h.b16 %v656
        %v1948 = vunpack.c.l.b16 %v657
        %v1949 = vunpack.c.h.b16 %v657
        %v1950 = vunpack.c.l.b16 %v658
        %v1951 = vunpack.c.h.b16 %v658
        %v1952 = vunpack.c.l.b16 %v659
        %v1953 = vunpack.c.h.b16 %v659
        %v1954 = vunpack.c.l.b16 %v660
        %v1955 = vunpack.c.h.b16 %v660
        %v1956 = vunpack.c.l.b16 %v661
        %v1957 = vunpack.c.h.b16 %v661
        %v1958 = vunpack.c.l.b16 %v662
        %v1959 = vunpack.c.h.b16 %v662
        %v1960 = vunpack.c.l.b16 %v663
        %v1961 = vunpack.c.h.b16 %v663
        %v1962 = vunpack.c.l.b16 %v664
        %v1963 = vunpack.c.h.b16 %v664
        %v1964 = vunpack.c.l.b16 %v665
        %v1965 = vunpack.c.h.b16 %v665
        %v1966 = vunpack.c.l.b16 %v666
        %v1967 = vunpack.c.h.b16 %v666
        %v1968 = vunpack.c.l.b16 %v667
        %v1969 = vunpack.c.h.b16 %v667
        %v1970 = vunpack.c.l.b16 %v668
        %v1971 = vunpack.c.h.b16 %v668
        %v1972 = vunpack.c.l.b16 %v669
        %v1973 = vunpack.c.h.b16 %v669
        %v1974 = vunpack.c.l.b16 %v670
        %v1975 = vunpack.c.h.b16 %v670
        %v1976 = vunpack.c.l.b16 %v671
        %v1977 = vunpack.c.h.b16 %v671
        %v1978 = vunpack.c.l.b16 %v672
        %v1979 = vunpack.c.h.b16 %v672
        %v1980 = vunpack.c.l.b16 %v673
        %v1981 = vunpack.c.h.b16 %v673
        %v1982 = vunpack.c.l.b16 %v674
        %v1983 = vunpack.c.h.b16 %v674
        %v1984 = vunpack.c.l.b16 %v675
        %v1985 = vunpack.c.h.b16 %v675
        %v1986 = vunpack.c.l.b16 %v676
        %v1987 = vunpack.c.h.b16 %v676
        %v1988 = vunpack.c.l.b16 %v677
        %v1989 = vunpack.c.h.b16 %v677
        %v1990 = vpack.c.b16 %v1234, %v1222
        %v1991 = vpack.c.b16 %v1235, %v1223
        %v1992 = vpack.c.b16 %v1236, %v1224
        %v1993 = vpack.c.b16 %v1237, %v1225
        %v1994 = vpack.c.b16 %v1238, %v1226
        %v1995 = vpack.c.b16 %v1239, %v1227
        %v1996 = vpack.c.b16 %v1240, %v1228
        %v1997 = vpack.c.b16 %v1241, %v1229
        %v1998 = vpack.c.b16 %v1242, %v1230
        %v1999 = vpack.c.b16 %v1243, %v1231
        %v2000 = vpack.c.b16 %v1244, %v1232
        %v2001 = vpack.c.b16 %v1245, %v1233
        %v2002 = vpack.c.b16 %v1258, %v1246
        %v2003 = vpack.c.b16 %v1259, %v1247
        %v2004 = vpack.c.b16 %v1260, %v1248
        %v2005 = vpack.c.b16 %v1261, %v1249
        %v2006 = vpack.c.b16 %v1262, %v1250
        %v2007 = vpack.c.b16 %v1263, %v1251
        %v2008 = vpack.c.b16 %v1264, %v1252
        %v2009 = vpack.c.b16 %v1265, %v1253
        %v2010 = vpack.c.b16 %v1266, %v1254
        %v2011 = vpack.c.b16 %v1267, %v1255
        %v2012 = vpack.c.b16 %v1268, %v1256
        %v2013 = vpack.c.b16 %v1269, %v1257
        %v2014 = vpack.c.b16 %v1282, %v1270
        %v2015 = vpack.c.b16 %v1283, %v1271
        %v2016 = vpack.c.b16 %v1284, %v1272
        %v2017 = vpack.c.b16 %v1285, %v1273
        %v2018 = vpack.c.b16 %v1286, %v1274
        %v2019 = vpack.c.b16 %v1287, %v1275
        %v2020 = vpack.c.b16 %v1288, %v1276
        %v2021 = vpack.c.b16 %v1289, %v1277
        %v2022 = vpack.c.b16 %v1290, %v1278
        %v2023 = vpack.c.b16 %v1291, %v1279
        %v2024 = vpack.c.b16 %v1292, %v1280
        %v2025 = vpack.c.b16 %v1293, %v1281
        %v2026 = vpack.c.b16 %v1306, %v1294
        %v2027 = vpack.c.b16 %v1307, %v1295
        %v2028 = vpack.c.b16 %v1308, %v1296
        %v2029 = vpack.c.b16 %v1309, %v1297
        %v2030 = vpack.c.b16 %v1310, %v1298
        %v2031 = vpack.c.b16 %v1311, %v1299
        %v2032 = vpack.c.b16 %v1312, %v1300
        %v2033 = vpack.c.b16 %v1313, %v1301
        %v2034 = vpack.c.b16 %v1314, %v1302
        %v2035 = vpack.c.b16 %v1315, %v1303
        %v2036 = vpack.c.b16 %v1316, %v1304
        %v2037 = vpack.c.b16 %v1317, %v1305
        %v2038 = vpack.c.b16 %v1330, %v1318
        %v2039 = vpack.c.b16 %v1331, %v1319
        %v2040 = vpack.c.b16 %v1332, %v1320
        %v2041 = vpack.c.b16 %v1333, %v1321
        %v2042 = vpack.c.b16 %v1334, %v1322
        %v2043 = vpack.c.b16 %v1335, %v1323
        %v2044 = vpack.c.b16 %v1336, %v1324
        %v2045 = vpack.c.b16 %v1337, %v1325
        %v2046 = vpack.c.b16 %v1338, %v1326
        %v2047 = vpack.c.b16 %v1339, %v1327
        %v2048 = vpack.c.b16 %v1340, %v1328
        %v2049 = vpack.c.b16 %v1341, %v1329
        %v2050 = vpack.c.b16 %v1354, %v1342
        %v2051 = vpack.c.b16 %v1355, %v1343
        %v2052 = vpack.c.b16 %v1356, %v1344
        %v2053 = vpack.c.b16 %v1357, %v1345
        %v2054 = vpack.c.b16 %v1358, %v1346
        %v2055 = vpack.c.b16 %v1359, %v1347
        %v2056 = vpack.c.b16 %v1360, %v1348
        %v2057 = vpack.c.b16 %v1361, %v1349
        %v2058 = vpack.c.b16 %v1362, %v1350
        %v2059 = vpack.c.b16 %v1363, %v1351
        %v2060 = vpack.c.b16 %v1364, %v1352
        %v2061 = vpack.c.b16 %v1365, %v1353
        %v2062 = vpack.c.b16 %v1378, %v1366
        %v2063 = vpack.c.b16 %v1379, %v1367
        %v2064 = vpack.c.b16 %v1380, %v1368
        %v2065 = vpack.c.b16 %v1381, %v1369
        %v2066 = vpack.c.b16 %v1382, %v1370
        %v2067 = vpack.c.b16 %v1383, %v1371
        %v2068 = vpack.c.b16 %v1384, %v1372
        %v2069 = vpack.c.b16 %v1385, %v1373
        %v2070 = vpack.c.b16 %v1386, %v1374
        %v2071 = vpack.c.b16 %v1387, %v1375
        %v2072 = vpack.c.b16 %v1388, %v1376
        %v2073 = vpack.c.b16 %v1389, %v1377
        %v2074 = vpack.c.b16 %v1402, %v1390
        %v2075 = vpack.c.b16 %v1403, %v1391
        %v2076 = vpack.c.b16 %v1404, %v1392
        %v2077 = vpack.c.b16 %v1405, %v1393
        %v2078 = vpack.c.b16 %v1406, %v1394
        %v2079 = vpack.c.b16 %v1407, %v1395
        %v2080 = vpack.c.b16 %v1408, %v1396
        %v2081 = vpack.c.b16 %v1409, %v1397
        %v2082 = vpack.c.b16 %v1410, %v1398
        %v2083 = vpack.c.b16 %v1411, %v1399
        %v2084 = vpack.c.b16 %v1412, %v1400
        %v2085 = vpack.c.b16 %v1413, %v1401
        %v2086 = vpack.c.b16 %v1426, %v1414
        %v2087 = vpack.c.b16 %v1427, %v1415
        %v2088 = vpack.c.b16 %v1428, %v1416
        %v2089 = vpack.c.b16 %v1429, %v1417
        %v2090 = vpack.c.b16 %v1430, %v1418
        %v2091 = vpack.c.b16 %v1431, %v1419
        %v2092 = vpack.c.b16 %v1432, %v1420
        %v2093 = vpack.c.b16 %v1433, %v1421
        %v2094 = vpack.c.b16 %v1434, %v1422
        %v2095 = vpack.c.b16 %v1435, %v1423
        %v2096 = vpack.c.b16 %v1436, %v1424
        %v2097 = vpack.c.b16 %v1437, %v1425
        %v2098 = vpack.c.b16 %v1450, %v1438
        %v2099 = vpack.c.b16 %v1451, %v1439
        %v2100 = vpack.c.b16 %v1452, %v1440
        %v2101 = vpack.c.b16 %v1453, %v1441
        %v2102 = vpack.c.b16 %v1454, %v1442
        %v2103 = vpack.c.b16 %v1455, %v1443
        %v2104 = vpack.c.b16 %v1456, %v1444
        %v2105 = vpack.c.b16 %v1457, %v1445
        %v2106 = vpack.c.b16 %v1458, %v1446
        %v2107 = vpack.c.b16 %v1459, %v1447
        %v2108 = vpack.c.b16 %v1460, %v1448
        %v2109 = vpack.c.b16 %v1461, %v1449
        %v2110 = vpack.c.b16 %v1474, %v1462
        %v2111 = vpack.c.b16 %v1475, %v1463
        %v2112 = vpack.c.b16 %v1476, %v1464
        %v2113 = vpack.c.b16 %v1477, %v1465
        %v2114 = vpack.c.b16 %v1478, %v1466
        %v2115 = vpack.c.b16 %v1479, %v1467
        %v2116 = vpack.c.b16 %v1480, %v1468
        %v2117 = vpack.c.b16 %v1481, %v1469
        %v2118 = vpack.c.b16 %v1482, %v1470
        %v2119 = vpack.c.b16 %v1483, %v1471
        %v2120 = vpack.c.b16 %v1484, %v1472
        %v2121 = vpack.c.b16 %v1485, %v1473
        %v2122 = vpack.c.b16 %v1498, %v1486
        %v2123 = vpack.c.b16 %v1499, %v1487
        %v2124 = vpack.c.b16 %v1500, %v1488
        %v2125 = vpack.c.b16 %v1501, %v1489
        %v2126 = vpack.c.b16 %v1502, %v1490
        %v2127 = vpack.c.b16 %v1503, %v1491
        %v2128 = vpack.c.b16 %v1504, %v1492
        %v2129 = vpack.c.b16 %v1505, %v1493
        %v2130 = vpack.c.b16 %v1506, %v1494
        %v2131 = vpack.c.b16 %v1507, %v1495
        %v2132 = vpack.c.b16 %v1508, %v1496
        %v2133 = vpack.c.b16 %v1509, %v1497
        %v2134 = vpack.c.b16 %v1522, %v1510
        %v2135 = vpack.c.b16 %v1523, %v1511
        %v2136 = vpack.c.b16 %v1524, %v1512
        %v2137 = vpack.c.b16 %v1525, %v1513
        %v2138 = vpack.c.b16 %v1526, %v1514
        %v2139 = vpack.c.b16 %v1527, %v1515
        %v2140 = vpack.c.b16 %v1528, %v1516
        %v2141 = vpack.c.b16 %v1529, %v1517
        %v2142 = vpack.c.b16 %v1530, %v1518
        %v2143 = vpack.c.b16 %v1531, %v1519
        %v2144 = vpack.c.b16 %v1532, %v1520
        %v2145 = vpack.c.b16 %v1533, %v1521
        %v2146 = vpack.c.b16 %v1546, %v1534
        %v2147 = vpack.c.b16 %v1547, %v1535
        %v2148 = vpack.c.b16 %v1548, %v1536
        %v2149 = vpack.c.b16 %v1549, %v1537
        %v2150 = vpack.c.b16 %v1550, %v1538
        %v2151 = vpack.c.b16 %v1551, %v1539
        %v2152 = vpack.c.b16 %v1552, %v1540
        %v2153 = vpack.c.b16 %v1553, %v1541
        %v2154 = vpack.c.b16 %v1554, %v1542
        %v2155 = vpack.c.b16 %v1555, %v1543
        %v2156 = vpack.c.b16 %v1556, %v1544
        %v2157 = vpack.c.b16 %v1557, %v1545
        %v2158 = vpack.c.b16 %v1570, %v1558
        %v2159 = vpack.c.b16 %v1571, %v1559
        %v2160 = vpack.c.b16 %v1572, %v1560
        %v2161 = vpack.c.b16 %v1573, %v1561
        %v2162 = vpack.c.b16 %v1574, %v1562
        %v2163 = vpack.c.b16 %v1575, %v1563
        %v2164 = vpack.c.b16 %v1576, %v1564
        %v2165 = vpack.c.b16 %v1577, %v1565
        %v2166 = vpack.c.b16 %v1578, %v1566
        %v2167 = vpack.c.b16 %v1579, %v1567
        %v2168 = vpack.c.b16 %v1580, %v1568
        %v2169 = vpack.c.b16 %v1581, %v1569
        %v2170 = vpack.c.b16 %v1594, %v1582
        %v2171 = vpack.c.b16 %v1595, %v1583
        %v2172 = vpack.c.b16 %v1596, %v1584
        %v2173 = vpack.c.b16 %v1597, %v1585
        %v2174 = vpack.c.b16 %v1598, %v1586
        %v2175 = vpack.c.b16 %v1599, %v1587
        %v2176 = vpack.c.b16 %v1600, %v1588
        %v2177 = vpack.c.b16 %v1601, %v1589
        %v2178 = vpack.c.b16 %v1602, %v1590
        %v2179 = vpack.c.b16 %v1603, %v1591
        %v2180 = vpack.c.b16 %v1604, %v1592
        %v2181 = vpack.c.b16 %v1605, %v1593
        %v2182 = vpack.c.b16 %v1618, %v1606
        %v2183 = vpack.c.b16 %v1619, %v1607
        %v2184 = vpack.c.b16 %v1620, %v1608
        %v2185 = vpack.c.b16 %v1621, %v1609
        %v2186 = vpack.c.b16 %v1622, %v1610
        %v2187 = vpack.c.b16 %v1623, %v1611
        %v2188 = vpack.c.b16 %v1624, %v1612
        %v2189 = vpack.c.b16 %v1625, %v1613
        %v2190 = vpack.c.b16 %v1626, %v1614
        %v2191 = vpack.c.b16 %v1627, %v1615
        %v2192 = vpack.c.b16 %v1628, %v1616
        %v2193 = vpack.c.b16 %v1629, %v1617
        %v2194 = vpack.c.b16 %v1642, %v1630
        %v2195 = vpack.c.b16 %v1643, %v1631
        %v2196 = vpack.c.b16 %v1644, %v1632
        %v2197 = vpack.c.b16 %v1645, %v1633
        %v2198 = vpack.c.b16 %v1646, %v1634
        %v2199 = vpack.c.b16 %v1647, %v1635
        %v2200 = vpack.c.b16 %v1648, %v1636
        %v2201 = vpack.c.b16 %v1649, %v1637
        %v2202 = vpack.c.b16 %v1650, %v1638
        %v2203 = vpack.c.b16 %v1651, %v1639
        %v2204 = vpack.c.b16 %v1652, %v1640
        %v2205 = vpack.c.b16 %v1653, %v1641
        %v2206 = vpack.c.b16 %v1666, %v1654
        %v2207 = vpack.c.b16 %v1667, %v1655
        %v2208 = vpack.c.b16 %v1668, %v1656
        %v2209 = vpack.c.b16 %v1669, %v1657
        %v2210 = vpack.c.b16 %v1670, %v1658
        %v2211 = vpack.c.b16 %v1671, %v1659
        %v2212 = vpack.c.b16 %v1672, %v1660
        %v2213 = vpack.c.b16 %v1673, %v1661
        %v2214 = vpack.c.b16 %v1674, %v1662
        %v2215 = vpack.c.b16 %v1675, %v1663
        %v2216 = vpack.c.b16 %v1676, %v1664
        %v2217 = vpack.c.b16 %v1677, %v1665
        %v2218 = vpack.c.b16 %v1690, %v1678
        %v2219 = vpack.c.b16 %v1691, %v1679
        %v2220 = vpack.c.b16 %v1692, %v1680
        %v2221 = vpack.c.b16 %v1693, %v1681
        %v2222 = vpack.c.b16 %v1694, %v1682
        %v2223 = vpack.c.b16 %v1695, %v1683
        %v2224 = vpack.c.b16 %v1696, %v1684
        %v2225 = vpack.c.b16 %v1697, %v1685
        %v2226 = vpack.c.b16 %v1698, %v1686
        %v2227 = vpack.c.b16 %v1699, %v1687
        %v2228 = vpack.c.b16 %v1700, %v1688
        %v2229 = vpack.c.b16 %v1701, %v1689
        %v2230 = vpack.c.b16 %v1714, %v1702
        %v2231 = vpack.c.b16 %v1715, %v1703
        %v2232 = vpack.c.b16 %v1716, %v1704
        %v2233 = vpack.c.b16 %v1717, %v1705
        %v2234 = vpack.c.b16 %v1718, %v1706
        %v2235 = vpack.c.b16 %v1719, %v1707
        %v2236 = vpack.c.b16 %v1720, %v1708
        %v2237 = vpack.c.b16 %v1721, %v1709
        %v2238 = vpack.c.b16 %v1722, %v1710
        %v2239 = vpack.c.b16 %v1723, %v1711
        %v2240 = vpack.c.b16 %v1724, %v1712
        %v2241 = vpack.c.b16 %v1725, %v1713
        %v2242 = vpack.c.b16 %v1738, %v1726
        %v2243 = vpack.c.b16 %v1739, %v1727
        %v2244 = vpack.c.b16 %v1740, %v1728
        %v2245 = vpack.c.b16 %v1741, %v1729
        %v2246 = vpack.c.b16 %v1742, %v1730
        %v2247 = vpack.c.b16 %v1743, %v1731
        %v2248 = vpack.c.b16 %v1744, %v1732
        %v2249 = vpack.c.b16 %v1745, %v1733
        %v2250 = vpack.c.b16 %v1746, %v1734
        %v2251 = vpack.c.b16 %v1747, %v1735
        %v2252 = vpack.c.b16 %v1748, %v1736
        %v2253 = vpack.c.b16 %v1749, %v1737
        %v2254 = vpack.c.b16 %v1762, %v1750
        %v2255 = vpack.c.b16 %v1763, %v1751
        %v2256 = vpack.c.b16 %v1764, %v1752
        %v2257 = vpack.c.b16 %v1765, %v1753
        %v2258 = vpack.c.b16 %v1766, %v1754
        %v2259 = vpack.c.b16 %v1767, %v1755
        %v2260 = vpack.c.b16 %v1768, %v1756
        %v2261 = vpack.c.b16 %v1769, %v1757
        %v2262 = vpack.c.b16 %v1770, %v1758
        %v2263 = vpack.c.b16 %v1771, %v1759
        %v2264 = vpack.c.b16 %v1772, %v1760
        %v2265 = vpack.c.b16 %v1773, %v1761
        %v2266 = vpack.c.b16 %v1786, %v1774
        %v2267 = vpack.c.b16 %v1787, %v1775
        %v2268 = vpack.c.b16 %v1788, %v1776
        %v2269 = vpack.c.b16 %v1789, %v1777
        %v2270 = vpack.c.b16 %v1790, %v1778
        %v2271 = vpack.c.b16 %v1791, %v1779
        %v2272 = vpack.c.b16 %v1792, %v1780
        %v2273 = vpack.c.b16 %v1793, %v1781
        %v2274 = vpack.c.b16 %v1794, %v1782
        %v2275 = vpack.c.b16 %v1795, %v1783
        %v2276 = vpack.c.b16 %v1796, %v1784
        %v2277 = vpack.c.b16 %v1797, %v1785
        %v2278 = vpack.c.b16 %v1810, %v1798
        %v2279 = vpack.c.b16 %v1811, %v1799
        %v2280 = vpack.c.b16 %v1812, %v1800
        %v2281 = vpack.c.b16 %v1813, %v1801
        %v2282 = vpack.c.b16 %v1814, %v1802
        %v2283 = vpack.c.b16 %v1815, %v1803
        %v2284 = vpack.c.b16 %v1816, %v1804
        %v2285 = vpack.c.b16 %v1817, %v1805
        %v2286 = vpack.c.b16 %v1818, %v1806
        %v2287 = vpack.c.b16 %v1819, %v1807
        %v2288 = vpack.c.b16 %v1820, %v1808
        %v2289 = vpack.c.b16 %v1821, %v1809
        %v2290 = vpack.c.b16 %v1834, %v1822
        %v2291 = vpack.c.b16 %v1835, %v1823
        %v2292 = vpack.c.b16 %v1836, %v1824
        %v2293 = vpack.c.b16 %v1837, %v1825
        %v2294 = vpack.c.b16 %v1838, %v1826
        %v2295 = vpack.c.b16 %v1839, %v1827
        %v2296 = vpack.c.b16 %v1840, %v1828
        %v2297 = vpack.c.b16 %v1841, %v1829
        %v2298 = vpack.c.b16 %v1842, %v1830
        %v2299 = vpack.c.b16 %v1843, %v1831
        %v2300 = vpack.c.b16 %v1844, %v1832
        %v2301 = vpack.c.b16 %v1845, %v1833
        %v2302 = vpack.c.b16 %v1858, %v1846
        %v2303 = vpack.c.b16 %v1859, %v1847
        %v2304 = vpack.c.b16 %v1860, %v1848
        %v2305 = vpack.c.b16 %v1861, %v1849
        %v2306 = vpack.c.b16 %v1862, %v1850
        %v2307 = vpack.c.b16 %v1863, %v1851
        %v2308 = vpack.c.b16 %v1864, %v1852
        %v2309 = vpack.c.b16 %v1865, %v1853
        %v2310 = vpack.c.b16 %v1866, %v1854
        %v2311 = vpack.c.b16 %v1867, %v1855
        %v2312 = vpack.c.b16 %v1868, %v1856
        %v2313 = vpack.c.b16 %v1869, %v1857
        %v2314 = vpack.c.b16 %v1882, %v1870
        %v2315 = vpack.c.b16 %v1883, %v1871
        %v2316 = vpack.c.b16 %v1884, %v1872
        %v2317 = vpack.c.b16 %v1885, %v1873
        %v2318 = vpack.c.b16 %v1886, %v1874
        %v2319 = vpack.c.b16 %v1887, %v1875
        %v2320 = vpack.c.b16 %v1888, %v1876
        %v2321 = vpack.c.b16 %v1889, %v1877
        %v2322 = vpack.c.b16 %v1890, %v1878
        %v2323 = vpack.c.b16 %v1891, %v1879
        %v2324 = vpack.c.b16 %v1892, %v1880
        %v2325 = vpack.c.b16 %v1893, %v1881
        %v2326 = vpack.c.b16 %v1906, %v1894
        %v2327 = vpack.c.b16 %v1907, %v1895
        %v2328 = vpack.c.b16 %v1908, %v1896
        %v2329 = vpack.c.b16 %v1909, %v1897
        %v2330 = vpack.c.b16 %v1910, %v1898
        %v2331 = vpack.c.b16 %v1911, %v1899
        %v2332 = vpack.c.b16 %v1912, %v1900
        %v2333 = vpack.c.b16 %v1913, %v1901
        %v2334 = vpack.c.b16 %v1914, %v1902
        %v2335 = vpack.c.b16 %v1915, %v1903
        %v2336 = vpack.c.b16 %v1916, %v1904
        %v2337 = vpack.c.b16 %v1917, %v1905
        %v2338 = vpack.c.b16 %v1930, %v1918
        %v2339 = vpack.c.b16 %v1931, %v1919
        %v2340 = vpack.c.b16 %v1932, %v1920
        %v2341 = vpack.c.b16 %v1933, %v1921
        %v2342 = vpack.c.b16 %v1934, %v1922
        %v2343 = vpack.c.b16 %v1935, %v1923
        %v2344 = vpack.c.b16 %v1936, %v1924
        %v2345 = vpack.c.b16 %v1937, %v1925
        %v2346 = vpack.c.b16 %v1938, %v1926
        %v2347 = vpack.c.b16 %v1939, %v1927
        %v2348 = vpack.c.b16 %v1940, %v1928
        %v2349 = vpack.c.b16 %v1941, %v1929
        %v2350 = vpack.c.b16 %v1954, %v1942
        %v2351 = vpack.c.b16 %v1955, %v1943
        %v2352 = vpack.c.b16 %v1956, %v1944
        %v2353 = vpack.c.b16 %v1957, %v1945
        %v2354 = vpack.c.b16 %v1958, %v1946
        %v2355 = vpack.c.b16 %v1959, %v1947
        %v2356 = vpack.c.b16 %v1960, %v1948
        %v2357 = vpack.c.b16 %v1961, %v1949
        %v2358 = vpack.c.b16 %v1962, %v1950
        %v2359 = vpack.c.b16 %v1963, %v1951
        %v2360 = vpack.c.b16 %v1964, %v1952
        %v2361 = vpack.c.b16 %v1965, %v1953
        %v2362 = vpack.c.b16 %v1978, %v1966
        %v2363 = vpack.c.b16 %v1979, %v1967
        %v2364 = vpack.c.b16 %v1980, %v1968
        %v2365 = vpack.c.b16 %v1981, %v1969
        %v2366 = vpack.c.b16 %v1982, %v1970
        %v2367 = vpack.c.b16 %v1983, %v1971
        %v2368 = vpack.c.b16 %v1984, %v1972
        %v2369 = vpack.c.b16 %v1985, %v1973
        %v2370 = vpack.c.b16 %v1986, %v1974
        %v2371 = vpack.c.b16 %v1987, %v1975
        %v2372 = vpack.c.b16 %v1988, %v1976
        %v2373 = vpack.c.b16 %v1989, %v1977
        %2758 = vmatprep.subr.bf16.mxu0 %v2075
        %2759 = vmatpush1.bf16.msra.mxu0 %v2074
        %2760 = vmatprep.subr.bf16.mxu0 %v2063
        %2761 = vmatpush1.bf16.msra.mxu0 %v2062
        %2762 = vmatprep.subr.bf16.mxu0 %v2051
        %2763 = vmatpush1.bf16.msra.mxu0 %v2050
        %2764 = vmatprep.subr.bf16.mxu0 %v2039
        %2765 = vmatpush1.bf16.msra.mxu0 %v2038
        %2766 = vmatprep.subr.bf16.mxu0 %v2027
        %2767 = vmatpush1.bf16.msra.mxu0 %v2026
        %2768 = vmatprep.subr.bf16.mxu0 %v2015
        %2769 = vmatpush1.bf16.msra.mxu0 %v2014
        %2770 = vmatprep.subr.bf16.mxu0 %v2003
        %2771 = vmatpush1.bf16.msra.mxu0 %v2002
        %2772 = vmatprep.subr.bf16.mxu0 %v1991
        %2773 = vmatpush1.bf16.msra.mxu0 %v1990
        %2774 = vmatprep.subr.bf16.mxu0 %v2171
        %2775 = vmatpush2.bf16.msra.mxu0 %v2170
        %2776 = vmatprep.subr.bf16.mxu0 %v2159
        %2777 = vmatpush2.bf16.msra.mxu0 %v2158
        %2778 = vmatprep.subr.bf16.mxu0 %v2147
        %2779 = vmatpush2.bf16.msra.mxu0 %v2146
        %2780 = vmatprep.subr.bf16.mxu0 %v2135
        %2781 = vmatpush2.bf16.msra.mxu0 %v2134
        %2782 = vmatprep.subr.bf16.mxu0 %v2123
        %2783 = vmatpush2.bf16.msra.mxu0 %v2122
        %2784 = vmatprep.subr.bf16.mxu0 %v2111
        %2785 = vmatpush2.bf16.msra.mxu0 %v2110
        %2786 = vmatprep.subr.bf16.mxu0 %v2099
        %2787 = vmatpush2.bf16.msra.mxu0 %v2098
        %2788 = vmatprep.subr.bf16.mxu0 %v2087
        %2789 = vmatpush2.bf16.msra.mxu0 %v2086
        %2790 = vmatprep.mubr.bf16.mxu0 %v775
        %2791 = vmatmul.mubr.bf16.gmra.mxu0 %v774
        %v2792 = vpop.f32.mrf.mxu0
        %v2793 = vadd.f32 0.0, %v2792
        %v2794 = vpop.f32.mrf.mxu0
        %v2795 = vadd.f32 0.0, %v2794
        %v2796 = vpop.f32.mrf.mxu0
        %v2797 = vadd.f32 0.0, %v2796
        %v2798 = vpop.f32.mrf.mxu0
        %v2799 = vadd.f32 0.0, %v2798
        %2800 = vmatprep.mubr.bf16.mxu0 %v779
        %2801 = vmatmul.mubr.bf16.gmra.mxu0 %v778
        %v2802 = vpop.f32.mrf.mxu0
        %v2803 = vadd.f32 0.0, %v2802
        %v2804 = vpop.f32.mrf.mxu0
        %v2805 = vadd.f32 0.0, %v2804
        %v2806 = vpop.f32.mrf.mxu0
        %v2807 = vadd.f32 0.0, %v2806
        %v2808 = vpop.f32.mrf.mxu0
        %v2809 = vadd.f32 0.0, %v2808
        %2810 = vmatprep.mubr.bf16.mxu0 %v783
        %2811 = vmatmul.mubr.bf16.gmra.mxu0 %v782
        %v2812 = vpop.f32.mrf.mxu0
        %v2813 = vadd.f32 0.0, %v2812
        %v2814 = vpop.f32.mrf.mxu0
        %v2815 = vadd.f32 0.0, %v2814
        %v2816 = vpop.f32.mrf.mxu0
        %v2817 = vadd.f32 0.0, %v2816
        %v2818 = vpop.f32.mrf.mxu0
        %v2819 = vadd.f32 0.0, %v2818
        %2820 = vmatprep.mubr.bf16.mxu0 %v787
        %2821 = vmatmul.mubr.bf16.gmra.mxu0 %v786
        %v2822 = vpop.f32.mrf.mxu0
        %v2823 = vadd.f32 0.0, %v2822
        %v2824 = vpop.f32.mrf.mxu0
        %v2825 = vadd.f32 0.0, %v2824
        %v2826 = vpop.f32.mrf.mxu0
        %v2827 = vadd.f32 0.0, %v2826
        %v2828 = vpop.f32.mrf.mxu0
        %v2829 = vadd.f32 0.0, %v2828
        %2830 = vmatprep.mubr.bf16.mxu0 %v791
        %2831 = vmatmul.mubr.bf16.gmra.mxu0 %v790
        %v2832 = vpop.f32.mrf.mxu0
        %v2833 = vadd.f32 0.0, %v2832
        %v2834 = vpop.f32.mrf.mxu0
        %v2835 = vadd.f32 0.0, %v2834
        %v2836 = vpop.f32.mrf.mxu0
        %v2837 = vadd.f32 0.0, %v2836
        %v2838 = vpop.f32.mrf.mxu0
        %v2839 = vadd.f32 0.0, %v2838
        %2840 = vmatprep.mubr.bf16.mxu0 %v795
        %2841 = vmatmul.mubr.bf16.gmra.mxu0 %v794
        %v2842 = vpop.f32.mrf.mxu0
        %v2843 = vadd.f32 0.0, %v2842
        %v2844 = vpop.f32.mrf.mxu0
        %v2845 = vadd.f32 0.0, %v2844
        %v2846 = vpop.f32.mrf.mxu0
        %v2847 = vadd.f32 0.0, %v2846
        %v2848 = vpop.f32.mrf.mxu0
        %v2849 = vadd.f32 0.0, %v2848
        %2850 = vmatprep.mubr.bf16.mxu0 %v799
        %2851 = vmatmul.mubr.bf16.gmra.mxu0 %v798
        %v2852 = vpop.f32.mrf.mxu0
        %v2853 = vadd.f32 0.0, %v2852
        %v2854 = vpop.f32.mrf.mxu0
        %v2855 = vadd.f32 0.0, %v2854
        %v2856 = vpop.f32.mrf.mxu0
        %v2857 = vadd.f32 0.0, %v2856
        %v2858 = vpop.f32.mrf.mxu0
        %v2859 = vadd.f32 0.0, %v2858
        %2860 = vmatprep.mubr.bf16.mxu0 %v803
        %2861 = vmatmul.mubr.bf16.gmra.mxu0 %v802
        %v2862 = vpop.f32.mrf.mxu0
        %v2863 = vadd.f32 0.0, %v2862
        %v2864 = vpop.f32.mrf.mxu0
        %v2865 = vadd.f32 0.0, %v2864
        %v2866 = vpop.f32.mrf.mxu0
        %v2867 = vadd.f32 0.0, %v2866
        %v2868 = vpop.f32.mrf.mxu0
        %v2869 = vadd.f32 0.0, %v2868
        %2870 = vdwg.mxu0
        %2871 = vmatprep.subr.bf16.mxu0 %v2267
        %2872 = vmatpush1.bf16.msra.mxu0 %v2266
        %2873 = vmatprep.subr.bf16.mxu0 %v2255
        %2874 = vmatpush1.bf16.msra.mxu0 %v2254
        %2875 = vmatprep.subr.bf16.mxu0 %v2243
        %2876 = vmatpush1.bf16.msra.mxu0 %v2242
        %2877 = vmatprep.subr.bf16.mxu0 %v2231
        %2878 = vmatpush1.bf16.msra.mxu0 %v2230
        %2879 = vmatprep.subr.bf16.mxu0 %v2219
        %2880 = vmatpush1.bf16.msra.mxu0 %v2218
        %2881 = vmatprep.subr.bf16.mxu0 %v2207
        %2882 = vmatpush1.bf16.msra.mxu0 %v2206
        %2883 = vmatprep.subr.bf16.mxu0 %v2195
        %2884 = vmatpush1.bf16.msra.mxu0 %v2194
        %2885 = vmatprep.subr.bf16.mxu0 %v2183
        %2886 = vmatpush1.bf16.msra.mxu0 %v2182
        %2887 = vmatprep.subr.bf16.mxu0 %v2363
        %2888 = vmatpush2.bf16.msra.mxu0 %v2362
        %2889 = vmatprep.subr.bf16.mxu0 %v2351
        %2890 = vmatpush2.bf16.msra.mxu0 %v2350
        %2891 = vmatprep.subr.bf16.mxu0 %v2339
        %2892 = vmatpush2.bf16.msra.mxu0 %v2338
        %2893 = vmatprep.subr.bf16.mxu0 %v2327
        %2894 = vmatpush2.bf16.msra.mxu0 %v2326
        %2895 = vmatprep.subr.bf16.mxu0 %v2315
        %2896 = vmatpush2.bf16.msra.mxu0 %v2314
        %2897 = vmatprep.subr.bf16.mxu0 %v2303
        %2898 = vmatpush2.bf16.msra.mxu0 %v2302
        %2899 = vmatprep.subr.bf16.mxu0 %v2291
        %2900 = vmatpush2.bf16.msra.mxu0 %v2290
        %2901 = vmatprep.subr.bf16.mxu0 %v2279
        %2902 = vmatpush2.bf16.msra.mxu0 %v2278
        %2903 = vmatprep.mubr.bf16.mxu0 %v777
        %2904 = vmatmul.mubr.bf16.gmra.mxu0 %v776
        %v2905 = vpop.f32.mrf.mxu0
        %v2906 = vadd.f32 %v2793, %v2905
        %v2907 = vpop.f32.mrf.mxu0
        %v2908 = vadd.f32 %v2795, %v2907
        %v2909 = vpop.f32.mrf.mxu0
        %v2910 = vadd.f32 %v2797, %v2909
        %v2911 = vpop.f32.mrf.mxu0
        %v2912 = vadd.f32 %v2799, %v2911
        %2913 = vmatprep.mubr.bf16.mxu0 %v781
        %2914 = vmatmul.mubr.bf16.gmra.mxu0 %v780
        %v2915 = vpop.f32.mrf.mxu0
        %v2916 = vadd.f32 %v2803, %v2915
        %v2917 = vpop.f32.mrf.mxu0
        %v2918 = vadd.f32 %v2805, %v2917
        %v2919 = vpop.f32.mrf.mxu0
        %v2920 = vadd.f32 %v2807, %v2919
        %v2921 = vpop.f32.mrf.mxu0
        %v2922 = vadd.f32 %v2809, %v2921
        %2923 = vmatprep.mubr.bf16.mxu0 %v785
        %2924 = vmatmul.mubr.bf16.gmra.mxu0 %v784
        %v2925 = vpop.f32.mrf.mxu0
        %v2926 = vadd.f32 %v2813, %v2925
        %v2927 = vpop.f32.mrf.mxu0
        %v2928 = vadd.f32 %v2815, %v2927
        %v2929 = vpop.f32.mrf.mxu0
        %v2930 = vadd.f32 %v2817, %v2929
        %v2931 = vpop.f32.mrf.mxu0
        %v2932 = vadd.f32 %v2819, %v2931
        %2933 = vmatprep.mubr.bf16.mxu0 %v789
        %2934 = vmatmul.mubr.bf16.gmra.mxu0 %v788
        %v2935 = vpop.f32.mrf.mxu0
        %v2936 = vadd.f32 %v2823, %v2935
        %v2937 = vpop.f32.mrf.mxu0
        %v2938 = vadd.f32 %v2825, %v2937
        %v2939 = vpop.f32.mrf.mxu0
        %v2940 = vadd.f32 %v2827, %v2939
        %v2941 = vpop.f32.mrf.mxu0
        %v2942 = vadd.f32 %v2829, %v2941
        %2943 = vmatprep.mubr.bf16.mxu0 %v793
        %2944 = vmatmul.mubr.bf16.gmra.mxu0 %v792
        %v2945 = vpop.f32.mrf.mxu0
        %v2946 = vadd.f32 %v2833, %v2945
        %v2947 = vpop.f32.mrf.mxu0
        %v2948 = vadd.f32 %v2835, %v2947
        %v2949 = vpop.f32.mrf.mxu0
        %v2950 = vadd.f32 %v2837, %v2949
        %v2951 = vpop.f32.mrf.mxu0
        %v2952 = vadd.f32 %v2839, %v2951
        %2953 = vmatprep.mubr.bf16.mxu0 %v797
        %2954 = vmatmul.mubr.bf16.gmra.mxu0 %v796
        %v2955 = vpop.f32.mrf.mxu0
        %v2956 = vadd.f32 %v2843, %v2955
        %v2957 = vpop.f32.mrf.mxu0
        %v2958 = vadd.f32 %v2845, %v2957
        %v2959 = vpop.f32.mrf.mxu0
        %v2960 = vadd.f32 %v2847, %v2959
        %v2961 = vpop.f32.mrf.mxu0
        %v2962 = vadd.f32 %v2849, %v2961
        %2963 = vmatprep.mubr.bf16.mxu0 %v801
        %2964 = vmatmul.mubr.bf16.gmra.mxu0 %v800
        %v2965 = vpop.f32.mrf.mxu0
        %v2966 = vadd.f32 %v2853, %v2965
        %v2967 = vpop.f32.mrf.mxu0
        %v2968 = vadd.f32 %v2855, %v2967
        %v2969 = vpop.f32.mrf.mxu0
        %v2970 = vadd.f32 %v2857, %v2969
        %v2971 = vpop.f32.mrf.mxu0
        %v2972 = vadd.f32 %v2859, %v2971
        %2973 = vmatprep.mubr.bf16.mxu0 %v805
        %2974 = vmatmul.mubr.bf16.gmra.mxu0 %v804
        %v2975 = vpop.f32.mrf.mxu0
        %v2976 = vadd.f32 %v2863, %v2975
        %v2977 = vpop.f32.mrf.mxu0
        %v2978 = vadd.f32 %v2865, %v2977
        %v2979 = vpop.f32.mrf.mxu0
        %v2980 = vadd.f32 %v2867, %v2979
        %v2981 = vpop.f32.mrf.mxu0
        %v2982 = vadd.f32 %v2869, %v2981
        %2983 = vdwg.mxu0
        %2984 = vmatprep.subr.bf16.mxu0 %v2077
        %2985 = vmatpush1.bf16.msra.mxu0 %v2076
        %2986 = vmatprep.subr.bf16.mxu0 %v2065
        %2987 = vmatpush1.bf16.msra.mxu0 %v2064
        %2988 = vmatprep.subr.bf16.mxu0 %v2053
        %2989 = vmatpush1.bf16.msra.mxu0 %v2052
        %2990 = vmatprep.subr.bf16.mxu0 %v2041
        %2991 = vmatpush1.bf16.msra.mxu0 %v2040
        %2992 = vmatprep.subr.bf16.mxu0 %v2029
        %2993 = vmatpush1.bf16.msra.mxu0 %v2028
        %2994 = vmatprep.subr.bf16.mxu0 %v2017
        %2995 = vmatpush1.bf16.msra.mxu0 %v2016
        %2996 = vmatprep.subr.bf16.mxu0 %v2005
        %2997 = vmatpush1.bf16.msra.mxu0 %v2004
        %2998 = vmatprep.subr.bf16.mxu0 %v1993
        %2999 = vmatpush1.bf16.msra.mxu0 %v1992
        %3000 = vmatprep.subr.bf16.mxu0 %v2173
        %3001 = vmatpush2.bf16.msra.mxu0 %v2172
        %3002 = vmatprep.subr.bf16.mxu0 %v2161
        %3003 = vmatpush2.bf16.msra.mxu0 %v2160
        %3004 = vmatprep.subr.bf16.mxu0 %v2149
        %3005 = vmatpush2.bf16.msra.mxu0 %v2148
        %3006 = vmatprep.subr.bf16.mxu0 %v2137
        %3007 = vmatpush2.bf16.msra.mxu0 %v2136
        %3008 = vmatprep.subr.bf16.mxu0 %v2125
        %3009 = vmatpush2.bf16.msra.mxu0 %v2124
        %3010 = vmatprep.subr.bf16.mxu0 %v2113
        %3011 = vmatpush2.bf16.msra.mxu0 %v2112
        %3012 = vmatprep.subr.bf16.mxu0 %v2101
        %3013 = vmatpush2.bf16.msra.mxu0 %v2100
        %3014 = vmatprep.subr.bf16.mxu0 %v2089
        %3015 = vmatpush2.bf16.msra.mxu0 %v2088
        %3016 = vmatprep.mubr.bf16.mxu0 %v775
        %3017 = vmatmul.mubr.bf16.gmra.mxu0 %v774
        %v3018 = vpop.f32.mrf.mxu0
        %v3019 = vadd.f32 0.0, %v3018
        %v3020 = vpop.f32.mrf.mxu0
        %v3021 = vadd.f32 0.0, %v3020
        %v3022 = vpop.f32.mrf.mxu0
        %v3023 = vadd.f32 0.0, %v3022
        %v3024 = vpop.f32.mrf.mxu0
        %v3025 = vadd.f32 0.0, %v3024
        %3026 = vmatprep.mubr.bf16.mxu0 %v779
        %3027 = vmatmul.mubr.bf16.gmra.mxu0 %v778
        %v3028 = vpop.f32.mrf.mxu0
        %v3029 = vadd.f32 0.0, %v3028
        %v3030 = vpop.f32.mrf.mxu0
        %v3031 = vadd.f32 0.0, %v3030
        %v3032 = vpop.f32.mrf.mxu0
        %v3033 = vadd.f32 0.0, %v3032
        %v3034 = vpop.f32.mrf.mxu0
        %v3035 = vadd.f32 0.0, %v3034
        %3036 = vmatprep.mubr.bf16.mxu0 %v783
        %3037 = vmatmul.mubr.bf16.gmra.mxu0 %v782
        %v3038 = vpop.f32.mrf.mxu0
        %v3039 = vadd.f32 0.0, %v3038
        %v3040 = vpop.f32.mrf.mxu0
        %v3041 = vadd.f32 0.0, %v3040
        %v3042 = vpop.f32.mrf.mxu0
        %v3043 = vadd.f32 0.0, %v3042
        %v3044 = vpop.f32.mrf.mxu0
        %v3045 = vadd.f32 0.0, %v3044
        %3046 = vmatprep.mubr.bf16.mxu0 %v787
        %3047 = vmatmul.mubr.bf16.gmra.mxu0 %v786
        %v3048 = vpop.f32.mrf.mxu0
        %v3049 = vadd.f32 0.0, %v3048
        %v3050 = vpop.f32.mrf.mxu0
        %v3051 = vadd.f32 0.0, %v3050
        %v3052 = vpop.f32.mrf.mxu0
        %v3053 = vadd.f32 0.0, %v3052
        %v3054 = vpop.f32.mrf.mxu0
        %v3055 = vadd.f32 0.0, %v3054
        %3056 = vmatprep.mubr.bf16.mxu0 %v791
        %3057 = vmatmul.mubr.bf16.gmra.mxu0 %v790
        %v3058 = vpop.f32.mrf.mxu0
        %v3059 = vadd.f32 0.0, %v3058
        %v3060 = vpop.f32.mrf.mxu0
        %v3061 = vadd.f32 0.0, %v3060
        %v3062 = vpop.f32.mrf.mxu0
        %v3063 = vadd.f32 0.0, %v3062
        %v3064 = vpop.f32.mrf.mxu0
        %v3065 = vadd.f32 0.0, %v3064
        %3066 = vmatprep.mubr.bf16.mxu0 %v795
        %3067 = vmatmul.mubr.bf16.gmra.mxu0 %v794
        %v3068 = vpop.f32.mrf.mxu0
        %v3069 = vadd.f32 0.0, %v3068
        %v3070 = vpop.f32.mrf.mxu0
        %v3071 = vadd.f32 0.0, %v3070
        %v3072 = vpop.f32.mrf.mxu0
        %v3073 = vadd.f32 0.0, %v3072
        %v3074 = vpop.f32.mrf.mxu0
        %v3075 = vadd.f32 0.0, %v3074
        %3076 = vmatprep.mubr.bf16.mxu0 %v799
        %3077 = vmatmul.mubr.bf16.gmra.mxu0 %v798
        %v3078 = vpop.f32.mrf.mxu0
        %v3079 = vadd.f32 0.0, %v3078
        %v3080 = vpop.f32.mrf.mxu0
        %v3081 = vadd.f32 0.0, %v3080
        %v3082 = vpop.f32.mrf.mxu0
        %v3083 = vadd.f32 0.0, %v3082
        %v3084 = vpop.f32.mrf.mxu0
        %v3085 = vadd.f32 0.0, %v3084
        %3086 = vmatprep.mubr.bf16.mxu0 %v803
        %3087 = vmatmul.mubr.bf16.gmra.mxu0 %v802
        %v3088 = vpop.f32.mrf.mxu0
        %v3089 = vadd.f32 0.0, %v3088
        %v3090 = vpop.f32.mrf.mxu0
        %v3091 = vadd.f32 0.0, %v3090
        %v3092 = vpop.f32.mrf.mxu0
        %v3093 = vadd.f32 0.0, %v3092
        %v3094 = vpop.f32.mrf.mxu0
        %v3095 = vadd.f32 0.0, %v3094
        %3096 = vdwg.mxu0
        %3097 = vmatprep.subr.bf16.mxu0 %v2269
        %3098 = vmatpush1.bf16.msra.mxu0 %v2268
        %3099 = vmatprep.subr.bf16.mxu0 %v2257
        %3100 = vmatpush1.bf16.msra.mxu0 %v2256
        %3101 = vmatprep.subr.bf16.mxu0 %v2245
        %3102 = vmatpush1.bf16.msra.mxu0 %v2244
        %3103 = vmatprep.subr.bf16.mxu0 %v2233
        %3104 = vmatpush1.bf16.msra.mxu0 %v2232
        %3105 = vmatprep.subr.bf16.mxu0 %v2221
        %3106 = vmatpush1.bf16.msra.mxu0 %v2220
        %3107 = vmatprep.subr.bf16.mxu0 %v2209
        %3108 = vmatpush1.bf16.msra.mxu0 %v2208
        %3109 = vmatprep.subr.bf16.mxu0 %v2197
        %3110 = vmatpush1.bf16.msra.mxu0 %v2196
        %3111 = vmatprep.subr.bf16.mxu0 %v2185
        %3112 = vmatpush1.bf16.msra.mxu0 %v2184
        %3113 = vmatprep.subr.bf16.mxu0 %v2365
        %3114 = vmatpush2.bf16.msra.mxu0 %v2364
        %3115 = vmatprep.subr.bf16.mxu0 %v2353
        %3116 = vmatpush2.bf16.msra.mxu0 %v2352
        %3117 = vmatprep.subr.bf16.mxu0 %v2341
        %3118 = vmatpush2.bf16.msra.mxu0 %v2340
        %3119 = vmatprep.subr.bf16.mxu0 %v2329
        %3120 = vmatpush2.bf16.msra.mxu0 %v2328
        %3121 = vmatprep.subr.bf16.mxu0 %v2317
        %3122 = vmatpush2.bf16.msra.mxu0 %v2316
        %3123 = vmatprep.subr.bf16.mxu0 %v2305
        %3124 = vmatpush2.bf16.msra.mxu0 %v2304
        %3125 = vmatprep.subr.bf16.mxu0 %v2293
        %3126 = vmatpush2.bf16.msra.mxu0 %v2292
        %3127 = vmatprep.subr.bf16.mxu0 %v2281
        %3128 = vmatpush2.bf16.msra.mxu0 %v2280
        %3129 = vmatprep.mubr.bf16.mxu0 %v777
        %3130 = vmatmul.mubr.bf16.gmra.mxu0 %v776
        %v3131 = vpop.f32.mrf.mxu0
        %v3132 = vadd.f32 %v3019, %v3131
        %v3133 = vpop.f32.mrf.mxu0
        %v3134 = vadd.f32 %v3021, %v3133
        %v3135 = vpop.f32.mrf.mxu0
        %v3136 = vadd.f32 %v3023, %v3135
        %v3137 = vpop.f32.mrf.mxu0
        %v3138 = vadd.f32 %v3025, %v3137
        %3139 = vmatprep.mubr.bf16.mxu0 %v781
        %3140 = vmatmul.mubr.bf16.gmra.mxu0 %v780
        %v3141 = vpop.f32.mrf.mxu0
        %v3142 = vadd.f32 %v3029, %v3141
        %v3143 = vpop.f32.mrf.mxu0
        %v3144 = vadd.f32 %v3031, %v3143
        %v3145 = vpop.f32.mrf.mxu0
        %v3146 = vadd.f32 %v3033, %v3145
        %v3147 = vpop.f32.mrf.mxu0
        %v3148 = vadd.f32 %v3035, %v3147
        %3149 = vmatprep.mubr.bf16.mxu0 %v785
        %3150 = vmatmul.mubr.bf16.gmra.mxu0 %v784
        %v3151 = vpop.f32.mrf.mxu0
        %v3152 = vadd.f32 %v3039, %v3151
        %v3153 = vpop.f32.mrf.mxu0
        %v3154 = vadd.f32 %v3041, %v3153
        %v3155 = vpop.f32.mrf.mxu0
        %v3156 = vadd.f32 %v3043, %v3155
        %v3157 = vpop.f32.mrf.mxu0
        %v3158 = vadd.f32 %v3045, %v3157
        %3159 = vmatprep.mubr.bf16.mxu0 %v789
        %3160 = vmatmul.mubr.bf16.gmra.mxu0 %v788
        %v3161 = vpop.f32.mrf.mxu0
        %v3162 = vadd.f32 %v3049, %v3161
        %v3163 = vpop.f32.mrf.mxu0
        %v3164 = vadd.f32 %v3051, %v3163
        %v3165 = vpop.f32.mrf.mxu0
        %v3166 = vadd.f32 %v3053, %v3165
        %v3167 = vpop.f32.mrf.mxu0
        %v3168 = vadd.f32 %v3055, %v3167
        %3169 = vmatprep.mubr.bf16.mxu0 %v793
        %3170 = vmatmul.mubr.bf16.gmra.mxu0 %v792
        %v3171 = vpop.f32.mrf.mxu0
        %v3172 = vadd.f32 %v3059, %v3171
        %v3173 = vpop.f32.mrf.mxu0
        %v3174 = vadd.f32 %v3061, %v3173
        %v3175 = vpop.f32.mrf.mxu0
        %v3176 = vadd.f32 %v3063, %v3175
        %v3177 = vpop.f32.mrf.mxu0
        %v3178 = vadd.f32 %v3065, %v3177
        %3179 = vmatprep.mubr.bf16.mxu0 %v797
        %3180 = vmatmul.mubr.bf16.gmra.mxu0 %v796
        %v3181 = vpop.f32.mrf.mxu0
        %v3182 = vadd.f32 %v3069, %v3181
        %v3183 = vpop.f32.mrf.mxu0
        %v3184 = vadd.f32 %v3071, %v3183
        %v3185 = vpop.f32.mrf.mxu0
        %v3186 = vadd.f32 %v3073, %v3185
        %v3187 = vpop.f32.mrf.mxu0
        %v3188 = vadd.f32 %v3075, %v3187
        %3189 = vmatprep.mubr.bf16.mxu0 %v801
        %3190 = vmatmul.mubr.bf16.gmra.mxu0 %v800
        %v3191 = vpop.f32.mrf.mxu0
        %v3192 = vadd.f32 %v3079, %v3191
        %v3193 = vpop.f32.mrf.mxu0
        %v3194 = vadd.f32 %v3081, %v3193
        %v3195 = vpop.f32.mrf.mxu0
        %v3196 = vadd.f32 %v3083, %v3195
        %v3197 = vpop.f32.mrf.mxu0
        %v3198 = vadd.f32 %v3085, %v3197
        %3199 = vmatprep.mubr.bf16.mxu0 %v805
        %3200 = vmatmul.mubr.bf16.gmra.mxu0 %v804
        %v3201 = vpop.f32.mrf.mxu0
        %v3202 = vadd.f32 %v3089, %v3201
        %v3203 = vpop.f32.mrf.mxu0
        %v3204 = vadd.f32 %v3091, %v3203
        %v3205 = vpop.f32.mrf.mxu0
        %v3206 = vadd.f32 %v3093, %v3205
        %v3207 = vpop.f32.mrf.mxu0
        %v3208 = vadd.f32 %v3095, %v3207
        %3209 = vdwg.mxu0
        %3210 = vmatprep.subr.bf16.mxu0 %v2079
        %3211 = vmatpush1.bf16.msra.mxu0 %v2078
        %3212 = vmatprep.subr.bf16.mxu0 %v2067
        %3213 = vmatpush1.bf16.msra.mxu0 %v2066
        %3214 = vmatprep.subr.bf16.mxu0 %v2055
        %3215 = vmatpush1.bf16.msra.mxu0 %v2054
        %3216 = vmatprep.subr.bf16.mxu0 %v2043
        %3217 = vmatpush1.bf16.msra.mxu0 %v2042
        %3218 = vmatprep.subr.bf16.mxu0 %v2031
        %3219 = vmatpush1.bf16.msra.mxu0 %v2030
        %3220 = vmatprep.subr.bf16.mxu0 %v2019
        %3221 = vmatpush1.bf16.msra.mxu0 %v2018
        %3222 = vmatprep.subr.bf16.mxu0 %v2007
        %3223 = vmatpush1.bf16.msra.mxu0 %v2006
        %3224 = vmatprep.subr.bf16.mxu0 %v1995
        %3225 = vmatpush1.bf16.msra.mxu0 %v1994
        %3226 = vmatprep.subr.bf16.mxu0 %v2175
        %3227 = vmatpush2.bf16.msra.mxu0 %v2174
        %3228 = vmatprep.subr.bf16.mxu0 %v2163
        %3229 = vmatpush2.bf16.msra.mxu0 %v2162
        %3230 = vmatprep.subr.bf16.mxu0 %v2151
        %3231 = vmatpush2.bf16.msra.mxu0 %v2150
        %3232 = vmatprep.subr.bf16.mxu0 %v2139
        %3233 = vmatpush2.bf16.msra.mxu0 %v2138
        %3234 = vmatprep.subr.bf16.mxu0 %v2127
        %3235 = vmatpush2.bf16.msra.mxu0 %v2126
        %3236 = vmatprep.subr.bf16.mxu0 %v2115
        %3237 = vmatpush2.bf16.msra.mxu0 %v2114
        %3238 = vmatprep.subr.bf16.mxu0 %v2103
        %3239 = vmatpush2.bf16.msra.mxu0 %v2102
        %3240 = vmatprep.subr.bf16.mxu0 %v2091
        %3241 = vmatpush2.bf16.msra.mxu0 %v2090
        %3242 = vmatprep.mubr.bf16.mxu0 %v775
        %3243 = vmatmul.mubr.bf16.gmra.mxu0 %v774
        %v3244 = vpop.f32.mrf.mxu0
        %v3245 = vadd.f32 0.0, %v3244
        %v3246 = vpop.f32.mrf.mxu0
        %v3247 = vadd.f32 0.0, %v3246
        %v3248 = vpop.f32.mrf.mxu0
        %v3249 = vadd.f32 0.0, %v3248
        %v3250 = vpop.f32.mrf.mxu0
        %v3251 = vadd.f32 0.0, %v3250
        %3252 = vmatprep.mubr.bf16.mxu0 %v779
        %3253 = vmatmul.mubr.bf16.gmra.mxu0 %v778
        %v3254 = vpop.f32.mrf.mxu0
        %v3255 = vadd.f32 0.0, %v3254
        %v3256 = vpop.f32.mrf.mxu0
        %v3257 = vadd.f32 0.0, %v3256
        %v3258 = vpop.f32.mrf.mxu0
        %v3259 = vadd.f32 0.0, %v3258
        %v3260 = vpop.f32.mrf.mxu0
        %v3261 = vadd.f32 0.0, %v3260
        %3262 = vmatprep.mubr.bf16.mxu0 %v783
        %3263 = vmatmul.mubr.bf16.gmra.mxu0 %v782
        %v3264 = vpop.f32.mrf.mxu0
        %v3265 = vadd.f32 0.0, %v3264
        %v3266 = vpop.f32.mrf.mxu0
        %v3267 = vadd.f32 0.0, %v3266
        %v3268 = vpop.f32.mrf.mxu0
        %v3269 = vadd.f32 0.0, %v3268
        %v3270 = vpop.f32.mrf.mxu0
        %v3271 = vadd.f32 0.0, %v3270
        %3272 = vmatprep.mubr.bf16.mxu0 %v787
        %3273 = vmatmul.mubr.bf16.gmra.mxu0 %v786
        %v3274 = vpop.f32.mrf.mxu0
        %v3275 = vadd.f32 0.0, %v3274
        %v3276 = vpop.f32.mrf.mxu0
        %v3277 = vadd.f32 0.0, %v3276
        %v3278 = vpop.f32.mrf.mxu0
        %v3279 = vadd.f32 0.0, %v3278
        %v3280 = vpop.f32.mrf.mxu0
        %v3281 = vadd.f32 0.0, %v3280
        %3282 = vmatprep.mubr.bf16.mxu0 %v791
        %3283 = vmatmul.mubr.bf16.gmra.mxu0 %v790
        %v3284 = vpop.f32.mrf.mxu0
        %v3285 = vadd.f32 0.0, %v3284
        %v3286 = vpop.f32.mrf.mxu0
        %v3287 = vadd.f32 0.0, %v3286
        %v3288 = vpop.f32.mrf.mxu0
        %v3289 = vadd.f32 0.0, %v3288
        %v3290 = vpop.f32.mrf.mxu0
        %v3291 = vadd.f32 0.0, %v3290
        %3292 = vmatprep.mubr.bf16.mxu0 %v795
        %3293 = vmatmul.mubr.bf16.gmra.mxu0 %v794
        %v3294 = vpop.f32.mrf.mxu0
        %v3295 = vadd.f32 0.0, %v3294
        %v3296 = vpop.f32.mrf.mxu0
        %v3297 = vadd.f32 0.0, %v3296
        %v3298 = vpop.f32.mrf.mxu0
        %v3299 = vadd.f32 0.0, %v3298
        %v3300 = vpop.f32.mrf.mxu0
        %v3301 = vadd.f32 0.0, %v3300
        %3302 = vmatprep.mubr.bf16.mxu0 %v799
        %3303 = vmatmul.mubr.bf16.gmra.mxu0 %v798
        %v3304 = vpop.f32.mrf.mxu0
        %v3305 = vadd.f32 0.0, %v3304
        %v3306 = vpop.f32.mrf.mxu0
        %v3307 = vadd.f32 0.0, %v3306
        %v3308 = vpop.f32.mrf.mxu0
        %v3309 = vadd.f32 0.0, %v3308
        %v3310 = vpop.f32.mrf.mxu0
        %v3311 = vadd.f32 0.0, %v3310
        %3312 = vmatprep.mubr.bf16.mxu0 %v803
        %3313 = vmatmul.mubr.bf16.gmra.mxu0 %v802
        %v3314 = vpop.f32.mrf.mxu0
        %v3315 = vadd.f32 0.0, %v3314
        %v3316 = vpop.f32.mrf.mxu0
        %v3317 = vadd.f32 0.0, %v3316
        %v3318 = vpop.f32.mrf.mxu0
        %v3319 = vadd.f32 0.0, %v3318
        %v3320 = vpop.f32.mrf.mxu0
        %v3321 = vadd.f32 0.0, %v3320
        %3322 = vdwg.mxu0
        %3323 = vmatprep.subr.bf16.mxu0 %v2271
        %3324 = vmatpush1.bf16.msra.mxu0 %v2270
        %3325 = vmatprep.subr.bf16.mxu0 %v2259
        %3326 = vmatpush1.bf16.msra.mxu0 %v2258
        %3327 = vmatprep.subr.bf16.mxu0 %v2247
        %3328 = vmatpush1.bf16.msra.mxu0 %v2246
        %3329 = vmatprep.subr.bf16.mxu0 %v2235
        %3330 = vmatpush1.bf16.msra.mxu0 %v2234
        %3331 = vmatprep.subr.bf16.mxu0 %v2223
        %3332 = vmatpush1.bf16.msra.mxu0 %v2222
        %3333 = vmatprep.subr.bf16.mxu0 %v2211
        %3334 = vmatpush1.bf16.msra.mxu0 %v2210
        %3335 = vmatprep.subr.bf16.mxu0 %v2199
        %3336 = vmatpush1.bf16.msra.mxu0 %v2198
        %3337 = vmatprep.subr.bf16.mxu0 %v2187
        %3338 = vmatpush1.bf16.msra.mxu0 %v2186
        %3339 = vmatprep.subr.bf16.mxu0 %v2367
        %3340 = vmatpush2.bf16.msra.mxu0 %v2366
        %3341 = vmatprep.subr.bf16.mxu0 %v2355
        %3342 = vmatpush2.bf16.msra.mxu0 %v2354
        %3343 = vmatprep.subr.bf16.mxu0 %v2343
        %3344 = vmatpush2.bf16.msra.mxu0 %v2342
        %3345 = vmatprep.subr.bf16.mxu0 %v2331
        %3346 = vmatpush2.bf16.msra.mxu0 %v2330
        %3347 = vmatprep.subr.bf16.mxu0 %v2319
        %3348 = vmatpush2.bf16.msra.mxu0 %v2318
        %3349 = vmatprep.subr.bf16.mxu0 %v2307
        %3350 = vmatpush2.bf16.msra.mxu0 %v2306
        %3351 = vmatprep.subr.bf16.mxu0 %v2295
        %3352 = vmatpush2.bf16.msra.mxu0 %v2294
        %3353 = vmatprep.subr.bf16.mxu0 %v2283
        %3354 = vmatpush2.bf16.msra.mxu0 %v2282
        %3355 = vmatprep.mubr.bf16.mxu0 %v777
        %3356 = vmatmul.mubr.bf16.gmra.mxu0 %v776
        %v3357 = vpop.f32.mrf.mxu0
        %v3358 = vadd.f32 %v3245, %v3357
        %v3359 = vpop.f32.mrf.mxu0
        %v3360 = vadd.f32 %v3247, %v3359
        %v3361 = vpop.f32.mrf.mxu0
        %v3362 = vadd.f32 %v3249, %v3361
        %v3363 = vpop.f32.mrf.mxu0
        %v3364 = vadd.f32 %v3251, %v3363
        %3365 = vmatprep.mubr.bf16.mxu0 %v781
        %3366 = vmatmul.mubr.bf16.gmra.mxu0 %v780
        %v3367 = vpop.f32.mrf.mxu0
        %v3368 = vadd.f32 %v3255, %v3367
        %v3369 = vpop.f32.mrf.mxu0
        %v3370 = vadd.f32 %v3257, %v3369
        %v3371 = vpop.f32.mrf.mxu0
        %v3372 = vadd.f32 %v3259, %v3371
        %v3373 = vpop.f32.mrf.mxu0
        %v3374 = vadd.f32 %v3261, %v3373
        %3375 = vmatprep.mubr.bf16.mxu0 %v785
        %3376 = vmatmul.mubr.bf16.gmra.mxu0 %v784
        %v3377 = vpop.f32.mrf.mxu0
        %v3378 = vadd.f32 %v3265, %v3377
        %v3379 = vpop.f32.mrf.mxu0
        %v3380 = vadd.f32 %v3267, %v3379
        %v3381 = vpop.f32.mrf.mxu0
        %v3382 = vadd.f32 %v3269, %v3381
        %v3383 = vpop.f32.mrf.mxu0
        %v3384 = vadd.f32 %v3271, %v3383
        %3385 = vmatprep.mubr.bf16.mxu0 %v789
        %3386 = vmatmul.mubr.bf16.gmra.mxu0 %v788
        %v3387 = vpop.f32.mrf.mxu0
        %v3388 = vadd.f32 %v3275, %v3387
        %v3389 = vpop.f32.mrf.mxu0
        %v3390 = vadd.f32 %v3277, %v3389
        %v3391 = vpop.f32.mrf.mxu0
        %v3392 = vadd.f32 %v3279, %v3391
        %v3393 = vpop.f32.mrf.mxu0
        %v3394 = vadd.f32 %v3281, %v3393
        %3395 = vmatprep.mubr.bf16.mxu0 %v793
        %3396 = vmatmul.mubr.bf16.gmra.mxu0 %v792
        %v3397 = vpop.f32.mrf.mxu0
        %v3398 = vadd.f32 %v3285, %v3397
        %v3399 = vpop.f32.mrf.mxu0
        %v3400 = vadd.f32 %v3287, %v3399
        %v3401 = vpop.f32.mrf.mxu0
        %v3402 = vadd.f32 %v3289, %v3401
        %v3403 = vpop.f32.mrf.mxu0
        %v3404 = vadd.f32 %v3291, %v3403
        %3405 = vmatprep.mubr.bf16.mxu0 %v797
        %3406 = vmatmul.mubr.bf16.gmra.mxu0 %v796
        %v3407 = vpop.f32.mrf.mxu0
        %v3408 = vadd.f32 %v3295, %v3407
        %v3409 = vpop.f32.mrf.mxu0
        %v3410 = vadd.f32 %v3297, %v3409
        %v3411 = vpop.f32.mrf.mxu0
        %v3412 = vadd.f32 %v3299, %v3411
        %v3413 = vpop.f32.mrf.mxu0
        %v3414 = vadd.f32 %v3301, %v3413
        %3415 = vmatprep.mubr.bf16.mxu0 %v801
        %3416 = vmatmul.mubr.bf16.gmra.mxu0 %v800
        %v3417 = vpop.f32.mrf.mxu0
        %v3418 = vadd.f32 %v3305, %v3417
        %v3419 = vpop.f32.mrf.mxu0
        %v3420 = vadd.f32 %v3307, %v3419
        %v3421 = vpop.f32.mrf.mxu0
        %v3422 = vadd.f32 %v3309, %v3421
        %v3423 = vpop.f32.mrf.mxu0
        %v3424 = vadd.f32 %v3311, %v3423
        %3425 = vmatprep.mubr.bf16.mxu0 %v805
        %3426 = vmatmul.mubr.bf16.gmra.mxu0 %v804
        %v3427 = vpop.f32.mrf.mxu0
        %v3428 = vadd.f32 %v3315, %v3427
        %v3429 = vpop.f32.mrf.mxu0
        %v3430 = vadd.f32 %v3317, %v3429
        %v3431 = vpop.f32.mrf.mxu0
        %v3432 = vadd.f32 %v3319, %v3431
        %v3433 = vpop.f32.mrf.mxu0
        %v3434 = vadd.f32 %v3321, %v3433
        %3435 = vdwg.mxu0
        %3436 = vmatprep.subr.bf16.mxu0 %v2081
        %3437 = vmatpush1.bf16.msra.mxu0 %v2080
        %3438 = vmatprep.subr.bf16.mxu0 %v2069
        %3439 = vmatpush1.bf16.msra.mxu0 %v2068
        %3440 = vmatprep.subr.bf16.mxu0 %v2057
        %3441 = vmatpush1.bf16.msra.mxu0 %v2056
        %3442 = vmatprep.subr.bf16.mxu0 %v2045
        %3443 = vmatpush1.bf16.msra.mxu0 %v2044
        %3444 = vmatprep.subr.bf16.mxu0 %v2033
        %3445 = vmatpush1.bf16.msra.mxu0 %v2032
        %3446 = vmatprep.subr.bf16.mxu0 %v2021
        %3447 = vmatpush1.bf16.msra.mxu0 %v2020
        %3448 = vmatprep.subr.bf16.mxu0 %v2009
        %3449 = vmatpush1.bf16.msra.mxu0 %v2008
        %3450 = vmatprep.subr.bf16.mxu0 %v1997
        %3451 = vmatpush1.bf16.msra.mxu0 %v1996
        %3452 = vmatprep.subr.bf16.mxu0 %v2177
        %3453 = vmatpush2.bf16.msra.mxu0 %v2176
        %3454 = vmatprep.subr.bf16.mxu0 %v2165
        %3455 = vmatpush2.bf16.msra.mxu0 %v2164
        %3456 = vmatprep.subr.bf16.mxu0 %v2153
        %3457 = vmatpush2.bf16.msra.mxu0 %v2152
        %3458 = vmatprep.subr.bf16.mxu0 %v2141
        %3459 = vmatpush2.bf16.msra.mxu0 %v2140
        %3460 = vmatprep.subr.bf16.mxu0 %v2129
        %3461 = vmatpush2.bf16.msra.mxu0 %v2128
        %3462 = vmatprep.subr.bf16.mxu0 %v2117
        %3463 = vmatpush2.bf16.msra.mxu0 %v2116
        %3464 = vmatprep.subr.bf16.mxu0 %v2105
        %3465 = vmatpush2.bf16.msra.mxu0 %v2104
        %3466 = vmatprep.subr.bf16.mxu0 %v2093
        %3467 = vmatpush2.bf16.msra.mxu0 %v2092
        %3468 = vmatprep.mubr.bf16.mxu0 %v775
        %3469 = vmatmul.mubr.bf16.gmra.mxu0 %v774
        %v3470 = vpop.f32.mrf.mxu0
        %v3471 = vadd.f32 0.0, %v3470
        %v3472 = vpop.f32.mrf.mxu0
        %v3473 = vadd.f32 0.0, %v3472
        %v3474 = vpop.f32.mrf.mxu0
        %v3475 = vadd.f32 0.0, %v3474
        %v3476 = vpop.f32.mrf.mxu0
        %v3477 = vadd.f32 0.0, %v3476
        %3478 = vmatprep.mubr.bf16.mxu0 %v779
        %3479 = vmatmul.mubr.bf16.gmra.mxu0 %v778
        %v3480 = vpop.f32.mrf.mxu0
        %v3481 = vadd.f32 0.0, %v3480
        %v3482 = vpop.f32.mrf.mxu0
        %v3483 = vadd.f32 0.0, %v3482
        %v3484 = vpop.f32.mrf.mxu0
        %v3485 = vadd.f32 0.0, %v3484
        %v3486 = vpop.f32.mrf.mxu0
        %v3487 = vadd.f32 0.0, %v3486
        %3488 = vmatprep.mubr.bf16.mxu0 %v783
        %3489 = vmatmul.mubr.bf16.gmra.mxu0 %v782
        %v3490 = vpop.f32.mrf.mxu0
        %v3491 = vadd.f32 0.0, %v3490
        %v3492 = vpop.f32.mrf.mxu0
        %v3493 = vadd.f32 0.0, %v3492
        %v3494 = vpop.f32.mrf.mxu0
        %v3495 = vadd.f32 0.0, %v3494
        %v3496 = vpop.f32.mrf.mxu0
        %v3497 = vadd.f32 0.0, %v3496
        %3498 = vmatprep.mubr.bf16.mxu0 %v787
        %3499 = vmatmul.mubr.bf16.gmra.mxu0 %v786
        %v3500 = vpop.f32.mrf.mxu0
        %v3501 = vadd.f32 0.0, %v3500
        %v3502 = vpop.f32.mrf.mxu0
        %v3503 = vadd.f32 0.0, %v3502
        %v3504 = vpop.f32.mrf.mxu0
        %v3505 = vadd.f32 0.0, %v3504
        %v3506 = vpop.f32.mrf.mxu0
        %v3507 = vadd.f32 0.0, %v3506
        %3508 = vmatprep.mubr.bf16.mxu0 %v791
        %3509 = vmatmul.mubr.bf16.gmra.mxu0 %v790
        %v3510 = vpop.f32.mrf.mxu0
        %v3511 = vadd.f32 0.0, %v3510
        %v3512 = vpop.f32.mrf.mxu0
        %v3513 = vadd.f32 0.0, %v3512
        %v3514 = vpop.f32.mrf.mxu0
        %v3515 = vadd.f32 0.0, %v3514
        %v3516 = vpop.f32.mrf.mxu0
        %v3517 = vadd.f32 0.0, %v3516
        %3518 = vmatprep.mubr.bf16.mxu0 %v795
        %3519 = vmatmul.mubr.bf16.gmra.mxu0 %v794
        %v3520 = vpop.f32.mrf.mxu0
        %v3521 = vadd.f32 0.0, %v3520
        %v3522 = vpop.f32.mrf.mxu0
        %v3523 = vadd.f32 0.0, %v3522
        %v3524 = vpop.f32.mrf.mxu0
        %v3525 = vadd.f32 0.0, %v3524
        %v3526 = vpop.f32.mrf.mxu0
        %v3527 = vadd.f32 0.0, %v3526
        %3528 = vmatprep.mubr.bf16.mxu0 %v799
        %3529 = vmatmul.mubr.bf16.gmra.mxu0 %v798
        %v3530 = vpop.f32.mrf.mxu0
        %v3531 = vadd.f32 0.0, %v3530
        %v3532 = vpop.f32.mrf.mxu0
        %v3533 = vadd.f32 0.0, %v3532
        %v3534 = vpop.f32.mrf.mxu0
        %v3535 = vadd.f32 0.0, %v3534
        %v3536 = vpop.f32.mrf.mxu0
        %v3537 = vadd.f32 0.0, %v3536
        %3538 = vmatprep.mubr.bf16.mxu0 %v803
        %3539 = vmatmul.mubr.bf16.gmra.mxu0 %v802
        %v3540 = vpop.f32.mrf.mxu0
        %v3541 = vadd.f32 0.0, %v3540
        %v3542 = vpop.f32.mrf.mxu0
        %v3543 = vadd.f32 0.0, %v3542
        %v3544 = vpop.f32.mrf.mxu0
        %v3545 = vadd.f32 0.0, %v3544
        %v3546 = vpop.f32.mrf.mxu0
        %v3547 = vadd.f32 0.0, %v3546
        %3548 = vdwg.mxu0
        %3549 = vmatprep.subr.bf16.mxu0 %v2273
        %3550 = vmatpush1.bf16.msra.mxu0 %v2272
        %3551 = vmatprep.subr.bf16.mxu0 %v2261
        %3552 = vmatpush1.bf16.msra.mxu0 %v2260
        %3553 = vmatprep.subr.bf16.mxu0 %v2249
        %3554 = vmatpush1.bf16.msra.mxu0 %v2248
        %3555 = vmatprep.subr.bf16.mxu0 %v2237
        %3556 = vmatpush1.bf16.msra.mxu0 %v2236
        %3557 = vmatprep.subr.bf16.mxu0 %v2225
        %3558 = vmatpush1.bf16.msra.mxu0 %v2224
        %3559 = vmatprep.subr.bf16.mxu0 %v2213
        %3560 = vmatpush1.bf16.msra.mxu0 %v2212
        %3561 = vmatprep.subr.bf16.mxu0 %v2201
        %3562 = vmatpush1.bf16.msra.mxu0 %v2200
        %3563 = vmatprep.subr.bf16.mxu0 %v2189
        %3564 = vmatpush1.bf16.msra.mxu0 %v2188
        %3565 = vmatprep.subr.bf16.mxu0 %v2369
        %3566 = vmatpush2.bf16.msra.mxu0 %v2368
        %3567 = vmatprep.subr.bf16.mxu0 %v2357
        %3568 = vmatpush2.bf16.msra.mxu0 %v2356
        %3569 = vmatprep.subr.bf16.mxu0 %v2345
        %3570 = vmatpush2.bf16.msra.mxu0 %v2344
        %3571 = vmatprep.subr.bf16.mxu0 %v2333
        %3572 = vmatpush2.bf16.msra.mxu0 %v2332
        %3573 = vmatprep.subr.bf16.mxu0 %v2321
        %3574 = vmatpush2.bf16.msra.mxu0 %v2320
        %3575 = vmatprep.subr.bf16.mxu0 %v2309
        %3576 = vmatpush2.bf16.msra.mxu0 %v2308
        %3577 = vmatprep.subr.bf16.mxu0 %v2297
        %3578 = vmatpush2.bf16.msra.mxu0 %v2296
        %3579 = vmatprep.subr.bf16.mxu0 %v2285
        %3580 = vmatpush2.bf16.msra.mxu0 %v2284
        %3581 = vmatprep.mubr.bf16.mxu0 %v777
        %3582 = vmatmul.mubr.bf16.gmra.mxu0 %v776
        %v3583 = vpop.f32.mrf.mxu0
        %v3584 = vadd.f32 %v3471, %v3583
        %v3585 = vpop.f32.mrf.mxu0
        %v3586 = vadd.f32 %v3473, %v3585
        %v3587 = vpop.f32.mrf.mxu0
        %v3588 = vadd.f32 %v3475, %v3587
        %v3589 = vpop.f32.mrf.mxu0
        %v3590 = vadd.f32 %v3477, %v3589
        %3591 = vmatprep.mubr.bf16.mxu0 %v781
        %3592 = vmatmul.mubr.bf16.gmra.mxu0 %v780
        %v3593 = vpop.f32.mrf.mxu0
        %v3594 = vadd.f32 %v3481, %v3593
        %v3595 = vpop.f32.mrf.mxu0
        %v3596 = vadd.f32 %v3483, %v3595
        %v3597 = vpop.f32.mrf.mxu0
        %v3598 = vadd.f32 %v3485, %v3597
        %v3599 = vpop.f32.mrf.mxu0
        %v3600 = vadd.f32 %v3487, %v3599
        %3601 = vmatprep.mubr.bf16.mxu0 %v785
        %3602 = vmatmul.mubr.bf16.gmra.mxu0 %v784
        %v3603 = vpop.f32.mrf.mxu0
        %v3604 = vadd.f32 %v3491, %v3603
        %v3605 = vpop.f32.mrf.mxu0
        %v3606 = vadd.f32 %v3493, %v3605
        %v3607 = vpop.f32.mrf.mxu0
        %v3608 = vadd.f32 %v3495, %v3607
        %v3609 = vpop.f32.mrf.mxu0
        %v3610 = vadd.f32 %v3497, %v3609
        %3611 = vmatprep.mubr.bf16.mxu0 %v789
        %3612 = vmatmul.mubr.bf16.gmra.mxu0 %v788
        %v3613 = vpop.f32.mrf.mxu0
        %v3614 = vadd.f32 %v3501, %v3613
        %v3615 = vpop.f32.mrf.mxu0
        %v3616 = vadd.f32 %v3503, %v3615
        %v3617 = vpop.f32.mrf.mxu0
        %v3618 = vadd.f32 %v3505, %v3617
        %v3619 = vpop.f32.mrf.mxu0
        %v3620 = vadd.f32 %v3507, %v3619
        %3621 = vmatprep.mubr.bf16.mxu0 %v793
        %3622 = vmatmul.mubr.bf16.gmra.mxu0 %v792
        %v3623 = vpop.f32.mrf.mxu0
        %v3624 = vadd.f32 %v3511, %v3623
        %v3625 = vpop.f32.mrf.mxu0
        %v3626 = vadd.f32 %v3513, %v3625
        %v3627 = vpop.f32.mrf.mxu0
        %v3628 = vadd.f32 %v3515, %v3627
        %v3629 = vpop.f32.mrf.mxu0
        %v3630 = vadd.f32 %v3517, %v3629
        %3631 = vmatprep.mubr.bf16.mxu0 %v797
        %3632 = vmatmul.mubr.bf16.gmra.mxu0 %v796
        %v3633 = vpop.f32.mrf.mxu0
        %v3634 = vadd.f32 %v3521, %v3633
        %v3635 = vpop.f32.mrf.mxu0
        %v3636 = vadd.f32 %v3523, %v3635
        %v3637 = vpop.f32.mrf.mxu0
        %v3638 = vadd.f32 %v3525, %v3637
        %v3639 = vpop.f32.mrf.mxu0
        %v3640 = vadd.f32 %v3527, %v3639
        %3641 = vmatprep.mubr.bf16.mxu0 %v801
        %3642 = vmatmul.mubr.bf16.gmra.mxu0 %v800
        %v3643 = vpop.f32.mrf.mxu0
        %v3644 = vadd.f32 %v3531, %v3643
        %v3645 = vpop.f32.mrf.mxu0
        %v3646 = vadd.f32 %v3533, %v3645
        %v3647 = vpop.f32.mrf.mxu0
        %v3648 = vadd.f32 %v3535, %v3647
        %v3649 = vpop.f32.mrf.mxu0
        %v3650 = vadd.f32 %v3537, %v3649
        %3651 = vmatprep.mubr.bf16.mxu0 %v805
        %3652 = vmatmul.mubr.bf16.gmra.mxu0 %v804
        %v3653 = vpop.f32.mrf.mxu0
        %v3654 = vadd.f32 %v3541, %v3653
        %v3655 = vpop.f32.mrf.mxu0
        %v3656 = vadd.f32 %v3543, %v3655
        %v3657 = vpop.f32.mrf.mxu0
        %v3658 = vadd.f32 %v3545, %v3657
        %v3659 = vpop.f32.mrf.mxu0
        %v3660 = vadd.f32 %v3547, %v3659
        %3661 = vdwg.mxu0
        %3662 = vmatprep.subr.bf16.mxu0 %v2083
        %3663 = vmatpush1.bf16.msra.mxu0 %v2082
        %3664 = vmatprep.subr.bf16.mxu0 %v2071
        %3665 = vmatpush1.bf16.msra.mxu0 %v2070
        %3666 = vmatprep.subr.bf16.mxu0 %v2059
        %3667 = vmatpush1.bf16.msra.mxu0 %v2058
        %3668 = vmatprep.subr.bf16.mxu0 %v2047
        %3669 = vmatpush1.bf16.msra.mxu0 %v2046
        %3670 = vmatprep.subr.bf16.mxu0 %v2035
        %3671 = vmatpush1.bf16.msra.mxu0 %v2034
        %3672 = vmatprep.subr.bf16.mxu0 %v2023
        %3673 = vmatpush1.bf16.msra.mxu0 %v2022
        %3674 = vmatprep.subr.bf16.mxu0 %v2011
        %3675 = vmatpush1.bf16.msra.mxu0 %v2010
        %3676 = vmatprep.subr.bf16.mxu0 %v1999
        %3677 = vmatpush1.bf16.msra.mxu0 %v1998
        %3678 = vmatprep.subr.bf16.mxu0 %v2179
        %3679 = vmatpush2.bf16.msra.mxu0 %v2178
        %3680 = vmatprep.subr.bf16.mxu0 %v2167
        %3681 = vmatpush2.bf16.msra.mxu0 %v2166
        %3682 = vmatprep.subr.bf16.mxu0 %v2155
        %3683 = vmatpush2.bf16.msra.mxu0 %v2154
        %3684 = vmatprep.subr.bf16.mxu0 %v2143
        %3685 = vmatpush2.bf16.msra.mxu0 %v2142
        %3686 = vmatprep.subr.bf16.mxu0 %v2131
        %3687 = vmatpush2.bf16.msra.mxu0 %v2130
        %3688 = vmatprep.subr.bf16.mxu0 %v2119
        %3689 = vmatpush2.bf16.msra.mxu0 %v2118
        %3690 = vmatprep.subr.bf16.mxu0 %v2107
        %3691 = vmatpush2.bf16.msra.mxu0 %v2106
        %3692 = vmatprep.subr.bf16.mxu0 %v2095
        %3693 = vmatpush2.bf16.msra.mxu0 %v2094
        %3694 = vmatprep.mubr.bf16.mxu0 %v775
        %3695 = vmatmul.mubr.bf16.gmra.mxu0 %v774
        %v3696 = vpop.f32.mrf.mxu0
        %v3697 = vadd.f32 0.0, %v3696
        %v3698 = vpop.f32.mrf.mxu0
        %v3699 = vadd.f32 0.0, %v3698
        %v3700 = vpop.f32.mrf.mxu0
        %v3701 = vadd.f32 0.0, %v3700
        %v3702 = vpop.f32.mrf.mxu0
        %v3703 = vadd.f32 0.0, %v3702
        %3704 = vmatprep.mubr.bf16.mxu0 %v779
        %3705 = vmatmul.mubr.bf16.gmra.mxu0 %v778
        %v3706 = vpop.f32.mrf.mxu0
        %v3707 = vadd.f32 0.0, %v3706
        %v3708 = vpop.f32.mrf.mxu0
        %v3709 = vadd.f32 0.0, %v3708
        %v3710 = vpop.f32.mrf.mxu0
        %v3711 = vadd.f32 0.0, %v3710
        %v3712 = vpop.f32.mrf.mxu0
        %v3713 = vadd.f32 0.0, %v3712
        %3714 = vmatprep.mubr.bf16.mxu0 %v783
        %3715 = vmatmul.mubr.bf16.gmra.mxu0 %v782
        %v3716 = vpop.f32.mrf.mxu0
        %v3717 = vadd.f32 0.0, %v3716
        %v3718 = vpop.f32.mrf.mxu0
        %v3719 = vadd.f32 0.0, %v3718
        %v3720 = vpop.f32.mrf.mxu0
        %v3721 = vadd.f32 0.0, %v3720
        %v3722 = vpop.f32.mrf.mxu0
        %v3723 = vadd.f32 0.0, %v3722
        %3724 = vmatprep.mubr.bf16.mxu0 %v787
        %3725 = vmatmul.mubr.bf16.gmra.mxu0 %v786
        %v3726 = vpop.f32.mrf.mxu0
        %v3727 = vadd.f32 0.0, %v3726
        %v3728 = vpop.f32.mrf.mxu0
        %v3729 = vadd.f32 0.0, %v3728
        %v3730 = vpop.f32.mrf.mxu0
        %v3731 = vadd.f32 0.0, %v3730
        %v3732 = vpop.f32.mrf.mxu0
        %v3733 = vadd.f32 0.0, %v3732
        %3734 = vmatprep.mubr.bf16.mxu0 %v791
        %3735 = vmatmul.mubr.bf16.gmra.mxu0 %v790
        %v3736 = vpop.f32.mrf.mxu0
        %v3737 = vadd.f32 0.0, %v3736
        %v3738 = vpop.f32.mrf.mxu0
        %v3739 = vadd.f32 0.0, %v3738
        %v3740 = vpop.f32.mrf.mxu0
        %v3741 = vadd.f32 0.0, %v3740
        %v3742 = vpop.f32.mrf.mxu0
        %v3743 = vadd.f32 0.0, %v3742
        %3744 = vmatprep.mubr.bf16.mxu0 %v795
        %3745 = vmatmul.mubr.bf16.gmra.mxu0 %v794
        %v3746 = vpop.f32.mrf.mxu0
        %v3747 = vadd.f32 0.0, %v3746
        %v3748 = vpop.f32.mrf.mxu0
        %v3749 = vadd.f32 0.0, %v3748
        %v3750 = vpop.f32.mrf.mxu0
        %v3751 = vadd.f32 0.0, %v3750
        %v3752 = vpop.f32.mrf.mxu0
        %v3753 = vadd.f32 0.0, %v3752
        %3754 = vmatprep.mubr.bf16.mxu0 %v799
        %3755 = vmatmul.mubr.bf16.gmra.mxu0 %v798
        %v3756 = vpop.f32.mrf.mxu0
        %v3757 = vadd.f32 0.0, %v3756
        %v3758 = vpop.f32.mrf.mxu0
        %v3759 = vadd.f32 0.0, %v3758
        %v3760 = vpop.f32.mrf.mxu0
        %v3761 = vadd.f32 0.0, %v3760
        %v3762 = vpop.f32.mrf.mxu0
        %v3763 = vadd.f32 0.0, %v3762
        %3764 = vmatprep.mubr.bf16.mxu0 %v803
        %3765 = vmatmul.mubr.bf16.gmra.mxu0 %v802
        %v3766 = vpop.f32.mrf.mxu0
        %v3767 = vadd.f32 0.0, %v3766
        %v3768 = vpop.f32.mrf.mxu0
        %v3769 = vadd.f32 0.0, %v3768
        %v3770 = vpop.f32.mrf.mxu0
        %v3771 = vadd.f32 0.0, %v3770
        %v3772 = vpop.f32.mrf.mxu0
        %v3773 = vadd.f32 0.0, %v3772
        %3774 = vdwg.mxu0
        %3775 = vmatprep.subr.bf16.mxu0 %v2275
        %3776 = vmatpush1.bf16.msra.mxu0 %v2274
        %3777 = vmatprep.subr.bf16.mxu0 %v2263
        %3778 = vmatpush1.bf16.msra.mxu0 %v2262
        %3779 = vmatprep.subr.bf16.mxu0 %v2251
        %3780 = vmatpush1.bf16.msra.mxu0 %v2250
        %3781 = vmatprep.subr.bf16.mxu0 %v2239
        %3782 = vmatpush1.bf16.msra.mxu0 %v2238
        %3783 = vmatprep.subr.bf16.mxu0 %v2227
        %3784 = vmatpush1.bf16.msra.mxu0 %v2226
        %3785 = vmatprep.subr.bf16.mxu0 %v2215
        %3786 = vmatpush1.bf16.msra.mxu0 %v2214
        %3787 = vmatprep.subr.bf16.mxu0 %v2203
        %3788 = vmatpush1.bf16.msra.mxu0 %v2202
        %3789 = vmatprep.subr.bf16.mxu0 %v2191
        %3790 = vmatpush1.bf16.msra.mxu0 %v2190
        %3791 = vmatprep.subr.bf16.mxu0 %v2371
        %3792 = vmatpush2.bf16.msra.mxu0 %v2370
        %3793 = vmatprep.subr.bf16.mxu0 %v2359
        %3794 = vmatpush2.bf16.msra.mxu0 %v2358
        %3795 = vmatprep.subr.bf16.mxu0 %v2347
        %3796 = vmatpush2.bf16.msra.mxu0 %v2346
        %3797 = vmatprep.subr.bf16.mxu0 %v2335
        %3798 = vmatpush2.bf16.msra.mxu0 %v2334
        %3799 = vmatprep.subr.bf16.mxu0 %v2323
        %3800 = vmatpush2.bf16.msra.mxu0 %v2322
        %3801 = vmatprep.subr.bf16.mxu0 %v2311
        %3802 = vmatpush2.bf16.msra.mxu0 %v2310
        %3803 = vmatprep.subr.bf16.mxu0 %v2299
        %3804 = vmatpush2.bf16.msra.mxu0 %v2298
        %3805 = vmatprep.subr.bf16.mxu0 %v2287
        %3806 = vmatpush2.bf16.msra.mxu0 %v2286
        %3807 = vmatprep.mubr.bf16.mxu0 %v777
        %3808 = vmatmul.mubr.bf16.gmra.mxu0 %v776
        %v3809 = vpop.f32.mrf.mxu0
        %v3810 = vadd.f32 %v3697, %v3809
        %v3811 = vpop.f32.mrf.mxu0
        %v3812 = vadd.f32 %v3699, %v3811
        %v3813 = vpop.f32.mrf.mxu0
        %v3814 = vadd.f32 %v3701, %v3813
        %v3815 = vpop.f32.mrf.mxu0
        %v3816 = vadd.f32 %v3703, %v3815
        %3817 = vmatprep.mubr.bf16.mxu0 %v781
        %3818 = vmatmul.mubr.bf16.gmra.mxu0 %v780
        %v3819 = vpop.f32.mrf.mxu0
        %v3820 = vadd.f32 %v3707, %v3819
        %v3821 = vpop.f32.mrf.mxu0
        %v3822 = vadd.f32 %v3709, %v3821
        %v3823 = vpop.f32.mrf.mxu0
        %v3824 = vadd.f32 %v3711, %v3823
        %v3825 = vpop.f32.mrf.mxu0
        %v3826 = vadd.f32 %v3713, %v3825
        %3827 = vmatprep.mubr.bf16.mxu0 %v785
        %3828 = vmatmul.mubr.bf16.gmra.mxu0 %v784
        %v3829 = vpop.f32.mrf.mxu0
        %v3830 = vadd.f32 %v3717, %v3829
        %v3831 = vpop.f32.mrf.mxu0
        %v3832 = vadd.f32 %v3719, %v3831
        %v3833 = vpop.f32.mrf.mxu0
        %v3834 = vadd.f32 %v3721, %v3833
        %v3835 = vpop.f32.mrf.mxu0
        %v3836 = vadd.f32 %v3723, %v3835
        %3837 = vmatprep.mubr.bf16.mxu0 %v789
        %3838 = vmatmul.mubr.bf16.gmra.mxu0 %v788
        %v3839 = vpop.f32.mrf.mxu0
        %v3840 = vadd.f32 %v3727, %v3839
        %v3841 = vpop.f32.mrf.mxu0
        %v3842 = vadd.f32 %v3729, %v3841
        %v3843 = vpop.f32.mrf.mxu0
        %v3844 = vadd.f32 %v3731, %v3843
        %v3845 = vpop.f32.mrf.mxu0
        %v3846 = vadd.f32 %v3733, %v3845
        %3847 = vmatprep.mubr.bf16.mxu0 %v793
        %3848 = vmatmul.mubr.bf16.gmra.mxu0 %v792
        %v3849 = vpop.f32.mrf.mxu0
        %v3850 = vadd.f32 %v3737, %v3849
        %v3851 = vpop.f32.mrf.mxu0
        %v3852 = vadd.f32 %v3739, %v3851
        %v3853 = vpop.f32.mrf.mxu0
        %v3854 = vadd.f32 %v3741, %v3853
        %v3855 = vpop.f32.mrf.mxu0
        %v3856 = vadd.f32 %v3743, %v3855
        %3857 = vmatprep.mubr.bf16.mxu0 %v797
        %3858 = vmatmul.mubr.bf16.gmra.mxu0 %v796
        %v3859 = vpop.f32.mrf.mxu0
        %v3860 = vadd.f32 %v3747, %v3859
        %v3861 = vpop.f32.mrf.mxu0
        %v3862 = vadd.f32 %v3749, %v3861
        %v3863 = vpop.f32.mrf.mxu0
        %v3864 = vadd.f32 %v3751, %v3863
        %v3865 = vpop.f32.mrf.mxu0
        %v3866 = vadd.f32 %v3753, %v3865
        %3867 = vmatprep.mubr.bf16.mxu0 %v801
        %3868 = vmatmul.mubr.bf16.gmra.mxu0 %v800
        %v3869 = vpop.f32.mrf.mxu0
        %v3870 = vadd.f32 %v3757, %v3869
        %v3871 = vpop.f32.mrf.mxu0
        %v3872 = vadd.f32 %v3759, %v3871
        %v3873 = vpop.f32.mrf.mxu0
        %v3874 = vadd.f32 %v3761, %v3873
        %v3875 = vpop.f32.mrf.mxu0
        %v3876 = vadd.f32 %v3763, %v3875
        %3877 = vmatprep.mubr.bf16.mxu0 %v805
        %3878 = vmatmul.mubr.bf16.gmra.mxu0 %v804
        %v3879 = vpop.f32.mrf.mxu0
        %v3880 = vadd.f32 %v3767, %v3879
        %v3881 = vpop.f32.mrf.mxu0
        %v3882 = vadd.f32 %v3769, %v3881
        %v3883 = vpop.f32.mrf.mxu0
        %v3884 = vadd.f32 %v3771, %v3883
        %v3885 = vpop.f32.mrf.mxu0
        %v3886 = vadd.f32 %v3773, %v3885
        %3887 = vdwg.mxu0
        %3888 = vmatprep.subr.bf16.mxu0 %v2085
        %3889 = vmatpush1.bf16.msra.mxu0 %v2084
        %3890 = vmatprep.subr.bf16.mxu0 %v2073
        %3891 = vmatpush1.bf16.msra.mxu0 %v2072
        %3892 = vmatprep.subr.bf16.mxu0 %v2061
        %3893 = vmatpush1.bf16.msra.mxu0 %v2060
        %3894 = vmatprep.subr.bf16.mxu0 %v2049
        %3895 = vmatpush1.bf16.msra.mxu0 %v2048
        %3896 = vmatprep.subr.bf16.mxu0 %v2037
        %3897 = vmatpush1.bf16.msra.mxu0 %v2036
        %3898 = vmatprep.subr.bf16.mxu0 %v2025
        %3899 = vmatpush1.bf16.msra.mxu0 %v2024
        %3900 = vmatprep.subr.bf16.mxu0 %v2013
        %3901 = vmatpush1.bf16.msra.mxu0 %v2012
        %3902 = vmatprep.subr.bf16.mxu0 %v2001
        %3903 = vmatpush1.bf16.msra.mxu0 %v2000
        %3904 = vmatprep.subr.bf16.mxu0 %v2181
        %3905 = vmatpush2.bf16.msra.mxu0 %v2180
        %3906 = vmatprep.subr.bf16.mxu0 %v2169
        %3907 = vmatpush2.bf16.msra.mxu0 %v2168
        %3908 = vmatprep.subr.bf16.mxu0 %v2157
        %3909 = vmatpush2.bf16.msra.mxu0 %v2156
        %3910 = vmatprep.subr.bf16.mxu0 %v2145
        %3911 = vmatpush2.bf16.msra.mxu0 %v2144
        %3912 = vmatprep.subr.bf16.mxu0 %v2133
        %3913 = vmatpush2.bf16.msra.mxu0 %v2132
        %3914 = vmatprep.subr.bf16.mxu0 %v2121
        %3915 = vmatpush2.bf16.msra.mxu0 %v2120
        %3916 = vmatprep.subr.bf16.mxu0 %v2109
        %3917 = vmatpush2.bf16.msra.mxu0 %v2108
        %3918 = vmatprep.subr.bf16.mxu0 %v2097
        %3919 = vmatpush2.bf16.msra.mxu0 %v2096
        %3920 = vmatprep.mubr.bf16.mxu0 %v775
        %3921 = vmatmul.mubr.bf16.gmra.mxu0 %v774
        %v3922 = vpop.f32.mrf.mxu0
        %v3923 = vadd.f32 0.0, %v3922
        %v3924 = vpop.f32.mrf.mxu0
        %v3925 = vadd.f32 0.0, %v3924
        %v3926 = vpop.f32.mrf.mxu0
        %v3927 = vadd.f32 0.0, %v3926
        %v3928 = vpop.f32.mrf.mxu0
        %v3929 = vadd.f32 0.0, %v3928
        %3930 = vmatprep.mubr.bf16.mxu0 %v779
        %3931 = vmatmul.mubr.bf16.gmra.mxu0 %v778
        %v3932 = vpop.f32.mrf.mxu0
        %v3933 = vadd.f32 0.0, %v3932
        %v3934 = vpop.f32.mrf.mxu0
        %v3935 = vadd.f32 0.0, %v3934
        %v3936 = vpop.f32.mrf.mxu0
        %v3937 = vadd.f32 0.0, %v3936
        %v3938 = vpop.f32.mrf.mxu0
        %v3939 = vadd.f32 0.0, %v3938
        %3940 = vmatprep.mubr.bf16.mxu0 %v783
        %3941 = vmatmul.mubr.bf16.gmra.mxu0 %v782
        %v3942 = vpop.f32.mrf.mxu0
        %v3943 = vadd.f32 0.0, %v3942
        %v3944 = vpop.f32.mrf.mxu0
        %v3945 = vadd.f32 0.0, %v3944
        %v3946 = vpop.f32.mrf.mxu0
        %v3947 = vadd.f32 0.0, %v3946
        %v3948 = vpop.f32.mrf.mxu0
        %v3949 = vadd.f32 0.0, %v3948
        %3950 = vmatprep.mubr.bf16.mxu0 %v787
        %3951 = vmatmul.mubr.bf16.gmra.mxu0 %v786
        %v3952 = vpop.f32.mrf.mxu0
        %v3953 = vadd.f32 0.0, %v3952
        %v3954 = vpop.f32.mrf.mxu0
        %v3955 = vadd.f32 0.0, %v3954
        %v3956 = vpop.f32.mrf.mxu0
        %v3957 = vadd.f32 0.0, %v3956
        %v3958 = vpop.f32.mrf.mxu0
        %v3959 = vadd.f32 0.0, %v3958
        %3960 = vmatprep.mubr.bf16.mxu0 %v791
        %3961 = vmatmul.mubr.bf16.gmra.mxu0 %v790
        %v3962 = vpop.f32.mrf.mxu0
        %v3963 = vadd.f32 0.0, %v3962
        %v3964 = vpop.f32.mrf.mxu0
        %v3965 = vadd.f32 0.0, %v3964
        %v3966 = vpop.f32.mrf.mxu0
        %v3967 = vadd.f32 0.0, %v3966
        %v3968 = vpop.f32.mrf.mxu0
        %v3969 = vadd.f32 0.0, %v3968
        %3970 = vmatprep.mubr.bf16.mxu0 %v795
        %3971 = vmatmul.mubr.bf16.gmra.mxu0 %v794
        %v3972 = vpop.f32.mrf.mxu0
        %v3973 = vadd.f32 0.0, %v3972
        %v3974 = vpop.f32.mrf.mxu0
        %v3975 = vadd.f32 0.0, %v3974
        %v3976 = vpop.f32.mrf.mxu0
        %v3977 = vadd.f32 0.0, %v3976
        %v3978 = vpop.f32.mrf.mxu0
        %v3979 = vadd.f32 0.0, %v3978
        %3980 = vmatprep.mubr.bf16.mxu0 %v799
        %3981 = vmatmul.mubr.bf16.gmra.mxu0 %v798
        %v3982 = vpop.f32.mrf.mxu0
        %v3983 = vadd.f32 0.0, %v3982
        %v3984 = vpop.f32.mrf.mxu0
        %v3985 = vadd.f32 0.0, %v3984
        %v3986 = vpop.f32.mrf.mxu0
        %v3987 = vadd.f32 0.0, %v3986
        %v3988 = vpop.f32.mrf.mxu0
        %v3989 = vadd.f32 0.0, %v3988
        %3990 = vmatprep.mubr.bf16.mxu0 %v803
        %3991 = vmatmul.mubr.bf16.gmra.mxu0 %v802
        %v3992 = vpop.f32.mrf.mxu0
        %v3993 = vadd.f32 0.0, %v3992
        %v3994 = vpop.f32.mrf.mxu0
        %v3995 = vadd.f32 0.0, %v3994
        %v3996 = vpop.f32.mrf.mxu0
        %v3997 = vadd.f32 0.0, %v3996
        %v3998 = vpop.f32.mrf.mxu0
        %v3999 = vadd.f32 0.0, %v3998
        %4000 = vdwg.mxu0
        %4001 = vmatprep.subr.bf16.mxu0 %v2277
        %4002 = vmatpush1.bf16.msra.mxu0 %v2276
        %4003 = vmatprep.subr.bf16.mxu0 %v2265
        %4004 = vmatpush1.bf16.msra.mxu0 %v2264
        %4005 = vmatprep.subr.bf16.mxu0 %v2253
        %4006 = vmatpush1.bf16.msra.mxu0 %v2252
        %4007 = vmatprep.subr.bf16.mxu0 %v2241
        %4008 = vmatpush1.bf16.msra.mxu0 %v2240
        %4009 = vmatprep.subr.bf16.mxu0 %v2229
        %4010 = vmatpush1.bf16.msra.mxu0 %v2228
        %4011 = vmatprep.subr.bf16.mxu0 %v2217
        %4012 = vmatpush1.bf16.msra.mxu0 %v2216
        %4013 = vmatprep.subr.bf16.mxu0 %v2205
        %4014 = vmatpush1.bf16.msra.mxu0 %v2204
        %4015 = vmatprep.subr.bf16.mxu0 %v2193
        %4016 = vmatpush1.bf16.msra.mxu0 %v2192
        %4017 = vmatprep.subr.bf16.mxu0 %v2373
        %4018 = vmatpush2.bf16.msra.mxu0 %v2372
        %4019 = vmatprep.subr.bf16.mxu0 %v2361
        %4020 = vmatpush2.bf16.msra.mxu0 %v2360
        %4021 = vmatprep.subr.bf16.mxu0 %v2349
        %4022 = vmatpush2.bf16.msra.mxu0 %v2348
        %4023 = vmatprep.subr.bf16.mxu0 %v2337
        %4024 = vmatpush2.bf16.msra.mxu0 %v2336
        %4025 = vmatprep.subr.bf16.mxu0 %v2325
        %4026 = vmatpush2.bf16.msra.mxu0 %v2324
        %4027 = vmatprep.subr.bf16.mxu0 %v2313
        %4028 = vmatpush2.bf16.msra.mxu0 %v2312
        %4029 = vmatprep.subr.bf16.mxu0 %v2301
        %4030 = vmatpush2.bf16.msra.mxu0 %v2300
        %4031 = vmatprep.subr.bf16.mxu0 %v2289
        %4032 = vmatpush2.bf16.msra.mxu0 %v2288
        %4033 = vmatprep.mubr.bf16.mxu0 %v777
        %4034 = vmatmul.mubr.bf16.gmra.mxu0 %v776
        %v4035 = vpop.f32.mrf.mxu0
        %v4036 = vadd.f32 %v3923, %v4035
        %v4037 = vpop.f32.mrf.mxu0
        %v4038 = vadd.f32 %v3925, %v4037
        %v4039 = vpop.f32.mrf.mxu0
        %v4040 = vadd.f32 %v3927, %v4039
        %v4041 = vpop.f32.mrf.mxu0
        %v4042 = vadd.f32 %v3929, %v4041
        %4043 = vmatprep.mubr.bf16.mxu0 %v781
        %4044 = vmatmul.mubr.bf16.gmra.mxu0 %v780
        %v4045 = vpop.f32.mrf.mxu0
        %v4046 = vadd.f32 %v3933, %v4045
        %v4047 = vpop.f32.mrf.mxu0
        %v4048 = vadd.f32 %v3935, %v4047
        %v4049 = vpop.f32.mrf.mxu0
        %v4050 = vadd.f32 %v3937, %v4049
        %v4051 = vpop.f32.mrf.mxu0
        %v4052 = vadd.f32 %v3939, %v4051
        %4053 = vmatprep.mubr.bf16.mxu0 %v785
        %4054 = vmatmul.mubr.bf16.gmra.mxu0 %v784
        %v4055 = vpop.f32.mrf.mxu0
        %v4056 = vadd.f32 %v3943, %v4055
        %v4057 = vpop.f32.mrf.mxu0
        %v4058 = vadd.f32 %v3945, %v4057
        %v4059 = vpop.f32.mrf.mxu0
        %v4060 = vadd.f32 %v3947, %v4059
        %v4061 = vpop.f32.mrf.mxu0
        %v4062 = vadd.f32 %v3949, %v4061
        %4063 = vmatprep.mubr.bf16.mxu0 %v789
        %4064 = vmatmul.mubr.bf16.gmra.mxu0 %v788
        %v4065 = vpop.f32.mrf.mxu0
        %v4066 = vadd.f32 %v3953, %v4065
        %v4067 = vpop.f32.mrf.mxu0
        %v4068 = vadd.f32 %v3955, %v4067
        %v4069 = vpop.f32.mrf.mxu0
        %v4070 = vadd.f32 %v3957, %v4069
        %v4071 = vpop.f32.mrf.mxu0
        %v4072 = vadd.f32 %v3959, %v4071
        %4073 = vmatprep.mubr.bf16.mxu0 %v793
        %4074 = vmatmul.mubr.bf16.gmra.mxu0 %v792
        %v4075 = vpop.f32.mrf.mxu0
        %v4076 = vadd.f32 %v3963, %v4075
        %v4077 = vpop.f32.mrf.mxu0
        %v4078 = vadd.f32 %v3965, %v4077
        %v4079 = vpop.f32.mrf.mxu0
        %v4080 = vadd.f32 %v3967, %v4079
        %v4081 = vpop.f32.mrf.mxu0
        %v4082 = vadd.f32 %v3969, %v4081
        %4083 = vmatprep.mubr.bf16.mxu0 %v797
        %4084 = vmatmul.mubr.bf16.gmra.mxu0 %v796
        %v4085 = vpop.f32.mrf.mxu0
        %v4086 = vadd.f32 %v3973, %v4085
        %v4087 = vpop.f32.mrf.mxu0
        %v4088 = vadd.f32 %v3975, %v4087
        %v4089 = vpop.f32.mrf.mxu0
        %v4090 = vadd.f32 %v3977, %v4089
        %v4091 = vpop.f32.mrf.mxu0
        %v4092 = vadd.f32 %v3979, %v4091
        %4093 = vmatprep.mubr.bf16.mxu0 %v801
        %4094 = vmatmul.mubr.bf16.gmra.mxu0 %v800
        %v4095 = vpop.f32.mrf.mxu0
        %v4096 = vadd.f32 %v3983, %v4095
        %v4097 = vpop.f32.mrf.mxu0
        %v4098 = vadd.f32 %v3985, %v4097
        %v4099 = vpop.f32.mrf.mxu0
        %v4100 = vadd.f32 %v3987, %v4099
        %v4101 = vpop.f32.mrf.mxu0
        %v4102 = vadd.f32 %v3989, %v4101
        %4103 = vmatprep.mubr.bf16.mxu0 %v805
        %4104 = vmatmul.mubr.bf16.gmra.mxu0 %v804
        %v4105 = vpop.f32.mrf.mxu0
        %v4106 = vadd.f32 %v3993, %v4105
        %v4107 = vpop.f32.mrf.mxu0
        %v4108 = vadd.f32 %v3995, %v4107
        %v4109 = vpop.f32.mrf.mxu0
        %v4110 = vadd.f32 %v3997, %v4109
        %v4111 = vpop.f32.mrf.mxu0
        %v4112 = vadd.f32 %v3999, %v4111
        %4113 = vdwg.mxu0
        %v4114 = vpack.c.bf16 %v2910, %v2906
        %v4115 = vpack.c.bf16 %v2912, %v2908
        %v4116 = vpack.c.bf16 %v3136, %v3132
        %v4117 = vpack.c.bf16 %v3138, %v3134
        %v4118 = vpack.c.bf16 %v3362, %v3358
        %v4119 = vpack.c.bf16 %v3364, %v3360
        %v4120 = vpack.c.bf16 %v3588, %v3584
        %v4121 = vpack.c.bf16 %v3590, %v3586
        %v4122 = vpack.c.bf16 %v3814, %v3810
        %v4123 = vpack.c.bf16 %v3816, %v3812
        %v4124 = vpack.c.bf16 %v4040, %v4036
        %v4125 = vpack.c.bf16 %v4042, %v4038
        %v4126 = vpack.c.bf16 %v2920, %v2916
        %v4127 = vpack.c.bf16 %v2922, %v2918
        %v4128 = vpack.c.bf16 %v3146, %v3142
        %v4129 = vpack.c.bf16 %v3148, %v3144
        %v4130 = vpack.c.bf16 %v3372, %v3368
        %v4131 = vpack.c.bf16 %v3374, %v3370
        %v4132 = vpack.c.bf16 %v3598, %v3594
        %v4133 = vpack.c.bf16 %v3600, %v3596
        %v4134 = vpack.c.bf16 %v3824, %v3820
        %v4135 = vpack.c.bf16 %v3826, %v3822
        %v4136 = vpack.c.bf16 %v4050, %v4046
        %v4137 = vpack.c.bf16 %v4052, %v4048
        %v4138 = vpack.c.bf16 %v2930, %v2926
        %v4139 = vpack.c.bf16 %v2932, %v2928
        %v4140 = vpack.c.bf16 %v3156, %v3152
        %v4141 = vpack.c.bf16 %v3158, %v3154
        %v4142 = vpack.c.bf16 %v3382, %v3378
        %v4143 = vpack.c.bf16 %v3384, %v3380
        %v4144 = vpack.c.bf16 %v3608, %v3604
        %v4145 = vpack.c.bf16 %v3610, %v3606
        %v4146 = vpack.c.bf16 %v3834, %v3830
        %v4147 = vpack.c.bf16 %v3836, %v3832
        %v4148 = vpack.c.bf16 %v4060, %v4056
        %v4149 = vpack.c.bf16 %v4062, %v4058
        %v4150 = vpack.c.bf16 %v2940, %v2936
        %v4151 = vpack.c.bf16 %v2942, %v2938
        %v4152 = vpack.c.bf16 %v3166, %v3162
        %v4153 = vpack.c.bf16 %v3168, %v3164
        %v4154 = vpack.c.bf16 %v3392, %v3388
        %v4155 = vpack.c.bf16 %v3394, %v3390
        %v4156 = vpack.c.bf16 %v3618, %v3614
        %v4157 = vpack.c.bf16 %v3620, %v3616
        %v4158 = vpack.c.bf16 %v3844, %v3840
        %v4159 = vpack.c.bf16 %v3846, %v3842
        %v4160 = vpack.c.bf16 %v4070, %v4066
        %v4161 = vpack.c.bf16 %v4072, %v4068
        %v4162 = vpack.c.bf16 %v2950, %v2946
        %v4163 = vpack.c.bf16 %v2952, %v2948
        %v4164 = vpack.c.bf16 %v3176, %v3172
        %v4165 = vpack.c.bf16 %v3178, %v3174
        %v4166 = vpack.c.bf16 %v3402, %v3398
        %v4167 = vpack.c.bf16 %v3404, %v3400
        %v4168 = vpack.c.bf16 %v3628, %v3624
        %v4169 = vpack.c.bf16 %v3630, %v3626
        %v4170 = vpack.c.bf16 %v3854, %v3850
        %v4171 = vpack.c.bf16 %v3856, %v3852
        %v4172 = vpack.c.bf16 %v4080, %v4076
        %v4173 = vpack.c.bf16 %v4082, %v4078
        %v4174 = vpack.c.bf16 %v2960, %v2956
        %v4175 = vpack.c.bf16 %v2962, %v2958
        %v4176 = vpack.c.bf16 %v3186, %v3182
        %v4177 = vpack.c.bf16 %v3188, %v3184
        %v4178 = vpack.c.bf16 %v3412, %v3408
        %v4179 = vpack.c.bf16 %v3414, %v3410
        %v4180 = vpack.c.bf16 %v3638, %v3634
        %v4181 = vpack.c.bf16 %v3640, %v3636
        %v4182 = vpack.c.bf16 %v3864, %v3860
        %v4183 = vpack.c.bf16 %v3866, %v3862
        %v4184 = vpack.c.bf16 %v4090, %v4086
        %v4185 = vpack.c.bf16 %v4092, %v4088
        %v4186 = vpack.c.bf16 %v2970, %v2966
        %v4187 = vpack.c.bf16 %v2972, %v2968
        %v4188 = vpack.c.bf16 %v3196, %v3192
        %v4189 = vpack.c.bf16 %v3198, %v3194
        %v4190 = vpack.c.bf16 %v3422, %v3418
        %v4191 = vpack.c.bf16 %v3424, %v3420
        %v4192 = vpack.c.bf16 %v3648, %v3644
        %v4193 = vpack.c.bf16 %v3650, %v3646
        %v4194 = vpack.c.bf16 %v3874, %v3870
        %v4195 = vpack.c.bf16 %v3876, %v3872
        %v4196 = vpack.c.bf16 %v4100, %v4096
        %v4197 = vpack.c.bf16 %v4102, %v4098
        %v4198 = vpack.c.bf16 %v2980, %v2976
        %v4199 = vpack.c.bf16 %v2982, %v2978
        %v4200 = vpack.c.bf16 %v3206, %v3202
        %v4201 = vpack.c.bf16 %v3208, %v3204
        %v4202 = vpack.c.bf16 %v3432, %v3428
        %v4203 = vpack.c.bf16 %v3434, %v3430
        %v4204 = vpack.c.bf16 %v3658, %v3654
        %v4205 = vpack.c.bf16 %v3660, %v3656
        %v4206 = vpack.c.bf16 %v3884, %v3880
        %v4207 = vpack.c.bf16 %v3886, %v3882
        %v4208 = vpack.c.bf16 %v4110, %v4106
        %v4209 = vpack.c.bf16 %v4112, %v4108
        %v4210 = vlaneseq
        %v4211 = vshrl.u32 %v4210, 7
        %v4212 = vadd.s32 %v4211, 8
        %v4213 = vadd.s32 %v4211, 16
        %v4214 = vadd.s32 %v4211, 24
        %v4215 = vlaneseq
        %v4216 = vand.u32 %v4215, 127
        %vm4217 = vcmp.ge.s32.totalorder %v4211, %v4216
        %vm4218 = vcmp.ge.s32.totalorder %v4212, %v4216
        %vm4219 = vcmp.ge.s32.totalorder %v4213, %v4216
        %vm4220 = vcmp.ge.s32.totalorder %v4214, %v4216
        %v4221 = vld [vmem:[#allocation8] sm:$0xf]
        %v4223 = vlaneseq
        %v4224 = vshrl.u32 %v4223, 7
        %v4225 = vsub.s32 0, %v4224
        %v4226 = vrot.slane %v4221, %v4225
        %v4227 = vlaneseq
        %v4228 = vshrl.u32 %v4227, 7
        %v4229 = vsub.s32 1, %v4228
        %v4230 = vrot.slane %v4221, %v4229
        %v4231 = vlaneseq
        %v4232 = vshrl.u32 %v4231, 7
        %v4233 = vsub.s32 2, %v4232
        %v4234 = vrot.slane %v4221, %v4233
        %v4235 = vlaneseq
        %v4236 = vshrl.u32 %v4235, 7
        %v4237 = vsub.s32 3, %v4236
        %v4238 = vrot.slane %v4221, %v4237
        %4243 = vmatprep.subr.bf16.mxu0 0
        %4244 = vmatpush1.bf16.xpose.msra.mxu0 0
        %4245 = vmatprep.subr.bf16.mxu0 0
        %4246 = vmatpush1.bf16.xpose.msra.mxu0 0
        %4247 = vmatprep.subr.bf16.mxu0 0
        %4248 = vmatpush1.bf16.xpose.msra.mxu0 0
        %4249 = vmatprep.subr.bf16.mxu0 0
        %4250 = vmatpush1.bf16.xpose.msra.mxu0 0
        %4251 = vmatprep.subr.bf16.mxu0 0
        %4252 = vmatpush1.bf16.xpose.msra.mxu0 0
        %4253 = vmatprep.subr.bf16.mxu0 0
        %4254 = vmatpush1.bf16.xpose.msra.mxu0 0
        %4255 = vmatprep.subr.bf16.mxu0 0
        %4256 = vmatpush1.bf16.xpose.msra.mxu0 %v4130
        %4257 = vmatprep.subr.bf16.mxu0 0
        %4258 = vmatpush1.bf16.xpose.msra.mxu0 %v4118
        %4259 = vmatprep.subr.bf16.mxu0 0
        %4260 = vmatpush2.bf16.xpose.msra.mxu0 0
        %4261 = vmatprep.subr.bf16.mxu0 0
        %4262 = vmatpush2.bf16.xpose.msra.mxu0 0
        %4263 = vmatprep.subr.bf16.mxu0 0
        %4264 = vmatpush2.bf16.xpose.msra.mxu0 0
        %4265 = vmatprep.subr.bf16.mxu0 0
        %4266 = vmatpush2.bf16.xpose.msra.mxu0 0
        %4267 = vmatprep.subr.bf16.mxu0 0
        %4268 = vmatpush2.bf16.xpose.msra.mxu0 0
        %4269 = vmatprep.subr.bf16.mxu0 0
        %4270 = vmatpush2.bf16.xpose.msra.mxu0 0
        %4271 = vmatprep.subr.bf16.mxu0 0
        %4272 = vmatpush2.bf16.xpose.msra.mxu0 0
        %4273 = vmatprep.subr.bf16.mxu0 0
        %4274 = vmatpush2.bf16.xpose.msra.mxu0 0
        %4275 = vmatprep.mubr.bf16.mxu0 0
        %4276 = vmatmul.mubr.bf16.gmra.mxu0 %v4114
        %v4277 = vpop.f32.mrf.mxu0
        %v4278 = vadd.f32 0.0, %v4277
        %v4279 = vpop.f32.mrf.mxu0
        %v4280 = vpop.f32.mrf.mxu0
        %v4281 = vadd.f32 0.0, %v4280
        %v4282 = vpop.f32.mrf.mxu0
        %4283 = vmatprep.mubr.bf16.mxu0 0
        %4284 = vmatmul.mubr.bf16.gmra.mxu0 %v4126
        %v4285 = vpop.f32.mrf.mxu0
        %v4286 = vadd.f32 0.0, %v4285
        %v4287 = vpop.f32.mrf.mxu0
        %v4288 = vpop.f32.mrf.mxu0
        %v4289 = vadd.f32 0.0, %v4288
        %v4290 = vpop.f32.mrf.mxu0
        %4291 = vdwg.mxu0
        %4292 = vmatprep.subr.bf16.mxu0 0
        %4293 = vmatpush1.bf16.xpose.msra.mxu0 0
        %4294 = vmatprep.subr.bf16.mxu0 0
        %4295 = vmatpush1.bf16.xpose.msra.mxu0 0
        %4296 = vmatprep.subr.bf16.mxu0 0
        %4297 = vmatpush1.bf16.xpose.msra.mxu0 0
        %4298 = vmatprep.subr.bf16.mxu0 0
        %4299 = vmatpush1.bf16.xpose.msra.mxu0 0
        %4300 = vmatprep.subr.bf16.mxu0 0
        %4301 = vmatpush1.bf16.xpose.msra.mxu0 0
        %4302 = vmatprep.subr.bf16.mxu0 0
        %4303 = vmatpush1.bf16.xpose.msra.mxu0 0
        %4304 = vmatprep.subr.bf16.mxu0 0
        %4305 = vmatpush1.bf16.xpose.msra.mxu0 %v4154
        %4306 = vmatprep.subr.bf16.mxu0 0
        %4307 = vmatpush1.bf16.xpose.msra.mxu0 %v4142
        %4308 = vmatprep.subr.bf16.mxu0 0
        %4309 = vmatpush2.bf16.xpose.msra.mxu0 0
        %4310 = vmatprep.subr.bf16.mxu0 0
        %4311 = vmatpush2.bf16.xpose.msra.mxu0 0
        %4312 = vmatprep.subr.bf16.mxu0 0
        %4313 = vmatpush2.bf16.xpose.msra.mxu0 0
        %4314 = vmatprep.subr.bf16.mxu0 0
        %4315 = vmatpush2.bf16.xpose.msra.mxu0 0
        %4316 = vmatprep.subr.bf16.mxu0 0
        %4317 = vmatpush2.bf16.xpose.msra.mxu0 0
        %4318 = vmatprep.subr.bf16.mxu0 0
        %4319 = vmatpush2.bf16.xpose.msra.mxu0 0
        %4320 = vmatprep.subr.bf16.mxu0 0
        %4321 = vmatpush2.bf16.xpose.msra.mxu0 0
        %4322 = vmatprep.subr.bf16.mxu0 0
        %4323 = vmatpush2.bf16.xpose.msra.mxu0 0
        %4324 = vmatprep.mubr.bf16.mxu0 0
        %4325 = vmatmul.mubr.bf16.gmra.mxu0 %v4138
        %v4326 = vpop.f32.mrf.mxu0
        %v4327 = vadd.f32 0.0, %v4326
        %v4328 = vpop.f32.mrf.mxu0
        %v4329 = vpop.f32.mrf.mxu0
        %v4330 = vadd.f32 0.0, %v4329
        %v4331 = vpop.f32.mrf.mxu0
        %4332 = vmatprep.mubr.bf16.mxu0 0
        %4333 = vmatmul.mubr.bf16.gmra.mxu0 %v4150
        %v4334 = vpop.f32.mrf.mxu0
        %v4335 = vadd.f32 0.0, %v4334
        %v4336 = vpop.f32.mrf.mxu0
        %v4337 = vpop.f32.mrf.mxu0
        %v4338 = vadd.f32 0.0, %v4337
        %v4339 = vpop.f32.mrf.mxu0
        %4340 = vdwg.mxu0
        %4341 = vmatprep.subr.bf16.mxu0 0
        %4342 = vmatpush1.bf16.xpose.msra.mxu0 0
        %4343 = vmatprep.subr.bf16.mxu0 0
        %4344 = vmatpush1.bf16.xpose.msra.mxu0 0
        %4345 = vmatprep.subr.bf16.mxu0 0
        %4346 = vmatpush1.bf16.xpose.msra.mxu0 0
        %4347 = vmatprep.subr.bf16.mxu0 0
        %4348 = vmatpush1.bf16.xpose.msra.mxu0 0
        %4349 = vmatprep.subr.bf16.mxu0 0
        %4350 = vmatpush1.bf16.xpose.msra.mxu0 0
        %4351 = vmatprep.subr.bf16.mxu0 0
        %4352 = vmatpush1.bf16.xpose.msra.mxu0 0
        %4353 = vmatprep.subr.bf16.mxu0 0
        %4354 = vmatpush1.bf16.xpose.msra.mxu0 %v4178
        %4355 = vmatprep.subr.bf16.mxu0 0
        %4356 = vmatpush1.bf16.xpose.msra.mxu0 %v4166
        %4357 = vmatprep.subr.bf16.mxu0 0
        %4358 = vmatpush2.bf16.xpose.msra.mxu0 0
        %4359 = vmatprep.subr.bf16.mxu0 0
        %4360 = vmatpush2.bf16.xpose.msra.mxu0 0
        %4361 = vmatprep.subr.bf16.mxu0 0
        %4362 = vmatpush2.bf16.xpose.msra.mxu0 0
        %4363 = vmatprep.subr.bf16.mxu0 0
        %4364 = vmatpush2.bf16.xpose.msra.mxu0 0
        %4365 = vmatprep.subr.bf16.mxu0 0
        %4366 = vmatpush2.bf16.xpose.msra.mxu0 0
        %4367 = vmatprep.subr.bf16.mxu0 0
        %4368 = vmatpush2.bf16.xpose.msra.mxu0 0
        %4369 = vmatprep.subr.bf16.mxu0 0
        %4370 = vmatpush2.bf16.xpose.msra.mxu0 0
        %4371 = vmatprep.subr.bf16.mxu0 0
        %4372 = vmatpush2.bf16.xpose.msra.mxu0 0
        %4373 = vmatprep.mubr.bf16.mxu0 0
        %4374 = vmatmul.mubr.bf16.gmra.mxu0 %v4162
        %v4375 = vpop.f32.mrf.mxu0
        %v4376 = vadd.f32 0.0, %v4375
        %v4377 = vpop.f32.mrf.mxu0
        %v4378 = vpop.f32.mrf.mxu0
        %v4379 = vadd.f32 0.0, %v4378
        %v4380 = vpop.f32.mrf.mxu0
        %4381 = vmatprep.mubr.bf16.mxu0 0
        %4382 = vmatmul.mubr.bf16.gmra.mxu0 %v4174
        %v4383 = vpop.f32.mrf.mxu0
        %v4384 = vadd.f32 0.0, %v4383
        %v4385 = vpop.f32.mrf.mxu0
        %v4386 = vpop.f32.mrf.mxu0
        %v4387 = vadd.f32 0.0, %v4386
        %v4388 = vpop.f32.mrf.mxu0
        %4389 = vdwg.mxu0
        %4390 = vmatprep.subr.bf16.mxu0 0
        %4391 = vmatpush1.bf16.xpose.msra.mxu0 0
        %4392 = vmatprep.subr.bf16.mxu0 0
        %4393 = vmatpush1.bf16.xpose.msra.mxu0 0
        %4394 = vmatprep.subr.bf16.mxu0 0
        %4395 = vmatpush1.bf16.xpose.msra.mxu0 0
        %4396 = vmatprep.subr.bf16.mxu0 0
        %4397 = vmatpush1.bf16.xpose.msra.mxu0 0
        %4398 = vmatprep.subr.bf16.mxu0 0
        %4399 = vmatpush1.bf16.xpose.msra.mxu0 0
        %4400 = vmatprep.subr.bf16.mxu0 0
        %4401 = vmatpush1.bf16.xpose.msra.mxu0 0
        %4402 = vmatprep.subr.bf16.mxu0 0
        %4403 = vmatpush1.bf16.xpose.msra.mxu0 %v4202
        %4404 = vmatprep.subr.bf16.mxu0 0
        %4405 = vmatpush1.bf16.xpose.msra.mxu0 %v4190
        %4406 = vmatprep.subr.bf16.mxu0 0
        %4407 = vmatpush2.bf16.xpose.msra.mxu0 0
        %4408 = vmatprep.subr.bf16.mxu0 0
        %4409 = vmatpush2.bf16.xpose.msra.mxu0 0
        %4410 = vmatprep.subr.bf16.mxu0 0
        %4411 = vmatpush2.bf16.xpose.msra.mxu0 0
        %4412 = vmatprep.subr.bf16.mxu0 0
        %4413 = vmatpush2.bf16.xpose.msra.mxu0 0
        %4414 = vmatprep.subr.bf16.mxu0 0
        %4415 = vmatpush2.bf16.xpose.msra.mxu0 0
        %4416 = vmatprep.subr.bf16.mxu0 0
        %4417 = vmatpush2.bf16.xpose.msra.mxu0 0
        %4418 = vmatprep.subr.bf16.mxu0 0
        %4419 = vmatpush2.bf16.xpose.msra.mxu0 0
        %4420 = vmatprep.subr.bf16.mxu0 0
        %4421 = vmatpush2.bf16.xpose.msra.mxu0 0
        %4422 = vmatprep.mubr.bf16.mxu0 0
        %4423 = vmatmul.mubr.bf16.gmra.mxu0 %v4186
        %v4424 = vpop.f32.mrf.mxu0
        %v4425 = vadd.f32 0.0, %v4424
        %v4426 = vpop.f32.mrf.mxu0
        %v4427 = vpop.f32.mrf.mxu0
        %v4428 = vadd.f32 0.0, %v4427
        %v4429 = vpop.f32.mrf.mxu0
        %4430 = vmatprep.mubr.bf16.mxu0 0
        %4431 = vmatmul.mubr.bf16.gmra.mxu0 %v4198
        %v4432 = vpop.f32.mrf.mxu0
        %v4433 = vadd.f32 0.0, %v4432
        %v4434 = vpop.f32.mrf.mxu0
        %v4435 = vpop.f32.mrf.mxu0
        %v4436 = vadd.f32 0.0, %v4435
        %v4437 = vpop.f32.mrf.mxu0
        %4438 = vdwg.mxu0
        %v4439 = vsel %vm4217, %v4278, -1e+30
        %v4440 = vsel %vm4218, %v4281, -1e+30
        %v4441 = vsel %vm4219, %v4286, -1e+30
        %v4442 = vsel %vm4220, %v4289, -1e+30
        %v4443 = vsel %vm4217, %v4327, -1e+30
        %v4444 = vsel %vm4218, %v4330, -1e+30
        %v4445 = vsel %vm4219, %v4335, -1e+30
        %v4446 = vsel %vm4220, %v4338, -1e+30
        %v4447 = vsel %vm4217, %v4376, -1e+30
        %v4448 = vsel %vm4218, %v4379, -1e+30
        %v4449 = vsel %vm4219, %v4384, -1e+30
        %v4450 = vsel %vm4220, %v4387, -1e+30
        %v4451 = vsel %vm4217, %v4425, -1e+30
        %v4452 = vsel %vm4218, %v4428, -1e+30
        %v4453 = vsel %vm4219, %v4433, -1e+30
        %v4454 = vsel %vm4220, %v4436, -1e+30
        %vm4455 = vcmask 261120
        %v4456 = vsel %vm4455, %v4439, -inf
        %4457 = vmax.xlane.f32.xlu0 %v4456
        %v4458 = vpop.xlane.xlu0 %4457
        %v4459 = vsel %vm4455, %v4440, -inf
        %4460 = vmax.xlane.f32.xlu0 %v4459
        %v4461 = vpop.xlane.xlu0 %4460
        %v4462 = vsel %vm4455, %v4441, -inf
        %4463 = vmax.xlane.f32.xlu0 %v4462
        %v4464 = vpop.xlane.xlu0 %4463
        %v4465 = vsel %vm4455, %v4442, -inf
        %4466 = vmax.xlane.f32.xlu0 %v4465
        %v4467 = vpop.xlane.xlu0 %4466
        %v4468 = vsel %vm4455, %v4443, -inf
        %4469 = vmax.xlane.f32.xlu0 %v4468
        %v4470 = vpop.xlane.xlu0 %4469
        %v4471 = vsel %vm4455, %v4444, -inf
        %4472 = vmax.xlane.f32.xlu0 %v4471
        %v4473 = vpop.xlane.xlu0 %4472
        %v4474 = vsel %vm4455, %v4445, -inf
        %4475 = vmax.xlane.f32.xlu0 %v4474
        %v4476 = vpop.xlane.xlu0 %4475
        %v4477 = vsel %vm4455, %v4446, -inf
        %4478 = vmax.xlane.f32.xlu0 %v4477
        %v4479 = vpop.xlane.xlu0 %4478
        %v4480 = vsel %vm4455, %v4447, -inf
        %4481 = vmax.xlane.f32.xlu0 %v4480
        %v4482 = vpop.xlane.xlu0 %4481
        %v4483 = vsel %vm4455, %v4448, -inf
        %4484 = vmax.xlane.f32.xlu0 %v4483
        %v4485 = vpop.xlane.xlu0 %4484
        %v4486 = vsel %vm4455, %v4449, -inf
        %4487 = vmax.xlane.f32.xlu0 %v4486
        %v4488 = vpop.xlane.xlu0 %4487
        %v4489 = vsel %vm4455, %v4450, -inf
        %4490 = vmax.xlane.f32.xlu0 %v4489
        %v4491 = vpop.xlane.xlu0 %4490
        %v4492 = vsel %vm4455, %v4451, -inf
        %4493 = vmax.xlane.f32.xlu0 %v4492
        %v4494 = vpop.xlane.xlu0 %4493
        %v4495 = vsel %vm4455, %v4452, -inf
        %4496 = vmax.xlane.f32.xlu0 %v4495
        %v4497 = vpop.xlane.xlu0 %4496
        %v4498 = vsel %vm4455, %v4453, -inf
        %4499 = vmax.xlane.f32.xlu0 %v4498
        %v4500 = vpop.xlane.xlu0 %4499
        %v4501 = vsel %vm4455, %v4454, -inf
        %4502 = vmax.xlane.f32.xlu0 %v4501
        %v4503 = vpop.xlane.xlu0 %4502
        %v4504 = vsub.f32 %v4439, %v4458
        %v4505 = vsub.f32 %v4440, %v4461
        %v4506 = vsub.f32 %v4441, %v4464
        %v4507 = vsub.f32 %v4442, %v4467
        %v4508 = vsub.f32 %v4443, %v4470
        %v4509 = vsub.f32 %v4444, %v4473
        %v4510 = vsub.f32 %v4445, %v4476
        %v4511 = vsub.f32 %v4446, %v4479
        %v4512 = vsub.f32 %v4447, %v4482
        %v4513 = vsub.f32 %v4448, %v4485
        %v4514 = vsub.f32 %v4449, %v4488
        %v4515 = vsub.f32 %v4450, %v4491
        %v4516 = vsub.f32 %v4451, %v4494
        %v4517 = vsub.f32 %v4452, %v4497
        %v4518 = vsub.f32 %v4453, %v4500
        %v4519 = vsub.f32 %v4454, %v4503
        %v4520 = vmul.f32 %v4504, 1.442695
        %v4521 = vpow.pop %v4520
        %v4522 = vmul.f32 %v4505, 1.442695
        %v4523 = vpow.pop %v4522
        %v4524 = vmul.f32 %v4506, 1.442695
        %v4525 = vpow.pop %v4524
        %v4526 = vmul.f32 %v4507, 1.442695
        %v4527 = vpow.pop %v4526
        %v4528 = vmul.f32 %v4508, 1.442695
        %v4529 = vpow.pop %v4528
        %v4530 = vmul.f32 %v4509, 1.442695
        %v4531 = vpow.pop %v4530
        %v4532 = vmul.f32 %v4510, 1.442695
        %v4533 = vpow.pop %v4532
        %v4534 = vmul.f32 %v4511, 1.442695
        %v4535 = vpow.pop %v4534
        %v4536 = vmul.f32 %v4512, 1.442695
        %v4537 = vpow.pop %v4536
        %v4538 = vmul.f32 %v4513, 1.442695
        %v4539 = vpow.pop %v4538
        %v4540 = vmul.f32 %v4514, 1.442695
        %v4541 = vpow.pop %v4540
        %v4542 = vmul.f32 %v4515, 1.442695
        %v4543 = vpow.pop %v4542
        %v4544 = vmul.f32 %v4516, 1.442695
        %v4545 = vpow.pop %v4544
        %v4546 = vmul.f32 %v4517, 1.442695
        %v4547 = vpow.pop %v4546
        %v4548 = vmul.f32 %v4518, 1.442695
        %v4549 = vpow.pop %v4548
        %v4550 = vmul.f32 %v4519, 1.442695
        %v4551 = vpow.pop %v4550
        %v4552 = vsel %vm4455, %v4521, 0.0
        %4553 = vadd.xlane.f32.xlu0 %v4552
        %v4554 = vpop.xlane.xlu0 %4553
        %v4555 = vsel %vm4455, %v4523, 0.0
        %4556 = vadd.xlane.f32.xlu0 %v4555
        %v4557 = vpop.xlane.xlu0 %4556
        %v4558 = vsel %vm4455, %v4525, 0.0
        %4559 = vadd.xlane.f32.xlu0 %v4558
        %v4560 = vpop.xlane.xlu0 %4559
        %v4561 = vsel %vm4455, %v4527, 0.0
        %4562 = vadd.xlane.f32.xlu0 %v4561
        %v4563 = vpop.xlane.xlu0 %4562
        %v4564 = vsel %vm4455, %v4529, 0.0
        %4565 = vadd.xlane.f32.xlu0 %v4564
        %v4566 = vpop.xlane.xlu0 %4565
        %v4567 = vsel %vm4455, %v4531, 0.0
        %4568 = vadd.xlane.f32.xlu0 %v4567
        %v4569 = vpop.xlane.xlu0 %4568
        %v4570 = vsel %vm4455, %v4533, 0.0
        %4571 = vadd.xlane.f32.xlu0 %v4570
        %v4572 = vpop.xlane.xlu0 %4571
        %v4573 = vsel %vm4455, %v4535, 0.0
        %4574 = vadd.xlane.f32.xlu0 %v4573
        %v4575 = vpop.xlane.xlu0 %4574
        %v4576 = vsel %vm4455, %v4537, 0.0
        %4577 = vadd.xlane.f32.xlu0 %v4576
        %v4578 = vpop.xlane.xlu0 %4577
        %v4579 = vsel %vm4455, %v4539, 0.0
        %4580 = vadd.xlane.f32.xlu0 %v4579
        %v4581 = vpop.xlane.xlu0 %4580
        %v4582 = vsel %vm4455, %v4541, 0.0
        %4583 = vadd.xlane.f32.xlu0 %v4582
        %v4584 = vpop.xlane.xlu0 %4583
        %v4585 = vsel %vm4455, %v4543, 0.0
        %4586 = vadd.xlane.f32.xlu0 %v4585
        %v4587 = vpop.xlane.xlu0 %4586
        %v4588 = vsel %vm4455, %v4545, 0.0
        %4589 = vadd.xlane.f32.xlu0 %v4588
        %v4590 = vpop.xlane.xlu0 %4589
        %v4591 = vsel %vm4455, %v4547, 0.0
        %4592 = vadd.xlane.f32.xlu0 %v4591
        %v4593 = vpop.xlane.xlu0 %4592
        %v4594 = vsel %vm4455, %v4549, 0.0
        %4595 = vadd.xlane.f32.xlu0 %v4594
        %v4596 = vpop.xlane.xlu0 %4595
        %v4597 = vsel %vm4455, %v4551, 0.0
        %4598 = vadd.xlane.f32.xlu0 %v4597
        %v4599 = vpop.xlane.xlu0 %4598
        %v4600 = vrcp.pop %v4554
        %v4601 = vrcp.pop %v4557
        %v4602 = vrcp.pop %v4560
        %v4603 = vrcp.pop %v4563
        %v4604 = vrcp.pop %v4566
        %v4605 = vrcp.pop %v4569
        %v4606 = vrcp.pop %v4572
        %v4607 = vrcp.pop %v4575
        %v4608 = vrcp.pop %v4578
        %v4609 = vrcp.pop %v4581
        %v4610 = vrcp.pop %v4584
        %v4611 = vrcp.pop %v4587
        %v4612 = vrcp.pop %v4590
        %v4613 = vrcp.pop %v4593
        %v4614 = vrcp.pop %v4596
        %v4615 = vrcp.pop %v4599
        %v4616 = vpack.c.bf16 %v4523, %v4521
        %v4617 = vpack.c.bf16 %v4527, %v4525
        %v4618 = vpack.c.bf16 %v4531, %v4529
        %v4619 = vpack.c.bf16 %v4535, %v4533
        %v4620 = vpack.c.bf16 %v4539, %v4537
        %v4621 = vpack.c.bf16 %v4543, %v4541
        %v4622 = vpack.c.bf16 %v4547, %v4545
        %v4623 = vpack.c.bf16 %v4551, %v4549
        %v4625 = vsel %vm4455, %v4616, 0
        %v4628 = vsel %vm4455, %v4617, 0
        %4630 = vmatprep.subr.bf16.mxu0 0
        %4631 = vmatpush1.bf16.msra.mxu0 0
        %4632 = vmatprep.subr.bf16.mxu0 0
        %4633 = vmatpush1.bf16.msra.mxu0 0
        %4634 = vmatprep.subr.bf16.mxu0 0
        %4635 = vmatpush1.bf16.msra.mxu0 0
        %4636 = vmatprep.subr.bf16.mxu0 0
        %4637 = vmatpush1.bf16.msra.mxu0 0
        %4638 = vmatprep.subr.bf16.mxu0 0
        %4639 = vmatpush1.bf16.msra.mxu0 0
        %4640 = vmatprep.subr.bf16.mxu0 0
        %4641 = vmatpush1.bf16.msra.mxu0 0
        %4642 = vmatprep.subr.bf16.mxu0 0
        %4643 = vmatpush1.bf16.msra.mxu0 %v4134
        %4644 = vmatprep.subr.bf16.mxu0 0
        %4645 = vmatpush1.bf16.msra.mxu0 %v4122
        %4646 = vmatprep.subr.bf16.mxu0 0
        %4647 = vmatpush2.bf16.msra.mxu0 0
        %4648 = vmatprep.subr.bf16.mxu0 0
        %4649 = vmatpush2.bf16.msra.mxu0 0
        %4650 = vmatprep.subr.bf16.mxu0 0
        %4651 = vmatpush2.bf16.msra.mxu0 0
        %4652 = vmatprep.subr.bf16.mxu0 0
        %4653 = vmatpush2.bf16.msra.mxu0 0
        %4654 = vmatprep.subr.bf16.mxu0 0
        %4655 = vmatpush2.bf16.msra.mxu0 0
        %4656 = vmatprep.subr.bf16.mxu0 0
        %4657 = vmatpush2.bf16.msra.mxu0 0
        %4658 = vmatprep.subr.bf16.mxu0 0
        %4659 = vmatpush2.bf16.msra.mxu0 0
        %4660 = vmatprep.subr.bf16.mxu0 0
        %4661 = vmatpush2.bf16.msra.mxu0 0
        %4662 = vmatprep.mubr.bf16.mxu0 0
        %4663 = vmatmul.mubr.bf16.gmra.mxu0 %v4625
        %v4664 = vpop.f32.mrf.mxu0
        %v4665 = vadd.f32 0.0, %v4664
        %v4666 = vpop.f32.mrf.mxu0
        %v4667 = vpop.f32.mrf.mxu0
        %v4668 = vadd.f32 0.0, %v4667
        %v4669 = vpop.f32.mrf.mxu0
        %4670 = vmatprep.mubr.bf16.mxu0 0
        %4671 = vmatmul.mubr.bf16.gmra.mxu0 %v4628
        %v4672 = vpop.f32.mrf.mxu0
        %v4673 = vadd.f32 0.0, %v4672
        %v4674 = vpop.f32.mrf.mxu0
        %v4675 = vpop.f32.mrf.mxu0
        %v4676 = vadd.f32 0.0, %v4675
        %v4677 = vpop.f32.mrf.mxu0
        %4678 = vdwg.mxu0
        %v4680 = vsel %vm4455, %v4618, 0
        %v4683 = vsel %vm4455, %v4619, 0
        %4685 = vmatprep.subr.bf16.mxu0 0
        %4686 = vmatpush1.bf16.msra.mxu0 0
        %4687 = vmatprep.subr.bf16.mxu0 0
        %4688 = vmatpush1.bf16.msra.mxu0 0
        %4689 = vmatprep.subr.bf16.mxu0 0
        %4690 = vmatpush1.bf16.msra.mxu0 0
        %4691 = vmatprep.subr.bf16.mxu0 0
        %4692 = vmatpush1.bf16.msra.mxu0 0
        %4693 = vmatprep.subr.bf16.mxu0 0
        %4694 = vmatpush1.bf16.msra.mxu0 0
        %4695 = vmatprep.subr.bf16.mxu0 0
        %4696 = vmatpush1.bf16.msra.mxu0 0
        %4697 = vmatprep.subr.bf16.mxu0 0
        %4698 = vmatpush1.bf16.msra.mxu0 %v4158
        %4699 = vmatprep.subr.bf16.mxu0 0
        %4700 = vmatpush1.bf16.msra.mxu0 %v4146
        %4701 = vmatprep.subr.bf16.mxu0 0
        %4702 = vmatpush2.bf16.msra.mxu0 0
        %4703 = vmatprep.subr.bf16.mxu0 0
        %4704 = vmatpush2.bf16.msra.mxu0 0
        %4705 = vmatprep.subr.bf16.mxu0 0
        %4706 = vmatpush2.bf16.msra.mxu0 0
        %4707 = vmatprep.subr.bf16.mxu0 0
        %4708 = vmatpush2.bf16.msra.mxu0 0
        %4709 = vmatprep.subr.bf16.mxu0 0
        %4710 = vmatpush2.bf16.msra.mxu0 0
        %4711 = vmatprep.subr.bf16.mxu0 0
        %4712 = vmatpush2.bf16.msra.mxu0 0
        %4713 = vmatprep.subr.bf16.mxu0 0
        %4714 = vmatpush2.bf16.msra.mxu0 0
        %4715 = vmatprep.subr.bf16.mxu0 0
        %4716 = vmatpush2.bf16.msra.mxu0 0
        %4717 = vmatprep.mubr.bf16.mxu0 0
        %4718 = vmatmul.mubr.bf16.gmra.mxu0 %v4680
        %v4719 = vpop.f32.mrf.mxu0
        %v4720 = vadd.f32 0.0, %v4719
        %v4721 = vpop.f32.mrf.mxu0
        %v4722 = vpop.f32.mrf.mxu0
        %v4723 = vadd.f32 0.0, %v4722
        %v4724 = vpop.f32.mrf.mxu0
        %4725 = vmatprep.mubr.bf16.mxu0 0
        %4726 = vmatmul.mubr.bf16.gmra.mxu0 %v4683
        %v4727 = vpop.f32.mrf.mxu0
        %v4728 = vadd.f32 0.0, %v4727
        %v4729 = vpop.f32.mrf.mxu0
        %v4730 = vpop.f32.mrf.mxu0
        %v4731 = vadd.f32 0.0, %v4730
        %v4732 = vpop.f32.mrf.mxu0
        %4733 = vdwg.mxu0
        %v4735 = vsel %vm4455, %v4620, 0
        %v4738 = vsel %vm4455, %v4621, 0
        %4740 = vmatprep.subr.bf16.mxu0 0
        %4741 = vmatpush1.bf16.msra.mxu0 0
        %4742 = vmatprep.subr.bf16.mxu0 0
        %4743 = vmatpush1.bf16.msra.mxu0 0
        %4744 = vmatprep.subr.bf16.mxu0 0
        %4745 = vmatpush1.bf16.msra.mxu0 0
        %4746 = vmatprep.subr.bf16.mxu0 0
        %4747 = vmatpush1.bf16.msra.mxu0 0
        %4748 = vmatprep.subr.bf16.mxu0 0
        %4749 = vmatpush1.bf16.msra.mxu0 0
        %4750 = vmatprep.subr.bf16.mxu0 0
        %4751 = vmatpush1.bf16.msra.mxu0 0
        %4752 = vmatprep.subr.bf16.mxu0 0
        %4753 = vmatpush1.bf16.msra.mxu0 %v4182
        %4754 = vmatprep.subr.bf16.mxu0 0
        %4755 = vmatpush1.bf16.msra.mxu0 %v4170
        %4756 = vmatprep.subr.bf16.mxu0 0
        %4757 = vmatpush2.bf16.msra.mxu0 0
        %4758 = vmatprep.subr.bf16.mxu0 0
        %4759 = vmatpush2.bf16.msra.mxu0 0
        %4760 = vmatprep.subr.bf16.mxu0 0
        %4761 = vmatpush2.bf16.msra.mxu0 0
        %4762 = vmatprep.subr.bf16.mxu0 0
        %4763 = vmatpush2.bf16.msra.mxu0 0
        %4764 = vmatprep.subr.bf16.mxu0 0
        %4765 = vmatpush2.bf16.msra.mxu0 0
        %4766 = vmatprep.subr.bf16.mxu0 0
        %4767 = vmatpush2.bf16.msra.mxu0 0
        %4768 = vmatprep.subr.bf16.mxu0 0
        %4769 = vmatpush2.bf16.msra.mxu0 0
        %4770 = vmatprep.subr.bf16.mxu0 0
        %4771 = vmatpush2.bf16.msra.mxu0 0
        %4772 = vmatprep.mubr.bf16.mxu0 0
        %4773 = vmatmul.mubr.bf16.gmra.mxu0 %v4735
        %v4774 = vpop.f32.mrf.mxu0
        %v4775 = vadd.f32 0.0, %v4774
        %v4776 = vpop.f32.mrf.mxu0
        %v4777 = vpop.f32.mrf.mxu0
        %v4778 = vadd.f32 0.0, %v4777
        %v4779 = vpop.f32.mrf.mxu0
        %4780 = vmatprep.mubr.bf16.mxu0 0
        %4781 = vmatmul.mubr.bf16.gmra.mxu0 %v4738
        %v4782 = vpop.f32.mrf.mxu0
        %v4783 = vadd.f32 0.0, %v4782
        %v4784 = vpop.f32.mrf.mxu0
        %v4785 = vpop.f32.mrf.mxu0
        %v4786 = vadd.f32 0.0, %v4785
        %v4787 = vpop.f32.mrf.mxu0
        %4788 = vdwg.mxu0
        %v4790 = vsel %vm4455, %v4622, 0
        %v4793 = vsel %vm4455, %v4623, 0
        %4795 = vmatprep.subr.bf16.mxu0 0
        %4796 = vmatpush1.bf16.msra.mxu0 0
        %4797 = vmatprep.subr.bf16.mxu0 0
        %4798 = vmatpush1.bf16.msra.mxu0 0
        %4799 = vmatprep.subr.bf16.mxu0 0
        %4800 = vmatpush1.bf16.msra.mxu0 0
        %4801 = vmatprep.subr.bf16.mxu0 0
        %4802 = vmatpush1.bf16.msra.mxu0 0
        %4803 = vmatprep.subr.bf16.mxu0 0
        %4804 = vmatpush1.bf16.msra.mxu0 0
        %4805 = vmatprep.subr.bf16.mxu0 0
        %4806 = vmatpush1.bf16.msra.mxu0 0
        %4807 = vmatprep.subr.bf16.mxu0 0
        %4808 = vmatpush1.bf16.msra.mxu0 %v4206
        %4809 = vmatprep.subr.bf16.mxu0 0
        %4810 = vmatpush1.bf16.msra.mxu0 %v4194
        %4811 = vmatprep.subr.bf16.mxu0 0
        %4812 = vmatpush2.bf16.msra.mxu0 0
        %4813 = vmatprep.subr.bf16.mxu0 0
        %4814 = vmatpush2.bf16.msra.mxu0 0
        %4815 = vmatprep.subr.bf16.mxu0 0
        %4816 = vmatpush2.bf16.msra.mxu0 0
        %4817 = vmatprep.subr.bf16.mxu0 0
        %4818 = vmatpush2.bf16.msra.mxu0 0
        %4819 = vmatprep.subr.bf16.mxu0 0
        %4820 = vmatpush2.bf16.msra.mxu0 0
        %4821 = vmatprep.subr.bf16.mxu0 0
        %4822 = vmatpush2.bf16.msra.mxu0 0
        %4823 = vmatprep.subr.bf16.mxu0 0
        %4824 = vmatpush2.bf16.msra.mxu0 0
        %4825 = vmatprep.subr.bf16.mxu0 0
        %4826 = vmatpush2.bf16.msra.mxu0 0
        %4827 = vmatprep.mubr.bf16.mxu0 0
        %4828 = vmatmul.mubr.bf16.gmra.mxu0 %v4790
        %v4829 = vpop.f32.mrf.mxu0
        %v4830 = vadd.f32 0.0, %v4829
        %v4831 = vpop.f32.mrf.mxu0
        %v4832 = vpop.f32.mrf.mxu0
        %v4833 = vadd.f32 0.0, %v4832
        %v4834 = vpop.f32.mrf.mxu0
        %4835 = vmatprep.mubr.bf16.mxu0 0
        %4836 = vmatmul.mubr.bf16.gmra.mxu0 %v4793
        %v4837 = vpop.f32.mrf.mxu0
        %v4838 = vadd.f32 0.0, %v4837
        %v4839 = vpop.f32.mrf.mxu0
        %v4840 = vpop.f32.mrf.mxu0
        %v4841 = vadd.f32 0.0, %v4840
        %v4842 = vpop.f32.mrf.mxu0
        %4843 = vdwg.mxu0
        %v4844 = vmul.f32 %v4665, %v4600
        %v4845 = vmul.f32 %v4668, %v4601
        %v4846 = vmul.f32 %v4673, %v4602
        %v4847 = vmul.f32 %v4676, %v4603
        %v4848 = vmul.f32 %v4720, %v4604
        %v4849 = vmul.f32 %v4723, %v4605
        %v4850 = vmul.f32 %v4728, %v4606
        %v4851 = vmul.f32 %v4731, %v4607
        %v4852 = vmul.f32 %v4775, %v4608
        %v4853 = vmul.f32 %v4778, %v4609
        %v4854 = vmul.f32 %v4783, %v4610
        %v4855 = vmul.f32 %v4786, %v4611
        %v4856 = vmul.f32 %v4830, %v4612
        %v4857 = vmul.f32 %v4833, %v4613
        %v4858 = vmul.f32 %v4838, %v4614
        %v4859 = vmul.f32 %v4841, %v4615
        %v4860 = vpack.c.bf16 %v4845, %v4844
        %v4861 = vpack.c.bf16 %v4847, %v4846
        %v4862 = vpack.c.bf16 %v4849, %v4848
        %v4863 = vpack.c.bf16 %v4851, %v4850
        %v4864 = vpack.c.bf16 %v4853, %v4852
        %v4865 = vpack.c.bf16 %v4855, %v4854
        %v4866 = vpack.c.bf16 %v4857, %v4856
        %v4867 = vpack.c.bf16 %v4859, %v4858
        %v4868 = vld [vmem:[#allocation7] sm:$0xff]
        %v4869 = vld [vmem:[#allocation7 + $0x8] sm:$0xff]
        %v4870 = vld [vmem:[#allocation7 + $0x10] sm:$0xff]
        %v4871 = vld [vmem:[#allocation7 + $0x18] sm:$0xff]
        %v4872 = vld [vmem:[#allocation7 + $0x20] sm:$0xff]
        %v4873 = vld [vmem:[#allocation7 + $0x28] sm:$0xff]
        %v4874 = vld [vmem:[#allocation7 + $0x30] sm:$0xff]
        %v4875 = vld [vmem:[#allocation7 + $0x38] sm:$0xff]
        %v4876 = vld [vmem:[#allocation7 + $0x40] sm:$0xff]
        %v4877 = vld [vmem:[#allocation7 + $0x48] sm:$0xff]
        %v4878 = vld [vmem:[#allocation7 + $0x50] sm:$0xff]
        %v4879 = vld [vmem:[#allocation7 + $0x58] sm:$0xff]
        %v4880 = vld [vmem:[#allocation7 + $0x60] sm:$0xff]
        %v4881 = vld [vmem:[#allocation7 + $0x68] sm:$0xff]
        %v4882 = vld [vmem:[#allocation7 + $0x70] sm:$0xff]
        %v4883 = vld [vmem:[#allocation7 + $0x78] sm:$0xff]
        %v4884 = vld [vmem:[#allocation7 + $0x80] sm:$0xff]
        %v4885 = vld [vmem:[#allocation7 + $0x88] sm:$0xff]
        %v4886 = vld [vmem:[#allocation7 + $0x90] sm:$0xff]
        %v4887 = vld [vmem:[#allocation7 + $0x98] sm:$0xff]
        %v4888 = vld [vmem:[#allocation7 + $0xa0] sm:$0xff]
        %v4889 = vld [vmem:[#allocation7 + $0xa8] sm:$0xff]
        %v4890 = vld [vmem:[#allocation7 + $0xb0] sm:$0xff]
        %v4891 = vld [vmem:[#allocation7 + $0xb8] sm:$0xff]
        %v4892 = vld [vmem:[#allocation7 + $0xc0] sm:$0xff]
        %v4893 = vld [vmem:[#allocation7 + $0xc8] sm:$0xff]
        %v4894 = vld [vmem:[#allocation7 + $0xd0] sm:$0xff]
        %v4895 = vld [vmem:[#allocation7 + $0xd8] sm:$0xff]
        %v4896 = vld [vmem:[#allocation7 + $0xe0] sm:$0xff]
        %v4897 = vld [vmem:[#allocation7 + $0xe8] sm:$0xff]
        %v4898 = vld [vmem:[#allocation7 + $0xf0] sm:$0xff]
        %v4899 = vld [vmem:[#allocation7 + $0xf8] sm:$0xff]
        %v4932 = vunpack.c.l.b16 %v4868
        %v4933 = vunpack.c.h.b16 %v4868
        %v4934 = vunpack.c.l.b16 %v4869
        %v4935 = vunpack.c.h.b16 %v4869
        %v4936 = vunpack.c.l.b16 %v4870
        %v4937 = vunpack.c.h.b16 %v4870
        %v4938 = vunpack.c.l.b16 %v4871
        %v4939 = vunpack.c.h.b16 %v4871
        %v4940 = vunpack.c.l.b16 %v4872
        %v4941 = vunpack.c.h.b16 %v4872
        %v4942 = vunpack.c.l.b16 %v4873
        %v4943 = vunpack.c.h.b16 %v4873
        %v4944 = vunpack.c.l.b16 %v4874
        %v4945 = vunpack.c.h.b16 %v4874
        %v4946 = vunpack.c.l.b16 %v4875
        %v4947 = vunpack.c.h.b16 %v4875
        %v4948 = vunpack.c.l.b16 %v4876
        %v4949 = vunpack.c.h.b16 %v4876
        %v4950 = vunpack.c.l.b16 %v4877
        %v4951 = vunpack.c.h.b16 %v4877
        %v4952 = vunpack.c.l.b16 %v4878
        %v4953 = vunpack.c.h.b16 %v4878
        %v4954 = vunpack.c.l.b16 %v4879
        %v4955 = vunpack.c.h.b16 %v4879
        %v4956 = vunpack.c.l.b16 %v4880
        %v4957 = vunpack.c.h.b16 %v4880
        %v4958 = vunpack.c.l.b16 %v4881
        %v4959 = vunpack.c.h.b16 %v4881
        %v4960 = vunpack.c.l.b16 %v4882
        %v4961 = vunpack.c.h.b16 %v4882
        %v4962 = vunpack.c.l.b16 %v4883
        %v4963 = vunpack.c.h.b16 %v4883
        %v4964 = vunpack.c.l.b16 %v4884
        %v4965 = vunpack.c.h.b16 %v4884
        %v4966 = vunpack.c.l.b16 %v4885
        %v4967 = vunpack.c.h.b16 %v4885
        %v4968 = vunpack.c.l.b16 %v4886
        %v4969 = vunpack.c.h.b16 %v4886
        %v4970 = vunpack.c.l.b16 %v4887
        %v4971 = vunpack.c.h.b16 %v4887
        %v4972 = vunpack.c.l.b16 %v4888
        %v4973 = vunpack.c.h.b16 %v4888
        %v4974 = vunpack.c.l.b16 %v4889
        %v4975 = vunpack.c.h.b16 %v4889
        %v4976 = vunpack.c.l.b16 %v4890
        %v4977 = vunpack.c.h.b16 %v4890
        %v4978 = vunpack.c.l.b16 %v4891
        %v4979 = vunpack.c.h.b16 %v4891
        %v4980 = vunpack.c.l.b16 %v4892
        %v4981 = vunpack.c.h.b16 %v4892
        %v4982 = vunpack.c.l.b16 %v4893
        %v4983 = vunpack.c.h.b16 %v4893
        %v4984 = vunpack.c.l.b16 %v4894
        %v4985 = vunpack.c.h.b16 %v4894
        %v4986 = vunpack.c.l.b16 %v4895
        %v4987 = vunpack.c.h.b16 %v4895
        %v4988 = vunpack.c.l.b16 %v4896
        %v4989 = vunpack.c.h.b16 %v4896
        %v4990 = vunpack.c.l.b16 %v4897
        %v4991 = vunpack.c.h.b16 %v4897
        %v4992 = vunpack.c.l.b16 %v4898
        %v4993 = vunpack.c.h.b16 %v4898
        %v4994 = vunpack.c.l.b16 %v4899
        %v4995 = vunpack.c.h.b16 %v4899
        %v4996 = vpack.c.b16 %v4936, %v4932
        %v4997 = vpack.c.b16 %v4937, %v4933
        %v4998 = vpack.c.b16 %v4938, %v4934
        %v4999 = vpack.c.b16 %v4939, %v4935
        %v5000 = vpack.c.b16 %v4944, %v4940
        %v5001 = vpack.c.b16 %v4945, %v4941
        %v5002 = vpack.c.b16 %v4946, %v4942
        %v5003 = vpack.c.b16 %v4947, %v4943
        %v5004 = vpack.c.b16 %v4952, %v4948
        %v5005 = vpack.c.b16 %v4953, %v4949
        %v5006 = vpack.c.b16 %v4954, %v4950
        %v5007 = vpack.c.b16 %v4955, %v4951
        %v5008 = vpack.c.b16 %v4960, %v4956
        %v5009 = vpack.c.b16 %v4961, %v4957
        %v5010 = vpack.c.b16 %v4962, %v4958
        %v5011 = vpack.c.b16 %v4963, %v4959
        %v5012 = vpack.c.b16 %v4968, %v4964
        %v5013 = vpack.c.b16 %v4969, %v4965
        %v5014 = vpack.c.b16 %v4970, %v4966
        %v5015 = vpack.c.b16 %v4971, %v4967
        %v5016 = vpack.c.b16 %v4976, %v4972
        %v5017 = vpack.c.b16 %v4977, %v4973
        %v5018 = vpack.c.b16 %v4978, %v4974
        %v5019 = vpack.c.b16 %v4979, %v4975
        %v5020 = vpack.c.b16 %v4984, %v4980
        %v5021 = vpack.c.b16 %v4985, %v4981
        %v5022 = vpack.c.b16 %v4986, %v4982
        %v5023 = vpack.c.b16 %v4987, %v4983
        %v5024 = vpack.c.b16 %v4992, %v4988
        %v5025 = vpack.c.b16 %v4993, %v4989
        %v5026 = vpack.c.b16 %v4994, %v4990
        %v5027 = vpack.c.b16 %v4995, %v4991
        %5060 = vmatprep.subr.bf16.mxu0 %v5025
        %5061 = vmatpush1.bf16.msra.mxu0 %v5024
        %5062 = vmatprep.subr.bf16.mxu0 %v5021
        %5063 = vmatpush1.bf16.msra.mxu0 %v5020
        %5064 = vmatprep.subr.bf16.mxu0 %v5017
        %5065 = vmatpush1.bf16.msra.mxu0 %v5016
        %5066 = vmatprep.subr.bf16.mxu0 %v5013
        %5067 = vmatpush1.bf16.msra.mxu0 %v5012
        %5068 = vmatprep.subr.bf16.mxu0 %v5009
        %5069 = vmatpush1.bf16.msra.mxu0 %v5008
        %5070 = vmatprep.subr.bf16.mxu0 %v5005
        %5071 = vmatpush1.bf16.msra.mxu0 %v5004
        %5072 = vmatprep.subr.bf16.mxu0 %v5001
        %5073 = vmatpush1.bf16.msra.mxu0 %v5000
        %5074 = vmatprep.subr.bf16.mxu0 %v4997
        %5075 = vmatpush1.bf16.msra.mxu0 %v4996
        %5076 = vmatprep.subr.bf16.mxu0 0
        %5077 = vmatpush2.bf16.msra.mxu0 0
        %5078 = vmatprep.subr.bf16.mxu0 0
        %5079 = vmatpush2.bf16.msra.mxu0 0
        %5080 = vmatprep.subr.bf16.mxu0 0
        %5081 = vmatpush2.bf16.msra.mxu0 0
        %5082 = vmatprep.subr.bf16.mxu0 0
        %5083 = vmatpush2.bf16.msra.mxu0 0
        %5084 = vmatprep.subr.bf16.mxu0 0
        %5085 = vmatpush2.bf16.msra.mxu0 0
        %5086 = vmatprep.subr.bf16.mxu0 0
        %5087 = vmatpush2.bf16.msra.mxu0 0
        %5088 = vmatprep.subr.bf16.mxu0 0
        %5089 = vmatpush2.bf16.msra.mxu0 0
        %5090 = vmatprep.subr.bf16.mxu0 0
        %5091 = vmatpush2.bf16.msra.mxu0 0
        %5092 = vmatprep.mubr.bf16.mxu0 0
        %5093 = vmatmul.mubr.bf16.gmra.mxu0 %v4860
        %v5094 = vpop.f32.mrf.mxu0
        %v5095 = vadd.f32 0.0, %v5094
        %v5096 = vpop.f32.mrf.mxu0
        %v5097 = vadd.f32 0.0, %v5096
        %v5098 = vpop.f32.mrf.mxu0
        %v5099 = vadd.f32 0.0, %v5098
        %v5100 = vpop.f32.mrf.mxu0
        %v5101 = vadd.f32 0.0, %v5100
        %5102 = vmatprep.mubr.bf16.mxu0 0
        %5103 = vmatmul.mubr.bf16.gmra.mxu0 %v4861
        %v5104 = vpop.f32.mrf.mxu0
        %v5105 = vadd.f32 0.0, %v5104
        %v5106 = vpop.f32.mrf.mxu0
        %v5107 = vadd.f32 0.0, %v5106
        %v5108 = vpop.f32.mrf.mxu0
        %v5109 = vadd.f32 0.0, %v5108
        %v5110 = vpop.f32.mrf.mxu0
        %v5111 = vadd.f32 0.0, %v5110
        %5112 = vmatprep.mubr.bf16.mxu0 0
        %5113 = vmatmul.mubr.bf16.gmra.mxu0 %v4862
        %v5114 = vpop.f32.mrf.mxu0
        %v5115 = vadd.f32 0.0, %v5114
        %v5116 = vpop.f32.mrf.mxu0
        %v5117 = vadd.f32 0.0, %v5116
        %v5118 = vpop.f32.mrf.mxu0
        %v5119 = vadd.f32 0.0, %v5118
        %v5120 = vpop.f32.mrf.mxu0
        %v5121 = vadd.f32 0.0, %v5120
        %5122 = vmatprep.mubr.bf16.mxu0 0
        %5123 = vmatmul.mubr.bf16.gmra.mxu0 %v4863
        %v5124 = vpop.f32.mrf.mxu0
        %v5125 = vadd.f32 0.0, %v5124
        %v5126 = vpop.f32.mrf.mxu0
        %v5127 = vadd.f32 0.0, %v5126
        %v5128 = vpop.f32.mrf.mxu0
        %v5129 = vadd.f32 0.0, %v5128
        %v5130 = vpop.f32.mrf.mxu0
        %v5131 = vadd.f32 0.0, %v5130
        %5132 = vmatprep.mubr.bf16.mxu0 0
        %5133 = vmatmul.mubr.bf16.gmra.mxu0 %v4864
        %v5134 = vpop.f32.mrf.mxu0
        %v5135 = vadd.f32 0.0, %v5134
        %v5136 = vpop.f32.mrf.mxu0
        %v5137 = vadd.f32 0.0, %v5136
        %v5138 = vpop.f32.mrf.mxu0
        %v5139 = vadd.f32 0.0, %v5138
        %v5140 = vpop.f32.mrf.mxu0
        %v5141 = vadd.f32 0.0, %v5140
        %5142 = vmatprep.mubr.bf16.mxu0 0
        %5143 = vmatmul.mubr.bf16.gmra.mxu0 %v4865
        %v5144 = vpop.f32.mrf.mxu0
        %v5145 = vadd.f32 0.0, %v5144
        %v5146 = vpop.f32.mrf.mxu0
        %v5147 = vadd.f32 0.0, %v5146
        %v5148 = vpop.f32.mrf.mxu0
        %v5149 = vadd.f32 0.0, %v5148
        %v5150 = vpop.f32.mrf.mxu0
        %v5151 = vadd.f32 0.0, %v5150
        %5152 = vmatprep.mubr.bf16.mxu0 0
        %5153 = vmatmul.mubr.bf16.gmra.mxu0 %v4866
        %v5154 = vpop.f32.mrf.mxu0
        %v5155 = vadd.f32 0.0, %v5154
        %v5156 = vpop.f32.mrf.mxu0
        %v5157 = vadd.f32 0.0, %v5156
        %v5158 = vpop.f32.mrf.mxu0
        %v5159 = vadd.f32 0.0, %v5158
        %v5160 = vpop.f32.mrf.mxu0
        %v5161 = vadd.f32 0.0, %v5160
        %5162 = vmatprep.mubr.bf16.mxu0 0
        %5163 = vmatmul.mubr.bf16.gmra.mxu0 %v4867
        %v5164 = vpop.f32.mrf.mxu0
        %v5165 = vadd.f32 0.0, %v5164
        %v5166 = vpop.f32.mrf.mxu0
        %v5167 = vadd.f32 0.0, %v5166
        %v5168 = vpop.f32.mrf.mxu0
        %v5169 = vadd.f32 0.0, %v5168
        %v5170 = vpop.f32.mrf.mxu0
        %v5171 = vadd.f32 0.0, %v5170
        %5172 = vdwg.mxu0
        %5173 = vmatprep.subr.bf16.mxu0 %v5027
        %5174 = vmatpush1.bf16.msra.mxu0 %v5026
        %5175 = vmatprep.subr.bf16.mxu0 %v5023
        %5176 = vmatpush1.bf16.msra.mxu0 %v5022
        %5177 = vmatprep.subr.bf16.mxu0 %v5019
        %5178 = vmatpush1.bf16.msra.mxu0 %v5018
        %5179 = vmatprep.subr.bf16.mxu0 %v5015
        %5180 = vmatpush1.bf16.msra.mxu0 %v5014
        %5181 = vmatprep.subr.bf16.mxu0 %v5011
        %5182 = vmatpush1.bf16.msra.mxu0 %v5010
        %5183 = vmatprep.subr.bf16.mxu0 %v5007
        %5184 = vmatpush1.bf16.msra.mxu0 %v5006
        %5185 = vmatprep.subr.bf16.mxu0 %v5003
        %5186 = vmatpush1.bf16.msra.mxu0 %v5002
        %5187 = vmatprep.subr.bf16.mxu0 %v4999
        %5188 = vmatpush1.bf16.msra.mxu0 %v4998
        %5189 = vmatprep.subr.bf16.mxu0 0
        %5190 = vmatpush2.bf16.msra.mxu0 0
        %5191 = vmatprep.subr.bf16.mxu0 0
        %5192 = vmatpush2.bf16.msra.mxu0 0
        %5193 = vmatprep.subr.bf16.mxu0 0
        %5194 = vmatpush2.bf16.msra.mxu0 0
        %5195 = vmatprep.subr.bf16.mxu0 0
        %5196 = vmatpush2.bf16.msra.mxu0 0
        %5197 = vmatprep.subr.bf16.mxu0 0
        %5198 = vmatpush2.bf16.msra.mxu0 0
        %5199 = vmatprep.subr.bf16.mxu0 0
        %5200 = vmatpush2.bf16.msra.mxu0 0
        %5201 = vmatprep.subr.bf16.mxu0 0
        %5202 = vmatpush2.bf16.msra.mxu0 0
        %5203 = vmatprep.subr.bf16.mxu0 0
        %5204 = vmatpush2.bf16.msra.mxu0 0
        %5205 = vmatprep.mubr.bf16.mxu0 0
        %5206 = vmatmul.mubr.bf16.gmra.mxu0 %v4860
        %v5207 = vpop.f32.mrf.mxu0
        %v5208 = vadd.f32 0.0, %v5207
        %v5209 = vpop.f32.mrf.mxu0
        %v5210 = vadd.f32 0.0, %v5209
        %v5211 = vpop.f32.mrf.mxu0
        %v5212 = vadd.f32 0.0, %v5211
        %v5213 = vpop.f32.mrf.mxu0
        %v5214 = vadd.f32 0.0, %v5213
        %5215 = vmatprep.mubr.bf16.mxu0 0
        %5216 = vmatmul.mubr.bf16.gmra.mxu0 %v4861
        %v5217 = vpop.f32.mrf.mxu0
        %v5218 = vadd.f32 0.0, %v5217
        %v5219 = vpop.f32.mrf.mxu0
        %v5220 = vadd.f32 0.0, %v5219
        %v5221 = vpop.f32.mrf.mxu0
        %v5222 = vadd.f32 0.0, %v5221
        %v5223 = vpop.f32.mrf.mxu0
        %v5224 = vadd.f32 0.0, %v5223
        %5225 = vmatprep.mubr.bf16.mxu0 0
        %5226 = vmatmul.mubr.bf16.gmra.mxu0 %v4862
        %v5227 = vpop.f32.mrf.mxu0
        %v5228 = vadd.f32 0.0, %v5227
        %v5229 = vpop.f32.mrf.mxu0
        %v5230 = vadd.f32 0.0, %v5229
        %v5231 = vpop.f32.mrf.mxu0
        %v5232 = vadd.f32 0.0, %v5231
        %v5233 = vpop.f32.mrf.mxu0
        %v5234 = vadd.f32 0.0, %v5233
        %5235 = vmatprep.mubr.bf16.mxu0 0
        %5236 = vmatmul.mubr.bf16.gmra.mxu0 %v4863
        %v5237 = vpop.f32.mrf.mxu0
        %v5238 = vadd.f32 0.0, %v5237
        %v5239 = vpop.f32.mrf.mxu0
        %v5240 = vadd.f32 0.0, %v5239
        %v5241 = vpop.f32.mrf.mxu0
        %v5242 = vadd.f32 0.0, %v5241
        %v5243 = vpop.f32.mrf.mxu0
        %v5244 = vadd.f32 0.0, %v5243
        %5245 = vmatprep.mubr.bf16.mxu0 0
        %5246 = vmatmul.mubr.bf16.gmra.mxu0 %v4864
        %v5247 = vpop.f32.mrf.mxu0
        %v5248 = vadd.f32 0.0, %v5247
        %v5249 = vpop.f32.mrf.mxu0
        %v5250 = vadd.f32 0.0, %v5249
        %v5251 = vpop.f32.mrf.mxu0
        %v5252 = vadd.f32 0.0, %v5251
        %v5253 = vpop.f32.mrf.mxu0
        %v5254 = vadd.f32 0.0, %v5253
        %5255 = vmatprep.mubr.bf16.mxu0 0
        %5256 = vmatmul.mubr.bf16.gmra.mxu0 %v4865
        %v5257 = vpop.f32.mrf.mxu0
        %v5258 = vadd.f32 0.0, %v5257
        %v5259 = vpop.f32.mrf.mxu0
        %v5260 = vadd.f32 0.0, %v5259
        %v5261 = vpop.f32.mrf.mxu0
        %v5262 = vadd.f32 0.0, %v5261
        %v5263 = vpop.f32.mrf.mxu0
        %v5264 = vadd.f32 0.0, %v5263
        %5265 = vmatprep.mubr.bf16.mxu0 0
        %5266 = vmatmul.mubr.bf16.gmra.mxu0 %v4866
        %v5267 = vpop.f32.mrf.mxu0
        %v5268 = vadd.f32 0.0, %v5267
        %v5269 = vpop.f32.mrf.mxu0
        %v5270 = vadd.f32 0.0, %v5269
        %v5271 = vpop.f32.mrf.mxu0
        %v5272 = vadd.f32 0.0, %v5271
        %v5273 = vpop.f32.mrf.mxu0
        %v5274 = vadd.f32 0.0, %v5273
        %5275 = vmatprep.mubr.bf16.mxu0 0
        %5276 = vmatmul.mubr.bf16.gmra.mxu0 %v4867
        %v5277 = vpop.f32.mrf.mxu0
        %v5278 = vadd.f32 0.0, %v5277
        %v5279 = vpop.f32.mrf.mxu0
        %v5280 = vadd.f32 0.0, %v5279
        %v5281 = vpop.f32.mrf.mxu0
        %v5282 = vadd.f32 0.0, %v5281
        %v5283 = vpop.f32.mrf.mxu0
        %v5284 = vadd.f32 0.0, %v5283
        %5285 = vdwg.mxu0
        %v5286 = vadd.f32 %v4226, %v5095
        %v5287 = vadd.f32 %v4230, %v5097
        %v5288 = vadd.f32 %v4234, %v5208
        %v5289 = vadd.f32 %v4238, %v5210
        %v5290 = vadd.f32 %v4226, %v5099
        %v5291 = vadd.f32 %v4230, %v5101
        %v5292 = vadd.f32 %v4234, %v5212
        %v5293 = vadd.f32 %v4238, %v5214
        %v5294 = vadd.f32 %v4226, %v5105
        %v5295 = vadd.f32 %v4230, %v5107
        %v5296 = vadd.f32 %v4234, %v5218
        %v5297 = vadd.f32 %v4238, %v5220
        %v5298 = vadd.f32 %v4226, %v5109
        %v5299 = vadd.f32 %v4230, %v5111
        %v5300 = vadd.f32 %v4234, %v5222
        %v5301 = vadd.f32 %v4238, %v5224
        %v5302 = vadd.f32 %v4226, %v5115
        %v5303 = vadd.f32 %v4230, %v5117
        %v5304 = vadd.f32 %v4234, %v5228
        %v5305 = vadd.f32 %v4238, %v5230
        %v5306 = vadd.f32 %v4226, %v5119
        %v5307 = vadd.f32 %v4230, %v5121
        %v5308 = vadd.f32 %v4234, %v5232
        %v5309 = vadd.f32 %v4238, %v5234
        %v5310 = vadd.f32 %v4226, %v5125
        %v5311 = vadd.f32 %v4230, %v5127
        %v5312 = vadd.f32 %v4234, %v5238
        %v5313 = vadd.f32 %v4238, %v5240
        %v5314 = vadd.f32 %v4226, %v5129
        %v5315 = vadd.f32 %v4230, %v5131
        %v5316 = vadd.f32 %v4234, %v5242
        %v5317 = vadd.f32 %v4238, %v5244
        %v5318 = vadd.f32 %v4226, %v5135
        %v5319 = vadd.f32 %v4230, %v5137
        %v5320 = vadd.f32 %v4234, %v5248
        %v5321 = vadd.f32 %v4238, %v5250
        %v5322 = vadd.f32 %v4226, %v5139
        %v5323 = vadd.f32 %v4230, %v5141
        %v5324 = vadd.f32 %v4234, %v5252
        %v5325 = vadd.f32 %v4238, %v5254
        %v5326 = vadd.f32 %v4226, %v5145
        %v5327 = vadd.f32 %v4230, %v5147
        %v5328 = vadd.f32 %v4234, %v5258
        %v5329 = vadd.f32 %v4238, %v5260
        %v5330 = vadd.f32 %v4226, %v5149
        %v5331 = vadd.f32 %v4230, %v5151
        %v5332 = vadd.f32 %v4234, %v5262
        %v5333 = vadd.f32 %v4238, %v5264
        %v5334 = vadd.f32 %v4226, %v5155
        %v5335 = vadd.f32 %v4230, %v5157
        %v5336 = vadd.f32 %v4234, %v5268
        %v5337 = vadd.f32 %v4238, %v5270
        %v5338 = vadd.f32 %v4226, %v5159
        %v5339 = vadd.f32 %v4230, %v5161
        %v5340 = vadd.f32 %v4234, %v5272
        %v5341 = vadd.f32 %v4238, %v5274
        %v5342 = vadd.f32 %v4226, %v5165
        %v5343 = vadd.f32 %v4230, %v5167
        %v5344 = vadd.f32 %v4234, %v5278
        %v5345 = vadd.f32 %v4238, %v5280
        %v5346 = vadd.f32 %v4226, %v5169
        %v5347 = vadd.f32 %v4230, %v5171
        %v5348 = vadd.f32 %v4234, %v5282
        %v5349 = vadd.f32 %v4238, %v5284
        %5350 = vmatprep.subr.bf16.mxu0 0
        %5351 = vmatpush1.bf16.xpose.msra.mxu0 0
        %5352 = vmatprep.subr.bf16.mxu0 0
        %5353 = vmatpush1.bf16.xpose.msra.mxu0 0
        %5354 = vmatprep.subr.bf16.mxu0 0
        %5355 = vmatpush1.bf16.xpose.msra.mxu0 0
        %5356 = vmatprep.subr.bf16.mxu0 0
        %5357 = vmatpush1.bf16.xpose.msra.mxu0 0
        %5358 = vmatprep.subr.bf16.mxu0 0
        %5359 = vmatpush1.bf16.xpose.msra.mxu0 0
        %5360 = vmatprep.subr.bf16.mxu0 0
        %5361 = vmatpush1.bf16.xpose.msra.mxu0 0
        %5362 = vmatprep.subr.bf16.mxu0 0
        %5363 = vmatpush1.bf16.xpose.msra.mxu0 %v4131
        %5364 = vmatprep.subr.bf16.mxu0 0
        %5365 = vmatpush1.bf16.xpose.msra.mxu0 %v4119
        %5366 = vmatprep.subr.bf16.mxu0 0
        %5367 = vmatpush2.bf16.xpose.msra.mxu0 0
        %5368 = vmatprep.subr.bf16.mxu0 0
        %5369 = vmatpush2.bf16.xpose.msra.mxu0 0
        %5370 = vmatprep.subr.bf16.mxu0 0
        %5371 = vmatpush2.bf16.xpose.msra.mxu0 0
        %5372 = vmatprep.subr.bf16.mxu0 0
        %5373 = vmatpush2.bf16.xpose.msra.mxu0 0
        %5374 = vmatprep.subr.bf16.mxu0 0
        %5375 = vmatpush2.bf16.xpose.msra.mxu0 0
        %5376 = vmatprep.subr.bf16.mxu0 0
        %5377 = vmatpush2.bf16.xpose.msra.mxu0 0
        %5378 = vmatprep.subr.bf16.mxu0 0
        %5379 = vmatpush2.bf16.xpose.msra.mxu0 0
        %5380 = vmatprep.subr.bf16.mxu0 0
        %5381 = vmatpush2.bf16.xpose.msra.mxu0 0
        %5382 = vmatprep.mubr.bf16.mxu0 0
        %5383 = vmatmul.mubr.bf16.gmra.mxu0 %v4115
        %v5384 = vpop.f32.mrf.mxu0
        %v5385 = vadd.f32 0.0, %v5384
        %v5386 = vpop.f32.mrf.mxu0
        %v5387 = vpop.f32.mrf.mxu0
        %v5388 = vadd.f32 0.0, %v5387
        %v5389 = vpop.f32.mrf.mxu0
        %5390 = vmatprep.mubr.bf16.mxu0 0
        %5391 = vmatmul.mubr.bf16.gmra.mxu0 %v4127
        %v5392 = vpop.f32.mrf.mxu0
        %v5393 = vadd.f32 0.0, %v5392
        %v5394 = vpop.f32.mrf.mxu0
        %v5395 = vpop.f32.mrf.mxu0
        %v5396 = vadd.f32 0.0, %v5395
        %v5397 = vpop.f32.mrf.mxu0
        %5398 = vdwg.mxu0
        %5399 = vmatprep.subr.bf16.mxu0 0
        %5400 = vmatpush1.bf16.xpose.msra.mxu0 0
        %5401 = vmatprep.subr.bf16.mxu0 0
        %5402 = vmatpush1.bf16.xpose.msra.mxu0 0
        %5403 = vmatprep.subr.bf16.mxu0 0
        %5404 = vmatpush1.bf16.xpose.msra.mxu0 0
        %5405 = vmatprep.subr.bf16.mxu0 0
        %5406 = vmatpush1.bf16.xpose.msra.mxu0 0
        %5407 = vmatprep.subr.bf16.mxu0 0
        %5408 = vmatpush1.bf16.xpose.msra.mxu0 0
        %5409 = vmatprep.subr.bf16.mxu0 0
        %5410 = vmatpush1.bf16.xpose.msra.mxu0 0
        %5411 = vmatprep.subr.bf16.mxu0 0
        %5412 = vmatpush1.bf16.xpose.msra.mxu0 %v4155
        %5413 = vmatprep.subr.bf16.mxu0 0
        %5414 = vmatpush1.bf16.xpose.msra.mxu0 %v4143
        %5415 = vmatprep.subr.bf16.mxu0 0
        %5416 = vmatpush2.bf16.xpose.msra.mxu0 0
        %5417 = vmatprep.subr.bf16.mxu0 0
        %5418 = vmatpush2.bf16.xpose.msra.mxu0 0
        %5419 = vmatprep.subr.bf16.mxu0 0
        %5420 = vmatpush2.bf16.xpose.msra.mxu0 0
        %5421 = vmatprep.subr.bf16.mxu0 0
        %5422 = vmatpush2.bf16.xpose.msra.mxu0 0
        %5423 = vmatprep.subr.bf16.mxu0 0
        %5424 = vmatpush2.bf16.xpose.msra.mxu0 0
        %5425 = vmatprep.subr.bf16.mxu0 0
        %5426 = vmatpush2.bf16.xpose.msra.mxu0 0
        %5427 = vmatprep.subr.bf16.mxu0 0
        %5428 = vmatpush2.bf16.xpose.msra.mxu0 0
        %5429 = vmatprep.subr.bf16.mxu0 0
        %5430 = vmatpush2.bf16.xpose.msra.mxu0 0
        %5431 = vmatprep.mubr.bf16.mxu0 0
        %5432 = vmatmul.mubr.bf16.gmra.mxu0 %v4139
        %v5433 = vpop.f32.mrf.mxu0
        %v5434 = vadd.f32 0.0, %v5433
        %v5435 = vpop.f32.mrf.mxu0
        %v5436 = vpop.f32.mrf.mxu0
        %v5437 = vadd.f32 0.0, %v5436
        %v5438 = vpop.f32.mrf.mxu0
        %5439 = vmatprep.mubr.bf16.mxu0 0
        %5440 = vmatmul.mubr.bf16.gmra.mxu0 %v4151
        %v5441 = vpop.f32.mrf.mxu0
        %v5442 = vadd.f32 0.0, %v5441
        %v5443 = vpop.f32.mrf.mxu0
        %v5444 = vpop.f32.mrf.mxu0
        %v5445 = vadd.f32 0.0, %v5444
        %v5446 = vpop.f32.mrf.mxu0
        %5447 = vdwg.mxu0
        %5448 = vmatprep.subr.bf16.mxu0 0
        %5449 = vmatpush1.bf16.xpose.msra.mxu0 0
        %5450 = vmatprep.subr.bf16.mxu0 0
        %5451 = vmatpush1.bf16.xpose.msra.mxu0 0
        %5452 = vmatprep.subr.bf16.mxu0 0
        %5453 = vmatpush1.bf16.xpose.msra.mxu0 0
        %5454 = vmatprep.subr.bf16.mxu0 0
        %5455 = vmatpush1.bf16.xpose.msra.mxu0 0
        %5456 = vmatprep.subr.bf16.mxu0 0
        %5457 = vmatpush1.bf16.xpose.msra.mxu0 0
        %5458 = vmatprep.subr.bf16.mxu0 0
        %5459 = vmatpush1.bf16.xpose.msra.mxu0 0
        %5460 = vmatprep.subr.bf16.mxu0 0
        %5461 = vmatpush1.bf16.xpose.msra.mxu0 %v4179
        %5462 = vmatprep.subr.bf16.mxu0 0
        %5463 = vmatpush1.bf16.xpose.msra.mxu0 %v4167
        %5464 = vmatprep.subr.bf16.mxu0 0
        %5465 = vmatpush2.bf16.xpose.msra.mxu0 0
        %5466 = vmatprep.subr.bf16.mxu0 0
        %5467 = vmatpush2.bf16.xpose.msra.mxu0 0
        %5468 = vmatprep.subr.bf16.mxu0 0
        %5469 = vmatpush2.bf16.xpose.msra.mxu0 0
        %5470 = vmatprep.subr.bf16.mxu0 0
        %5471 = vmatpush2.bf16.xpose.msra.mxu0 0
        %5472 = vmatprep.subr.bf16.mxu0 0
        %5473 = vmatpush2.bf16.xpose.msra.mxu0 0
        %5474 = vmatprep.subr.bf16.mxu0 0
        %5475 = vmatpush2.bf16.xpose.msra.mxu0 0
        %5476 = vmatprep.subr.bf16.mxu0 0
        %5477 = vmatpush2.bf16.xpose.msra.mxu0 0
        %5478 = vmatprep.subr.bf16.mxu0 0
        %5479 = vmatpush2.bf16.xpose.msra.mxu0 0
        %5480 = vmatprep.mubr.bf16.mxu0 0
        %5481 = vmatmul.mubr.bf16.gmra.mxu0 %v4163
        %v5482 = vpop.f32.mrf.mxu0
        %v5483 = vadd.f32 0.0, %v5482
        %v5484 = vpop.f32.mrf.mxu0
        %v5485 = vpop.f32.mrf.mxu0
        %v5486 = vadd.f32 0.0, %v5485
        %v5487 = vpop.f32.mrf.mxu0
        %5488 = vmatprep.mubr.bf16.mxu0 0
        %5489 = vmatmul.mubr.bf16.gmra.mxu0 %v4175
        %v5490 = vpop.f32.mrf.mxu0
        %v5491 = vadd.f32 0.0, %v5490
        %v5492 = vpop.f32.mrf.mxu0
        %v5493 = vpop.f32.mrf.mxu0
        %v5494 = vadd.f32 0.0, %v5493
        %v5495 = vpop.f32.mrf.mxu0
        %5496 = vdwg.mxu0
        %5497 = vmatprep.subr.bf16.mxu0 0
        %5498 = vmatpush1.bf16.xpose.msra.mxu0 0
        %5499 = vmatprep.subr.bf16.mxu0 0
        %5500 = vmatpush1.bf16.xpose.msra.mxu0 0
        %5501 = vmatprep.subr.bf16.mxu0 0
        %5502 = vmatpush1.bf16.xpose.msra.mxu0 0
        %5503 = vmatprep.subr.bf16.mxu0 0
        %5504 = vmatpush1.bf16.xpose.msra.mxu0 0
        %5505 = vmatprep.subr.bf16.mxu0 0
        %5506 = vmatpush1.bf16.xpose.msra.mxu0 0
        %5507 = vmatprep.subr.bf16.mxu0 0
        %5508 = vmatpush1.bf16.xpose.msra.mxu0 0
        %5509 = vmatprep.subr.bf16.mxu0 0
        %5510 = vmatpush1.bf16.xpose.msra.mxu0 %v4203
        %5511 = vmatprep.subr.bf16.mxu0 0
        %5512 = vmatpush1.bf16.xpose.msra.mxu0 %v4191
        %5513 = vmatprep.subr.bf16.mxu0 0
        %5514 = vmatpush2.bf16.xpose.msra.mxu0 0
        %5515 = vmatprep.subr.bf16.mxu0 0
        %5516 = vmatpush2.bf16.xpose.msra.mxu0 0
        %5517 = vmatprep.subr.bf16.mxu0 0
        %5518 = vmatpush2.bf16.xpose.msra.mxu0 0
        %5519 = vmatprep.subr.bf16.mxu0 0
        %5520 = vmatpush2.bf16.xpose.msra.mxu0 0
        %5521 = vmatprep.subr.bf16.mxu0 0
        %5522 = vmatpush2.bf16.xpose.msra.mxu0 0
        %5523 = vmatprep.subr.bf16.mxu0 0
        %5524 = vmatpush2.bf16.xpose.msra.mxu0 0
        %5525 = vmatprep.subr.bf16.mxu0 0
        %5526 = vmatpush2.bf16.xpose.msra.mxu0 0
        %5527 = vmatprep.subr.bf16.mxu0 0
        %5528 = vmatpush2.bf16.xpose.msra.mxu0 0
        %5529 = vmatprep.mubr.bf16.mxu0 0
        %5530 = vmatmul.mubr.bf16.gmra.mxu0 %v4187
        %v5531 = vpop.f32.mrf.mxu0
        %v5532 = vadd.f32 0.0, %v5531
        %v5533 = vpop.f32.mrf.mxu0
        %v5534 = vpop.f32.mrf.mxu0
        %v5535 = vadd.f32 0.0, %v5534
        %v5536 = vpop.f32.mrf.mxu0
        %5537 = vmatprep.mubr.bf16.mxu0 0
        %5538 = vmatmul.mubr.bf16.gmra.mxu0 %v4199
        %v5539 = vpop.f32.mrf.mxu0
        %v5540 = vadd.f32 0.0, %v5539
        %v5541 = vpop.f32.mrf.mxu0
        %v5542 = vpop.f32.mrf.mxu0
        %v5543 = vadd.f32 0.0, %v5542
        %v5544 = vpop.f32.mrf.mxu0
        %5545 = vdwg.mxu0
        %v5546 = vsel %vm4217, %v5385, -1e+30
        %v5547 = vsel %vm4218, %v5388, -1e+30
        %v5548 = vsel %vm4219, %v5393, -1e+30
        %v5549 = vsel %vm4220, %v5396, -1e+30
        %v5550 = vsel %vm4217, %v5434, -1e+30
        %v5551 = vsel %vm4218, %v5437, -1e+30
        %v5552 = vsel %vm4219, %v5442, -1e+30
        %v5553 = vsel %vm4220, %v5445, -1e+30
        %v5554 = vsel %vm4217, %v5483, -1e+30
        %v5555 = vsel %vm4218, %v5486, -1e+30
        %v5556 = vsel %vm4219, %v5491, -1e+30
        %v5557 = vsel %vm4220, %v5494, -1e+30
        %v5558 = vsel %vm4217, %v5532, -1e+30
        %v5559 = vsel %vm4218, %v5535, -1e+30
        %v5560 = vsel %vm4219, %v5540, -1e+30
        %v5561 = vsel %vm4220, %v5543, -1e+30
        %v5562 = vsel %vm4455, %v5546, -inf
        %5563 = vmax.xlane.f32.xlu0 %v5562
        %v5564 = vpop.xlane.xlu0 %5563
        %v5565 = vsel %vm4455, %v5547, -inf
        %5566 = vmax.xlane.f32.xlu0 %v5565
        %v5567 = vpop.xlane.xlu0 %5566
        %v5568 = vsel %vm4455, %v5548, -inf
        %5569 = vmax.xlane.f32.xlu0 %v5568
        %v5570 = vpop.xlane.xlu0 %5569
        %v5571 = vsel %vm4455, %v5549, -inf
        %5572 = vmax.xlane.f32.xlu0 %v5571
        %v5573 = vpop.xlane.xlu0 %5572
        %v5574 = vsel %vm4455, %v5550, -inf
        %5575 = vmax.xlane.f32.xlu0 %v5574
        %v5576 = vpop.xlane.xlu0 %5575
        %v5577 = vsel %vm4455, %v5551, -inf
        %5578 = vmax.xlane.f32.xlu0 %v5577
        %v5579 = vpop.xlane.xlu0 %5578
        %v5580 = vsel %vm4455, %v5552, -inf
        %5581 = vmax.xlane.f32.xlu0 %v5580
        %v5582 = vpop.xlane.xlu0 %5581
        %v5583 = vsel %vm4455, %v5553, -inf
        %5584 = vmax.xlane.f32.xlu0 %v5583
        %v5585 = vpop.xlane.xlu0 %5584
        %v5586 = vsel %vm4455, %v5554, -inf
        %5587 = vmax.xlane.f32.xlu0 %v5586
        %v5588 = vpop.xlane.xlu0 %5587
        %v5589 = vsel %vm4455, %v5555, -inf
        %5590 = vmax.xlane.f32.xlu0 %v5589
        %v5591 = vpop.xlane.xlu0 %5590
        %v5592 = vsel %vm4455, %v5556, -inf
        %5593 = vmax.xlane.f32.xlu0 %v5592
        %v5594 = vpop.xlane.xlu0 %5593
        %v5595 = vsel %vm4455, %v5557, -inf
        %5596 = vmax.xlane.f32.xlu0 %v5595
        %v5597 = vpop.xlane.xlu0 %5596
        %v5598 = vsel %vm4455, %v5558, -inf
        %5599 = vmax.xlane.f32.xlu0 %v5598
        %v5600 = vpop.xlane.xlu0 %5599
        %v5601 = vsel %vm4455, %v5559, -inf
        %5602 = vmax.xlane.f32.xlu0 %v5601
        %v5603 = vpop.xlane.xlu0 %5602
        %v5604 = vsel %vm4455, %v5560, -inf
        %5605 = vmax.xlane.f32.xlu0 %v5604
        %v5606 = vpop.xlane.xlu0 %5605
        %v5607 = vsel %vm4455, %v5561, -inf
        %5608 = vmax.xlane.f32.xlu0 %v5607
        %v5609 = vpop.xlane.xlu0 %5608
        %v5610 = vsub.f32 %v5546, %v5564
        %v5611 = vsub.f32 %v5547, %v5567
        %v5612 = vsub.f32 %v5548, %v5570
        %v5613 = vsub.f32 %v5549, %v5573
        %v5614 = vsub.f32 %v5550, %v5576
        %v5615 = vsub.f32 %v5551, %v5579
        %v5616 = vsub.f32 %v5552, %v5582
        %v5617 = vsub.f32 %v5553, %v5585
        %v5618 = vsub.f32 %v5554, %v5588
        %v5619 = vsub.f32 %v5555, %v5591
        %v5620 = vsub.f32 %v5556, %v5594
        %v5621 = vsub.f32 %v5557, %v5597
        %v5622 = vsub.f32 %v5558, %v5600
        %v5623 = vsub.f32 %v5559, %v5603
        %v5624 = vsub.f32 %v5560, %v5606
        %v5625 = vsub.f32 %v5561, %v5609
        %v5626 = vmul.f32 %v5610, 1.442695
        %v5627 = vpow.pop %v5626
        %v5628 = vmul.f32 %v5611, 1.442695
        %v5629 = vpow.pop %v5628
        %v5630 = vmul.f32 %v5612, 1.442695
        %v5631 = vpow.pop %v5630
        %v5632 = vmul.f32 %v5613, 1.442695
        %v5633 = vpow.pop %v5632
        %v5634 = vmul.f32 %v5614, 1.442695
        %v5635 = vpow.pop %v5634
        %v5636 = vmul.f32 %v5615, 1.442695
        %v5637 = vpow.pop %v5636
        %v5638 = vmul.f32 %v5616, 1.442695
        %v5639 = vpow.pop %v5638
        %v5640 = vmul.f32 %v5617, 1.442695
        %v5641 = vpow.pop %v5640
        %v5642 = vmul.f32 %v5618, 1.442695
        %v5643 = vpow.pop %v5642
        %v5644 = vmul.f32 %v5619, 1.442695
        %v5645 = vpow.pop %v5644
        %v5646 = vmul.f32 %v5620, 1.442695
        %v5647 = vpow.pop %v5646
        %v5648 = vmul.f32 %v5621, 1.442695
        %v5649 = vpow.pop %v5648
        %v5650 = vmul.f32 %v5622, 1.442695
        %v5651 = vpow.pop %v5650
        %v5652 = vmul.f32 %v5623, 1.442695
        %v5653 = vpow.pop %v5652
        %v5654 = vmul.f32 %v5624, 1.442695
        %v5655 = vpow.pop %v5654
        %v5656 = vmul.f32 %v5625, 1.442695
        %v5657 = vpow.pop %v5656
        %v5658 = vsel %vm4455, %v5627, 0.0
        %5659 = vadd.xlane.f32.xlu0 %v5658
        %v5660 = vpop.xlane.xlu0 %5659
        %v5661 = vsel %vm4455, %v5629, 0.0
        %5662 = vadd.xlane.f32.xlu0 %v5661
        %v5663 = vpop.xlane.xlu0 %5662
        %v5664 = vsel %vm4455, %v5631, 0.0
        %5665 = vadd.xlane.f32.xlu0 %v5664
        %v5666 = vpop.xlane.xlu0 %5665
        %v5667 = vsel %vm4455, %v5633, 0.0
        %5668 = vadd.xlane.f32.xlu0 %v5667
        %v5669 = vpop.xlane.xlu0 %5668
        %v5670 = vsel %vm4455, %v5635, 0.0
        %5671 = vadd.xlane.f32.xlu0 %v5670
        %v5672 = vpop.xlane.xlu0 %5671
        %v5673 = vsel %vm4455, %v5637, 0.0
        %5674 = vadd.xlane.f32.xlu0 %v5673
        %v5675 = vpop.xlane.xlu0 %5674
        %v5676 = vsel %vm4455, %v5639, 0.0
        %5677 = vadd.xlane.f32.xlu0 %v5676
        %v5678 = vpop.xlane.xlu0 %5677
        %v5679 = vsel %vm4455, %v5641, 0.0
        %5680 = vadd.xlane.f32.xlu0 %v5679
        %v5681 = vpop.xlane.xlu0 %5680
        %v5682 = vsel %vm4455, %v5643, 0.0
        %5683 = vadd.xlane.f32.xlu0 %v5682
        %v5684 = vpop.xlane.xlu0 %5683
        %v5685 = vsel %vm4455, %v5645, 0.0
        %5686 = vadd.xlane.f32.xlu0 %v5685
        %v5687 = vpop.xlane.xlu0 %5686
        %v5688 = vsel %vm4455, %v5647, 0.0
        %5689 = vadd.xlane.f32.xlu0 %v5688
        %v5690 = vpop.xlane.xlu0 %5689
        %v5691 = vsel %vm4455, %v5649, 0.0
        %5692 = vadd.xlane.f32.xlu0 %v5691
        %v5693 = vpop.xlane.xlu0 %5692
        %v5694 = vsel %vm4455, %v5651, 0.0
        %5695 = vadd.xlane.f32.xlu0 %v5694
        %v5696 = vpop.xlane.xlu0 %5695
        %v5697 = vsel %vm4455, %v5653, 0.0
        %5698 = vadd.xlane.f32.xlu0 %v5697
        %v5699 = vpop.xlane.xlu0 %5698
        %v5700 = vsel %vm4455, %v5655, 0.0
        %5701 = vadd.xlane.f32.xlu0 %v5700
        %v5702 = vpop.xlane.xlu0 %5701
        %v5703 = vsel %vm4455, %v5657, 0.0
        %5704 = vadd.xlane.f32.xlu0 %v5703
        %v5705 = vpop.xlane.xlu0 %5704
        %v5706 = vrcp.pop %v5660
        %v5707 = vrcp.pop %v5663
        %v5708 = vrcp.pop %v5666
        %v5709 = vrcp.pop %v5669
        %v5710 = vrcp.pop %v5672
        %v5711 = vrcp.pop %v5675
        %v5712 = vrcp.pop %v5678
        %v5713 = vrcp.pop %v5681
        %v5714 = vrcp.pop %v5684
        %v5715 = vrcp.pop %v5687
        %v5716 = vrcp.pop %v5690
        %v5717 = vrcp.pop %v5693
        %v5718 = vrcp.pop %v5696
        %v5719 = vrcp.pop %v5699
        %v5720 = vrcp.pop %v5702
        %v5721 = vrcp.pop %v5705
        %v5722 = vpack.c.bf16 %v5629, %v5627
        %v5723 = vpack.c.bf16 %v5633, %v5631
        %v5724 = vpack.c.bf16 %v5637, %v5635
        %v5725 = vpack.c.bf16 %v5641, %v5639
        %v5726 = vpack.c.bf16 %v5645, %v5643
        %v5727 = vpack.c.bf16 %v5649, %v5647
        %v5728 = vpack.c.bf16 %v5653, %v5651
        %v5729 = vpack.c.bf16 %v5657, %v5655
        %v5731 = vsel %vm4455, %v5722, 0
        %v5734 = vsel %vm4455, %v5723, 0
        %5736 = vmatprep.subr.bf16.mxu0 0
        %5737 = vmatpush1.bf16.msra.mxu0 0
        %5738 = vmatprep.subr.bf16.mxu0 0
        %5739 = vmatpush1.bf16.msra.mxu0 0
        %5740 = vmatprep.subr.bf16.mxu0 0
        %5741 = vmatpush1.bf16.msra.mxu0 0
        %5742 = vmatprep.subr.bf16.mxu0 0
        %5743 = vmatpush1.bf16.msra.mxu0 0
        %5744 = vmatprep.subr.bf16.mxu0 0
        %5745 = vmatpush1.bf16.msra.mxu0 0
        %5746 = vmatprep.subr.bf16.mxu0 0
        %5747 = vmatpush1.bf16.msra.mxu0 0
        %5748 = vmatprep.subr.bf16.mxu0 0
        %5749 = vmatpush1.bf16.msra.mxu0 %v4135
        %5750 = vmatprep.subr.bf16.mxu0 0
        %5751 = vmatpush1.bf16.msra.mxu0 %v4123
        %5752 = vmatprep.subr.bf16.mxu0 0
        %5753 = vmatpush2.bf16.msra.mxu0 0
        %5754 = vmatprep.subr.bf16.mxu0 0
        %5755 = vmatpush2.bf16.msra.mxu0 0
        %5756 = vmatprep.subr.bf16.mxu0 0
        %5757 = vmatpush2.bf16.msra.mxu0 0
        %5758 = vmatprep.subr.bf16.mxu0 0
        %5759 = vmatpush2.bf16.msra.mxu0 0
        %5760 = vmatprep.subr.bf16.mxu0 0
        %5761 = vmatpush2.bf16.msra.mxu0 0
        %5762 = vmatprep.subr.bf16.mxu0 0
        %5763 = vmatpush2.bf16.msra.mxu0 0
        %5764 = vmatprep.subr.bf16.mxu0 0
        %5765 = vmatpush2.bf16.msra.mxu0 0
        %5766 = vmatprep.subr.bf16.mxu0 0
        %5767 = vmatpush2.bf16.msra.mxu0 0
        %5768 = vmatprep.mubr.bf16.mxu0 0
        %5769 = vmatmul.mubr.bf16.gmra.mxu0 %v5731
        %v5770 = vpop.f32.mrf.mxu0
        %v5771 = vadd.f32 0.0, %v5770
        %v5772 = vpop.f32.mrf.mxu0
        %v5773 = vpop.f32.mrf.mxu0
        %v5774 = vadd.f32 0.0, %v5773
        %v5775 = vpop.f32.mrf.mxu0
        %5776 = vmatprep.mubr.bf16.mxu0 0
        %5777 = vmatmul.mubr.bf16.gmra.mxu0 %v5734
        %v5778 = vpop.f32.mrf.mxu0
        %v5779 = vadd.f32 0.0, %v5778
        %v5780 = vpop.f32.mrf.mxu0
        %v5781 = vpop.f32.mrf.mxu0
        %v5782 = vadd.f32 0.0, %v5781
        %v5783 = vpop.f32.mrf.mxu0
        %5784 = vdwg.mxu0
        %v5786 = vsel %vm4455, %v5724, 0
        %v5789 = vsel %vm4455, %v5725, 0
        %5791 = vmatprep.subr.bf16.mxu0 0
        %5792 = vmatpush1.bf16.msra.mxu0 0
        %5793 = vmatprep.subr.bf16.mxu0 0
        %5794 = vmatpush1.bf16.msra.mxu0 0
        %5795 = vmatprep.subr.bf16.mxu0 0
        %5796 = vmatpush1.bf16.msra.mxu0 0
        %5797 = vmatprep.subr.bf16.mxu0 0
        %5798 = vmatpush1.bf16.msra.mxu0 0
        %5799 = vmatprep.subr.bf16.mxu0 0
        %5800 = vmatpush1.bf16.msra.mxu0 0
        %5801 = vmatprep.subr.bf16.mxu0 0
        %5802 = vmatpush1.bf16.msra.mxu0 0
        %5803 = vmatprep.subr.bf16.mxu0 0
        %5804 = vmatpush1.bf16.msra.mxu0 %v4159
        %5805 = vmatprep.subr.bf16.mxu0 0
        %5806 = vmatpush1.bf16.msra.mxu0 %v4147
        %5807 = vmatprep.subr.bf16.mxu0 0
        %5808 = vmatpush2.bf16.msra.mxu0 0
        %5809 = vmatprep.subr.bf16.mxu0 0
        %5810 = vmatpush2.bf16.msra.mxu0 0
        %5811 = vmatprep.subr.bf16.mxu0 0
        %5812 = vmatpush2.bf16.msra.mxu0 0
        %5813 = vmatprep.subr.bf16.mxu0 0
        %5814 = vmatpush2.bf16.msra.mxu0 0
        %5815 = vmatprep.subr.bf16.mxu0 0
        %5816 = vmatpush2.bf16.msra.mxu0 0
        %5817 = vmatprep.subr.bf16.mxu0 0
        %5818 = vmatpush2.bf16.msra.mxu0 0
        %5819 = vmatprep.subr.bf16.mxu0 0
        %5820 = vmatpush2.bf16.msra.mxu0 0
        %5821 = vmatprep.subr.bf16.mxu0 0
        %5822 = vmatpush2.bf16.msra.mxu0 0
        %5823 = vmatprep.mubr.bf16.mxu0 0
        %5824 = vmatmul.mubr.bf16.gmra.mxu0 %v5786
        %v5825 = vpop.f32.mrf.mxu0
        %v5826 = vadd.f32 0.0, %v5825
        %v5827 = vpop.f32.mrf.mxu0
        %v5828 = vpop.f32.mrf.mxu0
        %v5829 = vadd.f32 0.0, %v5828
        %v5830 = vpop.f32.mrf.mxu0
        %5831 = vmatprep.mubr.bf16.mxu0 0
        %5832 = vmatmul.mubr.bf16.gmra.mxu0 %v5789
        %v5833 = vpop.f32.mrf.mxu0
        %v5834 = vadd.f32 0.0, %v5833
        %v5835 = vpop.f32.mrf.mxu0
        %v5836 = vpop.f32.mrf.mxu0
        %v5837 = vadd.f32 0.0, %v5836
        %v5838 = vpop.f32.mrf.mxu0
        %5839 = vdwg.mxu0
        %v5841 = vsel %vm4455, %v5726, 0
        %v5844 = vsel %vm4455, %v5727, 0
        %5846 = vmatprep.subr.bf16.mxu0 0
        %5847 = vmatpush1.bf16.msra.mxu0 0
        %5848 = vmatprep.subr.bf16.mxu0 0
        %5849 = vmatpush1.bf16.msra.mxu0 0
        %5850 = vmatprep.subr.bf16.mxu0 0
        %5851 = vmatpush1.bf16.msra.mxu0 0
        %5852 = vmatprep.subr.bf16.mxu0 0
        %5853 = vmatpush1.bf16.msra.mxu0 0
        %5854 = vmatprep.subr.bf16.mxu0 0
        %5855 = vmatpush1.bf16.msra.mxu0 0
        %5856 = vmatprep.subr.bf16.mxu0 0
        %5857 = vmatpush1.bf16.msra.mxu0 0
        %5858 = vmatprep.subr.bf16.mxu0 0
        %5859 = vmatpush1.bf16.msra.mxu0 %v4183
        %5860 = vmatprep.subr.bf16.mxu0 0
        %5861 = vmatpush1.bf16.msra.mxu0 %v4171
        %5862 = vmatprep.subr.bf16.mxu0 0
        %5863 = vmatpush2.bf16.msra.mxu0 0
        %5864 = vmatprep.subr.bf16.mxu0 0
        %5865 = vmatpush2.bf16.msra.mxu0 0
        %5866 = vmatprep.subr.bf16.mxu0 0
        %5867 = vmatpush2.bf16.msra.mxu0 0
        %5868 = vmatprep.subr.bf16.mxu0 0
        %5869 = vmatpush2.bf16.msra.mxu0 0
        %5870 = vmatprep.subr.bf16.mxu0 0
        %5871 = vmatpush2.bf16.msra.mxu0 0
        %5872 = vmatprep.subr.bf16.mxu0 0
        %5873 = vmatpush2.bf16.msra.mxu0 0
        %5874 = vmatprep.subr.bf16.mxu0 0
        %5875 = vmatpush2.bf16.msra.mxu0 0
        %5876 = vmatprep.subr.bf16.mxu0 0
        %5877 = vmatpush2.bf16.msra.mxu0 0
        %5878 = vmatprep.mubr.bf16.mxu0 0
        %5879 = vmatmul.mubr.bf16.gmra.mxu0 %v5841
        %v5880 = vpop.f32.mrf.mxu0
        %v5881 = vadd.f32 0.0, %v5880
        %v5882 = vpop.f32.mrf.mxu0
        %v5883 = vpop.f32.mrf.mxu0
        %v5884 = vadd.f32 0.0, %v5883
        %v5885 = vpop.f32.mrf.mxu0
        %5886 = vmatprep.mubr.bf16.mxu0 0
        %5887 = vmatmul.mubr.bf16.gmra.mxu0 %v5844
        %v5888 = vpop.f32.mrf.mxu0
        %v5889 = vadd.f32 0.0, %v5888
        %v5890 = vpop.f32.mrf.mxu0
        %v5891 = vpop.f32.mrf.mxu0
        %v5892 = vadd.f32 0.0, %v5891
        %v5893 = vpop.f32.mrf.mxu0
        %5894 = vdwg.mxu0
        %v5896 = vsel %vm4455, %v5728, 0
        %v5899 = vsel %vm4455, %v5729, 0
        %5901 = vmatprep.subr.bf16.mxu0 0
        %5902 = vmatpush1.bf16.msra.mxu0 0
        %5903 = vmatprep.subr.bf16.mxu0 0
        %5904 = vmatpush1.bf16.msra.mxu0 0
        %5905 = vmatprep.subr.bf16.mxu0 0
        %5906 = vmatpush1.bf16.msra.mxu0 0
        %5907 = vmatprep.subr.bf16.mxu0 0
        %5908 = vmatpush1.bf16.msra.mxu0 0
        %5909 = vmatprep.subr.bf16.mxu0 0
        %5910 = vmatpush1.bf16.msra.mxu0 0
        %5911 = vmatprep.subr.bf16.mxu0 0
        %5912 = vmatpush1.bf16.msra.mxu0 0
        %5913 = vmatprep.subr.bf16.mxu0 0
        %5914 = vmatpush1.bf16.msra.mxu0 %v4207
        %5915 = vmatprep.subr.bf16.mxu0 0
        %5916 = vmatpush1.bf16.msra.mxu0 %v4195
        %5917 = vmatprep.subr.bf16.mxu0 0
        %5918 = vmatpush2.bf16.msra.mxu0 0
        %5919 = vmatprep.subr.bf16.mxu0 0
        %5920 = vmatpush2.bf16.msra.mxu0 0
        %5921 = vmatprep.subr.bf16.mxu0 0
        %5922 = vmatpush2.bf16.msra.mxu0 0
        %5923 = vmatprep.subr.bf16.mxu0 0
        %5924 = vmatpush2.bf16.msra.mxu0 0
        %5925 = vmatprep.subr.bf16.mxu0 0
        %5926 = vmatpush2.bf16.msra.mxu0 0
        %5927 = vmatprep.subr.bf16.mxu0 0
        %5928 = vmatpush2.bf16.msra.mxu0 0
        %5929 = vmatprep.subr.bf16.mxu0 0
        %5930 = vmatpush2.bf16.msra.mxu0 0
        %5931 = vmatprep.subr.bf16.mxu0 0
        %5932 = vmatpush2.bf16.msra.mxu0 0
        %5933 = vmatprep.mubr.bf16.mxu0 0
        %5934 = vmatmul.mubr.bf16.gmra.mxu0 %v5896
        %v5935 = vpop.f32.mrf.mxu0
        %v5936 = vadd.f32 0.0, %v5935
        %v5937 = vpop.f32.mrf.mxu0
        %v5938 = vpop.f32.mrf.mxu0
        %v5939 = vadd.f32 0.0, %v5938
        %v5940 = vpop.f32.mrf.mxu0
        %5941 = vmatprep.mubr.bf16.mxu0 0
        %5942 = vmatmul.mubr.bf16.gmra.mxu0 %v5899
        %v5943 = vpop.f32.mrf.mxu0
        %v5944 = vadd.f32 0.0, %v5943
        %v5945 = vpop.f32.mrf.mxu0
        %v5946 = vpop.f32.mrf.mxu0
        %v5947 = vadd.f32 0.0, %v5946
        %v5948 = vpop.f32.mrf.mxu0
        %5949 = vdwg.mxu0
        %v5950 = vmul.f32 %v5771, %v5706
        %v5951 = vmul.f32 %v5774, %v5707
        %v5952 = vmul.f32 %v5779, %v5708
        %v5953 = vmul.f32 %v5782, %v5709
        %v5954 = vmul.f32 %v5826, %v5710
        %v5955 = vmul.f32 %v5829, %v5711
        %v5956 = vmul.f32 %v5834, %v5712
        %v5957 = vmul.f32 %v5837, %v5713
        %v5958 = vmul.f32 %v5881, %v5714
        %v5959 = vmul.f32 %v5884, %v5715
        %v5960 = vmul.f32 %v5889, %v5716
        %v5961 = vmul.f32 %v5892, %v5717
        %v5962 = vmul.f32 %v5936, %v5718
        %v5963 = vmul.f32 %v5939, %v5719
        %v5964 = vmul.f32 %v5944, %v5720
        %v5965 = vmul.f32 %v5947, %v5721
        %v5966 = vpack.c.bf16 %v5951, %v5950
        %v5967 = vpack.c.bf16 %v5953, %v5952
        %v5968 = vpack.c.bf16 %v5955, %v5954
        %v5969 = vpack.c.bf16 %v5957, %v5956
        %v5970 = vpack.c.bf16 %v5959, %v5958
        %v5971 = vpack.c.bf16 %v5961, %v5960
        %v5972 = vpack.c.bf16 %v5963, %v5962
        %v5973 = vpack.c.bf16 %v5965, %v5964
        %v5974 = vld [vmem:[#allocation7 + $0x100] sm:$0xff]
        %v5975 = vld [vmem:[#allocation7 + $0x108] sm:$0xff]
        %v5976 = vld [vmem:[#allocation7 + $0x110] sm:$0xff]
        %v5977 = vld [vmem:[#allocation7 + $0x118] sm:$0xff]
        %v5978 = vld [vmem:[#allocation7 + $0x120] sm:$0xff]
        %v5979 = vld [vmem:[#allocation7 + $0x128] sm:$0xff]
        %v5980 = vld [vmem:[#allocation7 + $0x130] sm:$0xff]
        %v5981 = vld [vmem:[#allocation7 + $0x138] sm:$0xff]
        %v5982 = vld [vmem:[#allocation7 + $0x140] sm:$0xff]
        %v5983 = vld [vmem:[#allocation7 + $0x148] sm:$0xff]
        %v5984 = vld [vmem:[#allocation7 + $0x150] sm:$0xff]
        %v5985 = vld [vmem:[#allocation7 + $0x158] sm:$0xff]
        %v5986 = vld [vmem:[#allocation7 + $0x160] sm:$0xff]
        %v5987 = vld [vmem:[#allocation7 + $0x168] sm:$0xff]
        %v5988 = vld [vmem:[#allocation7 + $0x170] sm:$0xff]
        %v5989 = vld [vmem:[#allocation7 + $0x178] sm:$0xff]
        %v5990 = vld [vmem:[#allocation7 + $0x180] sm:$0xff]
        %v5991 = vld [vmem:[#allocation7 + $0x188] sm:$0xff]
        %v5992 = vld [vmem:[#allocation7 + $0x190] sm:$0xff]
        %v5993 = vld [vmem:[#allocation7 + $0x198] sm:$0xff]
        %v5994 = vld [vmem:[#allocation7 + $0x1a0] sm:$0xff]
        %v5995 = vld [vmem:[#allocation7 + $0x1a8] sm:$0xff]
        %v5996 = vld [vmem:[#allocation7 + $0x1b0] sm:$0xff]
        %v5997 = vld [vmem:[#allocation7 + $0x1b8] sm:$0xff]
        %v5998 = vld [vmem:[#allocation7 + $0x1c0] sm:$0xff]
        %v5999 = vld [vmem:[#allocation7 + $0x1c8] sm:$0xff]
        %v6000 = vld [vmem:[#allocation7 + $0x1d0] sm:$0xff]
        %v6001 = vld [vmem:[#allocation7 + $0x1d8] sm:$0xff]
        %v6002 = vld [vmem:[#allocation7 + $0x1e0] sm:$0xff]
        %v6003 = vld [vmem:[#allocation7 + $0x1e8] sm:$0xff]
        %v6004 = vld [vmem:[#allocation7 + $0x1f0] sm:$0xff]
        %v6005 = vld [vmem:[#allocation7 + $0x1f8] sm:$0xff]
        %v6038 = vunpack.c.l.b16 %v5974
        %v6039 = vunpack.c.h.b16 %v5974
        %v6040 = vunpack.c.l.b16 %v5975
        %v6041 = vunpack.c.h.b16 %v5975
        %v6042 = vunpack.c.l.b16 %v5976
        %v6043 = vunpack.c.h.b16 %v5976
        %v6044 = vunpack.c.l.b16 %v5977
        %v6045 = vunpack.c.h.b16 %v5977
        %v6046 = vunpack.c.l.b16 %v5978
        %v6047 = vunpack.c.h.b16 %v5978
        %v6048 = vunpack.c.l.b16 %v5979
        %v6049 = vunpack.c.h.b16 %v5979
        %v6050 = vunpack.c.l.b16 %v5980
        %v6051 = vunpack.c.h.b16 %v5980
        %v6052 = vunpack.c.l.b16 %v5981
        %v6053 = vunpack.c.h.b16 %v5981
        %v6054 = vunpack.c.l.b16 %v5982
        %v6055 = vunpack.c.h.b16 %v5982
        %v6056 = vunpack.c.l.b16 %v5983
        %v6057 = vunpack.c.h.b16 %v5983
        %v6058 = vunpack.c.l.b16 %v5984
        %v6059 = vunpack.c.h.b16 %v5984
        %v6060 = vunpack.c.l.b16 %v5985
        %v6061 = vunpack.c.h.b16 %v5985
        %v6062 = vunpack.c.l.b16 %v5986
        %v6063 = vunpack.c.h.b16 %v5986
        %v6064 = vunpack.c.l.b16 %v5987
        %v6065 = vunpack.c.h.b16 %v5987
        %v6066 = vunpack.c.l.b16 %v5988
        %v6067 = vunpack.c.h.b16 %v5988
        %v6068 = vunpack.c.l.b16 %v5989
        %v6069 = vunpack.c.h.b16 %v5989
        %v6070 = vunpack.c.l.b16 %v5990
        %v6071 = vunpack.c.h.b16 %v5990
        %v6072 = vunpack.c.l.b16 %v5991
        %v6073 = vunpack.c.h.b16 %v5991
        %v6074 = vunpack.c.l.b16 %v5992
        %v6075 = vunpack.c.h.b16 %v5992
        %v6076 = vunpack.c.l.b16 %v5993
        %v6077 = vunpack.c.h.b16 %v5993
        %v6078 = vunpack.c.l.b16 %v5994
        %v6079 = vunpack.c.h.b16 %v5994
        %v6080 = vunpack.c.l.b16 %v5995
        %v6081 = vunpack.c.h.b16 %v5995
        %v6082 = vunpack.c.l.b16 %v5996
        %v6083 = vunpack.c.h.b16 %v5996
        %v6084 = vunpack.c.l.b16 %v5997
        %v6085 = vunpack.c.h.b16 %v5997
        %v6086 = vunpack.c.l.b16 %v5998
        %v6087 = vunpack.c.h.b16 %v5998
        %v6088 = vunpack.c.l.b16 %v5999
        %v6089 = vunpack.c.h.b16 %v5999
        %v6090 = vunpack.c.l.b16 %v6000
        %v6091 = vunpack.c.h.b16 %v6000
        %v6092 = vunpack.c.l.b16 %v6001
        %v6093 = vunpack.c.h.b16 %v6001
        %v6094 = vunpack.c.l.b16 %v6002
        %v6095 = vunpack.c.h.b16 %v6002
        %v6096 = vunpack.c.l.b16 %v6003
        %v6097 = vunpack.c.h.b16 %v6003
        %v6098 = vunpack.c.l.b16 %v6004
        %v6099 = vunpack.c.h.b16 %v6004
        %v6100 = vunpack.c.l.b16 %v6005
        %v6101 = vunpack.c.h.b16 %v6005
        %v6102 = vpack.c.b16 %v6042, %v6038
        %v6103 = vpack.c.b16 %v6043, %v6039
        %v6104 = vpack.c.b16 %v6044, %v6040
        %v6105 = vpack.c.b16 %v6045, %v6041
        %v6106 = vpack.c.b16 %v6050, %v6046
        %v6107 = vpack.c.b16 %v6051, %v6047
        %v6108 = vpack.c.b16 %v6052, %v6048
        %v6109 = vpack.c.b16 %v6053, %v6049
        %v6110 = vpack.c.b16 %v6058, %v6054
        %v6111 = vpack.c.b16 %v6059, %v6055
        %v6112 = vpack.c.b16 %v6060, %v6056
        %v6113 = vpack.c.b16 %v6061, %v6057
        %v6114 = vpack.c.b16 %v6066, %v6062
        %v6115 = vpack.c.b16 %v6067, %v6063
        %v6116 = vpack.c.b16 %v6068, %v6064
        %v6117 = vpack.c.b16 %v6069, %v6065
        %v6118 = vpack.c.b16 %v6074, %v6070
        %v6119 = vpack.c.b16 %v6075, %v6071
        %v6120 = vpack.c.b16 %v6076, %v6072
        %v6121 = vpack.c.b16 %v6077, %v6073
        %v6122 = vpack.c.b16 %v6082, %v6078
        %v6123 = vpack.c.b16 %v6083, %v6079
        %v6124 = vpack.c.b16 %v6084, %v6080
        %v6125 = vpack.c.b16 %v6085, %v6081
        %v6126 = vpack.c.b16 %v6090, %v6086
        %v6127 = vpack.c.b16 %v6091, %v6087
        %v6128 = vpack.c.b16 %v6092, %v6088
        %v6129 = vpack.c.b16 %v6093, %v6089
        %v6130 = vpack.c.b16 %v6098, %v6094
        %v6131 = vpack.c.b16 %v6099, %v6095
        %v6132 = vpack.c.b16 %v6100, %v6096
        %v6133 = vpack.c.b16 %v6101, %v6097
        %6166 = vmatprep.subr.bf16.mxu0 %v6131
        %6167 = vmatpush1.bf16.msra.mxu0 %v6130
        %6168 = vmatprep.subr.bf16.mxu0 %v6127
        %6169 = vmatpush1.bf16.msra.mxu0 %v6126
        %6170 = vmatprep.subr.bf16.mxu0 %v6123
        %6171 = vmatpush1.bf16.msra.mxu0 %v6122
        %6172 = vmatprep.subr.bf16.mxu0 %v6119
        %6173 = vmatpush1.bf16.msra.mxu0 %v6118
        %6174 = vmatprep.subr.bf16.mxu0 %v6115
        %6175 = vmatpush1.bf16.msra.mxu0 %v6114
        %6176 = vmatprep.subr.bf16.mxu0 %v6111
        %6177 = vmatpush1.bf16.msra.mxu0 %v6110
        %6178 = vmatprep.subr.bf16.mxu0 %v6107
        %6179 = vmatpush1.bf16.msra.mxu0 %v6106
        %6180 = vmatprep.subr.bf16.mxu0 %v6103
        %6181 = vmatpush1.bf16.msra.mxu0 %v6102
        %6182 = vmatprep.subr.bf16.mxu0 0
        %6183 = vmatpush2.bf16.msra.mxu0 0
        %6184 = vmatprep.subr.bf16.mxu0 0
        %6185 = vmatpush2.bf16.msra.mxu0 0
        %6186 = vmatprep.subr.bf16.mxu0 0
        %6187 = vmatpush2.bf16.msra.mxu0 0
        %6188 = vmatprep.subr.bf16.mxu0 0
        %6189 = vmatpush2.bf16.msra.mxu0 0
        %6190 = vmatprep.subr.bf16.mxu0 0
        %6191 = vmatpush2.bf16.msra.mxu0 0
        %6192 = vmatprep.subr.bf16.mxu0 0
        %6193 = vmatpush2.bf16.msra.mxu0 0
        %6194 = vmatprep.subr.bf16.mxu0 0
        %6195 = vmatpush2.bf16.msra.mxu0 0
        %6196 = vmatprep.subr.bf16.mxu0 0
        %6197 = vmatpush2.bf16.msra.mxu0 0
        %6198 = vmatprep.mubr.bf16.mxu0 0
        %6199 = vmatmul.mubr.bf16.gmra.mxu0 %v5966
        %v6200 = vpop.f32.mrf.mxu0
        %v6201 = vadd.f32 0.0, %v6200
        %v6202 = vpop.f32.mrf.mxu0
        %v6203 = vadd.f32 0.0, %v6202
        %v6204 = vpop.f32.mrf.mxu0
        %v6205 = vadd.f32 0.0, %v6204
        %v6206 = vpop.f32.mrf.mxu0
        %v6207 = vadd.f32 0.0, %v6206
        %6208 = vmatprep.mubr.bf16.mxu0 0
        %6209 = vmatmul.mubr.bf16.gmra.mxu0 %v5967
        %v6210 = vpop.f32.mrf.mxu0
        %v6211 = vadd.f32 0.0, %v6210
        %v6212 = vpop.f32.mrf.mxu0
        %v6213 = vadd.f32 0.0, %v6212
        %v6214 = vpop.f32.mrf.mxu0
        %v6215 = vadd.f32 0.0, %v6214
        %v6216 = vpop.f32.mrf.mxu0
        %v6217 = vadd.f32 0.0, %v6216
        %6218 = vmatprep.mubr.bf16.mxu0 0
        %6219 = vmatmul.mubr.bf16.gmra.mxu0 %v5968
        %v6220 = vpop.f32.mrf.mxu0
        %v6221 = vadd.f32 0.0, %v6220
        %v6222 = vpop.f32.mrf.mxu0
        %v6223 = vadd.f32 0.0, %v6222
        %v6224 = vpop.f32.mrf.mxu0
        %v6225 = vadd.f32 0.0, %v6224
        %v6226 = vpop.f32.mrf.mxu0
        %v6227 = vadd.f32 0.0, %v6226
        %6228 = vmatprep.mubr.bf16.mxu0 0
        %6229 = vmatmul.mubr.bf16.gmra.mxu0 %v5969
        %v6230 = vpop.f32.mrf.mxu0
        %v6231 = vadd.f32 0.0, %v6230
        %v6232 = vpop.f32.mrf.mxu0
        %v6233 = vadd.f32 0.0, %v6232
        %v6234 = vpop.f32.mrf.mxu0
        %v6235 = vadd.f32 0.0, %v6234
        %v6236 = vpop.f32.mrf.mxu0
        %v6237 = vadd.f32 0.0, %v6236
        %6238 = vmatprep.mubr.bf16.mxu0 0
        %6239 = vmatmul.mubr.bf16.gmra.mxu0 %v5970
        %v6240 = vpop.f32.mrf.mxu0
        %v6241 = vadd.f32 0.0, %v6240
        %v6242 = vpop.f32.mrf.mxu0
        %v6243 = vadd.f32 0.0, %v6242
        %v6244 = vpop.f32.mrf.mxu0
        %v6245 = vadd.f32 0.0, %v6244
        %v6246 = vpop.f32.mrf.mxu0
        %v6247 = vadd.f32 0.0, %v6246
        %6248 = vmatprep.mubr.bf16.mxu0 0
        %6249 = vmatmul.mubr.bf16.gmra.mxu0 %v5971
        %v6250 = vpop.f32.mrf.mxu0
        %v6251 = vadd.f32 0.0, %v6250
        %v6252 = vpop.f32.mrf.mxu0
        %v6253 = vadd.f32 0.0, %v6252
        %v6254 = vpop.f32.mrf.mxu0
        %v6255 = vadd.f32 0.0, %v6254
        %v6256 = vpop.f32.mrf.mxu0
        %v6257 = vadd.f32 0.0, %v6256
        %6258 = vmatprep.mubr.bf16.mxu0 0
        %6259 = vmatmul.mubr.bf16.gmra.mxu0 %v5972
        %v6260 = vpop.f32.mrf.mxu0
        %v6261 = vadd.f32 0.0, %v6260
        %v6262 = vpop.f32.mrf.mxu0
        %v6263 = vadd.f32 0.0, %v6262
        %v6264 = vpop.f32.mrf.mxu0
        %v6265 = vadd.f32 0.0, %v6264
        %v6266 = vpop.f32.mrf.mxu0
        %v6267 = vadd.f32 0.0, %v6266
        %6268 = vmatprep.mubr.bf16.mxu0 0
        %6269 = vmatmul.mubr.bf16.gmra.mxu0 %v5973
        %v6270 = vpop.f32.mrf.mxu0
        %v6271 = vadd.f32 0.0, %v6270
        %v6272 = vpop.f32.mrf.mxu0
        %v6273 = vadd.f32 0.0, %v6272
        %v6274 = vpop.f32.mrf.mxu0
        %v6275 = vadd.f32 0.0, %v6274
        %v6276 = vpop.f32.mrf.mxu0
        %v6277 = vadd.f32 0.0, %v6276
        %6278 = vdwg.mxu0
        %6279 = vmatprep.subr.bf16.mxu0 %v6133
        %6280 = vmatpush1.bf16.msra.mxu0 %v6132
        %6281 = vmatprep.subr.bf16.mxu0 %v6129
        %6282 = vmatpush1.bf16.msra.mxu0 %v6128
        %6283 = vmatprep.subr.bf16.mxu0 %v6125
        %6284 = vmatpush1.bf16.msra.mxu0 %v6124
        %6285 = vmatprep.subr.bf16.mxu0 %v6121
        %6286 = vmatpush1.bf16.msra.mxu0 %v6120
        %6287 = vmatprep.subr.bf16.mxu0 %v6117
        %6288 = vmatpush1.bf16.msra.mxu0 %v6116
        %6289 = vmatprep.subr.bf16.mxu0 %v6113
        %6290 = vmatpush1.bf16.msra.mxu0 %v6112
        %6291 = vmatprep.subr.bf16.mxu0 %v6109
        %6292 = vmatpush1.bf16.msra.mxu0 %v6108
        %6293 = vmatprep.subr.bf16.mxu0 %v6105
        %6294 = vmatpush1.bf16.msra.mxu0 %v6104
        %6295 = vmatprep.subr.bf16.mxu0 0
        %6296 = vmatpush2.bf16.msra.mxu0 0
        %6297 = vmatprep.subr.bf16.mxu0 0
        %6298 = vmatpush2.bf16.msra.mxu0 0
        %6299 = vmatprep.subr.bf16.mxu0 0
        %6300 = vmatpush2.bf16.msra.mxu0 0
        %6301 = vmatprep.subr.bf16.mxu0 0
        %6302 = vmatpush2.bf16.msra.mxu0 0
        %6303 = vmatprep.subr.bf16.mxu0 0
        %6304 = vmatpush2.bf16.msra.mxu0 0
        %6305 = vmatprep.subr.bf16.mxu0 0
        %6306 = vmatpush2.bf16.msra.mxu0 0
        %6307 = vmatprep.subr.bf16.mxu0 0
        %6308 = vmatpush2.bf16.msra.mxu0 0
        %6309 = vmatprep.subr.bf16.mxu0 0
        %6310 = vmatpush2.bf16.msra.mxu0 0
        %6311 = vmatprep.mubr.bf16.mxu0 0
        %6312 = vmatmul.mubr.bf16.gmra.mxu0 %v5966
        %v6313 = vpop.f32.mrf.mxu0
        %v6314 = vadd.f32 0.0, %v6313
        %v6315 = vpop.f32.mrf.mxu0
        %v6316 = vadd.f32 0.0, %v6315
        %v6317 = vpop.f32.mrf.mxu0
        %v6318 = vadd.f32 0.0, %v6317
        %v6319 = vpop.f32.mrf.mxu0
        %v6320 = vadd.f32 0.0, %v6319
        %6321 = vmatprep.mubr.bf16.mxu0 0
        %6322 = vmatmul.mubr.bf16.gmra.mxu0 %v5967
        %v6323 = vpop.f32.mrf.mxu0
        %v6324 = vadd.f32 0.0, %v6323
        %v6325 = vpop.f32.mrf.mxu0
        %v6326 = vadd.f32 0.0, %v6325
        %v6327 = vpop.f32.mrf.mxu0
        %v6328 = vadd.f32 0.0, %v6327
        %v6329 = vpop.f32.mrf.mxu0
        %v6330 = vadd.f32 0.0, %v6329
        %6331 = vmatprep.mubr.bf16.mxu0 0
        %6332 = vmatmul.mubr.bf16.gmra.mxu0 %v5968
        %v6333 = vpop.f32.mrf.mxu0
        %v6334 = vadd.f32 0.0, %v6333
        %v6335 = vpop.f32.mrf.mxu0
        %v6336 = vadd.f32 0.0, %v6335
        %v6337 = vpop.f32.mrf.mxu0
        %v6338 = vadd.f32 0.0, %v6337
        %v6339 = vpop.f32.mrf.mxu0
        %v6340 = vadd.f32 0.0, %v6339
        %6341 = vmatprep.mubr.bf16.mxu0 0
        %6342 = vmatmul.mubr.bf16.gmra.mxu0 %v5969
        %v6343 = vpop.f32.mrf.mxu0
        %v6344 = vadd.f32 0.0, %v6343
        %v6345 = vpop.f32.mrf.mxu0
        %v6346 = vadd.f32 0.0, %v6345
        %v6347 = vpop.f32.mrf.mxu0
        %v6348 = vadd.f32 0.0, %v6347
        %v6349 = vpop.f32.mrf.mxu0
        %v6350 = vadd.f32 0.0, %v6349
        %6351 = vmatprep.mubr.bf16.mxu0 0
        %6352 = vmatmul.mubr.bf16.gmra.mxu0 %v5970
        %v6353 = vpop.f32.mrf.mxu0
        %v6354 = vadd.f32 0.0, %v6353
        %v6355 = vpop.f32.mrf.mxu0
        %v6356 = vadd.f32 0.0, %v6355
        %v6357 = vpop.f32.mrf.mxu0
        %v6358 = vadd.f32 0.0, %v6357
        %v6359 = vpop.f32.mrf.mxu0
        %v6360 = vadd.f32 0.0, %v6359
        %6361 = vmatprep.mubr.bf16.mxu0 0
        %6362 = vmatmul.mubr.bf16.gmra.mxu0 %v5971
        %v6363 = vpop.f32.mrf.mxu0
        %v6364 = vadd.f32 0.0, %v6363
        %v6365 = vpop.f32.mrf.mxu0
        %v6366 = vadd.f32 0.0, %v6365
        %v6367 = vpop.f32.mrf.mxu0
        %v6368 = vadd.f32 0.0, %v6367
        %v6369 = vpop.f32.mrf.mxu0
        %v6370 = vadd.f32 0.0, %v6369
        %6371 = vmatprep.mubr.bf16.mxu0 0
        %6372 = vmatmul.mubr.bf16.gmra.mxu0 %v5972
        %v6373 = vpop.f32.mrf.mxu0
        %v6374 = vadd.f32 0.0, %v6373
        %v6375 = vpop.f32.mrf.mxu0
        %v6376 = vadd.f32 0.0, %v6375
        %v6377 = vpop.f32.mrf.mxu0
        %v6378 = vadd.f32 0.0, %v6377
        %v6379 = vpop.f32.mrf.mxu0
        %v6380 = vadd.f32 0.0, %v6379
        %6381 = vmatprep.mubr.bf16.mxu0 0
        %6382 = vmatmul.mubr.bf16.gmra.mxu0 %v5973
        %v6383 = vpop.f32.mrf.mxu0
        %v6384 = vadd.f32 0.0, %v6383
        %v6385 = vpop.f32.mrf.mxu0
        %v6386 = vadd.f32 0.0, %v6385
        %v6387 = vpop.f32.mrf.mxu0
        %v6388 = vadd.f32 0.0, %v6387
        %v6389 = vpop.f32.mrf.mxu0
        %v6390 = vadd.f32 0.0, %v6389
        %6391 = vdwg.mxu0
        %v6392 = vadd.f32 %v5286, %v6201
        %v6393 = vadd.f32 %v5287, %v6203
        %v6394 = vadd.f32 %v5288, %v6314
        %v6395 = vadd.f32 %v5289, %v6316
        %v6396 = vadd.f32 %v5290, %v6205
        %v6397 = vadd.f32 %v5291, %v6207
        %v6398 = vadd.f32 %v5292, %v6318
        %v6399 = vadd.f32 %v5293, %v6320
        %v6400 = vadd.f32 %v5294, %v6211
        %v6401 = vadd.f32 %v5295, %v6213
        %v6402 = vadd.f32 %v5296, %v6324
        %v6403 = vadd.f32 %v5297, %v6326
        %v6404 = vadd.f32 %v5298, %v6215
        %v6405 = vadd.f32 %v5299, %v6217
        %v6406 = vadd.f32 %v5300, %v6328
        %v6407 = vadd.f32 %v5301, %v6330
        %v6408 = vadd.f32 %v5302, %v6221
        %v6409 = vadd.f32 %v5303, %v6223
        %v6410 = vadd.f32 %v5304, %v6334
        %v6411 = vadd.f32 %v5305, %v6336
        %v6412 = vadd.f32 %v5306, %v6225
        %v6413 = vadd.f32 %v5307, %v6227
        %v6414 = vadd.f32 %v5308, %v6338
        %v6415 = vadd.f32 %v5309, %v6340
        %v6416 = vadd.f32 %v5310, %v6231
        %v6417 = vadd.f32 %v5311, %v6233
        %v6418 = vadd.f32 %v5312, %v6344
        %v6419 = vadd.f32 %v5313, %v6346
        %v6420 = vadd.f32 %v5314, %v6235
        %v6421 = vadd.f32 %v5315, %v6237
        %v6422 = vadd.f32 %v5316, %v6348
        %v6423 = vadd.f32 %v5317, %v6350
        %v6424 = vadd.f32 %v5318, %v6241
        %v6425 = vadd.f32 %v5319, %v6243
        %v6426 = vadd.f32 %v5320, %v6354
        %v6427 = vadd.f32 %v5321, %v6356
        %v6428 = vadd.f32 %v5322, %v6245
        %v6429 = vadd.f32 %v5323, %v6247
        %v6430 = vadd.f32 %v5324, %v6358
        %v6431 = vadd.f32 %v5325, %v6360
        %v6432 = vadd.f32 %v5326, %v6251
        %v6433 = vadd.f32 %v5327, %v6253
        %v6434 = vadd.f32 %v5328, %v6364
        %v6435 = vadd.f32 %v5329, %v6366
        %v6436 = vadd.f32 %v5330, %v6255
        %v6437 = vadd.f32 %v5331, %v6257
        %v6438 = vadd.f32 %v5332, %v6368
        %v6439 = vadd.f32 %v5333, %v6370
        %v6440 = vadd.f32 %v5334, %v6261
        %v6441 = vadd.f32 %v5335, %v6263
        %v6442 = vadd.f32 %v5336, %v6374
        %v6443 = vadd.f32 %v5337, %v6376
        %v6444 = vadd.f32 %v5338, %v6265
        %v6445 = vadd.f32 %v5339, %v6267
        %v6446 = vadd.f32 %v5340, %v6378
        %v6447 = vadd.f32 %v5341, %v6380
        %v6448 = vadd.f32 %v5342, %v6271
        %v6449 = vadd.f32 %v5343, %v6273
        %v6450 = vadd.f32 %v5344, %v6384
        %v6451 = vadd.f32 %v5345, %v6386
        %v6452 = vadd.f32 %v5346, %v6275
        %v6453 = vadd.f32 %v5347, %v6277
        %v6454 = vadd.f32 %v5348, %v6388
        %v6455 = vadd.f32 %v5349, %v6390
        %6456 = vmatprep.subr.bf16.mxu0 0
        %6457 = vmatpush1.bf16.xpose.msra.mxu0 0
        %6458 = vmatprep.subr.bf16.mxu0 0
        %6459 = vmatpush1.bf16.xpose.msra.mxu0 0
        %6460 = vmatprep.subr.bf16.mxu0 0
        %6461 = vmatpush1.bf16.xpose.msra.mxu0 0
        %6462 = vmatprep.subr.bf16.mxu0 0
        %6463 = vmatpush1.bf16.xpose.msra.mxu0 0
        %6464 = vmatprep.subr.bf16.mxu0 0
        %6465 = vmatpush1.bf16.xpose.msra.mxu0 0
        %6466 = vmatprep.subr.bf16.mxu0 0
        %6467 = vmatpush1.bf16.xpose.msra.mxu0 0
        %6468 = vmatprep.subr.bf16.mxu0 0
        %6469 = vmatpush1.bf16.xpose.msra.mxu0 %v4132
        %6470 = vmatprep.subr.bf16.mxu0 0
        %6471 = vmatpush1.bf16.xpose.msra.mxu0 %v4120
        %6472 = vmatprep.subr.bf16.mxu0 0
        %6473 = vmatpush2.bf16.xpose.msra.mxu0 0
        %6474 = vmatprep.subr.bf16.mxu0 0
        %6475 = vmatpush2.bf16.xpose.msra.mxu0 0
        %6476 = vmatprep.subr.bf16.mxu0 0
        %6477 = vmatpush2.bf16.xpose.msra.mxu0 0
        %6478 = vmatprep.subr.bf16.mxu0 0
        %6479 = vmatpush2.bf16.xpose.msra.mxu0 0
        %6480 = vmatprep.subr.bf16.mxu0 0
        %6481 = vmatpush2.bf16.xpose.msra.mxu0 0
        %6482 = vmatprep.subr.bf16.mxu0 0
        %6483 = vmatpush2.bf16.xpose.msra.mxu0 0
        %6484 = vmatprep.subr.bf16.mxu0 0
        %6485 = vmatpush2.bf16.xpose.msra.mxu0 0
        %6486 = vmatprep.subr.bf16.mxu0 0
        %6487 = vmatpush2.bf16.xpose.msra.mxu0 0
        %6488 = vmatprep.mubr.bf16.mxu0 0
        %6489 = vmatmul.mubr.bf16.gmra.mxu0 %v4116
        %v6490 = vpop.f32.mrf.mxu0
        %v6491 = vadd.f32 0.0, %v6490
        %v6492 = vpop.f32.mrf.mxu0
        %v6493 = vpop.f32.mrf.mxu0
        %v6494 = vadd.f32 0.0, %v6493
        %v6495 = vpop.f32.mrf.mxu0
        %6496 = vmatprep.mubr.bf16.mxu0 0
        %6497 = vmatmul.mubr.bf16.gmra.mxu0 %v4128
        %v6498 = vpop.f32.mrf.mxu0
        %v6499 = vadd.f32 0.0, %v6498
        %v6500 = vpop.f32.mrf.mxu0
        %v6501 = vpop.f32.mrf.mxu0
        %v6502 = vadd.f32 0.0, %v6501
        %v6503 = vpop.f32.mrf.mxu0
        %6504 = vdwg.mxu0
        %6505 = vmatprep.subr.bf16.mxu0 0
        %6506 = vmatpush1.bf16.xpose.msra.mxu0 0
        %6507 = vmatprep.subr.bf16.mxu0 0
        %6508 = vmatpush1.bf16.xpose.msra.mxu0 0
        %6509 = vmatprep.subr.bf16.mxu0 0
        %6510 = vmatpush1.bf16.xpose.msra.mxu0 0
        %6511 = vmatprep.subr.bf16.mxu0 0
        %6512 = vmatpush1.bf16.xpose.msra.mxu0 0
        %6513 = vmatprep.subr.bf16.mxu0 0
        %6514 = vmatpush1.bf16.xpose.msra.mxu0 0
        %6515 = vmatprep.subr.bf16.mxu0 0
        %6516 = vmatpush1.bf16.xpose.msra.mxu0 0
        %6517 = vmatprep.subr.bf16.mxu0 0
        %6518 = vmatpush1.bf16.xpose.msra.mxu0 %v4156
        %6519 = vmatprep.subr.bf16.mxu0 0
        %6520 = vmatpush1.bf16.xpose.msra.mxu0 %v4144
        %6521 = vmatprep.subr.bf16.mxu0 0
        %6522 = vmatpush2.bf16.xpose.msra.mxu0 0
        %6523 = vmatprep.subr.bf16.mxu0 0
        %6524 = vmatpush2.bf16.xpose.msra.mxu0 0
        %6525 = vmatprep.subr.bf16.mxu0 0
        %6526 = vmatpush2.bf16.xpose.msra.mxu0 0
        %6527 = vmatprep.subr.bf16.mxu0 0
        %6528 = vmatpush2.bf16.xpose.msra.mxu0 0
        %6529 = vmatprep.subr.bf16.mxu0 0
        %6530 = vmatpush2.bf16.xpose.msra.mxu0 0
        %6531 = vmatprep.subr.bf16.mxu0 0
        %6532 = vmatpush2.bf16.xpose.msra.mxu0 0
        %6533 = vmatprep.subr.bf16.mxu0 0
        %6534 = vmatpush2.bf16.xpose.msra.mxu0 0
        %6535 = vmatprep.subr.bf16.mxu0 0
        %6536 = vmatpush2.bf16.xpose.msra.mxu0 0
        %6537 = vmatprep.mubr.bf16.mxu0 0
        %6538 = vmatmul.mubr.bf16.gmra.mxu0 %v4140
        %v6539 = vpop.f32.mrf.mxu0
        %v6540 = vadd.f32 0.0, %v6539
        %v6541 = vpop.f32.mrf.mxu0
        %v6542 = vpop.f32.mrf.mxu0
        %v6543 = vadd.f32 0.0, %v6542
        %v6544 = vpop.f32.mrf.mxu0
        %6545 = vmatprep.mubr.bf16.mxu0 0
        %6546 = vmatmul.mubr.bf16.gmra.mxu0 %v4152
        %v6547 = vpop.f32.mrf.mxu0
        %v6548 = vadd.f32 0.0, %v6547
        %v6549 = vpop.f32.mrf.mxu0
        %v6550 = vpop.f32.mrf.mxu0
        %v6551 = vadd.f32 0.0, %v6550
        %v6552 = vpop.f32.mrf.mxu0
        %6553 = vdwg.mxu0
        %6554 = vmatprep.subr.bf16.mxu0 0
        %6555 = vmatpush1.bf16.xpose.msra.mxu0 0
        %6556 = vmatprep.subr.bf16.mxu0 0
        %6557 = vmatpush1.bf16.xpose.msra.mxu0 0
        %6558 = vmatprep.subr.bf16.mxu0 0
        %6559 = vmatpush1.bf16.xpose.msra.mxu0 0
        %6560 = vmatprep.subr.bf16.mxu0 0
        %6561 = vmatpush1.bf16.xpose.msra.mxu0 0
        %6562 = vmatprep.subr.bf16.mxu0 0
        %6563 = vmatpush1.bf16.xpose.msra.mxu0 0
        %6564 = vmatprep.subr.bf16.mxu0 0
        %6565 = vmatpush1.bf16.xpose.msra.mxu0 0
        %6566 = vmatprep.subr.bf16.mxu0 0
        %6567 = vmatpush1.bf16.xpose.msra.mxu0 %v4180
        %6568 = vmatprep.subr.bf16.mxu0 0
        %6569 = vmatpush1.bf16.xpose.msra.mxu0 %v4168
        %6570 = vmatprep.subr.bf16.mxu0 0
        %6571 = vmatpush2.bf16.xpose.msra.mxu0 0
        %6572 = vmatprep.subr.bf16.mxu0 0
        %6573 = vmatpush2.bf16.xpose.msra.mxu0 0
        %6574 = vmatprep.subr.bf16.mxu0 0
        %6575 = vmatpush2.bf16.xpose.msra.mxu0 0
        %6576 = vmatprep.subr.bf16.mxu0 0
        %6577 = vmatpush2.bf16.xpose.msra.mxu0 0
        %6578 = vmatprep.subr.bf16.mxu0 0
        %6579 = vmatpush2.bf16.xpose.msra.mxu0 0
        %6580 = vmatprep.subr.bf16.mxu0 0
        %6581 = vmatpush2.bf16.xpose.msra.mxu0 0
        %6582 = vmatprep.subr.bf16.mxu0 0
        %6583 = vmatpush2.bf16.xpose.msra.mxu0 0
        %6584 = vmatprep.subr.bf16.mxu0 0
        %6585 = vmatpush2.bf16.xpose.msra.mxu0 0
        %6586 = vmatprep.mubr.bf16.mxu0 0
        %6587 = vmatmul.mubr.bf16.gmra.mxu0 %v4164
        %v6588 = vpop.f32.mrf.mxu0
        %v6589 = vadd.f32 0.0, %v6588
        %v6590 = vpop.f32.mrf.mxu0
        %v6591 = vpop.f32.mrf.mxu0
        %v6592 = vadd.f32 0.0, %v6591
        %v6593 = vpop.f32.mrf.mxu0
        %6594 = vmatprep.mubr.bf16.mxu0 0
        %6595 = vmatmul.mubr.bf16.gmra.mxu0 %v4176
        %v6596 = vpop.f32.mrf.mxu0
        %v6597 = vadd.f32 0.0, %v6596
        %v6598 = vpop.f32.mrf.mxu0
        %v6599 = vpop.f32.mrf.mxu0
        %v6600 = vadd.f32 0.0, %v6599
        %v6601 = vpop.f32.mrf.mxu0
        %6602 = vdwg.mxu0
        %6603 = vmatprep.subr.bf16.mxu0 0
        %6604 = vmatpush1.bf16.xpose.msra.mxu0 0
        %6605 = vmatprep.subr.bf16.mxu0 0
        %6606 = vmatpush1.bf16.xpose.msra.mxu0 0
        %6607 = vmatprep.subr.bf16.mxu0 0
        %6608 = vmatpush1.bf16.xpose.msra.mxu0 0
        %6609 = vmatprep.subr.bf16.mxu0 0
        %6610 = vmatpush1.bf16.xpose.msra.mxu0 0
        %6611 = vmatprep.subr.bf16.mxu0 0
        %6612 = vmatpush1.bf16.xpose.msra.mxu0 0
        %6613 = vmatprep.subr.bf16.mxu0 0
        %6614 = vmatpush1.bf16.xpose.msra.mxu0 0
        %6615 = vmatprep.subr.bf16.mxu0 0
        %6616 = vmatpush1.bf16.xpose.msra.mxu0 %v4204
        %6617 = vmatprep.subr.bf16.mxu0 0
        %6618 = vmatpush1.bf16.xpose.msra.mxu0 %v4192
        %6619 = vmatprep.subr.bf16.mxu0 0
        %6620 = vmatpush2.bf16.xpose.msra.mxu0 0
        %6621 = vmatprep.subr.bf16.mxu0 0
        %6622 = vmatpush2.bf16.xpose.msra.mxu0 0
        %6623 = vmatprep.subr.bf16.mxu0 0
        %6624 = vmatpush2.bf16.xpose.msra.mxu0 0
        %6625 = vmatprep.subr.bf16.mxu0 0
        %6626 = vmatpush2.bf16.xpose.msra.mxu0 0
        %6627 = vmatprep.subr.bf16.mxu0 0
        %6628 = vmatpush2.bf16.xpose.msra.mxu0 0
        %6629 = vmatprep.subr.bf16.mxu0 0
        %6630 = vmatpush2.bf16.xpose.msra.mxu0 0
        %6631 = vmatprep.subr.bf16.mxu0 0
        %6632 = vmatpush2.bf16.xpose.msra.mxu0 0
        %6633 = vmatprep.subr.bf16.mxu0 0
        %6634 = vmatpush2.bf16.xpose.msra.mxu0 0
        %6635 = vmatprep.mubr.bf16.mxu0 0
        %6636 = vmatmul.mubr.bf16.gmra.mxu0 %v4188
        %v6637 = vpop.f32.mrf.mxu0
        %v6638 = vadd.f32 0.0, %v6637
        %v6639 = vpop.f32.mrf.mxu0
        %v6640 = vpop.f32.mrf.mxu0
        %v6641 = vadd.f32 0.0, %v6640
        %v6642 = vpop.f32.mrf.mxu0
        %6643 = vmatprep.mubr.bf16.mxu0 0
        %6644 = vmatmul.mubr.bf16.gmra.mxu0 %v4200
        %v6645 = vpop.f32.mrf.mxu0
        %v6646 = vadd.f32 0.0, %v6645
        %v6647 = vpop.f32.mrf.mxu0
        %v6648 = vpop.f32.mrf.mxu0
        %v6649 = vadd.f32 0.0, %v6648
        %v6650 = vpop.f32.mrf.mxu0
        %6651 = vdwg.mxu0
        %v6652 = vsel %vm4217, %v6491, -1e+30
        %v6653 = vsel %vm4218, %v6494, -1e+30
        %v6654 = vsel %vm4219, %v6499, -1e+30
        %v6655 = vsel %vm4220, %v6502, -1e+30
        %v6656 = vsel %vm4217, %v6540, -1e+30
        %v6657 = vsel %vm4218, %v6543, -1e+30
        %v6658 = vsel %vm4219, %v6548, -1e+30
        %v6659 = vsel %vm4220, %v6551, -1e+30
        %v6660 = vsel %vm4217, %v6589, -1e+30
        %v6661 = vsel %vm4218, %v6592, -1e+30
        %v6662 = vsel %vm4219, %v6597, -1e+30
        %v6663 = vsel %vm4220, %v6600, -1e+30
        %v6664 = vsel %vm4217, %v6638, -1e+30
        %v6665 = vsel %vm4218, %v6641, -1e+30
        %v6666 = vsel %vm4219, %v6646, -1e+30
        %v6667 = vsel %vm4220, %v6649, -1e+30
        %v6668 = vsel %vm4455, %v6652, -inf
        %6669 = vmax.xlane.f32.xlu0 %v6668
        %v6670 = vpop.xlane.xlu0 %6669
        %v6671 = vsel %vm4455, %v6653, -inf
        %6672 = vmax.xlane.f32.xlu0 %v6671
        %v6673 = vpop.xlane.xlu0 %6672
        %v6674 = vsel %vm4455, %v6654, -inf
        %6675 = vmax.xlane.f32.xlu0 %v6674
        %v6676 = vpop.xlane.xlu0 %6675
        %v6677 = vsel %vm4455, %v6655, -inf
        %6678 = vmax.xlane.f32.xlu0 %v6677
        %v6679 = vpop.xlane.xlu0 %6678
        %v6680 = vsel %vm4455, %v6656, -inf
        %6681 = vmax.xlane.f32.xlu0 %v6680
        %v6682 = vpop.xlane.xlu0 %6681
        %v6683 = vsel %vm4455, %v6657, -inf
        %6684 = vmax.xlane.f32.xlu0 %v6683
        %v6685 = vpop.xlane.xlu0 %6684
        %v6686 = vsel %vm4455, %v6658, -inf
        %6687 = vmax.xlane.f32.xlu0 %v6686
        %v6688 = vpop.xlane.xlu0 %6687
        %v6689 = vsel %vm4455, %v6659, -inf
        %6690 = vmax.xlane.f32.xlu0 %v6689
        %v6691 = vpop.xlane.xlu0 %6690
        %v6692 = vsel %vm4455, %v6660, -inf
        %6693 = vmax.xlane.f32.xlu0 %v6692
        %v6694 = vpop.xlane.xlu0 %6693
        %v6695 = vsel %vm4455, %v6661, -inf
        %6696 = vmax.xlane.f32.xlu0 %v6695
        %v6697 = vpop.xlane.xlu0 %6696
        %v6698 = vsel %vm4455, %v6662, -inf
        %6699 = vmax.xlane.f32.xlu0 %v6698
        %v6700 = vpop.xlane.xlu0 %6699
        %v6701 = vsel %vm4455, %v6663, -inf
        %6702 = vmax.xlane.f32.xlu0 %v6701
        %v6703 = vpop.xlane.xlu0 %6702
        %v6704 = vsel %vm4455, %v6664, -inf
        %6705 = vmax.xlane.f32.xlu0 %v6704
        %v6706 = vpop.xlane.xlu0 %6705
        %v6707 = vsel %vm4455, %v6665, -inf
        %6708 = vmax.xlane.f32.xlu0 %v6707
        %v6709 = vpop.xlane.xlu0 %6708
        %v6710 = vsel %vm4455, %v6666, -inf
        %6711 = vmax.xlane.f32.xlu0 %v6710
        %v6712 = vpop.xlane.xlu0 %6711
        %v6713 = vsel %vm4455, %v6667, -inf
        %6714 = vmax.xlane.f32.xlu0 %v6713
        %v6715 = vpop.xlane.xlu0 %6714
        %v6716 = vsub.f32 %v6652, %v6670
        %v6717 = vsub.f32 %v6653, %v6673
        %v6718 = vsub.f32 %v6654, %v6676
        %v6719 = vsub.f32 %v6655, %v6679
        %v6720 = vsub.f32 %v6656, %v6682
        %v6721 = vsub.f32 %v6657, %v6685
        %v6722 = vsub.f32 %v6658, %v6688
        %v6723 = vsub.f32 %v6659, %v6691
        %v6724 = vsub.f32 %v6660, %v6694
        %v6725 = vsub.f32 %v6661, %v6697
        %v6726 = vsub.f32 %v6662, %v6700
        %v6727 = vsub.f32 %v6663, %v6703
        %v6728 = vsub.f32 %v6664, %v6706
        %v6729 = vsub.f32 %v6665, %v6709
        %v6730 = vsub.f32 %v6666, %v6712
        %v6731 = vsub.f32 %v6667, %v6715
        %v6732 = vmul.f32 %v6716, 1.442695
        %v6733 = vpow.pop %v6732
        %v6734 = vmul.f32 %v6717, 1.442695
        %v6735 = vpow.pop %v6734
        %v6736 = vmul.f32 %v6718, 1.442695
        %v6737 = vpow.pop %v6736
        %v6738 = vmul.f32 %v6719, 1.442695
        %v6739 = vpow.pop %v6738
        %v6740 = vmul.f32 %v6720, 1.442695
        %v6741 = vpow.pop %v6740
        %v6742 = vmul.f32 %v6721, 1.442695
        %v6743 = vpow.pop %v6742
        %v6744 = vmul.f32 %v6722, 1.442695
        %v6745 = vpow.pop %v6744
        %v6746 = vmul.f32 %v6723, 1.442695
        %v6747 = vpow.pop %v6746
        %v6748 = vmul.f32 %v6724, 1.442695
        %v6749 = vpow.pop %v6748
        %v6750 = vmul.f32 %v6725, 1.442695
        %v6751 = vpow.pop %v6750
        %v6752 = vmul.f32 %v6726, 1.442695
        %v6753 = vpow.pop %v6752
        %v6754 = vmul.f32 %v6727, 1.442695
        %v6755 = vpow.pop %v6754
        %v6756 = vmul.f32 %v6728, 1.442695
        %v6757 = vpow.pop %v6756
        %v6758 = vmul.f32 %v6729, 1.442695
        %v6759 = vpow.pop %v6758
        %v6760 = vmul.f32 %v6730, 1.442695
        %v6761 = vpow.pop %v6760
        %v6762 = vmul.f32 %v6731, 1.442695
        %v6763 = vpow.pop %v6762
        %v6764 = vsel %vm4455, %v6733, 0.0
        %6765 = vadd.xlane.f32.xlu0 %v6764
        %v6766 = vpop.xlane.xlu0 %6765
        %v6767 = vsel %vm4455, %v6735, 0.0
        %6768 = vadd.xlane.f32.xlu0 %v6767
        %v6769 = vpop.xlane.xlu0 %6768
        %v6770 = vsel %vm4455, %v6737, 0.0
        %6771 = vadd.xlane.f32.xlu0 %v6770
        %v6772 = vpop.xlane.xlu0 %6771
        %v6773 = vsel %vm4455, %v6739, 0.0
        %6774 = vadd.xlane.f32.xlu0 %v6773
        %v6775 = vpop.xlane.xlu0 %6774
        %v6776 = vsel %vm4455, %v6741, 0.0
        %6777 = vadd.xlane.f32.xlu0 %v6776
        %v6778 = vpop.xlane.xlu0 %6777
        %v6779 = vsel %vm4455, %v6743, 0.0
        %6780 = vadd.xlane.f32.xlu0 %v6779
        %v6781 = vpop.xlane.xlu0 %6780
        %v6782 = vsel %vm4455, %v6745, 0.0
        %6783 = vadd.xlane.f32.xlu0 %v6782
        %v6784 = vpop.xlane.xlu0 %6783
        %v6785 = vsel %vm4455, %v6747, 0.0
        %6786 = vadd.xlane.f32.xlu0 %v6785
        %v6787 = vpop.xlane.xlu0 %6786
        %v6788 = vsel %vm4455, %v6749, 0.0
        %6789 = vadd.xlane.f32.xlu0 %v6788
        %v6790 = vpop.xlane.xlu0 %6789
        %v6791 = vsel %vm4455, %v6751, 0.0
        %6792 = vadd.xlane.f32.xlu0 %v6791
        %v6793 = vpop.xlane.xlu0 %6792
        %v6794 = vsel %vm4455, %v6753, 0.0
        %6795 = vadd.xlane.f32.xlu0 %v6794
        %v6796 = vpop.xlane.xlu0 %6795
        %v6797 = vsel %vm4455, %v6755, 0.0
        %6798 = vadd.xlane.f32.xlu0 %v6797
        %v6799 = vpop.xlane.xlu0 %6798
        %v6800 = vsel %vm4455, %v6757, 0.0
        %6801 = vadd.xlane.f32.xlu0 %v6800
        %v6802 = vpop.xlane.xlu0 %6801
        %v6803 = vsel %vm4455, %v6759, 0.0
        %6804 = vadd.xlane.f32.xlu0 %v6803
        %v6805 = vpop.xlane.xlu0 %6804
        %v6806 = vsel %vm4455, %v6761, 0.0
        %6807 = vadd.xlane.f32.xlu0 %v6806
        %v6808 = vpop.xlane.xlu0 %6807
        %v6809 = vsel %vm4455, %v6763, 0.0
        %6810 = vadd.xlane.f32.xlu0 %v6809
        %v6811 = vpop.xlane.xlu0 %6810
        %v6812 = vrcp.pop %v6766
        %v6813 = vrcp.pop %v6769
        %v6814 = vrcp.pop %v6772
        %v6815 = vrcp.pop %v6775
        %v6816 = vrcp.pop %v6778
        %v6817 = vrcp.pop %v6781
        %v6818 = vrcp.pop %v6784
        %v6819 = vrcp.pop %v6787
        %v6820 = vrcp.pop %v6790
        %v6821 = vrcp.pop %v6793
        %v6822 = vrcp.pop %v6796
        %v6823 = vrcp.pop %v6799
        %v6824 = vrcp.pop %v6802
        %v6825 = vrcp.pop %v6805
        %v6826 = vrcp.pop %v6808
        %v6827 = vrcp.pop %v6811
        %v6828 = vpack.c.bf16 %v6735, %v6733
        %v6829 = vpack.c.bf16 %v6739, %v6737
        %v6830 = vpack.c.bf16 %v6743, %v6741
        %v6831 = vpack.c.bf16 %v6747, %v6745
        %v6832 = vpack.c.bf16 %v6751, %v6749
        %v6833 = vpack.c.bf16 %v6755, %v6753
        %v6834 = vpack.c.bf16 %v6759, %v6757
        %v6835 = vpack.c.bf16 %v6763, %v6761
        %v6837 = vsel %vm4455, %v6828, 0
        %v6840 = vsel %vm4455, %v6829, 0
        %6842 = vmatprep.subr.bf16.mxu0 0
        %6843 = vmatpush1.bf16.msra.mxu0 0
        %6844 = vmatprep.subr.bf16.mxu0 0
        %6845 = vmatpush1.bf16.msra.mxu0 0
        %6846 = vmatprep.subr.bf16.mxu0 0
        %6847 = vmatpush1.bf16.msra.mxu0 0
        %6848 = vmatprep.subr.bf16.mxu0 0
        %6849 = vmatpush1.bf16.msra.mxu0 0
        %6850 = vmatprep.subr.bf16.mxu0 0
        %6851 = vmatpush1.bf16.msra.mxu0 0
        %6852 = vmatprep.subr.bf16.mxu0 0
        %6853 = vmatpush1.bf16.msra.mxu0 0
        %6854 = vmatprep.subr.bf16.mxu0 0
        %6855 = vmatpush1.bf16.msra.mxu0 %v4136
        %6856 = vmatprep.subr.bf16.mxu0 0
        %6857 = vmatpush1.bf16.msra.mxu0 %v4124
        %6858 = vmatprep.subr.bf16.mxu0 0
        %6859 = vmatpush2.bf16.msra.mxu0 0
        %6860 = vmatprep.subr.bf16.mxu0 0
        %6861 = vmatpush2.bf16.msra.mxu0 0
        %6862 = vmatprep.subr.bf16.mxu0 0
        %6863 = vmatpush2.bf16.msra.mxu0 0
        %6864 = vmatprep.subr.bf16.mxu0 0
        %6865 = vmatpush2.bf16.msra.mxu0 0
        %6866 = vmatprep.subr.bf16.mxu0 0
        %6867 = vmatpush2.bf16.msra.mxu0 0
        %6868 = vmatprep.subr.bf16.mxu0 0
        %6869 = vmatpush2.bf16.msra.mxu0 0
        %6870 = vmatprep.subr.bf16.mxu0 0
        %6871 = vmatpush2.bf16.msra.mxu0 0
        %6872 = vmatprep.subr.bf16.mxu0 0
        %6873 = vmatpush2.bf16.msra.mxu0 0
        %6874 = vmatprep.mubr.bf16.mxu0 0
        %6875 = vmatmul.mubr.bf16.gmra.mxu0 %v6837
        %v6876 = vpop.f32.mrf.mxu0
        %v6877 = vadd.f32 0.0, %v6876
        %v6878 = vpop.f32.mrf.mxu0
        %v6879 = vpop.f32.mrf.mxu0
        %v6880 = vadd.f32 0.0, %v6879
        %v6881 = vpop.f32.mrf.mxu0
        %6882 = vmatprep.mubr.bf16.mxu0 0
        %6883 = vmatmul.mubr.bf16.gmra.mxu0 %v6840
        %v6884 = vpop.f32.mrf.mxu0
        %v6885 = vadd.f32 0.0, %v6884
        %v6886 = vpop.f32.mrf.mxu0
        %v6887 = vpop.f32.mrf.mxu0
        %v6888 = vadd.f32 0.0, %v6887
        %v6889 = vpop.f32.mrf.mxu0
        %6890 = vdwg.mxu0
        %v6892 = vsel %vm4455, %v6830, 0
        %v6895 = vsel %vm4455, %v6831, 0
        %6897 = vmatprep.subr.bf16.mxu0 0
        %6898 = vmatpush1.bf16.msra.mxu0 0
        %6899 = vmatprep.subr.bf16.mxu0 0
        %6900 = vmatpush1.bf16.msra.mxu0 0
        %6901 = vmatprep.subr.bf16.mxu0 0
        %6902 = vmatpush1.bf16.msra.mxu0 0
        %6903 = vmatprep.subr.bf16.mxu0 0
        %6904 = vmatpush1.bf16.msra.mxu0 0
        %6905 = vmatprep.subr.bf16.mxu0 0
        %6906 = vmatpush1.bf16.msra.mxu0 0
        %6907 = vmatprep.subr.bf16.mxu0 0
        %6908 = vmatpush1.bf16.msra.mxu0 0
        %6909 = vmatprep.subr.bf16.mxu0 0
        %6910 = vmatpush1.bf16.msra.mxu0 %v4160
        %6911 = vmatprep.subr.bf16.mxu0 0
        %6912 = vmatpush1.bf16.msra.mxu0 %v4148
        %6913 = vmatprep.subr.bf16.mxu0 0
        %6914 = vmatpush2.bf16.msra.mxu0 0
        %6915 = vmatprep.subr.bf16.mxu0 0
        %6916 = vmatpush2.bf16.msra.mxu0 0
        %6917 = vmatprep.subr.bf16.mxu0 0
        %6918 = vmatpush2.bf16.msra.mxu0 0
        %6919 = vmatprep.subr.bf16.mxu0 0
        %6920 = vmatpush2.bf16.msra.mxu0 0
        %6921 = vmatprep.subr.bf16.mxu0 0
        %6922 = vmatpush2.bf16.msra.mxu0 0
        %6923 = vmatprep.subr.bf16.mxu0 0
        %6924 = vmatpush2.bf16.msra.mxu0 0
        %6925 = vmatprep.subr.bf16.mxu0 0
        %6926 = vmatpush2.bf16.msra.mxu0 0
        %6927 = vmatprep.subr.bf16.mxu0 0
        %6928 = vmatpush2.bf16.msra.mxu0 0
        %6929 = vmatprep.mubr.bf16.mxu0 0
        %6930 = vmatmul.mubr.bf16.gmra.mxu0 %v6892
        %v6931 = vpop.f32.mrf.mxu0
        %v6932 = vadd.f32 0.0, %v6931
        %v6933 = vpop.f32.mrf.mxu0
        %v6934 = vpop.f32.mrf.mxu0
        %v6935 = vadd.f32 0.0, %v6934
        %v6936 = vpop.f32.mrf.mxu0
        %6937 = vmatprep.mubr.bf16.mxu0 0
        %6938 = vmatmul.mubr.bf16.gmra.mxu0 %v6895
        %v6939 = vpop.f32.mrf.mxu0
        %v6940 = vadd.f32 0.0, %v6939
        %v6941 = vpop.f32.mrf.mxu0
        %v6942 = vpop.f32.mrf.mxu0
        %v6943 = vadd.f32 0.0, %v6942
        %v6944 = vpop.f32.mrf.mxu0
        %6945 = vdwg.mxu0
        %v6947 = vsel %vm4455, %v6832, 0
        %v6950 = vsel %vm4455, %v6833, 0
        %6952 = vmatprep.subr.bf16.mxu0 0
        %6953 = vmatpush1.bf16.msra.mxu0 0
        %6954 = vmatprep.subr.bf16.mxu0 0
        %6955 = vmatpush1.bf16.msra.mxu0 0
        %6956 = vmatprep.subr.bf16.mxu0 0
        %6957 = vmatpush1.bf16.msra.mxu0 0
        %6958 = vmatprep.subr.bf16.mxu0 0
        %6959 = vmatpush1.bf16.msra.mxu0 0
        %6960 = vmatprep.subr.bf16.mxu0 0
        %6961 = vmatpush1.bf16.msra.mxu0 0
        %6962 = vmatprep.subr.bf16.mxu0 0
        %6963 = vmatpush1.bf16.msra.mxu0 0
        %6964 = vmatprep.subr.bf16.mxu0 0
        %6965 = vmatpush1.bf16.msra.mxu0 %v4184
        %6966 = vmatprep.subr.bf16.mxu0 0
        %6967 = vmatpush1.bf16.msra.mxu0 %v4172
        %6968 = vmatprep.subr.bf16.mxu0 0
        %6969 = vmatpush2.bf16.msra.mxu0 0
        %6970 = vmatprep.subr.bf16.mxu0 0
        %6971 = vmatpush2.bf16.msra.mxu0 0
        %6972 = vmatprep.subr.bf16.mxu0 0
        %6973 = vmatpush2.bf16.msra.mxu0 0
        %6974 = vmatprep.subr.bf16.mxu0 0
        %6975 = vmatpush2.bf16.msra.mxu0 0
        %6976 = vmatprep.subr.bf16.mxu0 0
        %6977 = vmatpush2.bf16.msra.mxu0 0
        %6978 = vmatprep.subr.bf16.mxu0 0
        %6979 = vmatpush2.bf16.msra.mxu0 0
        %6980 = vmatprep.subr.bf16.mxu0 0
        %6981 = vmatpush2.bf16.msra.mxu0 0
        %6982 = vmatprep.subr.bf16.mxu0 0
        %6983 = vmatpush2.bf16.msra.mxu0 0
        %6984 = vmatprep.mubr.bf16.mxu0 0
        %6985 = vmatmul.mubr.bf16.gmra.mxu0 %v6947
        %v6986 = vpop.f32.mrf.mxu0
        %v6987 = vadd.f32 0.0, %v6986
        %v6988 = vpop.f32.mrf.mxu0
        %v6989 = vpop.f32.mrf.mxu0
        %v6990 = vadd.f32 0.0, %v6989
        %v6991 = vpop.f32.mrf.mxu0
        %6992 = vmatprep.mubr.bf16.mxu0 0
        %6993 = vmatmul.mubr.bf16.gmra.mxu0 %v6950
        %v6994 = vpop.f32.mrf.mxu0
        %v6995 = vadd.f32 0.0, %v6994
        %v6996 = vpop.f32.mrf.mxu0
        %v6997 = vpop.f32.mrf.mxu0
        %v6998 = vadd.f32 0.0, %v6997
        %v6999 = vpop.f32.mrf.mxu0
        %7000 = vdwg.mxu0
        %v7002 = vsel %vm4455, %v6834, 0
        %v7005 = vsel %vm4455, %v6835, 0
        %7007 = vmatprep.subr.bf16.mxu0 0
        %7008 = vmatpush1.bf16.msra.mxu0 0
        %7009 = vmatprep.subr.bf16.mxu0 0
        %7010 = vmatpush1.bf16.msra.mxu0 0
        %7011 = vmatprep.subr.bf16.mxu0 0
        %7012 = vmatpush1.bf16.msra.mxu0 0
        %7013 = vmatprep.subr.bf16.mxu0 0
        %7014 = vmatpush1.bf16.msra.mxu0 0
        %7015 = vmatprep.subr.bf16.mxu0 0
        %7016 = vmatpush1.bf16.msra.mxu0 0
        %7017 = vmatprep.subr.bf16.mxu0 0
        %7018 = vmatpush1.bf16.msra.mxu0 0
        %7019 = vmatprep.subr.bf16.mxu0 0
        %7020 = vmatpush1.bf16.msra.mxu0 %v4208
        %7021 = vmatprep.subr.bf16.mxu0 0
        %7022 = vmatpush1.bf16.msra.mxu0 %v4196
        %7023 = vmatprep.subr.bf16.mxu0 0
        %7024 = vmatpush2.bf16.msra.mxu0 0
        %7025 = vmatprep.subr.bf16.mxu0 0
        %7026 = vmatpush2.bf16.msra.mxu0 0
        %7027 = vmatprep.subr.bf16.mxu0 0
        %7028 = vmatpush2.bf16.msra.mxu0 0
        %7029 = vmatprep.subr.bf16.mxu0 0
        %7030 = vmatpush2.bf16.msra.mxu0 0
        %7031 = vmatprep.subr.bf16.mxu0 0
        %7032 = vmatpush2.bf16.msra.mxu0 0
        %7033 = vmatprep.subr.bf16.mxu0 0
        %7034 = vmatpush2.bf16.msra.mxu0 0
        %7035 = vmatprep.subr.bf16.mxu0 0
        %7036 = vmatpush2.bf16.msra.mxu0 0
        %7037 = vmatprep.subr.bf16.mxu0 0
        %7038 = vmatpush2.bf16.msra.mxu0 0
        %7039 = vmatprep.mubr.bf16.mxu0 0
        %7040 = vmatmul.mubr.bf16.gmra.mxu0 %v7002
        %v7041 = vpop.f32.mrf.mxu0
        %v7042 = vadd.f32 0.0, %v7041
        %v7043 = vpop.f32.mrf.mxu0
        %v7044 = vpop.f32.mrf.mxu0
        %v7045 = vadd.f32 0.0, %v7044
        %v7046 = vpop.f32.mrf.mxu0
        %7047 = vmatprep.mubr.bf16.mxu0 0
        %7048 = vmatmul.mubr.bf16.gmra.mxu0 %v7005
        %v7049 = vpop.f32.mrf.mxu0
        %v7050 = vadd.f32 0.0, %v7049
        %v7051 = vpop.f32.mrf.mxu0
        %v7052 = vpop.f32.mrf.mxu0
        %v7053 = vadd.f32 0.0, %v7052
        %v7054 = vpop.f32.mrf.mxu0
        %7055 = vdwg.mxu0
        %v7056 = vmul.f32 %v6877, %v6812
        %v7057 = vmul.f32 %v6880, %v6813
        %v7058 = vmul.f32 %v6885, %v6814
        %v7059 = vmul.f32 %v6888, %v6815
        %v7060 = vmul.f32 %v6932, %v6816
        %v7061 = vmul.f32 %v6935, %v6817
        %v7062 = vmul.f32 %v6940, %v6818
        %v7063 = vmul.f32 %v6943, %v6819
        %v7064 = vmul.f32 %v6987, %v6820
        %v7065 = vmul.f32 %v6990, %v6821
        %v7066 = vmul.f32 %v6995, %v6822
        %v7067 = vmul.f32 %v6998, %v6823
        %v7068 = vmul.f32 %v7042, %v6824
        %v7069 = vmul.f32 %v7045, %v6825
        %v7070 = vmul.f32 %v7050, %v6826
        %v7071 = vmul.f32 %v7053, %v6827
        %v7072 = vpack.c.bf16 %v7057, %v7056
        %v7073 = vpack.c.bf16 %v7059, %v7058
        %v7074 = vpack.c.bf16 %v7061, %v7060
        %v7075 = vpack.c.bf16 %v7063, %v7062
        %v7076 = vpack.c.bf16 %v7065, %v7064
        %v7077 = vpack.c.bf16 %v7067, %v7066
        %v7078 = vpack.c.bf16 %v7069, %v7068
        %v7079 = vpack.c.bf16 %v7071, %v7070
        %v7080 = vld [vmem:[#allocation7 + $0x200] sm:$0xff]
        %v7081 = vld [vmem:[#allocation7 + $0x208] sm:$0xff]
        %v7082 = vld [vmem:[#allocation7 + $0x210] sm:$0xff]
        %v7083 = vld [vmem:[#allocation7 + $0x218] sm:$0xff]
        %v7084 = vld [vmem:[#allocation7 + $0x220] sm:$0xff]
        %v7085 = vld [vmem:[#allocation7 + $0x228] sm:$0xff]
        %v7086 = vld [vmem:[#allocation7 + $0x230] sm:$0xff]
        %v7087 = vld [vmem:[#allocation7 + $0x238] sm:$0xff]
        %v7088 = vld [vmem:[#allocation7 + $0x240] sm:$0xff]
        %v7089 = vld [vmem:[#allocation7 + $0x248] sm:$0xff]
        %v7090 = vld [vmem:[#allocation7 + $0x250] sm:$0xff]
        %v7091 = vld [vmem:[#allocation7 + $0x258] sm:$0xff]
        %v7092 = vld [vmem:[#allocation7 + $0x260] sm:$0xff]
        %v7093 = vld [vmem:[#allocation7 + $0x268] sm:$0xff]
        %v7094 = vld [vmem:[#allocation7 + $0x270] sm:$0xff]
        %v7095 = vld [vmem:[#allocation7 + $0x278] sm:$0xff]
        %v7096 = vld [vmem:[#allocation7 + $0x280] sm:$0xff]
        %v7097 = vld [vmem:[#allocation7 + $0x288] sm:$0xff]
        %v7098 = vld [vmem:[#allocation7 + $0x290] sm:$0xff]
        %v7099 = vld [vmem:[#allocation7 + $0x298] sm:$0xff]
        %v7100 = vld [vmem:[#allocation7 + $0x2a0] sm:$0xff]
        %v7101 = vld [vmem:[#allocation7 + $0x2a8] sm:$0xff]
        %v7102 = vld [vmem:[#allocation7 + $0x2b0] sm:$0xff]
        %v7103 = vld [vmem:[#allocation7 + $0x2b8] sm:$0xff]
        %v7104 = vld [vmem:[#allocation7 + $0x2c0] sm:$0xff]
        %v7105 = vld [vmem:[#allocation7 + $0x2c8] sm:$0xff]
        %v7106 = vld [vmem:[#allocation7 + $0x2d0] sm:$0xff]
        %v7107 = vld [vmem:[#allocation7 + $0x2d8] sm:$0xff]
        %v7108 = vld [vmem:[#allocation7 + $0x2e0] sm:$0xff]
        %v7109 = vld [vmem:[#allocation7 + $0x2e8] sm:$0xff]
        %v7110 = vld [vmem:[#allocation7 + $0x2f0] sm:$0xff]
        %v7111 = vld [vmem:[#allocation7 + $0x2f8] sm:$0xff]
        %v7144 = vunpack.c.l.b16 %v7080
        %v7145 = vunpack.c.h.b16 %v7080
        %v7146 = vunpack.c.l.b16 %v7081
        %v7147 = vunpack.c.h.b16 %v7081
        %v7148 = vunpack.c.l.b16 %v7082
        %v7149 = vunpack.c.h.b16 %v7082
        %v7150 = vunpack.c.l.b16 %v7083
        %v7151 = vunpack.c.h.b16 %v7083
        %v7152 = vunpack.c.l.b16 %v7084
        %v7153 = vunpack.c.h.b16 %v7084
        %v7154 = vunpack.c.l.b16 %v7085
        %v7155 = vunpack.c.h.b16 %v7085
        %v7156 = vunpack.c.l.b16 %v7086
        %v7157 = vunpack.c.h.b16 %v7086
        %v7158 = vunpack.c.l.b16 %v7087
        %v7159 = vunpack.c.h.b16 %v7087
        %v7160 = vunpack.c.l.b16 %v7088
        %v7161 = vunpack.c.h.b16 %v7088
        %v7162 = vunpack.c.l.b16 %v7089
        %v7163 = vunpack.c.h.b16 %v7089
        %v7164 = vunpack.c.l.b16 %v7090
        %v7165 = vunpack.c.h.b16 %v7090
        %v7166 = vunpack.c.l.b16 %v7091
        %v7167 = vunpack.c.h.b16 %v7091
        %v7168 = vunpack.c.l.b16 %v7092
        %v7169 = vunpack.c.h.b16 %v7092
        %v7170 = vunpack.c.l.b16 %v7093
        %v7171 = vunpack.c.h.b16 %v7093
        %v7172 = vunpack.c.l.b16 %v7094
        %v7173 = vunpack.c.h.b16 %v7094
        %v7174 = vunpack.c.l.b16 %v7095
        %v7175 = vunpack.c.h.b16 %v7095
        %v7176 = vunpack.c.l.b16 %v7096
        %v7177 = vunpack.c.h.b16 %v7096
        %v7178 = vunpack.c.l.b16 %v7097
        %v7179 = vunpack.c.h.b16 %v7097
        %v7180 = vunpack.c.l.b16 %v7098
        %v7181 = vunpack.c.h.b16 %v7098
        %v7182 = vunpack.c.l.b16 %v7099
        %v7183 = vunpack.c.h.b16 %v7099
        %v7184 = vunpack.c.l.b16 %v7100
        %v7185 = vunpack.c.h.b16 %v7100
        %v7186 = vunpack.c.l.b16 %v7101
        %v7187 = vunpack.c.h.b16 %v7101
        %v7188 = vunpack.c.l.b16 %v7102
        %v7189 = vunpack.c.h.b16 %v7102
        %v7190 = vunpack.c.l.b16 %v7103
        %v7191 = vunpack.c.h.b16 %v7103
        %v7192 = vunpack.c.l.b16 %v7104
        %v7193 = vunpack.c.h.b16 %v7104
        %v7194 = vunpack.c.l.b16 %v7105
        %v7195 = vunpack.c.h.b16 %v7105
        %v7196 = vunpack.c.l.b16 %v7106
        %v7197 = vunpack.c.h.b16 %v7106
        %v7198 = vunpack.c.l.b16 %v7107
        %v7199 = vunpack.c.h.b16 %v7107
        %v7200 = vunpack.c.l.b16 %v7108
        %v7201 = vunpack.c.h.b16 %v7108
        %v7202 = vunpack.c.l.b16 %v7109
        %v7203 = vunpack.c.h.b16 %v7109
        %v7204 = vunpack.c.l.b16 %v7110
        %v7205 = vunpack.c.h.b16 %v7110
        %v7206 = vunpack.c.l.b16 %v7111
        %v7207 = vunpack.c.h.b16 %v7111
        %v7208 = vpack.c.b16 %v7148, %v7144
        %v7209 = vpack.c.b16 %v7149, %v7145
        %v7210 = vpack.c.b16 %v7150, %v7146
        %v7211 = vpack.c.b16 %v7151, %v7147
        %v7212 = vpack.c.b16 %v7156, %v7152
        %v7213 = vpack.c.b16 %v7157, %v7153
        %v7214 = vpack.c.b16 %v7158, %v7154
        %v7215 = vpack.c.b16 %v7159, %v7155
        %v7216 = vpack.c.b16 %v7164, %v7160
        %v7217 = vpack.c.b16 %v7165, %v7161
        %v7218 = vpack.c.b16 %v7166, %v7162
        %v7219 = vpack.c.b16 %v7167, %v7163
        %v7220 = vpack.c.b16 %v7172, %v7168
        %v7221 = vpack.c.b16 %v7173, %v7169
        %v7222 = vpack.c.b16 %v7174, %v7170
        %v7223 = vpack.c.b16 %v7175, %v7171
        %v7224 = vpack.c.b16 %v7180, %v7176
        %v7225 = vpack.c.b16 %v7181, %v7177
        %v7226 = vpack.c.b16 %v7182, %v7178
        %v7227 = vpack.c.b16 %v7183, %v7179
        %v7228 = vpack.c.b16 %v7188, %v7184
        %v7229 = vpack.c.b16 %v7189, %v7185
        %v7230 = vpack.c.b16 %v7190, %v7186
        %v7231 = vpack.c.b16 %v7191, %v7187
        %v7232 = vpack.c.b16 %v7196, %v7192
        %v7233 = vpack.c.b16 %v7197, %v7193
        %v7234 = vpack.c.b16 %v7198, %v7194
        %v7235 = vpack.c.b16 %v7199, %v7195
        %v7236 = vpack.c.b16 %v7204, %v7200
        %v7237 = vpack.c.b16 %v7205, %v7201
        %v7238 = vpack.c.b16 %v7206, %v7202
        %v7239 = vpack.c.b16 %v7207, %v7203
        %7272 = vmatprep.subr.bf16.mxu0 %v7237
        %7273 = vmatpush1.bf16.msra.mxu0 %v7236
        %7274 = vmatprep.subr.bf16.mxu0 %v7233
        %7275 = vmatpush1.bf16.msra.mxu0 %v7232
        %7276 = vmatprep.subr.bf16.mxu0 %v7229
        %7277 = vmatpush1.bf16.msra.mxu0 %v7228
        %7278 = vmatprep.subr.bf16.mxu0 %v7225
        %7279 = vmatpush1.bf16.msra.mxu0 %v7224
        %7280 = vmatprep.subr.bf16.mxu0 %v7221
        %7281 = vmatpush1.bf16.msra.mxu0 %v7220
        %7282 = vmatprep.subr.bf16.mxu0 %v7217
        %7283 = vmatpush1.bf16.msra.mxu0 %v7216
        %7284 = vmatprep.subr.bf16.mxu0 %v7213
        %7285 = vmatpush1.bf16.msra.mxu0 %v7212
        %7286 = vmatprep.subr.bf16.mxu0 %v7209
        %7287 = vmatpush1.bf16.msra.mxu0 %v7208
        %7288 = vmatprep.subr.bf16.mxu0 0
        %7289 = vmatpush2.bf16.msra.mxu0 0
        %7290 = vmatprep.subr.bf16.mxu0 0
        %7291 = vmatpush2.bf16.msra.mxu0 0
        %7292 = vmatprep.subr.bf16.mxu0 0
        %7293 = vmatpush2.bf16.msra.mxu0 0
        %7294 = vmatprep.subr.bf16.mxu0 0
        %7295 = vmatpush2.bf16.msra.mxu0 0
        %7296 = vmatprep.subr.bf16.mxu0 0
        %7297 = vmatpush2.bf16.msra.mxu0 0
        %7298 = vmatprep.subr.bf16.mxu0 0
        %7299 = vmatpush2.bf16.msra.mxu0 0
        %7300 = vmatprep.subr.bf16.mxu0 0
        %7301 = vmatpush2.bf16.msra.mxu0 0
        %7302 = vmatprep.subr.bf16.mxu0 0
        %7303 = vmatpush2.bf16.msra.mxu0 0
        %7304 = vmatprep.mubr.bf16.mxu0 0
        %7305 = vmatmul.mubr.bf16.gmra.mxu0 %v7072
        %v7306 = vpop.f32.mrf.mxu0
        %v7307 = vadd.f32 0.0, %v7306
        %v7308 = vpop.f32.mrf.mxu0
        %v7309 = vadd.f32 0.0, %v7308
        %v7310 = vpop.f32.mrf.mxu0
        %v7311 = vadd.f32 0.0, %v7310
        %v7312 = vpop.f32.mrf.mxu0
        %v7313 = vadd.f32 0.0, %v7312
        %7314 = vmatprep.mubr.bf16.mxu0 0
        %7315 = vmatmul.mubr.bf16.gmra.mxu0 %v7073
        %v7316 = vpop.f32.mrf.mxu0
        %v7317 = vadd.f32 0.0, %v7316
        %v7318 = vpop.f32.mrf.mxu0
        %v7319 = vadd.f32 0.0, %v7318
        %v7320 = vpop.f32.mrf.mxu0
        %v7321 = vadd.f32 0.0, %v7320
        %v7322 = vpop.f32.mrf.mxu0
        %v7323 = vadd.f32 0.0, %v7322
        %7324 = vmatprep.mubr.bf16.mxu0 0
        %7325 = vmatmul.mubr.bf16.gmra.mxu0 %v7074
        %v7326 = vpop.f32.mrf.mxu0
        %v7327 = vadd.f32 0.0, %v7326
        %v7328 = vpop.f32.mrf.mxu0
        %v7329 = vadd.f32 0.0, %v7328
        %v7330 = vpop.f32.mrf.mxu0
        %v7331 = vadd.f32 0.0, %v7330
        %v7332 = vpop.f32.mrf.mxu0
        %v7333 = vadd.f32 0.0, %v7332
        %7334 = vmatprep.mubr.bf16.mxu0 0
        %7335 = vmatmul.mubr.bf16.gmra.mxu0 %v7075
        %v7336 = vpop.f32.mrf.mxu0
        %v7337 = vadd.f32 0.0, %v7336
        %v7338 = vpop.f32.mrf.mxu0
        %v7339 = vadd.f32 0.0, %v7338
        %v7340 = vpop.f32.mrf.mxu0
        %v7341 = vadd.f32 0.0, %v7340
        %v7342 = vpop.f32.mrf.mxu0
        %v7343 = vadd.f32 0.0, %v7342
        %7344 = vmatprep.mubr.bf16.mxu0 0
        %7345 = vmatmul.mubr.bf16.gmra.mxu0 %v7076
        %v7346 = vpop.f32.mrf.mxu0
        %v7347 = vadd.f32 0.0, %v7346
        %v7348 = vpop.f32.mrf.mxu0
        %v7349 = vadd.f32 0.0, %v7348
        %v7350 = vpop.f32.mrf.mxu0
        %v7351 = vadd.f32 0.0, %v7350
        %v7352 = vpop.f32.mrf.mxu0
        %v7353 = vadd.f32 0.0, %v7352
        %7354 = vmatprep.mubr.bf16.mxu0 0
        %7355 = vmatmul.mubr.bf16.gmra.mxu0 %v7077
        %v7356 = vpop.f32.mrf.mxu0
        %v7357 = vadd.f32 0.0, %v7356
        %v7358 = vpop.f32.mrf.mxu0
        %v7359 = vadd.f32 0.0, %v7358
        %v7360 = vpop.f32.mrf.mxu0
        %v7361 = vadd.f32 0.0, %v7360
        %v7362 = vpop.f32.mrf.mxu0
        %v7363 = vadd.f32 0.0, %v7362
        %7364 = vmatprep.mubr.bf16.mxu0 0
        %7365 = vmatmul.mubr.bf16.gmra.mxu0 %v7078
        %v7366 = vpop.f32.mrf.mxu0
        %v7367 = vadd.f32 0.0, %v7366
        %v7368 = vpop.f32.mrf.mxu0
        %v7369 = vadd.f32 0.0, %v7368
        %v7370 = vpop.f32.mrf.mxu0
        %v7371 = vadd.f32 0.0, %v7370
        %v7372 = vpop.f32.mrf.mxu0
        %v7373 = vadd.f32 0.0, %v7372
        %7374 = vmatprep.mubr.bf16.mxu0 0
        %7375 = vmatmul.mubr.bf16.gmra.mxu0 %v7079
        %v7376 = vpop.f32.mrf.mxu0
        %v7377 = vadd.f32 0.0, %v7376
        %v7378 = vpop.f32.mrf.mxu0
        %v7379 = vadd.f32 0.0, %v7378
        %v7380 = vpop.f32.mrf.mxu0
        %v7381 = vadd.f32 0.0, %v7380
        %v7382 = vpop.f32.mrf.mxu0
        %v7383 = vadd.f32 0.0, %v7382
        %7384 = vdwg.mxu0
        %7385 = vmatprep.subr.bf16.mxu0 %v7239
        %7386 = vmatpush1.bf16.msra.mxu0 %v7238
        %7387 = vmatprep.subr.bf16.mxu0 %v7235
        %7388 = vmatpush1.bf16.msra.mxu0 %v7234
        %7389 = vmatprep.subr.bf16.mxu0 %v7231
        %7390 = vmatpush1.bf16.msra.mxu0 %v7230
        %7391 = vmatprep.subr.bf16.mxu0 %v7227
        %7392 = vmatpush1.bf16.msra.mxu0 %v7226
        %7393 = vmatprep.subr.bf16.mxu0 %v7223
        %7394 = vmatpush1.bf16.msra.mxu0 %v7222
        %7395 = vmatprep.subr.bf16.mxu0 %v7219
        %7396 = vmatpush1.bf16.msra.mxu0 %v7218
        %7397 = vmatprep.subr.bf16.mxu0 %v7215
        %7398 = vmatpush1.bf16.msra.mxu0 %v7214
        %7399 = vmatprep.subr.bf16.mxu0 %v7211
        %7400 = vmatpush1.bf16.msra.mxu0 %v7210
        %7401 = vmatprep.subr.bf16.mxu0 0
        %7402 = vmatpush2.bf16.msra.mxu0 0
        %7403 = vmatprep.subr.bf16.mxu0 0
        %7404 = vmatpush2.bf16.msra.mxu0 0
        %7405 = vmatprep.subr.bf16.mxu0 0
        %7406 = vmatpush2.bf16.msra.mxu0 0
        %7407 = vmatprep.subr.bf16.mxu0 0
        %7408 = vmatpush2.bf16.msra.mxu0 0
        %7409 = vmatprep.subr.bf16.mxu0 0
        %7410 = vmatpush2.bf16.msra.mxu0 0
        %7411 = vmatprep.subr.bf16.mxu0 0
        %7412 = vmatpush2.bf16.msra.mxu0 0
        %7413 = vmatprep.subr.bf16.mxu0 0
        %7414 = vmatpush2.bf16.msra.mxu0 0
        %7415 = vmatprep.subr.bf16.mxu0 0
        %7416 = vmatpush2.bf16.msra.mxu0 0
        %7417 = vmatprep.mubr.bf16.mxu0 0
        %7418 = vmatmul.mubr.bf16.gmra.mxu0 %v7072
        %v7419 = vpop.f32.mrf.mxu0
        %v7420 = vadd.f32 0.0, %v7419
        %v7421 = vpop.f32.mrf.mxu0
        %v7422 = vadd.f32 0.0, %v7421
        %v7423 = vpop.f32.mrf.mxu0
        %v7424 = vadd.f32 0.0, %v7423
        %v7425 = vpop.f32.mrf.mxu0
        %v7426 = vadd.f32 0.0, %v7425
        %7427 = vmatprep.mubr.bf16.mxu0 0
        %7428 = vmatmul.mubr.bf16.gmra.mxu0 %v7073
        %v7429 = vpop.f32.mrf.mxu0
        %v7430 = vadd.f32 0.0, %v7429
        %v7431 = vpop.f32.mrf.mxu0
        %v7432 = vadd.f32 0.0, %v7431
        %v7433 = vpop.f32.mrf.mxu0
        %v7434 = vadd.f32 0.0, %v7433
        %v7435 = vpop.f32.mrf.mxu0
        %v7436 = vadd.f32 0.0, %v7435
        %7437 = vmatprep.mubr.bf16.mxu0 0
        %7438 = vmatmul.mubr.bf16.gmra.mxu0 %v7074
        %v7439 = vpop.f32.mrf.mxu0
        %v7440 = vadd.f32 0.0, %v7439
        %v7441 = vpop.f32.mrf.mxu0
        %v7442 = vadd.f32 0.0, %v7441
        %v7443 = vpop.f32.mrf.mxu0
        %v7444 = vadd.f32 0.0, %v7443
        %v7445 = vpop.f32.mrf.mxu0
        %v7446 = vadd.f32 0.0, %v7445
        %7447 = vmatprep.mubr.bf16.mxu0 0
        %7448 = vmatmul.mubr.bf16.gmra.mxu0 %v7075
        %v7449 = vpop.f32.mrf.mxu0
        %v7450 = vadd.f32 0.0, %v7449
        %v7451 = vpop.f32.mrf.mxu0
        %v7452 = vadd.f32 0.0, %v7451
        %v7453 = vpop.f32.mrf.mxu0
        %v7454 = vadd.f32 0.0, %v7453
        %v7455 = vpop.f32.mrf.mxu0
        %v7456 = vadd.f32 0.0, %v7455
        %7457 = vmatprep.mubr.bf16.mxu0 0
        %7458 = vmatmul.mubr.bf16.gmra.mxu0 %v7076
        %v7459 = vpop.f32.mrf.mxu0
        %v7460 = vadd.f32 0.0, %v7459
        %v7461 = vpop.f32.mrf.mxu0
        %v7462 = vadd.f32 0.0, %v7461
        %v7463 = vpop.f32.mrf.mxu0
        %v7464 = vadd.f32 0.0, %v7463
        %v7465 = vpop.f32.mrf.mxu0
        %v7466 = vadd.f32 0.0, %v7465
        %7467 = vmatprep.mubr.bf16.mxu0 0
        %7468 = vmatmul.mubr.bf16.gmra.mxu0 %v7077
        %v7469 = vpop.f32.mrf.mxu0
        %v7470 = vadd.f32 0.0, %v7469
        %v7471 = vpop.f32.mrf.mxu0
        %v7472 = vadd.f32 0.0, %v7471
        %v7473 = vpop.f32.mrf.mxu0
        %v7474 = vadd.f32 0.0, %v7473
        %v7475 = vpop.f32.mrf.mxu0
        %v7476 = vadd.f32 0.0, %v7475
        %7477 = vmatprep.mubr.bf16.mxu0 0
        %7478 = vmatmul.mubr.bf16.gmra.mxu0 %v7078
        %v7479 = vpop.f32.mrf.mxu0
        %v7480 = vadd.f32 0.0, %v7479
        %v7481 = vpop.f32.mrf.mxu0
        %v7482 = vadd.f32 0.0, %v7481
        %v7483 = vpop.f32.mrf.mxu0
        %v7484 = vadd.f32 0.0, %v7483
        %v7485 = vpop.f32.mrf.mxu0
        %v7486 = vadd.f32 0.0, %v7485
        %7487 = vmatprep.mubr.bf16.mxu0 0
        %7488 = vmatmul.mubr.bf16.gmra.mxu0 %v7079
        %v7489 = vpop.f32.mrf.mxu0
        %v7490 = vadd.f32 0.0, %v7489
        %v7491 = vpop.f32.mrf.mxu0
        %v7492 = vadd.f32 0.0, %v7491
        %v7493 = vpop.f32.mrf.mxu0
        %v7494 = vadd.f32 0.0, %v7493
        %v7495 = vpop.f32.mrf.mxu0
        %v7496 = vadd.f32 0.0, %v7495
        %7497 = vdwg.mxu0
        %v7498 = vadd.f32 %v6392, %v7307
        %v7499 = vadd.f32 %v6393, %v7309
        %v7500 = vadd.f32 %v6394, %v7420
        %v7501 = vadd.f32 %v6395, %v7422
        %v7502 = vadd.f32 %v6396, %v7311
        %v7503 = vadd.f32 %v6397, %v7313
        %v7504 = vadd.f32 %v6398, %v7424
        %v7505 = vadd.f32 %v6399, %v7426
        %v7506 = vadd.f32 %v6400, %v7317
        %v7507 = vadd.f32 %v6401, %v7319
        %v7508 = vadd.f32 %v6402, %v7430
        %v7509 = vadd.f32 %v6403, %v7432
        %v7510 = vadd.f32 %v6404, %v7321
        %v7511 = vadd.f32 %v6405, %v7323
        %v7512 = vadd.f32 %v6406, %v7434
        %v7513 = vadd.f32 %v6407, %v7436
        %v7514 = vadd.f32 %v6408, %v7327
        %v7515 = vadd.f32 %v6409, %v7329
        %v7516 = vadd.f32 %v6410, %v7440
        %v7517 = vadd.f32 %v6411, %v7442
        %v7518 = vadd.f32 %v6412, %v7331
        %v7519 = vadd.f32 %v6413, %v7333
        %v7520 = vadd.f32 %v6414, %v7444
        %v7521 = vadd.f32 %v6415, %v7446
        %v7522 = vadd.f32 %v6416, %v7337
        %v7523 = vadd.f32 %v6417, %v7339
        %v7524 = vadd.f32 %v6418, %v7450
        %v7525 = vadd.f32 %v6419, %v7452
        %v7526 = vadd.f32 %v6420, %v7341
        %v7527 = vadd.f32 %v6421, %v7343
        %v7528 = vadd.f32 %v6422, %v7454
        %v7529 = vadd.f32 %v6423, %v7456
        %v7530 = vadd.f32 %v6424, %v7347
        %v7531 = vadd.f32 %v6425, %v7349
        %v7532 = vadd.f32 %v6426, %v7460
        %v7533 = vadd.f32 %v6427, %v7462
        %v7534 = vadd.f32 %v6428, %v7351
        %v7535 = vadd.f32 %v6429, %v7353
        %v7536 = vadd.f32 %v6430, %v7464
        %v7537 = vadd.f32 %v6431, %v7466
        %v7538 = vadd.f32 %v6432, %v7357
        %v7539 = vadd.f32 %v6433, %v7359
        %v7540 = vadd.f32 %v6434, %v7470
        %v7541 = vadd.f32 %v6435, %v7472
        %v7542 = vadd.f32 %v6436, %v7361
        %v7543 = vadd.f32 %v6437, %v7363
        %v7544 = vadd.f32 %v6438, %v7474
        %v7545 = vadd.f32 %v6439, %v7476
        %v7546 = vadd.f32 %v6440, %v7367
        %v7547 = vadd.f32 %v6441, %v7369
        %v7548 = vadd.f32 %v6442, %v7480
        %v7549 = vadd.f32 %v6443, %v7482
        %v7550 = vadd.f32 %v6444, %v7371
        %v7551 = vadd.f32 %v6445, %v7373
        %v7552 = vadd.f32 %v6446, %v7484
        %v7553 = vadd.f32 %v6447, %v7486
        %v7554 = vadd.f32 %v6448, %v7377
        %v7555 = vadd.f32 %v6449, %v7379
        %v7556 = vadd.f32 %v6450, %v7490
        %v7557 = vadd.f32 %v6451, %v7492
        %v7558 = vadd.f32 %v6452, %v7381
        %v7559 = vadd.f32 %v6453, %v7383
        %v7560 = vadd.f32 %v6454, %v7494
        %v7561 = vadd.f32 %v6455, %v7496
        %7562 = vmatprep.subr.bf16.mxu0 0
        %7563 = vmatpush1.bf16.xpose.msra.mxu0 0
        %7564 = vmatprep.subr.bf16.mxu0 0
        %7565 = vmatpush1.bf16.xpose.msra.mxu0 0
        %7566 = vmatprep.subr.bf16.mxu0 0
        %7567 = vmatpush1.bf16.xpose.msra.mxu0 0
        %7568 = vmatprep.subr.bf16.mxu0 0
        %7569 = vmatpush1.bf16.xpose.msra.mxu0 0
        %7570 = vmatprep.subr.bf16.mxu0 0
        %7571 = vmatpush1.bf16.xpose.msra.mxu0 0
        %7572 = vmatprep.subr.bf16.mxu0 0
        %7573 = vmatpush1.bf16.xpose.msra.mxu0 0
        %7574 = vmatprep.subr.bf16.mxu0 0
        %7575 = vmatpush1.bf16.xpose.msra.mxu0 %v4133
        %7576 = vmatprep.subr.bf16.mxu0 0
        %7577 = vmatpush1.bf16.xpose.msra.mxu0 %v4121
        %7578 = vmatprep.subr.bf16.mxu0 0
        %7579 = vmatpush2.bf16.xpose.msra.mxu0 0
        %7580 = vmatprep.subr.bf16.mxu0 0
        %7581 = vmatpush2.bf16.xpose.msra.mxu0 0
        %7582 = vmatprep.subr.bf16.mxu0 0
        %7583 = vmatpush2.bf16.xpose.msra.mxu0 0
        %7584 = vmatprep.subr.bf16.mxu0 0
        %7585 = vmatpush2.bf16.xpose.msra.mxu0 0
        %7586 = vmatprep.subr.bf16.mxu0 0
        %7587 = vmatpush2.bf16.xpose.msra.mxu0 0
        %7588 = vmatprep.subr.bf16.mxu0 0
        %7589 = vmatpush2.bf16.xpose.msra.mxu0 0
        %7590 = vmatprep.subr.bf16.mxu0 0
        %7591 = vmatpush2.bf16.xpose.msra.mxu0 0
        %7592 = vmatprep.subr.bf16.mxu0 0
        %7593 = vmatpush2.bf16.xpose.msra.mxu0 0
        %7594 = vmatprep.mubr.bf16.mxu0 0
        %7595 = vmatmul.mubr.bf16.gmra.mxu0 %v4117
        %v7596 = vpop.f32.mrf.mxu0
        %v7597 = vadd.f32 0.0, %v7596
        %v7598 = vpop.f32.mrf.mxu0
        %v7599 = vpop.f32.mrf.mxu0
        %v7600 = vadd.f32 0.0, %v7599
        %v7601 = vpop.f32.mrf.mxu0
        %7602 = vmatprep.mubr.bf16.mxu0 0
        %7603 = vmatmul.mubr.bf16.gmra.mxu0 %v4129
        %v7604 = vpop.f32.mrf.mxu0
        %v7605 = vadd.f32 0.0, %v7604
        %v7606 = vpop.f32.mrf.mxu0
        %v7607 = vpop.f32.mrf.mxu0
        %v7608 = vadd.f32 0.0, %v7607
        %v7609 = vpop.f32.mrf.mxu0
        %7610 = vdwg.mxu0
        %7611 = vmatprep.subr.bf16.mxu0 0
        %7612 = vmatpush1.bf16.xpose.msra.mxu0 0
        %7613 = vmatprep.subr.bf16.mxu0 0
        %7614 = vmatpush1.bf16.xpose.msra.mxu0 0
        %7615 = vmatprep.subr.bf16.mxu0 0
        %7616 = vmatpush1.bf16.xpose.msra.mxu0 0
        %7617 = vmatprep.subr.bf16.mxu0 0
        %7618 = vmatpush1.bf16.xpose.msra.mxu0 0
        %7619 = vmatprep.subr.bf16.mxu0 0
        %7620 = vmatpush1.bf16.xpose.msra.mxu0 0
        %7621 = vmatprep.subr.bf16.mxu0 0
        %7622 = vmatpush1.bf16.xpose.msra.mxu0 0
        %7623 = vmatprep.subr.bf16.mxu0 0
        %7624 = vmatpush1.bf16.xpose.msra.mxu0 %v4157
        %7625 = vmatprep.subr.bf16.mxu0 0
        %7626 = vmatpush1.bf16.xpose.msra.mxu0 %v4145
        %7627 = vmatprep.subr.bf16.mxu0 0
        %7628 = vmatpush2.bf16.xpose.msra.mxu0 0
        %7629 = vmatprep.subr.bf16.mxu0 0
        %7630 = vmatpush2.bf16.xpose.msra.mxu0 0
        %7631 = vmatprep.subr.bf16.mxu0 0
        %7632 = vmatpush2.bf16.xpose.msra.mxu0 0
        %7633 = vmatprep.subr.bf16.mxu0 0
        %7634 = vmatpush2.bf16.xpose.msra.mxu0 0
        %7635 = vmatprep.subr.bf16.mxu0 0
        %7636 = vmatpush2.bf16.xpose.msra.mxu0 0
        %7637 = vmatprep.subr.bf16.mxu0 0
        %7638 = vmatpush2.bf16.xpose.msra.mxu0 0
        %7639 = vmatprep.subr.bf16.mxu0 0
        %7640 = vmatpush2.bf16.xpose.msra.mxu0 0
        %7641 = vmatprep.subr.bf16.mxu0 0
        %7642 = vmatpush2.bf16.xpose.msra.mxu0 0
        %7643 = vmatprep.mubr.bf16.mxu0 0
        %7644 = vmatmul.mubr.bf16.gmra.mxu0 %v4141
        %v7645 = vpop.f32.mrf.mxu0
        %v7646 = vadd.f32 0.0, %v7645
        %v7647 = vpop.f32.mrf.mxu0
        %v7648 = vpop.f32.mrf.mxu0
        %v7649 = vadd.f32 0.0, %v7648
        %v7650 = vpop.f32.mrf.mxu0
        %7651 = vmatprep.mubr.bf16.mxu0 0
        %7652 = vmatmul.mubr.bf16.gmra.mxu0 %v4153
        %v7653 = vpop.f32.mrf.mxu0
        %v7654 = vadd.f32 0.0, %v7653
        %v7655 = vpop.f32.mrf.mxu0
        %v7656 = vpop.f32.mrf.mxu0
        %v7657 = vadd.f32 0.0, %v7656
        %v7658 = vpop.f32.mrf.mxu0
        %7659 = vdwg.mxu0
        %7660 = vmatprep.subr.bf16.mxu0 0
        %7661 = vmatpush1.bf16.xpose.msra.mxu0 0
        %7662 = vmatprep.subr.bf16.mxu0 0
        %7663 = vmatpush1.bf16.xpose.msra.mxu0 0
        %7664 = vmatprep.subr.bf16.mxu0 0
        %7665 = vmatpush1.bf16.xpose.msra.mxu0 0
        %7666 = vmatprep.subr.bf16.mxu0 0
        %7667 = vmatpush1.bf16.xpose.msra.mxu0 0
        %7668 = vmatprep.subr.bf16.mxu0 0
        %7669 = vmatpush1.bf16.xpose.msra.mxu0 0
        %7670 = vmatprep.subr.bf16.mxu0 0
        %7671 = vmatpush1.bf16.xpose.msra.mxu0 0
        %7672 = vmatprep.subr.bf16.mxu0 0
        %7673 = vmatpush1.bf16.xpose.msra.mxu0 %v4181
        %7674 = vmatprep.subr.bf16.mxu0 0
        %7675 = vmatpush1.bf16.xpose.msra.mxu0 %v4169
        %7676 = vmatprep.subr.bf16.mxu0 0
        %7677 = vmatpush2.bf16.xpose.msra.mxu0 0
        %7678 = vmatprep.subr.bf16.mxu0 0
        %7679 = vmatpush2.bf16.xpose.msra.mxu0 0
        %7680 = vmatprep.subr.bf16.mxu0 0
        %7681 = vmatpush2.bf16.xpose.msra.mxu0 0
        %7682 = vmatprep.subr.bf16.mxu0 0
        %7683 = vmatpush2.bf16.xpose.msra.mxu0 0
        %7684 = vmatprep.subr.bf16.mxu0 0
        %7685 = vmatpush2.bf16.xpose.msra.mxu0 0
        %7686 = vmatprep.subr.bf16.mxu0 0
        %7687 = vmatpush2.bf16.xpose.msra.mxu0 0
        %7688 = vmatprep.subr.bf16.mxu0 0
        %7689 = vmatpush2.bf16.xpose.msra.mxu0 0
        %7690 = vmatprep.subr.bf16.mxu0 0
        %7691 = vmatpush2.bf16.xpose.msra.mxu0 0
        %7692 = vmatprep.mubr.bf16.mxu0 0
        %7693 = vmatmul.mubr.bf16.gmra.mxu0 %v4165
        %v7694 = vpop.f32.mrf.mxu0
        %v7695 = vadd.f32 0.0, %v7694
        %v7696 = vpop.f32.mrf.mxu0
        %v7697 = vpop.f32.mrf.mxu0
        %v7698 = vadd.f32 0.0, %v7697
        %v7699 = vpop.f32.mrf.mxu0
        %7700 = vmatprep.mubr.bf16.mxu0 0
        %7701 = vmatmul.mubr.bf16.gmra.mxu0 %v4177
        %v7702 = vpop.f32.mrf.mxu0
        %v7703 = vadd.f32 0.0, %v7702
        %v7704 = vpop.f32.mrf.mxu0
        %v7705 = vpop.f32.mrf.mxu0
        %v7706 = vadd.f32 0.0, %v7705
        %v7707 = vpop.f32.mrf.mxu0
        %7708 = vdwg.mxu0
        %7709 = vmatprep.subr.bf16.mxu0 0
        %7710 = vmatpush1.bf16.xpose.msra.mxu0 0
        %7711 = vmatprep.subr.bf16.mxu0 0
        %7712 = vmatpush1.bf16.xpose.msra.mxu0 0
        %7713 = vmatprep.subr.bf16.mxu0 0
        %7714 = vmatpush1.bf16.xpose.msra.mxu0 0
        %7715 = vmatprep.subr.bf16.mxu0 0
        %7716 = vmatpush1.bf16.xpose.msra.mxu0 0
        %7717 = vmatprep.subr.bf16.mxu0 0
        %7718 = vmatpush1.bf16.xpose.msra.mxu0 0
        %7719 = vmatprep.subr.bf16.mxu0 0
        %7720 = vmatpush1.bf16.xpose.msra.mxu0 0
        %7721 = vmatprep.subr.bf16.mxu0 0
        %7722 = vmatpush1.bf16.xpose.msra.mxu0 %v4205
        %7723 = vmatprep.subr.bf16.mxu0 0
        %7724 = vmatpush1.bf16.xpose.msra.mxu0 %v4193
        %7725 = vmatprep.subr.bf16.mxu0 0
        %7726 = vmatpush2.bf16.xpose.msra.mxu0 0
        %7727 = vmatprep.subr.bf16.mxu0 0
        %7728 = vmatpush2.bf16.xpose.msra.mxu0 0
        %7729 = vmatprep.subr.bf16.mxu0 0
        %7730 = vmatpush2.bf16.xpose.msra.mxu0 0
        %7731 = vmatprep.subr.bf16.mxu0 0
        %7732 = vmatpush2.bf16.xpose.msra.mxu0 0
        %7733 = vmatprep.subr.bf16.mxu0 0
        %7734 = vmatpush2.bf16.xpose.msra.mxu0 0
        %7735 = vmatprep.subr.bf16.mxu0 0
        %7736 = vmatpush2.bf16.xpose.msra.mxu0 0
        %7737 = vmatprep.subr.bf16.mxu0 0
        %7738 = vmatpush2.bf16.xpose.msra.mxu0 0
        %7739 = vmatprep.subr.bf16.mxu0 0
        %7740 = vmatpush2.bf16.xpose.msra.mxu0 0
        %7741 = vmatprep.mubr.bf16.mxu0 0
        %7742 = vmatmul.mubr.bf16.gmra.mxu0 %v4189
        %v7743 = vpop.f32.mrf.mxu0
        %v7744 = vadd.f32 0.0, %v7743
        %v7745 = vpop.f32.mrf.mxu0
        %v7746 = vpop.f32.mrf.mxu0
        %v7747 = vadd.f32 0.0, %v7746
        %v7748 = vpop.f32.mrf.mxu0
        %7749 = vmatprep.mubr.bf16.mxu0 0
        %7750 = vmatmul.mubr.bf16.gmra.mxu0 %v4201
        %v7751 = vpop.f32.mrf.mxu0
        %v7752 = vadd.f32 0.0, %v7751
        %v7753 = vpop.f32.mrf.mxu0
        %v7754 = vpop.f32.mrf.mxu0
        %v7755 = vadd.f32 0.0, %v7754
        %v7756 = vpop.f32.mrf.mxu0
        %7757 = vdwg.mxu0
        %v7758 = vsel %vm4217, %v7597, -1e+30
        %v7759 = vsel %vm4218, %v7600, -1e+30
        %v7760 = vsel %vm4219, %v7605, -1e+30
        %v7761 = vsel %vm4220, %v7608, -1e+30
        %v7762 = vsel %vm4217, %v7646, -1e+30
        %v7763 = vsel %vm4218, %v7649, -1e+30
        %v7764 = vsel %vm4219, %v7654, -1e+30
        %v7765 = vsel %vm4220, %v7657, -1e+30
        %v7766 = vsel %vm4217, %v7695, -1e+30
        %v7767 = vsel %vm4218, %v7698, -1e+30
        %v7768 = vsel %vm4219, %v7703, -1e+30
        %v7769 = vsel %vm4220, %v7706, -1e+30
        %v7770 = vsel %vm4217, %v7744, -1e+30
        %v7771 = vsel %vm4218, %v7747, -1e+30
        %v7772 = vsel %vm4219, %v7752, -1e+30
        %v7773 = vsel %vm4220, %v7755, -1e+30
        %v7774 = vsel %vm4455, %v7758, -inf
        %7775 = vmax.xlane.f32.xlu0 %v7774
        %v7776 = vpop.xlane.xlu0 %7775
        %v7777 = vsel %vm4455, %v7759, -inf
        %7778 = vmax.xlane.f32.xlu0 %v7777
        %v7779 = vpop.xlane.xlu0 %7778
        %v7780 = vsel %vm4455, %v7760, -inf
        %7781 = vmax.xlane.f32.xlu0 %v7780
        %v7782 = vpop.xlane.xlu0 %7781
        %v7783 = vsel %vm4455, %v7761, -inf
        %7784 = vmax.xlane.f32.xlu0 %v7783
        %v7785 = vpop.xlane.xlu0 %7784
        %v7786 = vsel %vm4455, %v7762, -inf
        %7787 = vmax.xlane.f32.xlu0 %v7786
        %v7788 = vpop.xlane.xlu0 %7787
        %v7789 = vsel %vm4455, %v7763, -inf
        %7790 = vmax.xlane.f32.xlu0 %v7789
        %v7791 = vpop.xlane.xlu0 %7790
        %v7792 = vsel %vm4455, %v7764, -inf
        %7793 = vmax.xlane.f32.xlu0 %v7792
        %v7794 = vpop.xlane.xlu0 %7793
        %v7795 = vsel %vm4455, %v7765, -inf
        %7796 = vmax.xlane.f32.xlu0 %v7795
        %v7797 = vpop.xlane.xlu0 %7796
        %v7798 = vsel %vm4455, %v7766, -inf
        %7799 = vmax.xlane.f32.xlu0 %v7798
        %v7800 = vpop.xlane.xlu0 %7799
        %v7801 = vsel %vm4455, %v7767, -inf
        %7802 = vmax.xlane.f32.xlu0 %v7801
        %v7803 = vpop.xlane.xlu0 %7802
        %v7804 = vsel %vm4455, %v7768, -inf
        %7805 = vmax.xlane.f32.xlu0 %v7804
        %v7806 = vpop.xlane.xlu0 %7805
        %v7807 = vsel %vm4455, %v7769, -inf
        %7808 = vmax.xlane.f32.xlu0 %v7807
        %v7809 = vpop.xlane.xlu0 %7808
        %v7810 = vsel %vm4455, %v7770, -inf
        %7811 = vmax.xlane.f32.xlu0 %v7810
        %v7812 = vpop.xlane.xlu0 %7811
        %v7813 = vsel %vm4455, %v7771, -inf
        %7814 = vmax.xlane.f32.xlu0 %v7813
        %v7815 = vpop.xlane.xlu0 %7814
        %v7816 = vsel %vm4455, %v7772, -inf
        %7817 = vmax.xlane.f32.xlu0 %v7816
        %v7818 = vpop.xlane.xlu0 %7817
        %v7819 = vsel %vm4455, %v7773, -inf
        %7820 = vmax.xlane.f32.xlu0 %v7819
        %v7821 = vpop.xlane.xlu0 %7820
        %v7822 = vsub.f32 %v7758, %v7776
        %v7823 = vsub.f32 %v7759, %v7779
        %v7824 = vsub.f32 %v7760, %v7782
        %v7825 = vsub.f32 %v7761, %v7785
        %v7826 = vsub.f32 %v7762, %v7788
        %v7827 = vsub.f32 %v7763, %v7791
        %v7828 = vsub.f32 %v7764, %v7794
        %v7829 = vsub.f32 %v7765, %v7797
        %v7830 = vsub.f32 %v7766, %v7800
        %v7831 = vsub.f32 %v7767, %v7803
        %v7832 = vsub.f32 %v7768, %v7806
        %v7833 = vsub.f32 %v7769, %v7809
        %v7834 = vsub.f32 %v7770, %v7812
        %v7835 = vsub.f32 %v7771, %v7815
        %v7836 = vsub.f32 %v7772, %v7818
        %v7837 = vsub.f32 %v7773, %v7821
        %v7838 = vmul.f32 %v7822, 1.442695
        %v7839 = vpow.pop %v7838
        %v7840 = vmul.f32 %v7823, 1.442695
        %v7841 = vpow.pop %v7840
        %v7842 = vmul.f32 %v7824, 1.442695
        %v7843 = vpow.pop %v7842
        %v7844 = vmul.f32 %v7825, 1.442695
        %v7845 = vpow.pop %v7844
        %v7846 = vmul.f32 %v7826, 1.442695
        %v7847 = vpow.pop %v7846
        %v7848 = vmul.f32 %v7827, 1.442695
        %v7849 = vpow.pop %v7848
        %v7850 = vmul.f32 %v7828, 1.442695
        %v7851 = vpow.pop %v7850
        %v7852 = vmul.f32 %v7829, 1.442695
        %v7853 = vpow.pop %v7852
        %v7854 = vmul.f32 %v7830, 1.442695
        %v7855 = vpow.pop %v7854
        %v7856 = vmul.f32 %v7831, 1.442695
        %v7857 = vpow.pop %v7856
        %v7858 = vmul.f32 %v7832, 1.442695
        %v7859 = vpow.pop %v7858
        %v7860 = vmul.f32 %v7833, 1.442695
        %v7861 = vpow.pop %v7860
        %v7862 = vmul.f32 %v7834, 1.442695
        %v7863 = vpow.pop %v7862
        %v7864 = vmul.f32 %v7835, 1.442695
        %v7865 = vpow.pop %v7864
        %v7866 = vmul.f32 %v7836, 1.442695
        %v7867 = vpow.pop %v7866
        %v7868 = vmul.f32 %v7837, 1.442695
        %v7869 = vpow.pop %v7868
        %v7870 = vsel %vm4455, %v7839, 0.0
        %7871 = vadd.xlane.f32.xlu0 %v7870
        %v7872 = vpop.xlane.xlu0 %7871
        %v7873 = vsel %vm4455, %v7841, 0.0
        %7874 = vadd.xlane.f32.xlu0 %v7873
        %v7875 = vpop.xlane.xlu0 %7874
        %v7876 = vsel %vm4455, %v7843, 0.0
        %7877 = vadd.xlane.f32.xlu0 %v7876
        %v7878 = vpop.xlane.xlu0 %7877
        %v7879 = vsel %vm4455, %v7845, 0.0
        %7880 = vadd.xlane.f32.xlu0 %v7879
        %v7881 = vpop.xlane.xlu0 %7880
        %v7882 = vsel %vm4455, %v7847, 0.0
        %7883 = vadd.xlane.f32.xlu0 %v7882
        %v7884 = vpop.xlane.xlu0 %7883
        %v7885 = vsel %vm4455, %v7849, 0.0
        %7886 = vadd.xlane.f32.xlu0 %v7885
        %v7887 = vpop.xlane.xlu0 %7886
        %v7888 = vsel %vm4455, %v7851, 0.0
        %7889 = vadd.xlane.f32.xlu0 %v7888
        %v7890 = vpop.xlane.xlu0 %7889
        %v7891 = vsel %vm4455, %v7853, 0.0
        %7892 = vadd.xlane.f32.xlu0 %v7891
        %v7893 = vpop.xlane.xlu0 %7892
        %v7894 = vsel %vm4455, %v7855, 0.0
        %7895 = vadd.xlane.f32.xlu0 %v7894
        %v7896 = vpop.xlane.xlu0 %7895
        %v7897 = vsel %vm4455, %v7857, 0.0
        %7898 = vadd.xlane.f32.xlu0 %v7897
        %v7899 = vpop.xlane.xlu0 %7898
        %v7900 = vsel %vm4455, %v7859, 0.0
        %7901 = vadd.xlane.f32.xlu0 %v7900
        %v7902 = vpop.xlane.xlu0 %7901
        %v7903 = vsel %vm4455, %v7861, 0.0
        %7904 = vadd.xlane.f32.xlu0 %v7903
        %v7905 = vpop.xlane.xlu0 %7904
        %v7906 = vsel %vm4455, %v7863, 0.0
        %7907 = vadd.xlane.f32.xlu0 %v7906
        %v7908 = vpop.xlane.xlu0 %7907
        %v7909 = vsel %vm4455, %v7865, 0.0
        %7910 = vadd.xlane.f32.xlu0 %v7909
        %v7911 = vpop.xlane.xlu0 %7910
        %v7912 = vsel %vm4455, %v7867, 0.0
        %7913 = vadd.xlane.f32.xlu0 %v7912
        %v7914 = vpop.xlane.xlu0 %7913
        %v7915 = vsel %vm4455, %v7869, 0.0
        %7916 = vadd.xlane.f32.xlu0 %v7915
        %v7917 = vpop.xlane.xlu0 %7916
        %v7918 = vrcp.pop %v7872
        %v7919 = vrcp.pop %v7875
        %v7920 = vrcp.pop %v7878
        %v7921 = vrcp.pop %v7881
        %v7922 = vrcp.pop %v7884
        %v7923 = vrcp.pop %v7887
        %v7924 = vrcp.pop %v7890
        %v7925 = vrcp.pop %v7893
        %v7926 = vrcp.pop %v7896
        %v7927 = vrcp.pop %v7899
        %v7928 = vrcp.pop %v7902
        %v7929 = vrcp.pop %v7905
        %v7930 = vrcp.pop %v7908
        %v7931 = vrcp.pop %v7911
        %v7932 = vrcp.pop %v7914
        %v7933 = vrcp.pop %v7917
        %v7934 = vpack.c.bf16 %v7841, %v7839
        %v7935 = vpack.c.bf16 %v7845, %v7843
        %v7936 = vpack.c.bf16 %v7849, %v7847
        %v7937 = vpack.c.bf16 %v7853, %v7851
        %v7938 = vpack.c.bf16 %v7857, %v7855
        %v7939 = vpack.c.bf16 %v7861, %v7859
        %v7940 = vpack.c.bf16 %v7865, %v7863
        %v7941 = vpack.c.bf16 %v7869, %v7867
        %v7943 = vsel %vm4455, %v7934, 0
        %v7946 = vsel %vm4455, %v7935, 0
        %7948 = vmatprep.subr.bf16.mxu0 0
        %7949 = vmatpush1.bf16.msra.mxu0 0
        %7950 = vmatprep.subr.bf16.mxu0 0
        %7951 = vmatpush1.bf16.msra.mxu0 0
        %7952 = vmatprep.subr.bf16.mxu0 0
        %7953 = vmatpush1.bf16.msra.mxu0 0
        %7954 = vmatprep.subr.bf16.mxu0 0
        %7955 = vmatpush1.bf16.msra.mxu0 0
        %7956 = vmatprep.subr.bf16.mxu0 0
        %7957 = vmatpush1.bf16.msra.mxu0 0
        %7958 = vmatprep.subr.bf16.mxu0 0
        %7959 = vmatpush1.bf16.msra.mxu0 0
        %7960 = vmatprep.subr.bf16.mxu0 0
        %7961 = vmatpush1.bf16.msra.mxu0 %v4137
        %7962 = vmatprep.subr.bf16.mxu0 0
        %7963 = vmatpush1.bf16.msra.mxu0 %v4125
        %7964 = vmatprep.subr.bf16.mxu0 0
        %7965 = vmatpush2.bf16.msra.mxu0 0
        %7966 = vmatprep.subr.bf16.mxu0 0
        %7967 = vmatpush2.bf16.msra.mxu0 0
        %7968 = vmatprep.subr.bf16.mxu0 0
        %7969 = vmatpush2.bf16.msra.mxu0 0
        %7970 = vmatprep.subr.bf16.mxu0 0
        %7971 = vmatpush2.bf16.msra.mxu0 0
        %7972 = vmatprep.subr.bf16.mxu0 0
        %7973 = vmatpush2.bf16.msra.mxu0 0
        %7974 = vmatprep.subr.bf16.mxu0 0
        %7975 = vmatpush2.bf16.msra.mxu0 0
        %7976 = vmatprep.subr.bf16.mxu0 0
        %7977 = vmatpush2.bf16.msra.mxu0 0
        %7978 = vmatprep.subr.bf16.mxu0 0
        %7979 = vmatpush2.bf16.msra.mxu0 0
        %7980 = vmatprep.mubr.bf16.mxu0 0
        %7981 = vmatmul.mubr.bf16.gmra.mxu0 %v7943
        %v7982 = vpop.f32.mrf.mxu0
        %v7983 = vadd.f32 0.0, %v7982
        %v7984 = vpop.f32.mrf.mxu0
        %v7985 = vpop.f32.mrf.mxu0
        %v7986 = vadd.f32 0.0, %v7985
        %v7987 = vpop.f32.mrf.mxu0
        %7988 = vmatprep.mubr.bf16.mxu0 0
        %7989 = vmatmul.mubr.bf16.gmra.mxu0 %v7946
        %v7990 = vpop.f32.mrf.mxu0
        %v7991 = vadd.f32 0.0, %v7990
        %v7992 = vpop.f32.mrf.mxu0
        %v7993 = vpop.f32.mrf.mxu0
        %v7994 = vadd.f32 0.0, %v7993
        %v7995 = vpop.f32.mrf.mxu0
        %7996 = vdwg.mxu0
        %v7998 = vsel %vm4455, %v7936, 0
        %v8001 = vsel %vm4455, %v7937, 0
        %8003 = vmatprep.subr.bf16.mxu0 0
        %8004 = vmatpush1.bf16.msra.mxu0 0
        %8005 = vmatprep.subr.bf16.mxu0 0
        %8006 = vmatpush1.bf16.msra.mxu0 0
        %8007 = vmatprep.subr.bf16.mxu0 0
        %8008 = vmatpush1.bf16.msra.mxu0 0
        %8009 = vmatprep.subr.bf16.mxu0 0
        %8010 = vmatpush1.bf16.msra.mxu0 0
        %8011 = vmatprep.subr.bf16.mxu0 0
        %8012 = vmatpush1.bf16.msra.mxu0 0
        %8013 = vmatprep.subr.bf16.mxu0 0
        %8014 = vmatpush1.bf16.msra.mxu0 0
        %8015 = vmatprep.subr.bf16.mxu0 0
        %8016 = vmatpush1.bf16.msra.mxu0 %v4161
        %8017 = vmatprep.subr.bf16.mxu0 0
        %8018 = vmatpush1.bf16.msra.mxu0 %v4149
        %8019 = vmatprep.subr.bf16.mxu0 0
        %8020 = vmatpush2.bf16.msra.mxu0 0
        %8021 = vmatprep.subr.bf16.mxu0 0
        %8022 = vmatpush2.bf16.msra.mxu0 0
        %8023 = vmatprep.subr.bf16.mxu0 0
        %8024 = vmatpush2.bf16.msra.mxu0 0
        %8025 = vmatprep.subr.bf16.mxu0 0
        %8026 = vmatpush2.bf16.msra.mxu0 0
        %8027 = vmatprep.subr.bf16.mxu0 0
        %8028 = vmatpush2.bf16.msra.mxu0 0
        %8029 = vmatprep.subr.bf16.mxu0 0
        %8030 = vmatpush2.bf16.msra.mxu0 0
        %8031 = vmatprep.subr.bf16.mxu0 0
        %8032 = vmatpush2.bf16.msra.mxu0 0
        %8033 = vmatprep.subr.bf16.mxu0 0
        %8034 = vmatpush2.bf16.msra.mxu0 0
        %8035 = vmatprep.mubr.bf16.mxu0 0
        %8036 = vmatmul.mubr.bf16.gmra.mxu0 %v7998
        %v8037 = vpop.f32.mrf.mxu0
        %v8038 = vadd.f32 0.0, %v8037
        %v8039 = vpop.f32.mrf.mxu0
        %v8040 = vpop.f32.mrf.mxu0
        %v8041 = vadd.f32 0.0, %v8040
        %v8042 = vpop.f32.mrf.mxu0
        %8043 = vmatprep.mubr.bf16.mxu0 0
        %8044 = vmatmul.mubr.bf16.gmra.mxu0 %v8001
        %v8045 = vpop.f32.mrf.mxu0
        %v8046 = vadd.f32 0.0, %v8045
        %v8047 = vpop.f32.mrf.mxu0
        %v8048 = vpop.f32.mrf.mxu0
        %v8049 = vadd.f32 0.0, %v8048
        %v8050 = vpop.f32.mrf.mxu0
        %8051 = vdwg.mxu0
        %v8053 = vsel %vm4455, %v7938, 0
        %v8056 = vsel %vm4455, %v7939, 0
        %8058 = vmatprep.subr.bf16.mxu0 0
        %8059 = vmatpush1.bf16.msra.mxu0 0
        %8060 = vmatprep.subr.bf16.mxu0 0
        %8061 = vmatpush1.bf16.msra.mxu0 0
        %8062 = vmatprep.subr.bf16.mxu0 0
        %8063 = vmatpush1.bf16.msra.mxu0 0
        %8064 = vmatprep.subr.bf16.mxu0 0
        %8065 = vmatpush1.bf16.msra.mxu0 0
        %8066 = vmatprep.subr.bf16.mxu0 0
        %8067 = vmatpush1.bf16.msra.mxu0 0
        %8068 = vmatprep.subr.bf16.mxu0 0
        %8069 = vmatpush1.bf16.msra.mxu0 0
        %8070 = vmatprep.subr.bf16.mxu0 0
        %8071 = vmatpush1.bf16.msra.mxu0 %v4185
        %8072 = vmatprep.subr.bf16.mxu0 0
        %8073 = vmatpush1.bf16.msra.mxu0 %v4173
        %8074 = vmatprep.subr.bf16.mxu0 0
        %8075 = vmatpush2.bf16.msra.mxu0 0
        %8076 = vmatprep.subr.bf16.mxu0 0
        %8077 = vmatpush2.bf16.msra.mxu0 0
        %8078 = vmatprep.subr.bf16.mxu0 0
        %8079 = vmatpush2.bf16.msra.mxu0 0
        %8080 = vmatprep.subr.bf16.mxu0 0
        %8081 = vmatpush2.bf16.msra.mxu0 0
        %8082 = vmatprep.subr.bf16.mxu0 0
        %8083 = vmatpush2.bf16.msra.mxu0 0
        %8084 = vmatprep.subr.bf16.mxu0 0
        %8085 = vmatpush2.bf16.msra.mxu0 0
        %8086 = vmatprep.subr.bf16.mxu0 0
        %8087 = vmatpush2.bf16.msra.mxu0 0
        %8088 = vmatprep.subr.bf16.mxu0 0
        %8089 = vmatpush2.bf16.msra.mxu0 0
        %8090 = vmatprep.mubr.bf16.mxu0 0
        %8091 = vmatmul.mubr.bf16.gmra.mxu0 %v8053
        %v8092 = vpop.f32.mrf.mxu0
        %v8093 = vadd.f32 0.0, %v8092
        %v8094 = vpop.f32.mrf.mxu0
        %v8095 = vpop.f32.mrf.mxu0
        %v8096 = vadd.f32 0.0, %v8095
        %v8097 = vpop.f32.mrf.mxu0
        %8098 = vmatprep.mubr.bf16.mxu0 0
        %8099 = vmatmul.mubr.bf16.gmra.mxu0 %v8056
        %v8100 = vpop.f32.mrf.mxu0
        %v8101 = vadd.f32 0.0, %v8100
        %v8102 = vpop.f32.mrf.mxu0
        %v8103 = vpop.f32.mrf.mxu0
        %v8104 = vadd.f32 0.0, %v8103
        %v8105 = vpop.f32.mrf.mxu0
        %8106 = vdwg.mxu0
        %v8108 = vsel %vm4455, %v7940, 0
        %v8111 = vsel %vm4455, %v7941, 0
        %8113 = vmatprep.subr.bf16.mxu0 0
        %8114 = vmatpush1.bf16.msra.mxu0 0
        %8115 = vmatprep.subr.bf16.mxu0 0
        %8116 = vmatpush1.bf16.msra.mxu0 0
        %8117 = vmatprep.subr.bf16.mxu0 0
        %8118 = vmatpush1.bf16.msra.mxu0 0
        %8119 = vmatprep.subr.bf16.mxu0 0
        %8120 = vmatpush1.bf16.msra.mxu0 0
        %8121 = vmatprep.subr.bf16.mxu0 0
        %8122 = vmatpush1.bf16.msra.mxu0 0
        %8123 = vmatprep.subr.bf16.mxu0 0
        %8124 = vmatpush1.bf16.msra.mxu0 0
        %8125 = vmatprep.subr.bf16.mxu0 0
        %8126 = vmatpush1.bf16.msra.mxu0 %v4209
        %8127 = vmatprep.subr.bf16.mxu0 0
        %8128 = vmatpush1.bf16.msra.mxu0 %v4197
        %8129 = vmatprep.subr.bf16.mxu0 0
        %8130 = vmatpush2.bf16.msra.mxu0 0
        %8131 = vmatprep.subr.bf16.mxu0 0
        %8132 = vmatpush2.bf16.msra.mxu0 0
        %8133 = vmatprep.subr.bf16.mxu0 0
        %8134 = vmatpush2.bf16.msra.mxu0 0
        %8135 = vmatprep.subr.bf16.mxu0 0
        %8136 = vmatpush2.bf16.msra.mxu0 0
        %8137 = vmatprep.subr.bf16.mxu0 0
        %8138 = vmatpush2.bf16.msra.mxu0 0
        %8139 = vmatprep.subr.bf16.mxu0 0
        %8140 = vmatpush2.bf16.msra.mxu0 0
        %8141 = vmatprep.subr.bf16.mxu0 0
        %8142 = vmatpush2.bf16.msra.mxu0 0
        %8143 = vmatprep.subr.bf16.mxu0 0
        %8144 = vmatpush2.bf16.msra.mxu0 0
        %8145 = vmatprep.mubr.bf16.mxu0 0
        %8146 = vmatmul.mubr.bf16.gmra.mxu0 %v8108
        %v8147 = vpop.f32.mrf.mxu0
        %v8148 = vadd.f32 0.0, %v8147
        %v8149 = vpop.f32.mrf.mxu0
        %v8150 = vpop.f32.mrf.mxu0
        %v8151 = vadd.f32 0.0, %v8150
        %v8152 = vpop.f32.mrf.mxu0
        %8153 = vmatprep.mubr.bf16.mxu0 0
        %8154 = vmatmul.mubr.bf16.gmra.mxu0 %v8111
        %v8155 = vpop.f32.mrf.mxu0
        %v8156 = vadd.f32 0.0, %v8155
        %v8157 = vpop.f32.mrf.mxu0
        %v8158 = vpop.f32.mrf.mxu0
        %v8159 = vadd.f32 0.0, %v8158
        %v8160 = vpop.f32.mrf.mxu0
        %8161 = vdwg.mxu0
        %v8162 = vmul.f32 %v7983, %v7918
        %v8163 = vmul.f32 %v7986, %v7919
        %v8164 = vmul.f32 %v7991, %v7920
        %v8165 = vmul.f32 %v7994, %v7921
        %v8166 = vmul.f32 %v8038, %v7922
        %v8167 = vmul.f32 %v8041, %v7923
        %v8168 = vmul.f32 %v8046, %v7924
        %v8169 = vmul.f32 %v8049, %v7925
        %v8170 = vmul.f32 %v8093, %v7926
        %v8171 = vmul.f32 %v8096, %v7927
        %v8172 = vmul.f32 %v8101, %v7928
        %v8173 = vmul.f32 %v8104, %v7929
        %v8174 = vmul.f32 %v8148, %v7930
        %v8175 = vmul.f32 %v8151, %v7931
        %v8176 = vmul.f32 %v8156, %v7932
        %v8177 = vmul.f32 %v8159, %v7933
        %v8178 = vpack.c.bf16 %v8163, %v8162
        %v8179 = vpack.c.bf16 %v8165, %v8164
        %v8180 = vpack.c.bf16 %v8167, %v8166
        %v8181 = vpack.c.bf16 %v8169, %v8168
        %v8182 = vpack.c.bf16 %v8171, %v8170
        %v8183 = vpack.c.bf16 %v8173, %v8172
        %v8184 = vpack.c.bf16 %v8175, %v8174
        %v8185 = vpack.c.bf16 %v8177, %v8176
        %v8186 = vld [vmem:[#allocation7 + $0x300] sm:$0xff]
        %v8187 = vld [vmem:[#allocation7 + $0x308] sm:$0xff]
        %v8188 = vld [vmem:[#allocation7 + $0x310] sm:$0xff]
        %v8189 = vld [vmem:[#allocation7 + $0x318] sm:$0xff]
        %v8190 = vld [vmem:[#allocation7 + $0x320] sm:$0xff]
        %v8191 = vld [vmem:[#allocation7 + $0x328] sm:$0xff]
        %v8192 = vld [vmem:[#allocation7 + $0x330] sm:$0xff]
        %v8193 = vld [vmem:[#allocation7 + $0x338] sm:$0xff]
        %v8194 = vld [vmem:[#allocation7 + $0x340] sm:$0xff]
        %v8195 = vld [vmem:[#allocation7 + $0x348] sm:$0xff]
        %v8196 = vld [vmem:[#allocation7 + $0x350] sm:$0xff]
        %v8197 = vld [vmem:[#allocation7 + $0x358] sm:$0xff]
        %v8198 = vld [vmem:[#allocation7 + $0x360] sm:$0xff]
        %v8199 = vld [vmem:[#allocation7 + $0x368] sm:$0xff]
        %v8200 = vld [vmem:[#allocation7 + $0x370] sm:$0xff]
        %v8201 = vld [vmem:[#allocation7 + $0x378] sm:$0xff]
        %v8202 = vld [vmem:[#allocation7 + $0x380] sm:$0xff]
        %v8203 = vld [vmem:[#allocation7 + $0x388] sm:$0xff]
        %v8204 = vld [vmem:[#allocation7 + $0x390] sm:$0xff]
        %v8205 = vld [vmem:[#allocation7 + $0x398] sm:$0xff]
        %v8206 = vld [vmem:[#allocation7 + $0x3a0] sm:$0xff]
        %v8207 = vld [vmem:[#allocation7 + $0x3a8] sm:$0xff]
        %v8208 = vld [vmem:[#allocation7 + $0x3b0] sm:$0xff]
        %v8209 = vld [vmem:[#allocation7 + $0x3b8] sm:$0xff]
        %v8210 = vld [vmem:[#allocation7 + $0x3c0] sm:$0xff]
        %v8211 = vld [vmem:[#allocation7 + $0x3c8] sm:$0xff]
        %v8212 = vld [vmem:[#allocation7 + $0x3d0] sm:$0xff]
        %v8213 = vld [vmem:[#allocation7 + $0x3d8] sm:$0xff]
        %v8214 = vld [vmem:[#allocation7 + $0x3e0] sm:$0xff]
        %v8215 = vld [vmem:[#allocation7 + $0x3e8] sm:$0xff]
        %v8216 = vld [vmem:[#allocation7 + $0x3f0] sm:$0xff]
        %v8217 = vld [vmem:[#allocation7 + $0x3f8] sm:$0xff]
        %v8250 = vunpack.c.l.b16 %v8186
        %v8251 = vunpack.c.h.b16 %v8186
        %v8252 = vunpack.c.l.b16 %v8187
        %v8253 = vunpack.c.h.b16 %v8187
        %v8254 = vunpack.c.l.b16 %v8188
        %v8255 = vunpack.c.h.b16 %v8188
        %v8256 = vunpack.c.l.b16 %v8189
        %v8257 = vunpack.c.h.b16 %v8189
        %v8258 = vunpack.c.l.b16 %v8190
        %v8259 = vunpack.c.h.b16 %v8190
        %v8260 = vunpack.c.l.b16 %v8191
        %v8261 = vunpack.c.h.b16 %v8191
        %v8262 = vunpack.c.l.b16 %v8192
        %v8263 = vunpack.c.h.b16 %v8192
        %v8264 = vunpack.c.l.b16 %v8193
        %v8265 = vunpack.c.h.b16 %v8193
        %v8266 = vunpack.c.l.b16 %v8194
        %v8267 = vunpack.c.h.b16 %v8194
        %v8268 = vunpack.c.l.b16 %v8195
        %v8269 = vunpack.c.h.b16 %v8195
        %v8270 = vunpack.c.l.b16 %v8196
        %v8271 = vunpack.c.h.b16 %v8196
        %v8272 = vunpack.c.l.b16 %v8197
        %v8273 = vunpack.c.h.b16 %v8197
        %v8274 = vunpack.c.l.b16 %v8198
        %v8275 = vunpack.c.h.b16 %v8198
        %v8276 = vunpack.c.l.b16 %v8199
        %v8277 = vunpack.c.h.b16 %v8199
        %v8278 = vunpack.c.l.b16 %v8200
        %v8279 = vunpack.c.h.b16 %v8200
        %v8280 = vunpack.c.l.b16 %v8201
        %v8281 = vunpack.c.h.b16 %v8201
        %v8282 = vunpack.c.l.b16 %v8202
        %v8283 = vunpack.c.h.b16 %v8202
        %v8284 = vunpack.c.l.b16 %v8203
        %v8285 = vunpack.c.h.b16 %v8203
        %v8286 = vunpack.c.l.b16 %v8204
        %v8287 = vunpack.c.h.b16 %v8204
        %v8288 = vunpack.c.l.b16 %v8205
        %v8289 = vunpack.c.h.b16 %v8205
        %v8290 = vunpack.c.l.b16 %v8206
        %v8291 = vunpack.c.h.b16 %v8206
        %v8292 = vunpack.c.l.b16 %v8207
        %v8293 = vunpack.c.h.b16 %v8207
        %v8294 = vunpack.c.l.b16 %v8208
        %v8295 = vunpack.c.h.b16 %v8208
        %v8296 = vunpack.c.l.b16 %v8209
        %v8297 = vunpack.c.h.b16 %v8209
        %v8298 = vunpack.c.l.b16 %v8210
        %v8299 = vunpack.c.h.b16 %v8210
        %v8300 = vunpack.c.l.b16 %v8211
        %v8301 = vunpack.c.h.b16 %v8211
        %v8302 = vunpack.c.l.b16 %v8212
        %v8303 = vunpack.c.h.b16 %v8212
        %v8304 = vunpack.c.l.b16 %v8213
        %v8305 = vunpack.c.h.b16 %v8213
        %v8306 = vunpack.c.l.b16 %v8214
        %v8307 = vunpack.c.h.b16 %v8214
        %v8308 = vunpack.c.l.b16 %v8215
        %v8309 = vunpack.c.h.b16 %v8215
        %v8310 = vunpack.c.l.b16 %v8216
        %v8311 = vunpack.c.h.b16 %v8216
        %v8312 = vunpack.c.l.b16 %v8217
        %v8313 = vunpack.c.h.b16 %v8217
        %v8314 = vpack.c.b16 %v8254, %v8250
        %v8315 = vpack.c.b16 %v8255, %v8251
        %v8316 = vpack.c.b16 %v8256, %v8252
        %v8317 = vpack.c.b16 %v8257, %v8253
        %v8318 = vpack.c.b16 %v8262, %v8258
        %v8319 = vpack.c.b16 %v8263, %v8259
        %v8320 = vpack.c.b16 %v8264, %v8260
        %v8321 = vpack.c.b16 %v8265, %v8261
        %v8322 = vpack.c.b16 %v8270, %v8266
        %v8323 = vpack.c.b16 %v8271, %v8267
        %v8324 = vpack.c.b16 %v8272, %v8268
        %v8325 = vpack.c.b16 %v8273, %v8269
        %v8326 = vpack.c.b16 %v8278, %v8274
        %v8327 = vpack.c.b16 %v8279, %v8275
        %v8328 = vpack.c.b16 %v8280, %v8276
        %v8329 = vpack.c.b16 %v8281, %v8277
        %v8330 = vpack.c.b16 %v8286, %v8282
        %v8331 = vpack.c.b16 %v8287, %v8283
        %v8332 = vpack.c.b16 %v8288, %v8284
        %v8333 = vpack.c.b16 %v8289, %v8285
        %v8334 = vpack.c.b16 %v8294, %v8290
        %v8335 = vpack.c.b16 %v8295, %v8291
        %v8336 = vpack.c.b16 %v8296, %v8292
        %v8337 = vpack.c.b16 %v8297, %v8293
        %v8338 = vpack.c.b16 %v8302, %v8298
        %v8339 = vpack.c.b16 %v8303, %v8299
        %v8340 = vpack.c.b16 %v8304, %v8300
        %v8341 = vpack.c.b16 %v8305, %v8301
        %v8342 = vpack.c.b16 %v8310, %v8306
        %v8343 = vpack.c.b16 %v8311, %v8307
        %v8344 = vpack.c.b16 %v8312, %v8308
        %v8345 = vpack.c.b16 %v8313, %v8309
        %8378 = vmatprep.subr.bf16.mxu0 %v8343
        %8379 = vmatpush1.bf16.msra.mxu0 %v8342
        %8380 = vmatprep.subr.bf16.mxu0 %v8339
        %8381 = vmatpush1.bf16.msra.mxu0 %v8338
        %8382 = vmatprep.subr.bf16.mxu0 %v8335
        %8383 = vmatpush1.bf16.msra.mxu0 %v8334
        %8384 = vmatprep.subr.bf16.mxu0 %v8331
        %8385 = vmatpush1.bf16.msra.mxu0 %v8330
        %8386 = vmatprep.subr.bf16.mxu0 %v8327
        %8387 = vmatpush1.bf16.msra.mxu0 %v8326
        %8388 = vmatprep.subr.bf16.mxu0 %v8323
        %8389 = vmatpush1.bf16.msra.mxu0 %v8322
        %8390 = vmatprep.subr.bf16.mxu0 %v8319
        %8391 = vmatpush1.bf16.msra.mxu0 %v8318
        %8392 = vmatprep.subr.bf16.mxu0 %v8315
        %8393 = vmatpush1.bf16.msra.mxu0 %v8314
        %8394 = vmatprep.subr.bf16.mxu0 0
        %8395 = vmatpush2.bf16.msra.mxu0 0
        %8396 = vmatprep.subr.bf16.mxu0 0
        %8397 = vmatpush2.bf16.msra.mxu0 0
        %8398 = vmatprep.subr.bf16.mxu0 0
        %8399 = vmatpush2.bf16.msra.mxu0 0
        %8400 = vmatprep.subr.bf16.mxu0 0
        %8401 = vmatpush2.bf16.msra.mxu0 0
        %8402 = vmatprep.subr.bf16.mxu0 0
        %8403 = vmatpush2.bf16.msra.mxu0 0
        %8404 = vmatprep.subr.bf16.mxu0 0
        %8405 = vmatpush2.bf16.msra.mxu0 0
        %8406 = vmatprep.subr.bf16.mxu0 0
        %8407 = vmatpush2.bf16.msra.mxu0 0
        %8408 = vmatprep.subr.bf16.mxu0 0
        %8409 = vmatpush2.bf16.msra.mxu0 0
        %8410 = vmatprep.mubr.bf16.mxu0 0
        %8411 = vmatmul.mubr.bf16.gmra.mxu0 %v8178
        %v8412 = vpop.f32.mrf.mxu0
        %v8413 = vadd.f32 0.0, %v8412
        %v8414 = vpop.f32.mrf.mxu0
        %v8415 = vadd.f32 0.0, %v8414
        %v8416 = vpop.f32.mrf.mxu0
        %v8417 = vadd.f32 0.0, %v8416
        %v8418 = vpop.f32.mrf.mxu0
        %v8419 = vadd.f32 0.0, %v8418
        %8420 = vmatprep.mubr.bf16.mxu0 0
        %8421 = vmatmul.mubr.bf16.gmra.mxu0 %v8179
        %v8422 = vpop.f32.mrf.mxu0
        %v8423 = vadd.f32 0.0, %v8422
        %v8424 = vpop.f32.mrf.mxu0
        %v8425 = vadd.f32 0.0, %v8424
        %v8426 = vpop.f32.mrf.mxu0
        %v8427 = vadd.f32 0.0, %v8426
        %v8428 = vpop.f32.mrf.mxu0
        %v8429 = vadd.f32 0.0, %v8428
        %8430 = vmatprep.mubr.bf16.mxu0 0
        %8431 = vmatmul.mubr.bf16.gmra.mxu0 %v8180
        %v8432 = vpop.f32.mrf.mxu0
        %v8433 = vadd.f32 0.0, %v8432
        %v8434 = vpop.f32.mrf.mxu0
        %v8435 = vadd.f32 0.0, %v8434
        %v8436 = vpop.f32.mrf.mxu0
        %v8437 = vadd.f32 0.0, %v8436
        %v8438 = vpop.f32.mrf.mxu0
        %v8439 = vadd.f32 0.0, %v8438
        %8440 = vmatprep.mubr.bf16.mxu0 0
        %8441 = vmatmul.mubr.bf16.gmra.mxu0 %v8181
        %v8442 = vpop.f32.mrf.mxu0
        %v8443 = vadd.f32 0.0, %v8442
        %v8444 = vpop.f32.mrf.mxu0
        %v8445 = vadd.f32 0.0, %v8444
        %v8446 = vpop.f32.mrf.mxu0
        %v8447 = vadd.f32 0.0, %v8446
        %v8448 = vpop.f32.mrf.mxu0
        %v8449 = vadd.f32 0.0, %v8448
        %8450 = vmatprep.mubr.bf16.mxu0 0
        %8451 = vmatmul.mubr.bf16.gmra.mxu0 %v8182
        %v8452 = vpop.f32.mrf.mxu0
        %v8453 = vadd.f32 0.0, %v8452
        %v8454 = vpop.f32.mrf.mxu0
        %v8455 = vadd.f32 0.0, %v8454
        %v8456 = vpop.f32.mrf.mxu0
        %v8457 = vadd.f32 0.0, %v8456
        %v8458 = vpop.f32.mrf.mxu0
        %v8459 = vadd.f32 0.0, %v8458
        %8460 = vmatprep.mubr.bf16.mxu0 0
        %8461 = vmatmul.mubr.bf16.gmra.mxu0 %v8183
        %v8462 = vpop.f32.mrf.mxu0
        %v8463 = vadd.f32 0.0, %v8462
        %v8464 = vpop.f32.mrf.mxu0
        %v8465 = vadd.f32 0.0, %v8464
        %v8466 = vpop.f32.mrf.mxu0
        %v8467 = vadd.f32 0.0, %v8466
        %v8468 = vpop.f32.mrf.mxu0
        %v8469 = vadd.f32 0.0, %v8468
        %8470 = vmatprep.mubr.bf16.mxu0 0
        %8471 = vmatmul.mubr.bf16.gmra.mxu0 %v8184
        %v8472 = vpop.f32.mrf.mxu0
        %v8473 = vadd.f32 0.0, %v8472
        %v8474 = vpop.f32.mrf.mxu0
        %v8475 = vadd.f32 0.0, %v8474
        %v8476 = vpop.f32.mrf.mxu0
        %v8477 = vadd.f32 0.0, %v8476
        %v8478 = vpop.f32.mrf.mxu0
        %v8479 = vadd.f32 0.0, %v8478
        %8480 = vmatprep.mubr.bf16.mxu0 0
        %8481 = vmatmul.mubr.bf16.gmra.mxu0 %v8185
        %v8482 = vpop.f32.mrf.mxu0
        %v8483 = vadd.f32 0.0, %v8482
        %v8484 = vpop.f32.mrf.mxu0
        %v8485 = vadd.f32 0.0, %v8484
        %v8486 = vpop.f32.mrf.mxu0
        %v8487 = vadd.f32 0.0, %v8486
        %v8488 = vpop.f32.mrf.mxu0
        %v8489 = vadd.f32 0.0, %v8488
        %8490 = vdwg.mxu0
        %8491 = vmatprep.subr.bf16.mxu0 %v8345
        %8492 = vmatpush1.bf16.msra.mxu0 %v8344
        %8493 = vmatprep.subr.bf16.mxu0 %v8341
        %8494 = vmatpush1.bf16.msra.mxu0 %v8340
        %8495 = vmatprep.subr.bf16.mxu0 %v8337
        %8496 = vmatpush1.bf16.msra.mxu0 %v8336
        %8497 = vmatprep.subr.bf16.mxu0 %v8333
        %8498 = vmatpush1.bf16.msra.mxu0 %v8332
        %8499 = vmatprep.subr.bf16.mxu0 %v8329
        %8500 = vmatpush1.bf16.msra.mxu0 %v8328
        %8501 = vmatprep.subr.bf16.mxu0 %v8325
        %8502 = vmatpush1.bf16.msra.mxu0 %v8324
        %8503 = vmatprep.subr.bf16.mxu0 %v8321
        %8504 = vmatpush1.bf16.msra.mxu0 %v8320
        %8505 = vmatprep.subr.bf16.mxu0 %v8317
        %8506 = vmatpush1.bf16.msra.mxu0 %v8316
        %8507 = vmatprep.subr.bf16.mxu0 0
        %8508 = vmatpush2.bf16.msra.mxu0 0
        %8509 = vmatprep.subr.bf16.mxu0 0
        %8510 = vmatpush2.bf16.msra.mxu0 0
        %8511 = vmatprep.subr.bf16.mxu0 0
        %8512 = vmatpush2.bf16.msra.mxu0 0
        %8513 = vmatprep.subr.bf16.mxu0 0
        %8514 = vmatpush2.bf16.msra.mxu0 0
        %8515 = vmatprep.subr.bf16.mxu0 0
        %8516 = vmatpush2.bf16.msra.mxu0 0
        %8517 = vmatprep.subr.bf16.mxu0 0
        %8518 = vmatpush2.bf16.msra.mxu0 0
        %8519 = vmatprep.subr.bf16.mxu0 0
        %8520 = vmatpush2.bf16.msra.mxu0 0
        %8521 = vmatprep.subr.bf16.mxu0 0
        %8522 = vmatpush2.bf16.msra.mxu0 0
        %8523 = vmatprep.mubr.bf16.mxu0 0
        %8524 = vmatmul.mubr.bf16.gmra.mxu0 %v8178
        %v8525 = vpop.f32.mrf.mxu0
        %v8526 = vadd.f32 0.0, %v8525
        %v8527 = vpop.f32.mrf.mxu0
        %v8528 = vadd.f32 0.0, %v8527
        %v8529 = vpop.f32.mrf.mxu0
        %v8530 = vadd.f32 0.0, %v8529
        %v8531 = vpop.f32.mrf.mxu0
        %v8532 = vadd.f32 0.0, %v8531
        %8533 = vmatprep.mubr.bf16.mxu0 0
        %8534 = vmatmul.mubr.bf16.gmra.mxu0 %v8179
        %v8535 = vpop.f32.mrf.mxu0
        %v8536 = vadd.f32 0.0, %v8535
        %v8537 = vpop.f32.mrf.mxu0
        %v8538 = vadd.f32 0.0, %v8537
        %v8539 = vpop.f32.mrf.mxu0
        %v8540 = vadd.f32 0.0, %v8539
        %v8541 = vpop.f32.mrf.mxu0
        %v8542 = vadd.f32 0.0, %v8541
        %8543 = vmatprep.mubr.bf16.mxu0 0
        %8544 = vmatmul.mubr.bf16.gmra.mxu0 %v8180
        %v8545 = vpop.f32.mrf.mxu0
        %v8546 = vadd.f32 0.0, %v8545
        %v8547 = vpop.f32.mrf.mxu0
        %v8548 = vadd.f32 0.0, %v8547
        %v8549 = vpop.f32.mrf.mxu0
        %v8550 = vadd.f32 0.0, %v8549
        %v8551 = vpop.f32.mrf.mxu0
        %v8552 = vadd.f32 0.0, %v8551
        %8553 = vmatprep.mubr.bf16.mxu0 0
        %8554 = vmatmul.mubr.bf16.gmra.mxu0 %v8181
        %v8555 = vpop.f32.mrf.mxu0
        %v8556 = vadd.f32 0.0, %v8555
        %v8557 = vpop.f32.mrf.mxu0
        %v8558 = vadd.f32 0.0, %v8557
        %v8559 = vpop.f32.mrf.mxu0
        %v8560 = vadd.f32 0.0, %v8559
        %v8561 = vpop.f32.mrf.mxu0
        %v8562 = vadd.f32 0.0, %v8561
        %8563 = vmatprep.mubr.bf16.mxu0 0
        %8564 = vmatmul.mubr.bf16.gmra.mxu0 %v8182
        %v8565 = vpop.f32.mrf.mxu0
        %v8566 = vadd.f32 0.0, %v8565
        %v8567 = vpop.f32.mrf.mxu0
        %v8568 = vadd.f32 0.0, %v8567
        %v8569 = vpop.f32.mrf.mxu0
        %v8570 = vadd.f32 0.0, %v8569
        %v8571 = vpop.f32.mrf.mxu0
        %v8572 = vadd.f32 0.0, %v8571
        %8573 = vmatprep.mubr.bf16.mxu0 0
        %8574 = vmatmul.mubr.bf16.gmra.mxu0 %v8183
        %v8575 = vpop.f32.mrf.mxu0
        %v8576 = vadd.f32 0.0, %v8575
        %v8577 = vpop.f32.mrf.mxu0
        %v8578 = vadd.f32 0.0, %v8577
        %v8579 = vpop.f32.mrf.mxu0
        %v8580 = vadd.f32 0.0, %v8579
        %v8581 = vpop.f32.mrf.mxu0
        %v8582 = vadd.f32 0.0, %v8581
        %8583 = vmatprep.mubr.bf16.mxu0 0
        %8584 = vmatmul.mubr.bf16.gmra.mxu0 %v8184
        %v8585 = vpop.f32.mrf.mxu0
        %v8586 = vadd.f32 0.0, %v8585
        %v8587 = vpop.f32.mrf.mxu0
        %v8588 = vadd.f32 0.0, %v8587
        %v8589 = vpop.f32.mrf.mxu0
        %v8590 = vadd.f32 0.0, %v8589
        %v8591 = vpop.f32.mrf.mxu0
        %v8592 = vadd.f32 0.0, %v8591
        %8593 = vmatprep.mubr.bf16.mxu0 0
        %8594 = vmatmul.mubr.bf16.gmra.mxu0 %v8185
        %v8595 = vpop.f32.mrf.mxu0
        %v8596 = vadd.f32 0.0, %v8595
        %v8597 = vpop.f32.mrf.mxu0
        %v8598 = vadd.f32 0.0, %v8597
        %v8599 = vpop.f32.mrf.mxu0
        %v8600 = vadd.f32 0.0, %v8599
        %v8601 = vpop.f32.mrf.mxu0
        %v8602 = vadd.f32 0.0, %v8601
        %8603 = vdwg.mxu0
        %v8604 = vadd.f32 %v7498, %v8413
        %v8605 = vadd.f32 %v7499, %v8415
        %v8606 = vadd.f32 %v7500, %v8526
        %v8607 = vadd.f32 %v7501, %v8528
        %v8608 = vadd.f32 %v7502, %v8417
        %v8609 = vadd.f32 %v7503, %v8419
        %v8610 = vadd.f32 %v7504, %v8530
        %v8611 = vadd.f32 %v7505, %v8532
        %v8612 = vadd.f32 %v7506, %v8423
        %v8613 = vadd.f32 %v7507, %v8425
        %v8614 = vadd.f32 %v7508, %v8536
        %v8615 = vadd.f32 %v7509, %v8538
        %v8616 = vadd.f32 %v7510, %v8427
        %v8617 = vadd.f32 %v7511, %v8429
        %v8618 = vadd.f32 %v7512, %v8540
        %v8619 = vadd.f32 %v7513, %v8542
        %v8620 = vadd.f32 %v7514, %v8433
        %v8621 = vadd.f32 %v7515, %v8435
        %v8622 = vadd.f32 %v7516, %v8546
        %v8623 = vadd.f32 %v7517, %v8548
        %v8624 = vadd.f32 %v7518, %v8437
        %v8625 = vadd.f32 %v7519, %v8439
        %v8626 = vadd.f32 %v7520, %v8550
        %v8627 = vadd.f32 %v7521, %v8552
        %v8628 = vadd.f32 %v7522, %v8443
        %v8629 = vadd.f32 %v7523, %v8445
        %v8630 = vadd.f32 %v7524, %v8556
        %v8631 = vadd.f32 %v7525, %v8558
        %v8632 = vadd.f32 %v7526, %v8447
        %v8633 = vadd.f32 %v7527, %v8449
        %v8634 = vadd.f32 %v7528, %v8560
        %v8635 = vadd.f32 %v7529, %v8562
        %v8636 = vadd.f32 %v7530, %v8453
        %v8637 = vadd.f32 %v7531, %v8455
        %v8638 = vadd.f32 %v7532, %v8566
        %v8639 = vadd.f32 %v7533, %v8568
        %v8640 = vadd.f32 %v7534, %v8457
        %v8641 = vadd.f32 %v7535, %v8459
        %v8642 = vadd.f32 %v7536, %v8570
        %v8643 = vadd.f32 %v7537, %v8572
        %v8644 = vadd.f32 %v7538, %v8463
        %v8645 = vadd.f32 %v7539, %v8465
        %v8646 = vadd.f32 %v7540, %v8576
        %v8647 = vadd.f32 %v7541, %v8578
        %v8648 = vadd.f32 %v7542, %v8467
        %v8649 = vadd.f32 %v7543, %v8469
        %v8650 = vadd.f32 %v7544, %v8580
        %v8651 = vadd.f32 %v7545, %v8582
        %v8652 = vadd.f32 %v7546, %v8473
        %v8653 = vadd.f32 %v7547, %v8475
        %v8654 = vadd.f32 %v7548, %v8586
        %v8655 = vadd.f32 %v7549, %v8588
        %v8656 = vadd.f32 %v7550, %v8477
        %v8657 = vadd.f32 %v7551, %v8479
        %v8658 = vadd.f32 %v7552, %v8590
        %v8659 = vadd.f32 %v7553, %v8592
        %v8660 = vadd.f32 %v7554, %v8483
        %v8661 = vadd.f32 %v7555, %v8485
        %v8662 = vadd.f32 %v7556, %v8596
        %v8663 = vadd.f32 %v7557, %v8598
        %v8664 = vadd.f32 %v7558, %v8487
        %v8665 = vadd.f32 %v7559, %v8489
        %v8666 = vadd.f32 %v7560, %v8600
        %v8667 = vadd.f32 %v7561, %v8602
        %v8668 = vpack.c.bf16 %v8608, %v8604
        %v8669 = vpack.c.bf16 %v8609, %v8605
        %v8670 = vpack.c.bf16 %v8610, %v8606
        %v8671 = vpack.c.bf16 %v8611, %v8607
        %v8672 = vpack.c.bf16 %v8616, %v8612
        %v8673 = vpack.c.bf16 %v8617, %v8613
        %v8674 = vpack.c.bf16 %v8618, %v8614
        %v8675 = vpack.c.bf16 %v8619, %v8615
        %v8676 = vpack.c.bf16 %v8624, %v8620
        %v8677 = vpack.c.bf16 %v8625, %v8621
        %v8678 = vpack.c.bf16 %v8626, %v8622
        %v8679 = vpack.c.bf16 %v8627, %v8623
        %v8680 = vpack.c.bf16 %v8632, %v8628
        %v8681 = vpack.c.bf16 %v8633, %v8629
        %v8682 = vpack.c.bf16 %v8634, %v8630
        %v8683 = vpack.c.bf16 %v8635, %v8631
        %v8684 = vpack.c.bf16 %v8640, %v8636
        %v8685 = vpack.c.bf16 %v8641, %v8637
        %v8686 = vpack.c.bf16 %v8642, %v8638
        %v8687 = vpack.c.bf16 %v8643, %v8639
        %v8688 = vpack.c.bf16 %v8648, %v8644
        %v8689 = vpack.c.bf16 %v8649, %v8645
        %v8690 = vpack.c.bf16 %v8650, %v8646
        %v8691 = vpack.c.bf16 %v8651, %v8647
        %v8692 = vpack.c.bf16 %v8656, %v8652
        %v8693 = vpack.c.bf16 %v8657, %v8653
        %v8694 = vpack.c.bf16 %v8658, %v8654
        %v8695 = vpack.c.bf16 %v8659, %v8655
        %v8696 = vpack.c.bf16 %v8664, %v8660
        %v8697 = vpack.c.bf16 %v8665, %v8661
        %v8698 = vpack.c.bf16 %v8666, %v8662
        %v8699 = vpack.c.bf16 %v8667, %v8663
        %v8732 = vunpack.c.l.b16 %v8668
        %v8733 = vunpack.c.l.b16 %v8669
        %v8734 = vunpack.c.l.b16 %v8670
        %v8735 = vunpack.c.l.b16 %v8671
        %v8736 = vunpack.c.h.b16 %v8668
        %v8737 = vunpack.c.h.b16 %v8669
        %v8738 = vunpack.c.h.b16 %v8670
        %v8739 = vunpack.c.h.b16 %v8671
        %v8740 = vunpack.c.l.b16 %v8672
        %v8741 = vunpack.c.l.b16 %v8673
        %v8742 = vunpack.c.l.b16 %v8674
        %v8743 = vunpack.c.l.b16 %v8675
        %v8744 = vunpack.c.h.b16 %v8672
        %v8745 = vunpack.c.h.b16 %v8673
        %v8746 = vunpack.c.h.b16 %v8674
        %v8747 = vunpack.c.h.b16 %v8675
        %v8748 = vunpack.c.l.b16 %v8676
        %v8749 = vunpack.c.l.b16 %v8677
        %v8750 = vunpack.c.l.b16 %v8678
        %v8751 = vunpack.c.l.b16 %v8679
        %v8752 = vunpack.c.h.b16 %v8676
        %v8753 = vunpack.c.h.b16 %v8677
        %v8754 = vunpack.c.h.b16 %v8678
        %v8755 = vunpack.c.h.b16 %v8679
        %v8756 = vunpack.c.l.b16 %v8680
        %v8757 = vunpack.c.l.b16 %v8681
        %v8758 = vunpack.c.l.b16 %v8682
        %v8759 = vunpack.c.l.b16 %v8683
        %v8760 = vunpack.c.h.b16 %v8680
        %v8761 = vunpack.c.h.b16 %v8681
        %v8762 = vunpack.c.h.b16 %v8682
        %v8763 = vunpack.c.h.b16 %v8683
        %v8764 = vunpack.c.l.b16 %v8684
        %v8765 = vunpack.c.l.b16 %v8685
        %v8766 = vunpack.c.l.b16 %v8686
        %v8767 = vunpack.c.l.b16 %v8687
        %v8768 = vunpack.c.h.b16 %v8684
        %v8769 = vunpack.c.h.b16 %v8685
        %v8770 = vunpack.c.h.b16 %v8686
        %v8771 = vunpack.c.h.b16 %v8687
        %v8772 = vunpack.c.l.b16 %v8688
        %v8773 = vunpack.c.l.b16 %v8689
        %v8774 = vunpack.c.l.b16 %v8690
        %v8775 = vunpack.c.l.b16 %v8691
        %v8776 = vunpack.c.h.b16 %v8688
        %v8777 = vunpack.c.h.b16 %v8689
        %v8778 = vunpack.c.h.b16 %v8690
        %v8779 = vunpack.c.h.b16 %v8691
        %v8780 = vunpack.c.l.b16 %v8692
        %v8781 = vunpack.c.l.b16 %v8693
        %v8782 = vunpack.c.l.b16 %v8694
        %v8783 = vunpack.c.l.b16 %v8695
        %v8784 = vunpack.c.h.b16 %v8692
        %v8785 = vunpack.c.h.b16 %v8693
        %v8786 = vunpack.c.h.b16 %v8694
        %v8787 = vunpack.c.h.b16 %v8695
        %v8788 = vunpack.c.l.b16 %v8696
        %v8789 = vunpack.c.l.b16 %v8697
        %v8790 = vunpack.c.l.b16 %v8698
        %v8791 = vunpack.c.l.b16 %v8699
        %v8792 = vunpack.c.h.b16 %v8696
        %v8793 = vunpack.c.h.b16 %v8697
        %v8794 = vunpack.c.h.b16 %v8698
        %v8795 = vunpack.c.h.b16 %v8699
        %v8796 = vpack.c.b16 %v8733, %v8732
        %v8797 = vpack.c.b16 %v8735, %v8734
        %v8798 = vpack.c.b16 %v8737, %v8736
        %v8799 = vpack.c.b16 %v8739, %v8738
        %v8800 = vpack.c.b16 %v8741, %v8740
        %v8801 = vpack.c.b16 %v8743, %v8742
        %v8802 = vpack.c.b16 %v8745, %v8744
        %v8803 = vpack.c.b16 %v8747, %v8746
        %v8804 = vpack.c.b16 %v8749, %v8748
        %v8805 = vpack.c.b16 %v8751, %v8750
        %v8806 = vpack.c.b16 %v8753, %v8752
        %v8807 = vpack.c.b16 %v8755, %v8754
        %v8808 = vpack.c.b16 %v8757, %v8756
        %v8809 = vpack.c.b16 %v8759, %v8758
        %v8810 = vpack.c.b16 %v8761, %v8760
        %v8811 = vpack.c.b16 %v8763, %v8762
        %v8812 = vpack.c.b16 %v8765, %v8764
        %v8813 = vpack.c.b16 %v8767, %v8766
        %v8814 = vpack.c.b16 %v8769, %v8768
        %v8815 = vpack.c.b16 %v8771, %v8770
        %v8816 = vpack.c.b16 %v8773, %v8772
        %v8817 = vpack.c.b16 %v8775, %v8774
        %v8818 = vpack.c.b16 %v8777, %v8776
        %v8819 = vpack.c.b16 %v8779, %v8778
        %v8820 = vpack.c.b16 %v8781, %v8780
        %v8821 = vpack.c.b16 %v8783, %v8782
        %v8822 = vpack.c.b16 %v8785, %v8784
        %v8823 = vpack.c.b16 %v8787, %v8786
        %v8824 = vpack.c.b16 %v8789, %v8788
        %v8825 = vpack.c.b16 %v8791, %v8790
        %v8826 = vpack.c.b16 %v8793, %v8792
        %v8827 = vpack.c.b16 %v8795, %v8794
        %8860 = vst [vmem:[%s258] sm:$0xff] %v8796
        %8861 = vst [vmem:[%s258 + $0x8] sm:$0xff] %v8797
        %8862 = vst [vmem:[%s258 + $0x10] sm:$0xff] %v8798
        %8863 = vst [vmem:[%s258 + $0x18] sm:$0xff] %v8799
        %8864 = vst [vmem:[%s258 + $0x20] sm:$0xff] %v8800
        %8865 = vst [vmem:[%s258 + $0x28] sm:$0xff] %v8801
        %8866 = vst [vmem:[%s258 + $0x30] sm:$0xff] %v8802
        %8867 = vst [vmem:[%s258 + $0x38] sm:$0xff] %v8803
        %8868 = vst [vmem:[%s258 + $0x40] sm:$0xff] %v8804
        %8869 = vst [vmem:[%s258 + $0x48] sm:$0xff] %v8805
        %8870 = vst [vmem:[%s258 + $0x50] sm:$0xff] %v8806
        %8871 = vst [vmem:[%s258 + $0x58] sm:$0xff] %v8807
        %8872 = vst [vmem:[%s258 + $0x60] sm:$0xff] %v8808
        %8873 = vst [vmem:[%s258 + $0x68] sm:$0xff] %v8809
        %8874 = vst [vmem:[%s258 + $0x70] sm:$0xff] %v8810
        %8875 = vst [vmem:[%s258 + $0x78] sm:$0xff] %v8811
        %8876 = vst [vmem:[%s258 + $0x80] sm:$0xff] %v8812
        %8877 = vst [vmem:[%s258 + $0x88] sm:$0xff] %v8813
        %8878 = vst [vmem:[%s258 + $0x90] sm:$0xff] %v8814
        %8879 = vst [vmem:[%s258 + $0x98] sm:$0xff] %v8815
        %8880 = vst [vmem:[%s258 + $0xa0] sm:$0xff] %v8816
        %8881 = vst [vmem:[%s258 + $0xa8] sm:$0xff] %v8817
        %8882 = vst [vmem:[%s258 + $0xb0] sm:$0xff] %v8818
        %8883 = vst [vmem:[%s258 + $0xb8] sm:$0xff] %v8819
        %8884 = vst [vmem:[%s258 + $0xc0] sm:$0xff] %v8820
        %8885 = vst [vmem:[%s258 + $0xc8] sm:$0xff] %v8821
        %8886 = vst [vmem:[%s258 + $0xd0] sm:$0xff] %v8822
        %8887 = vst [vmem:[%s258 + $0xd8] sm:$0xff] %v8823
        %8888 = vst [vmem:[%s258 + $0xe0] sm:$0xff] %v8824
        %8889 = vst [vmem:[%s258 + $0xe8] sm:$0xff] %v8825
        %8890 = vst [vmem:[%s258 + $0xf0] sm:$0xff] %v8826
        %8891 = vst [vmem:[%s258 + $0xf8] sm:$0xff] %v8827
        %s8892 = sand.u32 %s120, 1
        %s8893 = scalar_lea.sflag [#allocation4], %s8892
        %s8894 = sand.u32 %s120, 1
        %s8895 = smul.addr %s8894, 256
        %s8896 = scalar_lea.vmem [#allocation10], %s8895
        // Predicated region
        $region53: #{tpu_custom_call.1} parent=35 // pred_check
          %p8897 = pneg %p130
        $region54: #{tpu_custom_call.1} parent=35 // pred_check_branch
          %8899 = sbr.rel (%p8897) target = $region56
        $region55: #{tpu_custom_call.1} parent=35 // pred_region
          %s8900 = smul.u32 4, %s23
          %s8902 = ssub.s32 4096, 4096
          %8903 = vsyncadd %s8893, %s8902
          %s8904 = smul.addr %s8900, 16
          %s8905 = smul.addr %s8904, 64
          %s8906 = scalar_lea.hbm %s4, %s8905
          %s8907 = sshll.u32 %s8896, 4
          %s8908 = int_to_ptr.vmem [resolvable:$true] %s8907
          %8913 = dma.vmem_to_hbm [thread:$0]  %s8908, 4096, %s8906, %s8893, 256, 256, 16
        $region56: #{tpu_custom_call.1} parent=35 // pred_fallthru
          _
      $region36: #{tpu_custom_call.1} parent=5 // pred_fallthru
        _
      %p8914 = scmp.le.s32.totalorder 2, %s18
      // Predicated region
      $region57: #{tpu_custom_call.1} parent=5 // pred_check
        %p8915 = pneg %p8914
      $region58: #{tpu_custom_call.1} parent=5 // pred_check_branch
        %8917 = sbr.rel (%p8915) target = $region60
      $region59: #{tpu_custom_call.1} parent=5 // pred_region
        %s8918 = ssub.s32 %s18, 2
        // Predicated region
        $region61: #{tpu_custom_call.1} parent=59 // pred_check
          %p8919 = pneg %p136
        $region62: #{tpu_custom_call.1} parent=59 // pred_check_branch
          %8921 = sbr.rel (%p8919) target = $region64
        $region63: #{tpu_custom_call.1} parent=59 // pred_region
          %s8922 = sand.u32 %s121, 1
          %s8923 = scalar_lea.sflag [#allocation4], %s8922
          %s8924 = sand.u32 %s121, 1
          %s8925 = smul.addr %s8924, 256
          %s8926 = scalar_lea.vmem [#allocation10], %s8925
          %8927 = dma.done %s8923, 4096
        $region64: #{tpu_custom_call.1} parent=59 // pred_fallthru
          _
      $region60: #{tpu_custom_call.1} parent=5 // pred_fallthru
        _
    $region6: #{tpu_custom_call.1} parent=1 // loop_footer
      %s22 = sadd.s32 1, %s18
    $region7: #{tpu_custom_call.1} parent=1 // loop_footer_branch
      %17 = sbr.rel target = $region3
    $region8: #{tpu_custom_call.1} parent=1 // loop_exit
      _
    %8928 = vsyncpa [#allocation3], 1
    %s8929 = scalar_lea.sflag [#allocation3], 1
    %8930 = vsyncpa %s8929, 1
    %8931 = vsyncpa [#allocation6], 1
    %8932 = vsyncpa [#allocation9], 1
    %8933 = vsyncpa [#allocation4], 1
    %s8934 = scalar_lea.sflag [#allocation4], 1
    %8935 = vsyncpa %s8934, 1

</llo_original>
